<compile_context>
chip_gen: v5e
topology: v5e:2x2
jax: 0.10.0
libtpu: 0.0.40
codegen_flags: <defaults>
</compile_context>

<pallas_src>
import numpy as np
import jax
import jax.numpy as jnp
from jax.experimental import pallas as pl
from jax.experimental.pallas import tpu as pltpu

FEAT_DIM = 512
FACE_SIZE = 112


# ---------------------------------------------------------------------------
# Fused crop + double adaptive-average-pool as two matmuls with precomputed
# pooling matrices (exact AdaptiveAvgPool2d semantics, composed in float64).
# ---------------------------------------------------------------------------
def _pool_matrix_np(in_size, out_size):
    """Row i averages input columns [floor(i*in/out), ceil((i+1)*in/out))."""
    m = np.zeros((out_size, in_size), dtype=np.float64)
    for i in range(out_size):
        s = (i * in_size) // out_size
        e = -((-(i + 1) * in_size) // out_size)  # ceil((i+1)*in/out)
        m[i, s:e] = 1.0 / float(e - s)
    return m


def _fused_pool_matrices(H, W):
    """Mh (112, H) and MwT (W, 112): [pool->(256,256) iff H!=256, like the
    reference's shape[2]-only check] + crop [35:223, 32:220] + pool->112."""
    if H == 256:
        # Reference skips the 256-pool entirely when H == 256.
        assert W >= 220, "H == 256 path needs W >= 220 for the [32:220) crop"
        ph1 = np.eye(H, dtype=np.float64)
        pw1 = np.eye(W, dtype=np.float64)
    else:
        ph1 = _pool_matrix_np(H, 256)
        pw1 = _pool_matrix_np(W, 256)
    ph1 = ph1[35:223, :]   # crop rows 35:223  -> 188 rows
    pw1 = pw1[32:220, :]   # crop cols 32:220  -> 188 cols
    mh = _pool_matrix_np(188, FACE_SIZE) @ ph1   # (112, H)
    mw = _pool_matrix_np(188, FACE_SIZE) @ pw1   # (112, W)
    # Passed to the kernel as bf16 (native MXU rate, half the VMEM footprint).
    return (jnp.asarray(mh, dtype=jnp.bfloat16),
            jnp.asarray(mw.T, dtype=jnp.bfloat16))          # (112,H), (W,112)


def _fused_pool_kernel(mh_ref, x_ref, mwt_ref, o_ref):
    # mh: (112, H) bf16, x: (1, C*H, W) f32, mwt: (W, 112) bf16
    # o : (1, C, 112, 112) bf16
    _, CH, _ = x_ref.shape
    _, C, _, _ = o_ref.shape
    H = CH // C
    mh = mh_ref[...]
    mwt = mwt_ref[...]
    x = x_ref[0].astype(jnp.bfloat16)                       # (C*H, W)
    # One fused W-pool matmul for all channels (better MXU occupancy).
    t = jnp.dot(x, mwt, preferred_element_type=jnp.float32)  # (C*H, 112)
    t = t.astype(jnp.bfloat16)
    for c in range(C):  # C is small & static; unrolled H-pool matmuls
        oc = jnp.dot(mh, t[c * H:(c + 1) * H],
                     preferred_element_type=jnp.float32)     # (112, 112)
        o_ref[0, c] = oc.astype(o_ref.dtype)


def fused_crop_pool(x, mh_bf16, mwt_bf16):
    """(B, C, H, W) f32 -> (B, C, 112, 112) bf16 in a single HBM pass."""
    B, C, H, W = x.shape
    # Merging (C, H) is a free contiguous reshape in HBM; lets the kernel run
    # the W-pool as one big matmul instead of C small ones.
    x3 = x.reshape(B, C * H, W)
    return pl.pallas_call(
        _fused_pool_kernel,
        out_shape=jax.ShapeDtypeStruct((B, C, FACE_SIZE, FACE_SIZE),
                                       jnp.bfloat16),
        grid_spec=pltpu.PrefetchScalarGridSpec(
            num_scalar_prefetch=0,
            grid=(B,),
            in_specs=[
                pl.BlockSpec((FACE_SIZE, H), lambda b: (0, 0)),
                pl.BlockSpec((1, C * H, W), lambda b: (b, 0, 0)),
                pl.BlockSpec((W, FACE_SIZE), lambda b: (0, 0)),
            ],
            out_specs=pl.BlockSpec((1, C, FACE_SIZE, FACE_SIZE),
                                   lambda b: (b, 0, 0, 0)),
        ),
        compiler_params=pltpu.CompilerParams(
            dimension_semantics=("parallel",)),
    )(mh_bf16, x3, mwt_bf16)


# ---------------------------------------------------------------------------
# Stand-in facenet: K-tiled bf16 matmul -> (B2, 512) f32 (unnormalized).
# HBM-bound on the weight stream; N is split "parallel" (1 tile per TC on
# v7x), K is the trailing reduction axis, accumulation goes straight into the
# resident f32 output block.
# ---------------------------------------------------------------------------
def _feature_kernel(x_ref, w_ref, o_ref):
    @pl.when(pl.program_id(1) == 0)
    def _():
        o_ref[...] = jnp.zeros_like(o_ref)

    o_ref[...] += jnp.dot(x_ref[...], w_ref[...],
                          preferred_element_type=jnp.float32)


def facenet_features(x_flat, w, *, tk=12544, tn=256):
    # tk=12544 = 98*128: 3 K steps for C=3, ~6.4 MB weight block, ~13 MB
    # double-buffered VMEM -> fits the v5e 16 MiB scoped default (no override
    # needed on any generation).  v6e/v7x could optionally use tk=18816.
    B2, K = x_flat.shape
    N = w.shape[1]
    assert K % tk == 0 and tk % 128 == 0 and N % tn == 0 and tn % 128 == 0
    return pl.pallas_call(
        _feature_kernel,
        out_shape=jax.ShapeDtypeStruct((B2, N), jnp.float32),
        grid_spec=pltpu.PrefetchScalarGridSpec(
            num_scalar_prefetch=0,
            grid=(N // tn, K // tk),   # N "parallel" (dual-TC on v7x), K reduce
            in_specs=[
                pl.BlockSpec((B2, tk), lambda n, k: (0, k)),
                pl.BlockSpec((tk, tn), lambda n, k: (k, n)),
            ],
            out_specs=pl.BlockSpec((B2, tn), lambda n, k: (0, n)),
        ),
        compiler_params=pltpu.CompilerParams(
            dimension_semantics=("parallel", "arbitrary")),
    )(x_flat, w)


# ---------------------------------------------------------------------------
# IDLoss.extract_feats / forward equivalents.
# ---------------------------------------------------------------------------
def extract_feats_batched(y_hat, y, w_bf16):
    """Pool y_hat and y separately (no raw-image concat), then run ONE batched
    feature pass over the concatenated pooled tensors so the ~38.5 MB weight
    matrix is streamed from HBM exactly once."""
    assert y_hat.shape == y.shape
    B, C, H, W = y.shape
    mh, mwt = _fused_pool_matrices(H, W)                   # host-side constants
    p_hat = fused_crop_pool(y_hat, mh, mwt)                # (B, C, 112, 112) bf16
    p_y = fused_crop_pool(y, mh, mwt)                      # (B, C, 112, 112) bf16
    pooled = jnp.concatenate([p_hat, p_y], axis=0)         # tiny bf16 concat
    x_flat = pooled.reshape(2 * B, C * FACE_SIZE * FACE_SIZE)  # contiguous merge
    raw = facenet_features(x_flat, w_bf16)                 # (2B, 512) f32
    # ArcFace-style L2 normalization; rsqrt keeps the epilogue off the VALU path.
    inv_norm = jax.lax.rsqrt(jnp.sum(raw * raw, axis=-1, keepdims=True) + 1e-12)
    return raw * inv_norm


def id_loss_forward(y_hat, y, w_bf16):
    n_samples = y.shape[0]
    feats = extract_feats_batched(y_hat, y, w_bf16)        # (2B, 512)
    y_hat_feats = feats[:n_samples]
    y_feats = jax.lax.stop_gradient(feats[n_samples:])     # .detach()
    loss = jnp.mean(1.0 - jnp.sum(y_hat_feats * y_feats, axis=-1))
    # The reference never updates sim_improvement inside its loop -> always 0.
    sim_improvement = jnp.float32(0.0) / n_samples
    return loss, sim_improvement


if __name__ == "__main__":
    key = jax.random.PRNGKey(0)
    k1, k2, k3 = jax.random.split(key, 3)

    # Small NCHW images; H != 256 so the fused 256-pool path is exercised too.
    B, C, H, W = 2, 3, 128, 128
    y_hat = jax.random.normal(k1, (B, C, H, W), dtype=jnp.float32)
    y = jax.random.normal(k2, (B, C, H, W), dtype=jnp.float32)

    # Deterministic stand-in facenet projection weights, streamed as bf16.
    K = C * FACE_SIZE * FACE_SIZE                          # 3 * 112 * 112 = 37632
    w = (jax.random.normal(k3, (K, FEAT_DIM), dtype=jnp.float32)
         / np.float32(np.sqrt(K))).astype(jnp.bfloat16)

    fwd = jax.jit(id_loss_forward)
    loss, sim = fwd(y_hat, y, w)
    jax.block_until_ready((loss, sim))
    assert bool(jnp.isfinite(loss))
    print("KERNEL_OK")
</pallas_src>

<mosaic_0001>
module attributes {stable_mosaic.version = 11 : i64} {
  func.func @_feature_kernel(%arg0: i32, %arg1: i32, %arg2: memref<4x12544xbf16, #tpu.memory_space<vmem>>, %arg3: memref<12544x256xbf16, #tpu.memory_space<vmem>>, %arg4: memref<4x256xf32, #tpu.memory_space<vmem>>) attributes {dimension_semantics = [#tpu.dimension_semantics<parallel>, #tpu.dimension_semantics<arbitrary>], iteration_bounds = array<i64: 2, 3>, scalar_prefetch = 0 : i64, scratch_operands = 0 : i64, tpu.core_type = #tpu.core_type<tc>, window_params = [{transform_indices = @transform_0, window_bounds = array<i64: 4, 12544>}, {transform_indices = @transform_1, window_bounds = array<i64: 12544, 256>}, {transform_indices = @transform_2, window_bounds = array<i64: 4, 256>}]} {
    %c0_i32 = arith.constant 0 : i32
    %0 = arith.cmpi eq, %arg1, %c0_i32 : i32
    %1 = arith.extui %0 : i1 to i32
    %c0_i32_0 = arith.constant 0 : i32
    %2 = arith.cmpi ne, %1, %c0_i32_0 : i32
    scf.if %2 {
      %cst_8 = arith.constant 0.000000e+00 : f32
      %9 = vector.broadcast %cst_8 : f32 to vector<4x256xf32>
      %c0_9 = arith.constant 0 : index
      %c0_10 = arith.constant 0 : index
      %10 = vector.load %arg4[%c0_9, %c0_10] : memref<4x256xf32, #tpu.memory_space<vmem>>, vector<4x256xf32>
      tpu.vector_store %arg4[%c0_9, %c0_10], %9 {strides = array<i32>} : memref<4x256xf32, #tpu.memory_space<vmem>>, vector<4x256xf32>,
    } else {
    }
    %c0 = arith.constant 0 : index
    %c0_1 = arith.constant 0 : index
    %3 = vector.load %arg4[%c0, %c0_1] : memref<4x256xf32, #tpu.memory_space<vmem>>, vector<4x256xf32>
    %c0_2 = arith.constant 0 : index
    %c0_3 = arith.constant 0 : index
    %4 = vector.load %arg2[%c0_2, %c0_3] : memref<4x12544xbf16, #tpu.memory_space<vmem>>, vector<4x12544xbf16>
    %c0_4 = arith.constant 0 : index
    %c0_5 = arith.constant 0 : index
    %5 = vector.load %arg3[%c0_4, %c0_5] : memref<12544x256xbf16, #tpu.memory_space<vmem>>, vector<12544x256xbf16>
    %cst = arith.constant dense<0.000000e+00> : vector<4x256xf32>
    %6 = tpu.matmul %4, %5, %cst {dimension_numbers = #tpu.dot_dimension_numbers<[1], [0], [0], [1], [0, 0, 1, 1], [], []>} : vector<4x12544xbf16>, vector<12544x256xbf16>, vector<4x256xf32> -> vector<4x256xf32>
    %7 = arith.addf %3, %6 : vector<4x256xf32>
    %c0_6 = arith.constant 0 : index
    %c0_7 = arith.constant 0 : index
    %8 = vector.load %arg4[%c0_6, %c0_7] : memref<4x256xf32, #tpu.memory_space<vmem>>, vector<4x256xf32>
    tpu.vector_store %arg4[%c0_6, %c0_7], %7 {strides = array<i32>} : memref<4x256xf32, #tpu.memory_space<vmem>>, vector<4x256xf32>,
    return
  }
  func.func @transform_0(%arg0: i32, %arg1: i32) -> (i32, i32) {
    %c0_i32 = arith.constant 0 : i32
    %c0_i32_0 = arith.constant 0 : i32
    return %c0_i32, %arg1 : i32, i32
  }
  func.func @transform_1(%arg0: i32, %arg1: i32) -> (i32, i32) {
    %c0_i32 = arith.constant 0 : i32
    return %arg1, %arg0 : i32, i32
  }
  func.func @transform_2(%arg0: i32, %arg1: i32) -> (i32, i32) {
    %c0_i32 = arith.constant 0 : i32
    %c0_i32_0 = arith.constant 0 : i32
    return %c0_i32, %arg0 : i32, i32
  }
}

module attributes {stable_mosaic.version = 11 : i64} {
  func.func @_fused_pool_kernel(%arg0: i32, %arg1: memref<112x128xbf16, #tpu.memory_space<vmem>>, %arg2: memref<1x384x128xf32, #tpu.memory_space<vmem>>, %arg3: memref<128x112xbf16, #tpu.memory_space<vmem>>, %arg4: memref<1x3x112x112xbf16, #tpu.memory_space<vmem>>) attributes {dimension_semantics = [#tpu.dimension_semantics<parallel>], iteration_bounds = array<i64: 2>, scalar_prefetch = 0 : i64, scratch_operands = 0 : i64, tpu.core_type = #tpu.core_type<tc>, window_params = [{pipeline_mode = #tpu.pipeline_mode<synchronous>, transform_indices = @transform_0, window_bounds = array<i64: 112, 128>}, {transform_indices = @transform_1, window_bounds = array<i64: 1, 384, 128>}, {pipeline_mode = #tpu.pipeline_mode<synchronous>, transform_indices = @transform_2, window_bounds = array<i64: 128, 112>}, {transform_indices = @transform_3, window_bounds = array<i64: 1, 3, 112, 112>}]} {
    %c0 = arith.constant 0 : index
    %c0_0 = arith.constant 0 : index
    %0 = vector.load %arg1[%c0, %c0_0] : memref<112x128xbf16, #tpu.memory_space<vmem>>, vector<112x128xbf16>
    %c0_1 = arith.constant 0 : index
    %c0_2 = arith.constant 0 : index
    %1 = vector.load %arg3[%c0_1, %c0_2] : memref<128x112xbf16, #tpu.memory_space<vmem>>, vector<128x112xbf16>
    %c0_3 = arith.constant 0 : index
    %c0_4 = arith.constant 0 : index
    %c0_5 = arith.constant 0 : index
    %2 = vector.load %arg2[%c0_3, %c0_4, %c0_5] : memref<1x384x128xf32, #tpu.memory_space<vmem>>, vector<1x384x128xf32>
    %3 = vector.shape_cast %2 : vector<1x384x128xf32> to vector<384x128xf32>
    %4 = arith.truncf %3 : vector<384x128xf32> to vector<384x128xbf16>
    %cst = arith.constant dense<0.000000e+00> : vector<384x112xf32>
    %5 = tpu.matmul %4, %1, %cst {dimension_numbers = #tpu.dot_dimension_numbers<[1], [0], [0], [1], [0, 0, 1, 1], [], []>} : vector<384x128xbf16>, vector<128x112xbf16>, vector<384x112xf32> -> vector<384x112xf32>
    %6 = arith.truncf %5 : vector<384x112xf32> to vector<384x112xbf16>
    %7 = vector.extract_strided_slice %6 {offsets = [0, 0], sizes = [128, 112], strides = [1, 1]} : vector<384x112xbf16> to vector<128x112xbf16>
    %cst_6 = arith.constant dense<0.000000e+00> : vector<112x112xf32>
    %8 = tpu.matmul %0, %7, %cst_6 {dimension_numbers = #tpu.dot_dimension_numbers<[1], [0], [0], [1], [0, 0, 1, 1], [], []>} : vector<112x128xbf16>, vector<128x112xbf16>, vector<112x112xf32> -> vector<112x112xf32>
    %9 = arith.truncf %8 : vector<112x112xf32> to vector<112x112xbf16>
    %c0_7 = arith.constant 0 : index
    %c0_8 = arith.constant 0 : index
    %c0_9 = arith.constant 0 : index
    %c0_10 = arith.constant 0 : index
    %10 = vector.load %arg4[%c0_7, %c0_8, %c0_9, %c0_10] : memref<1x3x112x112xbf16, #tpu.memory_space<vmem>>, vector<1x1x112x112xbf16>
    %11 = vector.shape_cast %10 : vector<1x1x112x112xbf16> to vector<112x112xbf16>
    %12 = vector.shape_cast %9 : vector<112x112xbf16> to vector<1x1x112x112xbf16>
    tpu.vector_store %arg4[%c0_7, %c0_8, %c0_9, %c0_10], %12 {strides = array<i32>} : memref<1x3x112x112xbf16, #tpu.memory_space<vmem>>, vector<1x1x112x112xbf16>,
    %13 = vector.extract_strided_slice %6 {offsets = [128, 0], sizes = [128, 112], strides = [1, 1]} : vector<384x112xbf16> to vector<128x112xbf16>
    %cst_11 = arith.constant dense<0.000000e+00> : vector<112x112xf32>
    %14 = tpu.matmul %0, %13, %cst_11 {dimension_numbers = #tpu.dot_dimension_numbers<[1], [0], [0], [1], [0, 0, 1, 1], [], []>} : vector<112x128xbf16>, vector<128x112xbf16>, vector<112x112xf32> -> vector<112x112xf32>
    %15 = arith.truncf %14 : vector<112x112xf32> to vector<112x112xbf16>
    %c0_12 = arith.constant 0 : index
    %c1 = arith.constant 1 : index
    %c0_13 = arith.constant 0 : index
    %c0_14 = arith.constant 0 : index
    %16 = vector.load %arg4[%c0_12, %c1, %c0_13, %c0_14] : memref<1x3x112x112xbf16, #tpu.memory_space<vmem>>, vector<1x1x112x112xbf16>
    %17 = vector.shape_cast %16 : vector<1x1x112x112xbf16> to vector<112x112xbf16>
    %18 = vector.shape_cast %15 : vector<112x112xbf16> to vector<1x1x112x112xbf16>
    tpu.vector_store %arg4[%c0_12, %c1, %c0_13, %c0_14], %18 {strides = array<i32>} : memref<1x3x112x112xbf16, #tpu.memory_space<vmem>>, vector<1x1x112x112xbf16>,
    %19 = vector.extract_strided_slice %6 {offsets = [256, 0], sizes = [128, 112], strides = [1, 1]} : vector<384x112xbf16> to vector<128x112xbf16>
    %cst_15 = arith.constant dense<0.000000e+00> : vector<112x112xf32>
    %20 = tpu.matmul %0, %19, %cst_15 {dimension_numbers = #tpu.dot_dimension_numbers<[1], [0], [0], [1], [0, 0, 1, 1], [], []>} : vector<112x128xbf16>, vector<128x112xbf16>, vector<112x112xf32> -> vector<112x112xf32>
    %21 = arith.truncf %20 : vector<112x112xf32> to vector<112x112xbf16>
    %c0_16 = arith.constant 0 : index
    %c2 = arith.constant 2 : index
    %c0_17 = arith.constant 0 : index
    %c0_18 = arith.constant 0 : index
    %22 = vector.load %arg4[%c0_16, %c2, %c0_17, %c0_18] : memref<1x3x112x112xbf16, #tpu.memory_space<vmem>>, vector<1x1x112x112xbf16>
    %23 = vector.shape_cast %22 : vector<1x1x112x112xbf16> to vector<112x112xbf16>
    %24 = vector.shape_cast %21 : vector<112x112xbf16> to vector<1x1x112x112xbf16>
    tpu.vector_store %arg4[%c0_16, %c2, %c0_17, %c0_18], %24 {strides = array<i32>} : memref<1x3x112x112xbf16, #tpu.memory_space<vmem>>, vector<1x1x112x112xbf16>,
    return
  }
  func.func @transform_0(%arg0: i32) -> (i32, i32) {
    %c0_i32 = arith.constant 0 : i32
    %c0_i32_0 = arith.constant 0 : i32
    %c0_i32_1 = arith.constant 0 : i32
    return %c0_i32, %c0_i32_0 : i32, i32
  }
  func.func @transform_1(%arg0: i32) -> (i32, i32, i32) {
    %c0_i32 = arith.constant 0 : i32
    %c0_i32_0 = arith.constant 0 : i32
    %c0_i32_1 = arith.constant 0 : i32
    return %arg0, %c0_i32, %c0_i32_0 : i32, i32, i32
  }
  func.func @transform_2(%arg0: i32) -> (i32, i32) {
    %c0_i32 = arith.constant 0 : i32
    %c0_i32_0 = arith.constant 0 : i32
    %c0_i32_1 = arith.constant 0 : i32
    return %c0_i32, %c0_i32_0 : i32, i32
  }
  func.func @transform_3(%arg0: i32) -> (i32, i32, i32, i32) {
    %c0_i32 = arith.constant 0 : i32
    %c0_i32_0 = arith.constant 0 : i32
    %c0_i32_1 = arith.constant 0 : i32
    %c0_i32_2 = arith.constant 0 : i32
    return %arg0, %c0_i32, %c0_i32_0, %c0_i32_1 : i32, i32, i32, i32
  }
}

</mosaic_0001>

<llo_original>
// kernel: id_loss_forward.3
$region0: #{id_loss_forward.3}
  #allocation0 [shape = 'u32[]', space=smem, size = 0x4, offset = 0x4, fixed_abs, tag = 'smem constant byte address 0x4 - core index']
  #allocation1 [shape = 'u32[72,128]{1,0:T(1,128)}', space=vmem, size = 0x9000, scoped, tag = 'internal scratch']
  %s0 = inlined_call_operand.hbm [shape: bf16[112,128], index: 0, kind: input, shape index: {}]
  %s1 = inlined_call_operand.hbm [shape: f32[2,384,128], index: 1, kind: input, shape index: {}]
  %s2 = inlined_call_operand.hbm [shape: bf16[128,112], index: 2, kind: input, shape index: {}]
  %s3 = inlined_call_operand.vmem [shape: bf16[2,3,112,112], index: 3, kind: output, shape index: {}]
  %s4 = sld [smem:[#allocation0]]
  $region57: #{id_loss_forward.3} parent=0
    _
  %s6 = ssub.s32 1, %s4
  %s7 = scalar_select 0, %s6, %s4
  $region1: #{id_loss_forward.3} parent=0
    #allocation2 [shape = 'u8[28672]{0}', space=vmem, size = 0x7000, scoped, tag = 'input window, operand 0, single buffered']
    #allocation3 [shape = 's32[2]{0}', space=sflag, size = 0x8, scoped, tag = 'scoped memory for id_loss_forward.3']
    #allocation4 [shape = 'u8[393216]{0}', space=vmem, size = 0x60000, scoped, tag = 'input window, operand 1']
    #allocation5 [shape = 's32[2]{0}', space=sflag, size = 0x8, scoped, tag = 'scoped memory for id_loss_forward.3']
    #allocation6 [shape = 'u8[32768]{0}', space=vmem, size = 0x8000, scoped, tag = 'input window, operand 2, single buffered']
    %8 = vsyncpa [#allocation3], 0
    %9 = vsyncpa [#allocation5], 0
    %s10 = scalar_lea.sflag [#allocation5], 1
    %11 = vsyncpa %s10, 0
    loop: start=0, step=1, limit=4
    $region2: #{id_loss_forward.3} parent=1 // loop_pre_header
      _
    $region3: #{id_loss_forward.3} parent=1 // loop_header
      %s13 = sphi 0, %s17
      %p14 = scmp.ge.s32.totalorder %s13, 4
      %s21 = sphi 0, %s21
      %s23 = sphi 0, %s21
      %s24 = sphi 0, %s23
      %s38 = sphi 0, %s24
      %s44 = sphi 0, %s46
      %s47 = sphi 0, %s44
      %s48 = sphi 0, %s47
      %s64 = sphi 0, %s48
      %s68 = sphi 0, %s68
      %s70 = sphi 0, %s68
      %s71 = sphi 0, %s70
      %s85 = sphi 0, %s71
      %s91 = sphi 0, %s93
      %s94 = sphi 0, %s91
      %s95 = sphi 0, %s94
      %s111 = sphi 0, %s95
    $region4: #{id_loss_forward.3} parent=1 // loop_header_branch
      %16 = sbr.rel (%p14) target = $region8
    $region5: #{id_loss_forward.3} parent=1 // loop_body
      %s18 = ssub.s32 %s13, 1
      %s19 = ssub.s32 %s13, 2
      %s20 = sadd.s32 %s13, 1
      %s22 = sadd.s32 %s21, 1
      %p25 = scmp.eq.s32.totalorder %s13, 1
      %p26 = scmp.ne.s32.totalorder %s21, %s23
      %p27 = scmp.eq.s32.totalorder %s13, 0
      %p28 = por %p26, %p27
      %p29 = scmp.ne.s32.totalorder %s21, %s23
      %p30 = scmp.eq.s32.totalorder %s18, 1
      %p31 = por %p29, %p30
      %p32 = scmp.ne.s32.totalorder %s23, %s24
      %p33 = scmp.eq.s32.totalorder %s18, 0
      %p34 = por %p32, %p33
      %p35 = scmp.ne.s32.totalorder %s23, %s24
      %p36 = scmp.eq.s32.totalorder %s19, 1
      %p37 = por %p35, %p36
      %p39 = scmp.ne.s32.totalorder %s24, %s38
      %p40 = scmp.eq.s32.totalorder %s19, 0
      %p41 = por %p39, %p40
      %s42 = ssub.s32 %s13, %s20
      %p43 = scmp.eq.s32.totalorder %s42, 0
      %s45 = sadd.s32 %s44, 1
      %s46 = scalar_select %p43, %s44, %s45
      %p49 = pneg %p43
      %p50 = scmp.eq.s32.totalorder %s13, 1
      %p51 = por %p49, %p50
      %p52 = scmp.ne.s32.totalorder %s44, %s47
      %p53 = scmp.eq.s32.totalorder %s13, 0
      %p54 = por %p52, %p53
      %p55 = scmp.ne.s32.totalorder %s44, %s47
      %p56 = scmp.eq.s32.totalorder %s18, 1
      %p57 = por %p55, %p56
      %p58 = scmp.ne.s32.totalorder %s47, %s48
      %p59 = scmp.eq.s32.totalorder %s18, 0
      %p60 = por %p58, %p59
      %p61 = scmp.ne.s32.totalorder %s47, %s48
      %p62 = scmp.eq.s32.totalorder %s19, 1
      %p63 = por %p61, %p62
      %p65 = scmp.ne.s32.totalorder %s48, %s64
      %p66 = scmp.eq.s32.totalorder %s19, 0
      %p67 = por %p65, %p66
      %s69 = sadd.s32 %s68, 1
      %p72 = scmp.eq.s32.totalorder %s13, 1
      %p73 = scmp.ne.s32.totalorder %s68, %s70
      %p74 = scmp.eq.s32.totalorder %s13, 0
      %p75 = por %p73, %p74
      %p76 = scmp.ne.s32.totalorder %s68, %s70
      %p77 = scmp.eq.s32.totalorder %s18, 1
      %p78 = por %p76, %p77
      %p79 = scmp.ne.s32.totalorder %s70, %s71
      %p80 = scmp.eq.s32.totalorder %s18, 0
      %p81 = por %p79, %p80
      %p82 = scmp.ne.s32.totalorder %s70, %s71
      %p83 = scmp.eq.s32.totalorder %s19, 1
      %p84 = por %p82, %p83
      %p86 = scmp.ne.s32.totalorder %s71, %s85
      %p87 = scmp.eq.s32.totalorder %s19, 0
      %p88 = por %p86, %p87
      %s89 = ssub.s32 %s13, %s20
      %p90 = scmp.eq.s32.totalorder %s89, 0
      %s92 = sadd.s32 %s91, 1
      %s93 = scalar_select %p90, %s91, %s92
      %p96 = pneg %p90
      %p97 = scmp.eq.s32.totalorder %s13, 1
      %p98 = por %p96, %p97
      %p99 = scmp.ne.s32.totalorder %s91, %s94
      %p100 = scmp.eq.s32.totalorder %s13, 0
      %p101 = por %p99, %p100
      %p102 = scmp.ne.s32.totalorder %s91, %s94
      %p103 = scmp.eq.s32.totalorder %s18, 1
      %p104 = por %p102, %p103
      %p105 = scmp.ne.s32.totalorder %s94, %s95
      %p106 = scmp.eq.s32.totalorder %s18, 0
      %p107 = por %p105, %p106
      %p108 = scmp.ne.s32.totalorder %s94, %s95
      %p109 = scmp.eq.s32.totalorder %s19, 1
      %p110 = por %p108, %p109
      %p112 = scmp.ne.s32.totalorder %s95, %s111
      %p113 = scmp.eq.s32.totalorder %s19, 0
      %p114 = por %p112, %p113
      %p115 = scmp.le.s32.totalorder 1, %s13
      %p116 = scmp.lt.s32.totalorder %s13, 3
      %p117 = pnand %p115, %p116
      %p118 = pneg %p117
      // Predicated region
      $region9: #{id_loss_forward.3} parent=5 // pred_check
        _
      $region10: #{id_loss_forward.3} parent=5 // pred_check_branch
        %120 = sbr.rel (%p117) target = $region12
      $region11: #{id_loss_forward.3} parent=5 // pred_region
        %s121 = ssub.s32 %s13, 1
        // Predicated region
        $region13: #{id_loss_forward.3} parent=11 // pred_check
          %p122 = pneg %p34
        $region14: #{id_loss_forward.3} parent=11 // pred_check_branch
          %124 = sbr.rel (%p122) target = $region16
        $region15: #{id_loss_forward.3} parent=11 // pred_region
          %126 = vsyncadd [#allocation3], 0
          %s127 = sshll.u32 %s0, 4
          %s128 = int_to_ptr.hbm [resolvable:$true] %s127
          %s129 = sshll.u32 [#allocation2], 4
          %s130 = int_to_ptr.vmem [resolvable:$true] %s129
          %135 = dma.hbm_to_vmem [thread:$0]  %s128, 896, %s130, [#allocation3], 64, 64, 4
        $region16: #{id_loss_forward.3} parent=11 // pred_fallthru
          _
        // Predicated region
        $region17: #{id_loss_forward.3} parent=11 // pred_check
          %p136 = pneg %p81
        $region18: #{id_loss_forward.3} parent=11 // pred_check_branch
          %138 = sbr.rel (%p136) target = $region20
        $region19: #{id_loss_forward.3} parent=11 // pred_region
          %140 = vsyncadd [#allocation5], 0
          %s141 = sshll.u32 %s2, 4
          %s142 = int_to_ptr.hbm [resolvable:$true] %s141
          %s143 = sshll.u32 [#allocation6], 4
          %s144 = int_to_ptr.vmem [resolvable:$true] %s143
          %149 = dma.hbm_to_vmem [thread:$0]  %s142, 1024, %s144, [#allocation5], 64, 64, 4
        $region20: #{id_loss_forward.3} parent=11 // pred_fallthru
          _
      $region12: #{id_loss_forward.3} parent=5 // pred_fallthru
        _
      %p150 = scmp.lt.s32.totalorder %s13, 2
      // Predicated region
      $region21: #{id_loss_forward.3} parent=5 // pred_check
        %p151 = pneg %p150
      $region22: #{id_loss_forward.3} parent=5 // pred_check_branch
        %153 = sbr.rel (%p151) target = $region24
      $region23: #{id_loss_forward.3} parent=5 // pred_region
        // Predicated region
        $region25: #{id_loss_forward.3} parent=23 // pred_check
          %p154 = pneg %p54
        $region26: #{id_loss_forward.3} parent=23 // pred_check_branch
          %156 = sbr.rel (%p154) target = $region28
        $region27: #{id_loss_forward.3} parent=23 // pred_region
          %s157 = sand.u32 %s13, 1
          %s158 = scalar_lea.sflag [#allocation5], %s157
          %s159 = sand.u32 %s44, 1
          %s160 = smul.addr %s159, 384
          %s161 = scalar_lea.vmem [#allocation4], %s160
          %163 = vsyncadd %s158, 0
          %s164 = smul.addr %s13, 48
          %s165 = smul.addr %s164, 8
          %s166 = scalar_lea.hbm %s1, %s165
          %s167 = sshll.u32 %s166, 4
          %s168 = int_to_ptr.hbm [resolvable:$true] %s167
          %s169 = sshll.u32 %s161, 4
          %s170 = int_to_ptr.vmem [resolvable:$true] %s169
          %175 = dma.hbm_to_vmem [thread:$0]  %s168, 6144, %s170, %s158, 128, 128, 8
        $region28: #{id_loss_forward.3} parent=23 // pred_fallthru
          _
      $region24: #{id_loss_forward.3} parent=5 // pred_fallthru
        _
      %p176 = scmp.le.s32.totalorder 1, %s13
      %p177 = scmp.lt.s32.totalorder %s13, 3
      %p178 = pnand %p176, %p177
      %p179 = pneg %p178
      // Predicated region
      $region29: #{id_loss_forward.3} parent=5 // pred_check
        _
      $region30: #{id_loss_forward.3} parent=5 // pred_check_branch
        %181 = sbr.rel (%p178) target = $region32
      $region31: #{id_loss_forward.3} parent=5 // pred_region
        %s182 = ssub.s32 %s13, 1
        // Predicated region
        $region33: #{id_loss_forward.3} parent=31 // pred_check
          %p183 = pneg %p34
        $region34: #{id_loss_forward.3} parent=31 // pred_check_branch
          %185 = sbr.rel (%p183) target = $region36
        $region35: #{id_loss_forward.3} parent=31 // pred_region
          %187 = dma.done [#allocation3], 896
        $region36: #{id_loss_forward.3} parent=31 // pred_fallthru
          _
        %s188 = sand.u32 %s18, 1
        %s189 = scalar_lea.sflag [#allocation5], %s188
        %s190 = sand.u32 %s47, 1
        %s191 = smul.addr %s190, 384
        %s192 = scalar_lea.vmem [#allocation4], %s191
        // Predicated region
        $region37: #{id_loss_forward.3} parent=31 // pred_check
          %p193 = pneg %p60
        $region38: #{id_loss_forward.3} parent=31 // pred_check_branch
          %195 = sbr.rel (%p193) target = $region40
        $region39: #{id_loss_forward.3} parent=31 // pred_region
          %197 = dma.done %s189, 6144
        $region40: #{id_loss_forward.3} parent=31 // pred_fallthru
          _
        // Predicated region
        $region41: #{id_loss_forward.3} parent=31 // pred_check
          %p198 = pneg %p81
        $region42: #{id_loss_forward.3} parent=31 // pred_check_branch
          %200 = sbr.rel (%p198) target = $region44
        $region43: #{id_loss_forward.3} parent=31 // pred_region
          %202 = dma.done [#allocation5], 1024
        $region44: #{id_loss_forward.3} parent=31 // pred_fallthru
          _
        %p203 = pneg %p34
        %p204 = pneg %p31
        %s205 = sand.u32 %s18, 1
        %s206 = scalar_lea.sflag [#allocation5], %s205
        %s207 = sand.u32 %s47, 1
        %s208 = smul.addr %s207, 384
        %s209 = scalar_lea.vmem [#allocation4], %s208
        %p210 = pneg %p60
        %p211 = pneg %p57
        %p212 = pneg %p81
        %p213 = pneg %p78
        %p214 = pneg %p107
        %p215 = pneg %p104
        %p216 = scmp.lt.s32.totalorder %s18, 1
        %s217 = scalar_select %p216, %s18, 1
        %s218 = smul.addr %s217, 42
        %s219 = smul.addr %s218, 4
        %s220 = scalar_lea.vmem %s3, %s219
        %p221 = scmp.lt.s32.totalorder %s18, 1
        %s222 = scalar_select %p221, %s18, 1
        %s223 = smul.addr %s222, 42
        %s224 = smul.addr %s223, 4
        %s225 = scalar_lea.vmem %s3, %s224
        %v226 = vld [vmem:[#allocation2] sm:$0xf]
        %v227 = vld [vmem:[#allocation2 + $0x4] sm:$0xf]
        %v228 = vld [vmem:[#allocation2 + $0x8] sm:$0xf]
        %v229 = vld [vmem:[#allocation2 + $0xc] sm:$0xf]
        %v230 = vld [vmem:[#allocation2 + $0x10] sm:$0xf]
        %v231 = vld [vmem:[#allocation2 + $0x14] sm:$0xf]
        %v232 = vld [vmem:[#allocation2 + $0x18] sm:$0xf]
        %v233 = vld [vmem:[#allocation2 + $0x1c] sm:$0xf]
        %v234 = vld [vmem:[#allocation2 + $0x20] sm:$0xf]
        %v235 = vld [vmem:[#allocation2 + $0x24] sm:$0xf]
        %v236 = vld [vmem:[#allocation2 + $0x28] sm:$0xf]
        %v237 = vld [vmem:[#allocation2 + $0x2c] sm:$0xf]
        %v238 = vld [vmem:[#allocation2 + $0x30] sm:$0xf]
        %v239 = vld [vmem:[#allocation2 + $0x34] sm:$0xf]
        %v240 = vld [vmem:[#allocation6] sm:$0xf]
        %v241 = vld [vmem:[#allocation6 + $0x4] sm:$0xf]
        %v242 = vld [vmem:[#allocation6 + $0x8] sm:$0xf]
        %v243 = vld [vmem:[#allocation6 + $0xc] sm:$0xf]
        %v244 = vld [vmem:[#allocation6 + $0x10] sm:$0xf]
        %v245 = vld [vmem:[#allocation6 + $0x14] sm:$0xf]
        %v246 = vld [vmem:[#allocation6 + $0x18] sm:$0xf]
        %v247 = vld [vmem:[#allocation6 + $0x1c] sm:$0xf]
        %v248 = vld [vmem:[#allocation6 + $0x20] sm:$0xf]
        %v249 = vld [vmem:[#allocation6 + $0x24] sm:$0xf]
        %v250 = vld [vmem:[#allocation6 + $0x28] sm:$0xf]
        %v251 = vld [vmem:[#allocation6 + $0x2c] sm:$0xf]
        %v252 = vld [vmem:[#allocation6 + $0x30] sm:$0xf]
        %v253 = vld [vmem:[#allocation6 + $0x34] sm:$0xf]
        %v254 = vld [vmem:[#allocation6 + $0x38] sm:$0xf]
        %v255 = vld [vmem:[#allocation6 + $0x3c] sm:$0xf]
        %v256 = vld [vmem:[%s192] sm:$0xff]
        %v257 = vld [vmem:[%s192 + $0x8] sm:$0xff]
        %v258 = vld [vmem:[%s192 + $0x10] sm:$0xff]
        %v259 = vld [vmem:[%s192 + $0x18] sm:$0xff]
        %v260 = vld [vmem:[%s192 + $0x20] sm:$0xff]
        %v261 = vld [vmem:[%s192 + $0x28] sm:$0xff]
        %v262 = vld [vmem:[%s192 + $0x30] sm:$0xff]
        %v263 = vld [vmem:[%s192 + $0x38] sm:$0xff]
        %v264 = vld [vmem:[%s192 + $0x40] sm:$0xff]
        %v265 = vld [vmem:[%s192 + $0x48] sm:$0xff]
        %v266 = vld [vmem:[%s192 + $0x50] sm:$0xff]
        %v267 = vld [vmem:[%s192 + $0x58] sm:$0xff]
        %v268 = vld [vmem:[%s192 + $0x60] sm:$0xff]
        %v269 = vld [vmem:[%s192 + $0x68] sm:$0xff]
        %v270 = vld [vmem:[%s192 + $0x70] sm:$0xff]
        %v271 = vld [vmem:[%s192 + $0x78] sm:$0xff]
        %v272 = vld [vmem:[%s192 + $0x80] sm:$0xff]
        %v273 = vld [vmem:[%s192 + $0x88] sm:$0xff]
        %v274 = vld [vmem:[%s192 + $0x90] sm:$0xff]
        %v275 = vld [vmem:[%s192 + $0x98] sm:$0xff]
        %v276 = vld [vmem:[%s192 + $0xa0] sm:$0xff]
        %v277 = vld [vmem:[%s192 + $0xa8] sm:$0xff]
        %v278 = vld [vmem:[%s192 + $0xb0] sm:$0xff]
        %v279 = vld [vmem:[%s192 + $0xb8] sm:$0xff]
        %v280 = vld [vmem:[%s192 + $0xc0] sm:$0xff]
        %v281 = vld [vmem:[%s192 + $0xc8] sm:$0xff]
        %v282 = vld [vmem:[%s192 + $0xd0] sm:$0xff]
        %v283 = vld [vmem:[%s192 + $0xd8] sm:$0xff]
        %v284 = vld [vmem:[%s192 + $0xe0] sm:$0xff]
        %v285 = vld [vmem:[%s192 + $0xe8] sm:$0xff]
        %v286 = vld [vmem:[%s192 + $0xf0] sm:$0xff]
        %v287 = vld [vmem:[%s192 + $0xf8] sm:$0xff]
        %v288 = vld [vmem:[%s192 + $0x100] sm:$0xff]
        %v289 = vld [vmem:[%s192 + $0x108] sm:$0xff]
        %v290 = vld [vmem:[%s192 + $0x110] sm:$0xff]
        %v291 = vld [vmem:[%s192 + $0x118] sm:$0xff]
        %v292 = vld [vmem:[%s192 + $0x120] sm:$0xff]
        %v293 = vld [vmem:[%s192 + $0x128] sm:$0xff]
        %v294 = vld [vmem:[%s192 + $0x130] sm:$0xff]
        %v295 = vld [vmem:[%s192 + $0x138] sm:$0xff]
        %v296 = vld [vmem:[%s192 + $0x140] sm:$0xff]
        %v297 = vld [vmem:[%s192 + $0x148] sm:$0xff]
        %v298 = vld [vmem:[%s192 + $0x150] sm:$0xff]
        %v299 = vld [vmem:[%s192 + $0x158] sm:$0xff]
        %v300 = vld [vmem:[%s192 + $0x160] sm:$0xff]
        %v301 = vld [vmem:[%s192 + $0x168] sm:$0xff]
        %v302 = vld [vmem:[%s192 + $0x170] sm:$0xff]
        %v303 = vld [vmem:[%s192 + $0x178] sm:$0xff]
        %v304 = vpack.c.bf16 %v257, %v256
        %v305 = vpack.c.bf16 %v259, %v258
        %v306 = vpack.c.bf16 %v261, %v260
        %v307 = vpack.c.bf16 %v263, %v262
        %v308 = vpack.c.bf16 %v265, %v264
        %v309 = vpack.c.bf16 %v267, %v266
        %v310 = vpack.c.bf16 %v269, %v268
        %v311 = vpack.c.bf16 %v271, %v270
        %v312 = vpack.c.bf16 %v273, %v272
        %v313 = vpack.c.bf16 %v275, %v274
        %v314 = vpack.c.bf16 %v277, %v276
        %v315 = vpack.c.bf16 %v279, %v278
        %v316 = vpack.c.bf16 %v281, %v280
        %v317 = vpack.c.bf16 %v283, %v282
        %v318 = vpack.c.bf16 %v285, %v284
        %v319 = vpack.c.bf16 %v287, %v286
        %v320 = vpack.c.bf16 %v289, %v288
        %v321 = vpack.c.bf16 %v291, %v290
        %v322 = vpack.c.bf16 %v293, %v292
        %v323 = vpack.c.bf16 %v295, %v294
        %v324 = vpack.c.bf16 %v297, %v296
        %v325 = vpack.c.bf16 %v299, %v298
        %v326 = vpack.c.bf16 %v301, %v300
        %v327 = vpack.c.bf16 %v303, %v302
        %v344 = vunpack.c.l.b16 %v240
        %v345 = vunpack.c.l.b16 %v241
        %v346 = vunpack.c.l.b16 %v242
        %v347 = vunpack.c.l.b16 %v243
        %v348 = vunpack.c.l.b16 %v244
        %v349 = vunpack.c.l.b16 %v245
        %v350 = vunpack.c.l.b16 %v246
        %v351 = vunpack.c.l.b16 %v247
        %v352 = vunpack.c.l.b16 %v248
        %v353 = vunpack.c.l.b16 %v249
        %v354 = vunpack.c.l.b16 %v250
        %v355 = vunpack.c.l.b16 %v251
        %v356 = vunpack.c.l.b16 %v252
        %v357 = vunpack.c.l.b16 %v253
        %v358 = vunpack.c.l.b16 %v254
        %v359 = vunpack.c.l.b16 %v255
        %v360 = vpack.c.b16 %v345, %v344
        %v361 = vpack.c.b16 %v347, %v346
        %v362 = vpack.c.b16 %v349, %v348
        %v363 = vpack.c.b16 %v351, %v350
        %v364 = vpack.c.b16 %v353, %v352
        %v365 = vpack.c.b16 %v355, %v354
        %v366 = vpack.c.b16 %v357, %v356
        %v367 = vpack.c.b16 %v359, %v358
        %376 = vmatpush.bf16.msra.mxu0 %v367
        %377 = vmatpush.bf16.msra.mxu0 %v366
        %378 = vmatpush.bf16.msra.mxu0 %v365
        %379 = vmatpush.bf16.msra.mxu0 %v364
        %380 = vmatpush.bf16.msra.mxu0 %v363
        %381 = vmatpush.bf16.msra.mxu0 %v362
        %382 = vmatpush.bf16.msra.mxu0 %v361
        %383 = vmatpush.bf16.msra.mxu0 %v360
        %384 = vmatmul.bf16.gmra.mxu0 %v304
        %v385 = vpop.f32.mrf.mxu0
        %v386 = vadd.f32 0.0, %v385
        %v387 = vpop.f32.mrf.mxu0
        %v388 = vadd.f32 0.0, %v387
        %389 = vmatmul.bf16.gmra.mxu0 %v305
        %v390 = vpop.f32.mrf.mxu0
        %v391 = vadd.f32 0.0, %v390
        %v392 = vpop.f32.mrf.mxu0
        %v393 = vadd.f32 0.0, %v392
        %394 = vmatmul.bf16.gmra.mxu0 %v306
        %v395 = vpop.f32.mrf.mxu0
        %v396 = vadd.f32 0.0, %v395
        %v397 = vpop.f32.mrf.mxu0
        %v398 = vadd.f32 0.0, %v397
        %399 = vmatmul.bf16.gmra.mxu0 %v307
        %v400 = vpop.f32.mrf.mxu0
        %v401 = vadd.f32 0.0, %v400
        %v402 = vpop.f32.mrf.mxu0
        %v403 = vadd.f32 0.0, %v402
        %404 = vmatmul.bf16.gmra.mxu0 %v308
        %v405 = vpop.f32.mrf.mxu0
        %v406 = vadd.f32 0.0, %v405
        %v407 = vpop.f32.mrf.mxu0
        %v408 = vadd.f32 0.0, %v407
        %409 = vmatmul.bf16.gmra.mxu0 %v309
        %v410 = vpop.f32.mrf.mxu0
        %v411 = vadd.f32 0.0, %v410
        %v412 = vpop.f32.mrf.mxu0
        %v413 = vadd.f32 0.0, %v412
        %414 = vmatmul.bf16.gmra.mxu0 %v310
        %v415 = vpop.f32.mrf.mxu0
        %v416 = vadd.f32 0.0, %v415
        %v417 = vpop.f32.mrf.mxu0
        %v418 = vadd.f32 0.0, %v417
        %419 = vmatmul.bf16.gmra.mxu0 %v311
        %v420 = vpop.f32.mrf.mxu0
        %v421 = vadd.f32 0.0, %v420
        %v422 = vpop.f32.mrf.mxu0
        %v423 = vadd.f32 0.0, %v422
        %424 = vmatmul.bf16.gmra.mxu0 %v312
        %v425 = vpop.f32.mrf.mxu0
        %v426 = vadd.f32 0.0, %v425
        %v427 = vpop.f32.mrf.mxu0
        %v428 = vadd.f32 0.0, %v427
        %429 = vmatmul.bf16.gmra.mxu0 %v313
        %v430 = vpop.f32.mrf.mxu0
        %v431 = vadd.f32 0.0, %v430
        %v432 = vpop.f32.mrf.mxu0
        %v433 = vadd.f32 0.0, %v432
        %434 = vmatmul.bf16.gmra.mxu0 %v314
        %v435 = vpop.f32.mrf.mxu0
        %v436 = vadd.f32 0.0, %v435
        %v437 = vpop.f32.mrf.mxu0
        %v438 = vadd.f32 0.0, %v437
        %439 = vmatmul.bf16.gmra.mxu0 %v315
        %v440 = vpop.f32.mrf.mxu0
        %v441 = vadd.f32 0.0, %v440
        %v442 = vpop.f32.mrf.mxu0
        %v443 = vadd.f32 0.0, %v442
        %444 = vmatmul.bf16.gmra.mxu0 %v316
        %v445 = vpop.f32.mrf.mxu0
        %v446 = vadd.f32 0.0, %v445
        %v447 = vpop.f32.mrf.mxu0
        %v448 = vadd.f32 0.0, %v447
        %449 = vmatmul.bf16.gmra.mxu0 %v317
        %v450 = vpop.f32.mrf.mxu0
        %v451 = vadd.f32 0.0, %v450
        %v452 = vpop.f32.mrf.mxu0
        %v453 = vadd.f32 0.0, %v452
        %454 = vmatmul.bf16.gmra.mxu0 %v318
        %v455 = vpop.f32.mrf.mxu0
        %v456 = vadd.f32 0.0, %v455
        %v457 = vpop.f32.mrf.mxu0
        %v458 = vadd.f32 0.0, %v457
        %459 = vmatmul.bf16.gmra.mxu0 %v319
        %v460 = vpop.f32.mrf.mxu0
        %v461 = vadd.f32 0.0, %v460
        %v462 = vpop.f32.mrf.mxu0
        %v463 = vadd.f32 0.0, %v462
        %464 = vmatmul.bf16.gmra.mxu0 %v320
        %v465 = vpop.f32.mrf.mxu0
        %v466 = vadd.f32 0.0, %v465
        %v467 = vpop.f32.mrf.mxu0
        %v468 = vadd.f32 0.0, %v467
        %469 = vmatmul.bf16.gmra.mxu0 %v321
        %v470 = vpop.f32.mrf.mxu0
        %v471 = vadd.f32 0.0, %v470
        %v472 = vpop.f32.mrf.mxu0
        %v473 = vadd.f32 0.0, %v472
        %474 = vmatmul.bf16.gmra.mxu0 %v322
        %v475 = vpop.f32.mrf.mxu0
        %v476 = vadd.f32 0.0, %v475
        %v477 = vpop.f32.mrf.mxu0
        %v478 = vadd.f32 0.0, %v477
        %479 = vmatmul.bf16.gmra.mxu0 %v323
        %v480 = vpop.f32.mrf.mxu0
        %v481 = vadd.f32 0.0, %v480
        %v482 = vpop.f32.mrf.mxu0
        %v483 = vadd.f32 0.0, %v482
        %484 = vmatmul.bf16.gmra.mxu0 %v324
        %v485 = vpop.f32.mrf.mxu0
        %v486 = vadd.f32 0.0, %v485
        %v487 = vpop.f32.mrf.mxu0
        %v488 = vadd.f32 0.0, %v487
        %489 = vmatmul.bf16.gmra.mxu0 %v325
        %v490 = vpop.f32.mrf.mxu0
        %v491 = vadd.f32 0.0, %v490
        %v492 = vpop.f32.mrf.mxu0
        %v493 = vadd.f32 0.0, %v492
        %494 = vmatmul.bf16.gmra.mxu0 %v326
        %v495 = vpop.f32.mrf.mxu0
        %v496 = vadd.f32 0.0, %v495
        %v497 = vpop.f32.mrf.mxu0
        %v498 = vadd.f32 0.0, %v497
        %499 = vmatmul.bf16.gmra.mxu0 %v327
        %v500 = vpop.f32.mrf.mxu0
        %v501 = vadd.f32 0.0, %v500
        %v502 = vpop.f32.mrf.mxu0
        %v503 = vadd.f32 0.0, %v502
        %504 = vdwg.mxu0
        %v505 = vpack.c.bf16 %v386, %v386
        %v506 = vpack.c.bf16 %v388, %v388
        %v507 = vpack.c.bf16 %v391, %v391
        %v508 = vpack.c.bf16 %v393, %v393
        %v509 = vpack.c.bf16 %v396, %v396
        %v510 = vpack.c.bf16 %v398, %v398
        %v511 = vpack.c.bf16 %v401, %v401
        %v512 = vpack.c.bf16 %v403, %v403
        %v513 = vpack.c.bf16 %v406, %v406
        %v514 = vpack.c.bf16 %v408, %v408
        %v515 = vpack.c.bf16 %v411, %v411
        %v516 = vpack.c.bf16 %v413, %v413
        %v517 = vpack.c.bf16 %v416, %v416
        %v518 = vpack.c.bf16 %v418, %v418
        %v519 = vpack.c.bf16 %v421, %v421
        %v520 = vpack.c.bf16 %v423, %v423
        %v521 = vpack.c.bf16 %v426, %v426
        %v522 = vpack.c.bf16 %v428, %v428
        %v523 = vpack.c.bf16 %v431, %v431
        %v524 = vpack.c.bf16 %v433, %v433
        %v525 = vpack.c.bf16 %v436, %v436
        %v526 = vpack.c.bf16 %v438, %v438
        %v527 = vpack.c.bf16 %v441, %v441
        %v528 = vpack.c.bf16 %v443, %v443
        %v529 = vpack.c.bf16 %v446, %v446
        %v530 = vpack.c.bf16 %v448, %v448
        %v531 = vpack.c.bf16 %v451, %v451
        %v532 = vpack.c.bf16 %v453, %v453
        %v533 = vpack.c.bf16 %v456, %v456
        %v534 = vpack.c.bf16 %v458, %v458
        %v535 = vpack.c.bf16 %v461, %v461
        %v536 = vpack.c.bf16 %v463, %v463
        %v537 = vpack.c.bf16 %v466, %v466
        %v538 = vpack.c.bf16 %v468, %v468
        %v539 = vpack.c.bf16 %v471, %v471
        %v540 = vpack.c.bf16 %v473, %v473
        %v541 = vpack.c.bf16 %v476, %v476
        %v542 = vpack.c.bf16 %v478, %v478
        %v543 = vpack.c.bf16 %v481, %v481
        %v544 = vpack.c.bf16 %v483, %v483
        %v545 = vpack.c.bf16 %v486, %v486
        %v546 = vpack.c.bf16 %v488, %v488
        %v547 = vpack.c.bf16 %v491, %v491
        %v548 = vpack.c.bf16 %v493, %v493
        %v549 = vpack.c.bf16 %v496, %v496
        %v550 = vpack.c.bf16 %v498, %v498
        %v551 = vpack.c.bf16 %v501, %v501
        %v552 = vpack.c.bf16 %v503, %v503
        %v567 = vunpack.c.l.b16 %v226
        %v568 = vunpack.c.l.b16 %v227
        %v569 = vunpack.c.l.b16 %v228
        %v570 = vunpack.c.l.b16 %v229
        %v571 = vunpack.c.l.b16 %v230
        %v572 = vunpack.c.l.b16 %v231
        %v573 = vunpack.c.l.b16 %v232
        %v574 = vunpack.c.l.b16 %v233
        %v575 = vunpack.c.l.b16 %v234
        %v576 = vunpack.c.l.b16 %v235
        %v577 = vunpack.c.l.b16 %v236
        %v578 = vunpack.c.l.b16 %v237
        %v579 = vunpack.c.l.b16 %v238
        %v580 = vunpack.c.l.b16 %v239
        %v581 = vpack.c.b16 %v568, %v567
        %v582 = vpack.c.b16 %v570, %v569
        %v583 = vpack.c.b16 %v572, %v571
        %v584 = vpack.c.b16 %v574, %v573
        %v585 = vpack.c.b16 %v576, %v575
        %v586 = vpack.c.b16 %v578, %v577
        %v587 = vpack.c.b16 %v580, %v579
        %v611 = vunpack.c.l.b16 %v505
        %v612 = vunpack.c.l.b16 %v506
        %v613 = vunpack.c.l.b16 %v507
        %v614 = vunpack.c.l.b16 %v508
        %v615 = vunpack.c.l.b16 %v509
        %v616 = vunpack.c.l.b16 %v510
        %v617 = vunpack.c.l.b16 %v511
        %v618 = vunpack.c.l.b16 %v512
        %v619 = vunpack.c.l.b16 %v513
        %v620 = vunpack.c.l.b16 %v514
        %v621 = vunpack.c.l.b16 %v515
        %v622 = vunpack.c.l.b16 %v516
        %v623 = vunpack.c.l.b16 %v517
        %v624 = vunpack.c.l.b16 %v518
        %v625 = vunpack.c.l.b16 %v519
        %v626 = vunpack.c.l.b16 %v520
        %v627 = vpack.c.b16 %v612, %v611
        %v628 = vpack.c.b16 %v614, %v613
        %v629 = vpack.c.b16 %v616, %v615
        %v630 = vpack.c.b16 %v618, %v617
        %v631 = vpack.c.b16 %v620, %v619
        %v632 = vpack.c.b16 %v622, %v621
        %v633 = vpack.c.b16 %v624, %v623
        %v634 = vpack.c.b16 %v626, %v625
        %643 = vmatpush.bf16.msra.mxu0 %v634
        %644 = vmatpush.bf16.msra.mxu0 %v633
        %645 = vmatpush.bf16.msra.mxu0 %v632
        %646 = vmatpush.bf16.msra.mxu0 %v631
        %647 = vmatpush.bf16.msra.mxu0 %v630
        %648 = vmatpush.bf16.msra.mxu0 %v629
        %649 = vmatpush.bf16.msra.mxu0 %v628
        %650 = vmatpush.bf16.msra.mxu0 %v627
        %651 = vmatmul.bf16.gmra.mxu0 %v581
        %v652 = vpop.f32.mrf.mxu0
        %v653 = vadd.f32 0.0, %v652
        %v654 = vpop.f32.mrf.mxu0
        %v655 = vadd.f32 0.0, %v654
        %656 = vmatmul.bf16.gmra.mxu0 %v582
        %v657 = vpop.f32.mrf.mxu0
        %v658 = vadd.f32 0.0, %v657
        %v659 = vpop.f32.mrf.mxu0
        %v660 = vadd.f32 0.0, %v659
        %661 = vmatmul.bf16.gmra.mxu0 %v583
        %v662 = vpop.f32.mrf.mxu0
        %v663 = vadd.f32 0.0, %v662
        %v664 = vpop.f32.mrf.mxu0
        %v665 = vadd.f32 0.0, %v664
        %666 = vmatmul.bf16.gmra.mxu0 %v584
        %v667 = vpop.f32.mrf.mxu0
        %v668 = vadd.f32 0.0, %v667
        %v669 = vpop.f32.mrf.mxu0
        %v670 = vadd.f32 0.0, %v669
        %671 = vmatmul.bf16.gmra.mxu0 %v585
        %v672 = vpop.f32.mrf.mxu0
        %v673 = vadd.f32 0.0, %v672
        %v674 = vpop.f32.mrf.mxu0
        %v675 = vadd.f32 0.0, %v674
        %676 = vmatmul.bf16.gmra.mxu0 %v586
        %v677 = vpop.f32.mrf.mxu0
        %v678 = vadd.f32 0.0, %v677
        %v679 = vpop.f32.mrf.mxu0
        %v680 = vadd.f32 0.0, %v679
        %681 = vmatmul.bf16.gmra.mxu0 %v587
        %v682 = vpop.f32.mrf.mxu0
        %v683 = vadd.f32 0.0, %v682
        %v684 = vpop.f32.mrf.mxu0
        %v685 = vadd.f32 0.0, %v684
        %686 = vdwg.mxu0
        %v687 = vpack.c.bf16 %v653, %v653
        %v688 = vpack.c.bf16 %v655, %v655
        %v689 = vpack.c.bf16 %v658, %v658
        %v690 = vpack.c.bf16 %v660, %v660
        %v691 = vpack.c.bf16 %v663, %v663
        %v692 = vpack.c.bf16 %v665, %v665
        %v693 = vpack.c.bf16 %v668, %v668
        %v694 = vpack.c.bf16 %v670, %v670
        %v695 = vpack.c.bf16 %v673, %v673
        %v696 = vpack.c.bf16 %v675, %v675
        %v697 = vpack.c.bf16 %v678, %v678
        %v698 = vpack.c.bf16 %v680, %v680
        %v699 = vpack.c.bf16 %v683, %v683
        %v700 = vpack.c.bf16 %v685, %v685
        %vm701 = vcmask 912384
        %702 = vst.msk [vmem:[%s225] sm:$0xf] %vm701, %v687
        %703 = vst.msk [vmem:[%s225 + $0x4] sm:$0xf] %vm701, %v688
        %704 = vst.msk [vmem:[%s225 + $0x8] sm:$0xf] %vm701, %v689
        %705 = vst.msk [vmem:[%s225 + $0xc] sm:$0xf] %vm701, %v690
        %706 = vst.msk [vmem:[%s225 + $0x10] sm:$0xf] %vm701, %v691
        %707 = vst.msk [vmem:[%s225 + $0x14] sm:$0xf] %vm701, %v692
        %708 = vst.msk [vmem:[%s225 + $0x18] sm:$0xf] %vm701, %v693
        %709 = vst.msk [vmem:[%s225 + $0x1c] sm:$0xf] %vm701, %v694
        %710 = vst.msk [vmem:[%s225 + $0x20] sm:$0xf] %vm701, %v695
        %711 = vst.msk [vmem:[%s225 + $0x24] sm:$0xf] %vm701, %v696
        %712 = vst.msk [vmem:[%s225 + $0x28] sm:$0xf] %vm701, %v697
        %713 = vst.msk [vmem:[%s225 + $0x2c] sm:$0xf] %vm701, %v698
        %714 = vst.msk [vmem:[%s225 + $0x30] sm:$0xf] %vm701, %v699
        %715 = vst.msk [vmem:[%s225 + $0x34] sm:$0xf] %vm701, %v700
        %v732 = vunpack.c.l.b16 %v521
        %v733 = vunpack.c.l.b16 %v522
        %v734 = vunpack.c.l.b16 %v523
        %v735 = vunpack.c.l.b16 %v524
        %v736 = vunpack.c.l.b16 %v525
        %v737 = vunpack.c.l.b16 %v526
        %v738 = vunpack.c.l.b16 %v527
        %v739 = vunpack.c.l.b16 %v528
        %v740 = vunpack.c.l.b16 %v529
        %v741 = vunpack.c.l.b16 %v530
        %v742 = vunpack.c.l.b16 %v531
        %v743 = vunpack.c.l.b16 %v532
        %v744 = vunpack.c.l.b16 %v533
        %v745 = vunpack.c.l.b16 %v534
        %v746 = vunpack.c.l.b16 %v535
        %v747 = vunpack.c.l.b16 %v536
        %v748 = vpack.c.b16 %v733, %v732
        %v749 = vpack.c.b16 %v735, %v734
        %v750 = vpack.c.b16 %v737, %v736
        %v751 = vpack.c.b16 %v739, %v738
        %v752 = vpack.c.b16 %v741, %v740
        %v753 = vpack.c.b16 %v743, %v742
        %v754 = vpack.c.b16 %v745, %v744
        %v755 = vpack.c.b16 %v747, %v746
        %764 = vmatpush.bf16.msra.mxu0 %v755
        %765 = vmatpush.bf16.msra.mxu0 %v754
        %766 = vmatpush.bf16.msra.mxu0 %v753
        %767 = vmatpush.bf16.msra.mxu0 %v752
        %768 = vmatpush.bf16.msra.mxu0 %v751
        %769 = vmatpush.bf16.msra.mxu0 %v750
        %770 = vmatpush.bf16.msra.mxu0 %v749
        %771 = vmatpush.bf16.msra.mxu0 %v748
        %772 = vmatmul.bf16.gmra.mxu0 %v581
        %v773 = vpop.f32.mrf.mxu0
        %v774 = vadd.f32 0.0, %v773
        %v775 = vpop.f32.mrf.mxu0
        %v776 = vadd.f32 0.0, %v775
        %777 = vmatmul.bf16.gmra.mxu0 %v582
        %v778 = vpop.f32.mrf.mxu0
        %v779 = vadd.f32 0.0, %v778
        %v780 = vpop.f32.mrf.mxu0
        %v781 = vadd.f32 0.0, %v780
        %782 = vmatmul.bf16.gmra.mxu0 %v583
        %v783 = vpop.f32.mrf.mxu0
        %v784 = vadd.f32 0.0, %v783
        %v785 = vpop.f32.mrf.mxu0
        %v786 = vadd.f32 0.0, %v785
        %787 = vmatmul.bf16.gmra.mxu0 %v584
        %v788 = vpop.f32.mrf.mxu0
        %v789 = vadd.f32 0.0, %v788
        %v790 = vpop.f32.mrf.mxu0
        %v791 = vadd.f32 0.0, %v790
        %792 = vmatmul.bf16.gmra.mxu0 %v585
        %v793 = vpop.f32.mrf.mxu0
        %v794 = vadd.f32 0.0, %v793
        %v795 = vpop.f32.mrf.mxu0
        %v796 = vadd.f32 0.0, %v795
        %797 = vmatmul.bf16.gmra.mxu0 %v586
        %v798 = vpop.f32.mrf.mxu0
        %v799 = vadd.f32 0.0, %v798
        %v800 = vpop.f32.mrf.mxu0
        %v801 = vadd.f32 0.0, %v800
        %802 = vmatmul.bf16.gmra.mxu0 %v587
        %v803 = vpop.f32.mrf.mxu0
        %v804 = vadd.f32 0.0, %v803
        %v805 = vpop.f32.mrf.mxu0
        %v806 = vadd.f32 0.0, %v805
        %807 = vdwg.mxu0
        %v808 = vpack.c.bf16 %v774, %v774
        %v809 = vpack.c.bf16 %v776, %v776
        %v810 = vpack.c.bf16 %v779, %v779
        %v811 = vpack.c.bf16 %v781, %v781
        %v812 = vpack.c.bf16 %v784, %v784
        %v813 = vpack.c.bf16 %v786, %v786
        %v814 = vpack.c.bf16 %v789, %v789
        %v815 = vpack.c.bf16 %v791, %v791
        %v816 = vpack.c.bf16 %v794, %v794
        %v817 = vpack.c.bf16 %v796, %v796
        %v818 = vpack.c.bf16 %v799, %v799
        %v819 = vpack.c.bf16 %v801, %v801
        %v820 = vpack.c.bf16 %v804, %v804
        %v821 = vpack.c.bf16 %v806, %v806
        %s822 = scalar_lea.vmem %s225, 56
        %823 = vst.msk [vmem:[%s822] sm:$0xf] %vm701, %v808
        %824 = vst.msk [vmem:[%s822 + $0x4] sm:$0xf] %vm701, %v809
        %825 = vst.msk [vmem:[%s822 + $0x8] sm:$0xf] %vm701, %v810
        %826 = vst.msk [vmem:[%s822 + $0xc] sm:$0xf] %vm701, %v811
        %827 = vst.msk [vmem:[%s822 + $0x10] sm:$0xf] %vm701, %v812
        %828 = vst.msk [vmem:[%s822 + $0x14] sm:$0xf] %vm701, %v813
        %829 = vst.msk [vmem:[%s822 + $0x18] sm:$0xf] %vm701, %v814
        %830 = vst.msk [vmem:[%s822 + $0x1c] sm:$0xf] %vm701, %v815
        %831 = vst.msk [vmem:[%s822 + $0x20] sm:$0xf] %vm701, %v816
        %832 = vst.msk [vmem:[%s822 + $0x24] sm:$0xf] %vm701, %v817
        %833 = vst.msk [vmem:[%s822 + $0x28] sm:$0xf] %vm701, %v818
        %834 = vst.msk [vmem:[%s822 + $0x2c] sm:$0xf] %vm701, %v819
        %835 = vst.msk [vmem:[%s822 + $0x30] sm:$0xf] %vm701, %v820
        %836 = vst.msk [vmem:[%s822 + $0x34] sm:$0xf] %vm701, %v821
        %v853 = vunpack.c.l.b16 %v537
        %v854 = vunpack.c.l.b16 %v538
        %v855 = vunpack.c.l.b16 %v539
        %v856 = vunpack.c.l.b16 %v540
        %v857 = vunpack.c.l.b16 %v541
        %v858 = vunpack.c.l.b16 %v542
        %v859 = vunpack.c.l.b16 %v543
        %v860 = vunpack.c.l.b16 %v544
        %v861 = vunpack.c.l.b16 %v545
        %v862 = vunpack.c.l.b16 %v546
        %v863 = vunpack.c.l.b16 %v547
        %v864 = vunpack.c.l.b16 %v548
        %v865 = vunpack.c.l.b16 %v549
        %v866 = vunpack.c.l.b16 %v550
        %v867 = vunpack.c.l.b16 %v551
        %v868 = vunpack.c.l.b16 %v552
        %v869 = vpack.c.b16 %v854, %v853
        %v870 = vpack.c.b16 %v856, %v855
        %v871 = vpack.c.b16 %v858, %v857
        %v872 = vpack.c.b16 %v860, %v859
        %v873 = vpack.c.b16 %v862, %v861
        %v874 = vpack.c.b16 %v864, %v863
        %v875 = vpack.c.b16 %v866, %v865
        %v876 = vpack.c.b16 %v868, %v867
        %885 = vmatpush.bf16.msra.mxu0 %v876
        %886 = vmatpush.bf16.msra.mxu0 %v875
        %887 = vmatpush.bf16.msra.mxu0 %v874
        %888 = vmatpush.bf16.msra.mxu0 %v873
        %889 = vmatpush.bf16.msra.mxu0 %v872
        %890 = vmatpush.bf16.msra.mxu0 %v871
        %891 = vmatpush.bf16.msra.mxu0 %v870
        %892 = vmatpush.bf16.msra.mxu0 %v869
        %893 = vmatmul.bf16.gmra.mxu0 %v581
        %v894 = vpop.f32.mrf.mxu0
        %v895 = vadd.f32 0.0, %v894
        %v896 = vpop.f32.mrf.mxu0
        %v897 = vadd.f32 0.0, %v896
        %898 = vmatmul.bf16.gmra.mxu0 %v582
        %v899 = vpop.f32.mrf.mxu0
        %v900 = vadd.f32 0.0, %v899
        %v901 = vpop.f32.mrf.mxu0
        %v902 = vadd.f32 0.0, %v901
        %903 = vmatmul.bf16.gmra.mxu0 %v583
        %v904 = vpop.f32.mrf.mxu0
        %v905 = vadd.f32 0.0, %v904
        %v906 = vpop.f32.mrf.mxu0
        %v907 = vadd.f32 0.0, %v906
        %908 = vmatmul.bf16.gmra.mxu0 %v584
        %v909 = vpop.f32.mrf.mxu0
        %v910 = vadd.f32 0.0, %v909
        %v911 = vpop.f32.mrf.mxu0
        %v912 = vadd.f32 0.0, %v911
        %913 = vmatmul.bf16.gmra.mxu0 %v585
        %v914 = vpop.f32.mrf.mxu0
        %v915 = vadd.f32 0.0, %v914
        %v916 = vpop.f32.mrf.mxu0
        %v917 = vadd.f32 0.0, %v916
        %918 = vmatmul.bf16.gmra.mxu0 %v586
        %v919 = vpop.f32.mrf.mxu0
        %v920 = vadd.f32 0.0, %v919
        %v921 = vpop.f32.mrf.mxu0
        %v922 = vadd.f32 0.0, %v921
        %923 = vmatmul.bf16.gmra.mxu0 %v587
        %v924 = vpop.f32.mrf.mxu0
        %v925 = vadd.f32 0.0, %v924
        %v926 = vpop.f32.mrf.mxu0
        %v927 = vadd.f32 0.0, %v926
        %928 = vdwg.mxu0
        %v929 = vpack.c.bf16 %v895, %v895
        %v930 = vpack.c.bf16 %v897, %v897
        %v931 = vpack.c.bf16 %v900, %v900
        %v932 = vpack.c.bf16 %v902, %v902
        %v933 = vpack.c.bf16 %v905, %v905
        %v934 = vpack.c.bf16 %v907, %v907
        %v935 = vpack.c.bf16 %v910, %v910
        %v936 = vpack.c.bf16 %v912, %v912
        %v937 = vpack.c.bf16 %v915, %v915
        %v938 = vpack.c.bf16 %v917, %v917
        %v939 = vpack.c.bf16 %v920, %v920
        %v940 = vpack.c.bf16 %v922, %v922
        %v941 = vpack.c.bf16 %v925, %v925
        %v942 = vpack.c.bf16 %v927, %v927
        %s943 = scalar_lea.vmem %s225, 112
        %944 = vst.msk [vmem:[%s943] sm:$0xf] %vm701, %v929
        %945 = vst.msk [vmem:[%s943 + $0x4] sm:$0xf] %vm701, %v930
        %946 = vst.msk [vmem:[%s943 + $0x8] sm:$0xf] %vm701, %v931
        %947 = vst.msk [vmem:[%s943 + $0xc] sm:$0xf] %vm701, %v932
        %948 = vst.msk [vmem:[%s943 + $0x10] sm:$0xf] %vm701, %v933
        %949 = vst.msk [vmem:[%s943 + $0x14] sm:$0xf] %vm701, %v934
        %950 = vst.msk [vmem:[%s943 + $0x18] sm:$0xf] %vm701, %v935
        %951 = vst.msk [vmem:[%s943 + $0x1c] sm:$0xf] %vm701, %v936
        %952 = vst.msk [vmem:[%s943 + $0x20] sm:$0xf] %vm701, %v937
        %953 = vst.msk [vmem:[%s943 + $0x24] sm:$0xf] %vm701, %v938
        %954 = vst.msk [vmem:[%s943 + $0x28] sm:$0xf] %vm701, %v939
        %955 = vst.msk [vmem:[%s943 + $0x2c] sm:$0xf] %vm701, %v940
        %956 = vst.msk [vmem:[%s943 + $0x30] sm:$0xf] %vm701, %v941
        %957 = vst.msk [vmem:[%s943 + $0x34] sm:$0xf] %vm701, %v942
        %p958 = scmp.lt.s32.totalorder %s18, 1
        %s959 = scalar_select %p958, %s18, 1
        %s960 = smul.addr %s959, 42
        %s961 = smul.addr %s960, 4
        %s962 = scalar_lea.vmem %s3, %s961
        // Predicated region
        $region45: #{id_loss_forward.3} parent=31 // pred_check
          %p963 = pneg %p104
        $region46: #{id_loss_forward.3} parent=31 // pred_check_branch
          %965 = sbr.rel (%p963) target = $region48
        $region47: #{id_loss_forward.3} parent=31 // pred_region
          _
        $region48: #{id_loss_forward.3} parent=31 // pred_fallthru
          _
      $region32: #{id_loss_forward.3} parent=5 // pred_fallthru
        _
      %p966 = scmp.le.s32.totalorder 2, %s13
      // Predicated region
      $region49: #{id_loss_forward.3} parent=5 // pred_check
        %p967 = pneg %p966
      $region50: #{id_loss_forward.3} parent=5 // pred_check_branch
        %969 = sbr.rel (%p967) target = $region52
      $region51: #{id_loss_forward.3} parent=5 // pred_region
        %s970 = ssub.s32 %s13, 2
        // Predicated region
        $region53: #{id_loss_forward.3} parent=51 // pred_check
          %p971 = pneg %p110
        $region54: #{id_loss_forward.3} parent=51 // pred_check_branch
          %973 = sbr.rel (%p971) target = $region56
        $region55: #{id_loss_forward.3} parent=51 // pred_region
          %p974 = scmp.lt.s32.totalorder %s19, 1
          %s975 = scalar_select %p974, %s19, 1
          %s976 = smul.addr %s975, 42
          %s977 = smul.addr %s976, 4
          %s978 = scalar_lea.vmem %s3, %s977
        $region56: #{id_loss_forward.3} parent=51 // pred_fallthru
          _
      $region52: #{id_loss_forward.3} parent=5 // pred_fallthru
        _
    $region6: #{id_loss_forward.3} parent=1 // loop_footer
      %s17 = sadd.s32 1, %s13
    $region7: #{id_loss_forward.3} parent=1 // loop_footer_branch
      %12 = sbr.rel target = $region3
    $region8: #{id_loss_forward.3} parent=1 // loop_exit
      _
    %979 = vsyncpa [#allocation3], 1
    %s980 = scalar_lea.sflag [#allocation3], 1
    %981 = vsyncpa %s980, 1
    %982 = vsyncpa [#allocation5], 1
    %s983 = scalar_lea.sflag [#allocation5], 1
    %984 = vsyncpa %s983, 1

// kernel: id_loss_forward.5
$region0: #{id_loss_forward.5}
  #allocation0 [shape = 'u32[]', space=smem, size = 0x4, offset = 0x4, fixed_abs, tag = 'smem constant byte address 0x4 - core index']
  #allocation1 [shape = 'u32[72,128]{1,0:T(1,128)}', space=vmem, size = 0x9000, scoped, tag = 'internal scratch']
  %s0 = inlined_call_operand.vmem [shape: bf16[4,37632], index: 0, kind: input, shape index: {}]
  %s1 = inlined_call_operand.hbm [shape: bf16[37632,512], index: 1, kind: input, shape index: {}]
  %s2 = inlined_call_operand.vmem [shape: f32[4,512], index: 2, kind: output, shape index: {}]
  %s3 = sld [smem:[#allocation0]]
  $region49: #{id_loss_forward.5} parent=0
    _
  %s5 = ssub.s32 1, %s3
  %s6 = scalar_select 0, %s5, %s3
  $region1: #{id_loss_forward.5} parent=0
    #allocation2 [shape = 'u8[12845056]{0}', space=vmem, size = 0xc40000, scoped, tag = 'input window, operand 1']
    #allocation3 [shape = 's32[2]{0}', space=sflag, size = 0x8, scoped, tag = 'scoped memory for id_loss_forward.5']
    %7 = vsyncpa [#allocation3], 0
    %s8 = scalar_lea.sflag [#allocation3], 1
    %9 = vsyncpa %s8, 0
    loop: start=0, step=1, limit=8
    $region2: #{id_loss_forward.5} parent=1 // loop_pre_header
      _
    $region3: #{id_loss_forward.5} parent=1 // loop_header
      %s11 = sphi 0, %s15
      %p12 = scmp.ge.s32.totalorder %s11, 8
      %s18 = sphi 0, %s30
      %s19 = sphi 0, %s26
      %s20 = sphi 0, %s18
      %s21 = sphi 0, %s19
      %s22 = sphi 0, %s20
      %s23 = sphi 0, %s21
      %s33 = sphi 0, %s35
      %s36 = sphi 0, %s33
      %s37 = sphi 0, %s36
      %s53 = sphi 0, %s37
      %s61 = sphi 0, %s63
      %s64 = sphi 0, %s61
      %s65 = sphi 0, %s64
      %s81 = sphi 0, %s65
      %s87 = sphi 0, %s89
      %s90 = sphi 0, %s87
      %s91 = sphi 0, %s90
      %s107 = sphi 0, %s91
    $region4: #{id_loss_forward.5} parent=1 // loop_header_branch
      %14 = sbr.rel (%p12) target = $region8
    $region5: #{id_loss_forward.5} parent=1 // loop_body
      %s16 = ssub.s32 %s11, 1
      %s17 = ssub.s32 %s11, 2
      %s24 = sadd.s32 1, %s19
      %p25 = scmp.ge.s32.totalorder %s24, 3
      %s26 = scalar_select %p25, 0, %s24
      %s27 = sadd.s32 1, %s18
      %s28 = scalar_select %p25, %s27, %s18
      %p29 = scmp.ge.s32.totalorder %s28, 2
      %s30 = scalar_select %p29, 0, %s28
      %s31 = ssub.s32 %s19, %s26
      %p32 = scmp.eq.s32.totalorder %s31, 0
      %s34 = sadd.s32 %s33, 1
      %s35 = scalar_select %p32, %s33, %s34
      %p38 = pneg %p32
      %p39 = scmp.eq.s32.totalorder %s11, 5
      %p40 = por %p38, %p39
      %p41 = scmp.ne.s32.totalorder %s33, %s36
      %p42 = scmp.eq.s32.totalorder %s11, 0
      %p43 = por %p41, %p42
      %p44 = scmp.ne.s32.totalorder %s33, %s36
      %p45 = scmp.eq.s32.totalorder %s16, 5
      %p46 = por %p44, %p45
      %p47 = scmp.ne.s32.totalorder %s36, %s37
      %p48 = scmp.eq.s32.totalorder %s16, 0
      %p49 = por %p47, %p48
      %p50 = scmp.ne.s32.totalorder %s36, %s37
      %p51 = scmp.eq.s32.totalorder %s17, 5
      %p52 = por %p50, %p51
      %p54 = scmp.ne.s32.totalorder %s37, %s53
      %p55 = scmp.eq.s32.totalorder %s17, 0
      %p56 = por %p54, %p55
      %s57 = ssub.s32 %s19, %s26
      %s58 = ssub.s32 %s18, %s30
      %s59 = sor.u32 %s57, %s58
      %p60 = scmp.eq.s32.totalorder %s59, 0
      %s62 = sadd.s32 %s61, 1
      %s63 = scalar_select %p60, %s61, %s62
      %p66 = pneg %p60
      %p67 = scmp.eq.s32.totalorder %s11, 5
      %p68 = por %p66, %p67
      %p69 = scmp.ne.s32.totalorder %s61, %s64
      %p70 = scmp.eq.s32.totalorder %s11, 0
      %p71 = por %p69, %p70
      %p72 = scmp.ne.s32.totalorder %s61, %s64
      %p73 = scmp.eq.s32.totalorder %s16, 5
      %p74 = por %p72, %p73
      %p75 = scmp.ne.s32.totalorder %s64, %s65
      %p76 = scmp.eq.s32.totalorder %s16, 0
      %p77 = por %p75, %p76
      %p78 = scmp.ne.s32.totalorder %s64, %s65
      %p79 = scmp.eq.s32.totalorder %s17, 5
      %p80 = por %p78, %p79
      %p82 = scmp.ne.s32.totalorder %s65, %s81
      %p83 = scmp.eq.s32.totalorder %s17, 0
      %p84 = por %p82, %p83
      %s85 = ssub.s32 %s18, %s30
      %p86 = scmp.eq.s32.totalorder %s85, 0
      %s88 = sadd.s32 %s87, 1
      %s89 = scalar_select %p86, %s87, %s88
      %p92 = pneg %p86
      %p93 = scmp.eq.s32.totalorder %s11, 5
      %p94 = por %p92, %p93
      %p95 = scmp.ne.s32.totalorder %s87, %s90
      %p96 = scmp.eq.s32.totalorder %s11, 0
      %p97 = por %p95, %p96
      %p98 = scmp.ne.s32.totalorder %s87, %s90
      %p99 = scmp.eq.s32.totalorder %s16, 5
      %p100 = por %p98, %p99
      %p101 = scmp.ne.s32.totalorder %s90, %s91
      %p102 = scmp.eq.s32.totalorder %s16, 0
      %p103 = por %p101, %p102
      %p104 = scmp.ne.s32.totalorder %s90, %s91
      %p105 = scmp.eq.s32.totalorder %s17, 5
      %p106 = por %p104, %p105
      %p108 = scmp.ne.s32.totalorder %s91, %s107
      %p109 = scmp.eq.s32.totalorder %s17, 0
      %p110 = por %p108, %p109
      %p111 = scmp.le.s32.totalorder 1, %s11
      %p112 = scmp.lt.s32.totalorder %s11, 7
      %p113 = pnand %p111, %p112
      %p114 = pneg %p113
      // Predicated region
      $region9: #{id_loss_forward.5} parent=5 // pred_check
        _
      $region10: #{id_loss_forward.5} parent=5 // pred_check_branch
        %116 = sbr.rel (%p113) target = $region12
      $region11: #{id_loss_forward.5} parent=5 // pred_region
        %s117 = ssub.s32 %s11, 1
      $region12: #{id_loss_forward.5} parent=5 // pred_fallthru
        _
      %p118 = scmp.lt.s32.totalorder %s11, 6
      // Predicated region
      $region13: #{id_loss_forward.5} parent=5 // pred_check
        %p119 = pneg %p118
      $region14: #{id_loss_forward.5} parent=5 // pred_check_branch
        %121 = sbr.rel (%p119) target = $region16
      $region15: #{id_loss_forward.5} parent=5 // pred_region
        // Predicated region
        $region17: #{id_loss_forward.5} parent=15 // pred_check
          %p122 = pneg %p43
        $region18: #{id_loss_forward.5} parent=15 // pred_check_branch
          %124 = sbr.rel (%p122) target = $region20
        $region19: #{id_loss_forward.5} parent=15 // pred_region
          %s125 = smul.u32 98, %s19
          %p126 = scmp.lt.s32.totalorder %s125, 293
          %s127 = scalar_select %p126, %s125, 293
          %s128 = smul.addr %s127, 2
          %s129 = scalar_lea.vmem %s0, %s128
          %s130 = smul.u32 98, %s19
        $region20: #{id_loss_forward.5} parent=15 // pred_fallthru
          _
        // Predicated region
        $region21: #{id_loss_forward.5} parent=15 // pred_check
          %p131 = pneg %p71
        $region22: #{id_loss_forward.5} parent=15 // pred_check_branch
          %133 = sbr.rel (%p131) target = $region24
        $region23: #{id_loss_forward.5} parent=15 // pred_region
          %s134 = sand.u32 %s61, 1
          %s135 = scalar_lea.sflag [#allocation3], %s134
          %s136 = sand.u32 %s61, 1
          %s137 = smul.addr %s136, 12544
          %s138 = scalar_lea.vmem [#allocation2], %s137
          %s139 = smul.u32 1568, %s19
          %s140 = smul.u32 2, %s18
          %142 = vsyncadd %s135, 0
          %s143 = smul.addr %s139, 4
          %s144 = sadd.s32 %s140, %s143
          %s145 = smul.addr %s144, 4
          %s146 = scalar_lea.hbm %s1, %s145
          %s147 = sshll.u32 %s146, 4
          %s148 = int_to_ptr.hbm [resolvable:$true] %s147
          %s149 = sshll.u32 %s138, 4
          %s150 = int_to_ptr.vmem [resolvable:$true] %s149
          %155 = dma.hbm_to_vmem [thread:$0]  %s148, 200704, %s150, %s135, 256, 128, 8
        $region24: #{id_loss_forward.5} parent=15 // pred_fallthru
          _
      $region16: #{id_loss_forward.5} parent=5 // pred_fallthru
        _
      %p156 = scmp.le.s32.totalorder 1, %s11
      %p157 = scmp.lt.s32.totalorder %s11, 7
      %p158 = pnand %p156, %p157
      %p159 = pneg %p158
      // Predicated region
      $region25: #{id_loss_forward.5} parent=5 // pred_check
        _
      $region26: #{id_loss_forward.5} parent=5 // pred_check_branch
        %161 = sbr.rel (%p158) target = $region28
      $region27: #{id_loss_forward.5} parent=5 // pred_region
        %s162 = ssub.s32 %s11, 1
        %s163 = sand.u32 %s64, 1
        %s164 = scalar_lea.sflag [#allocation3], %s163
        %s165 = sand.u32 %s64, 1
        %s166 = smul.addr %s165, 12544
        %s167 = scalar_lea.vmem [#allocation2], %s166
        // Predicated region
        $region29: #{id_loss_forward.5} parent=27 // pred_check
          %p168 = pneg %p77
        $region30: #{id_loss_forward.5} parent=27 // pred_check_branch
          %170 = sbr.rel (%p168) target = $region32
        $region31: #{id_loss_forward.5} parent=27 // pred_region
          %172 = dma.done %s164, 200704
        $region32: #{id_loss_forward.5} parent=27 // pred_fallthru
          _
        %s173 = smul.u32 98, %s21
        %p174 = scmp.lt.s32.totalorder %s173, 293
        %s175 = scalar_select %p174, %s173, 293
        %s176 = smul.addr %s175, 2
        %s177 = scalar_lea.vmem %s0, %s176
        %p178 = pneg %p49
        %p179 = pneg %p46
        %s180 = sand.u32 %s64, 1
        %s181 = scalar_lea.sflag [#allocation3], %s180
        %s182 = sand.u32 %s64, 1
        %s183 = smul.addr %s182, 12544
        %s184 = scalar_lea.vmem [#allocation2], %s183
        %p185 = pneg %p77
        %p186 = pneg %p74
        %p187 = pneg %p103
        %p188 = pneg %p100
        %s189 = smul.u32 2, %s20
        %p190 = scmp.lt.s32.totalorder %s189, 3
        %s191 = scalar_select %p190, %s189, 3
        %s192 = smul.addr %s191, 4
        %s193 = scalar_lea.vmem %s2, %s192
        %s194 = smul.u32 98, %s21
        %p195 = scmp.lt.s32.totalorder %s194, 293
        %s196 = scalar_select %p195, %s194, 293
        %s197 = smul.addr %s196, 2
        %s198 = scalar_lea.vmem %s0, %s197
        %s199 = smul.u32 98, %s21
        %s200 = smul.u32 1568, %s21
        %s201 = smul.u32 2, %s20
        %s202 = smul.u32 2, %s20
        %p203 = scmp.lt.s32.totalorder %s202, 3
        %s204 = scalar_select %p203, %s202, 3
        %s205 = smul.addr %s204, 4
        %s206 = scalar_lea.vmem %s2, %s205
        %s207 = smul.u32 2, %s20
        %p208 = scmp.eq.s32.totalorder %s21, 0
        // Predicated region
        $region33: #{id_loss_forward.5} parent=27 // pred_check
          %p209 = pneg %p208
        $region34: #{id_loss_forward.5} parent=27 // pred_check_branch
          %211 = sbr.rel (%p209) target = $region36
        $region35: #{id_loss_forward.5} parent=27 // pred_region
          %212 = vst [vmem:[%s206] sm:$0xff] 0.0
        $region36: #{id_loss_forward.5} parent=27 // pred_fallthru
          _
        %v213 = vld [vmem:[%s206] sm:$0xff]
        %v214 = vld [vmem:[%s198] sm:$0xff]
        %v215 = vld [vmem:[%s198 + $0x8] sm:$0xff]
        %v216 = vld [vmem:[%s198 + $0x10] sm:$0xff]
        %v217 = vld [vmem:[%s198 + $0x18] sm:$0xff]
        %v218 = vld [vmem:[%s198 + $0x20] sm:$0xff]
        %v219 = vld [vmem:[%s198 + $0x28] sm:$0xff]
        %v220 = vld [vmem:[%s198 + $0x30] sm:$0xff]
        %v221 = vld [vmem:[%s198 + $0x38] sm:$0xff]
        %v222 = vld [vmem:[%s198 + $0x40] sm:$0xff]
        %v223 = vld [vmem:[%s198 + $0x48] sm:$0xff]
        %v224 = vld [vmem:[%s198 + $0x50] sm:$0xff]
        %v225 = vld [vmem:[%s198 + $0x58] sm:$0xff]
        %v226 = vld [vmem:[%s198 + $0x60] sm:$0xff]
        %v227 = vld [vmem:[%s198 + $0x68] sm:$0xff]
        %v228 = vld [vmem:[%s198 + $0x70] sm:$0xff]
        %v229 = vld [vmem:[%s198 + $0x78] sm:$0xff]
        %v230 = vld [vmem:[%s198 + $0x80] sm:$0xff]
        %v231 = vld [vmem:[%s198 + $0x88] sm:$0xff]
        %v232 = vld [vmem:[%s198 + $0x90] sm:$0xff]
        %v233 = vld [vmem:[%s198 + $0x98] sm:$0xff]
        %v234 = vld [vmem:[%s198 + $0xa0] sm:$0xff]
        %v235 = vld [vmem:[%s198 + $0xa8] sm:$0xff]
        %v236 = vld [vmem:[%s198 + $0xb0] sm:$0xff]
        %v237 = vld [vmem:[%s198 + $0xb8] sm:$0xff]
        %v238 = vld [vmem:[%s198 + $0xc0] sm:$0xf]
        %v239 = vld [vmem:[%s167] sm:$0xff]
        %v240 = vld [vmem:[%s167 + $0x8] sm:$0xff]
        %v241 = vld [vmem:[%s167 + $0x10] sm:$0xff]
        %v242 = vld [vmem:[%s167 + $0x18] sm:$0xff]
        %v243 = vld [vmem:[%s167 + $0x20] sm:$0xff]
        %v244 = vld [vmem:[%s167 + $0x28] sm:$0xff]
        %v245 = vld [vmem:[%s167 + $0x30] sm:$0xff]
        %v246 = vld [vmem:[%s167 + $0x38] sm:$0xff]
        %v247 = vld [vmem:[%s167 + $0x40] sm:$0xff]
        %v248 = vld [vmem:[%s167 + $0x48] sm:$0xff]
        %v249 = vld [vmem:[%s167 + $0x50] sm:$0xff]
        %v250 = vld [vmem:[%s167 + $0x58] sm:$0xff]
        %v251 = vld [vmem:[%s167 + $0x60] sm:$0xff]
        %v252 = vld [vmem:[%s167 + $0x68] sm:$0xff]
        %v253 = vld [vmem:[%s167 + $0x70] sm:$0xff]
        %v254 = vld [vmem:[%s167 + $0x78] sm:$0xff]
        %v255 = vld [vmem:[%s167 + $0x80] sm:$0xff]
        %v256 = vld [vmem:[%s167 + $0x88] sm:$0xff]
        %v257 = vld [vmem:[%s167 + $0x90] sm:$0xff]
        %v258 = vld [vmem:[%s167 + $0x98] sm:$0xff]
        %v259 = vld [vmem:[%s167 + $0xa0] sm:$0xff]
        %v260 = vld [vmem:[%s167 + $0xa8] sm:$0xff]
        %v261 = vld [vmem:[%s167 + $0xb0] sm:$0xff]
        %v262 = vld [vmem:[%s167 + $0xb8] sm:$0xff]
        %v263 = vld [vmem:[%s167 + $0xc0] sm:$0xff]
        %v264 = vld [vmem:[%s167 + $0xc8] sm:$0xff]
        %v265 = vld [vmem:[%s167 + $0xd0] sm:$0xff]
        %v266 = vld [vmem:[%s167 + $0xd8] sm:$0xff]
        %v267 = vld [vmem:[%s167 + $0xe0] sm:$0xff]
        %v268 = vld [vmem:[%s167 + $0xe8] sm:$0xff]
        %v269 = vld [vmem:[%s167 + $0xf0] sm:$0xff]
        %v270 = vld [vmem:[%s167 + $0xf8] sm:$0xff]
        %v271 = vld [vmem:[%s167 + $0x100] sm:$0xff]
        %v272 = vld [vmem:[%s167 + $0x108] sm:$0xff]
        %v273 = vld [vmem:[%s167 + $0x110] sm:$0xff]
        %v274 = vld [vmem:[%s167 + $0x118] sm:$0xff]
        %v275 = vld [vmem:[%s167 + $0x120] sm:$0xff]
        %v276 = vld [vmem:[%s167 + $0x128] sm:$0xff]
        %v277 = vld [vmem:[%s167 + $0x130] sm:$0xff]
        %v278 = vld [vmem:[%s167 + $0x138] sm:$0xff]
        %v279 = vld [vmem:[%s167 + $0x140] sm:$0xff]
        %v280 = vld [vmem:[%s167 + $0x148] sm:$0xff]
        %v281 = vld [vmem:[%s167 + $0x150] sm:$0xff]
        %v282 = vld [vmem:[%s167 + $0x158] sm:$0xff]
        %v283 = vld [vmem:[%s167 + $0x160] sm:$0xff]
        %v284 = vld [vmem:[%s167 + $0x168] sm:$0xff]
        %v285 = vld [vmem:[%s167 + $0x170] sm:$0xff]
        %v286 = vld [vmem:[%s167 + $0x178] sm:$0xff]
        %v287 = vld [vmem:[%s167 + $0x180] sm:$0xff]
        %v288 = vld [vmem:[%s167 + $0x188] sm:$0xff]
        %v289 = vld [vmem:[%s167 + $0x190] sm:$0xff]
        %v290 = vld [vmem:[%s167 + $0x198] sm:$0xff]
        %v291 = vld [vmem:[%s167 + $0x1a0] sm:$0xff]
        %v292 = vld [vmem:[%s167 + $0x1a8] sm:$0xff]
        %v293 = vld [vmem:[%s167 + $0x1b0] sm:$0xff]
        %v294 = vld [vmem:[%s167 + $0x1b8] sm:$0xff]
        %v295 = vld [vmem:[%s167 + $0x1c0] sm:$0xff]
        %v296 = vld [vmem:[%s167 + $0x1c8] sm:$0xff]
        %v297 = vld [vmem:[%s167 + $0x1d0] sm:$0xff]
        %v298 = vld [vmem:[%s167 + $0x1d8] sm:$0xff]
        %v299 = vld [vmem:[%s167 + $0x1e0] sm:$0xff]
        %v300 = vld [vmem:[%s167 + $0x1e8] sm:$0xff]
        %v301 = vld [vmem:[%s167 + $0x1f0] sm:$0xff]
        %v302 = vld [vmem:[%s167 + $0x1f8] sm:$0xff]
        %v303 = vld [vmem:[%s167 + $0x200] sm:$0xff]
        %v304 = vld [vmem:[%s167 + $0x208] sm:$0xff]
        %v305 = vld [vmem:[%s167 + $0x210] sm:$0xff]
        %v306 = vld [vmem:[%s167 + $0x218] sm:$0xff]
        %v307 = vld [vmem:[%s167 + $0x220] sm:$0xff]
        %v308 = vld [vmem:[%s167 + $0x228] sm:$0xff]
        %v309 = vld [vmem:[%s167 + $0x230] sm:$0xff]
        %v310 = vld [vmem:[%s167 + $0x238] sm:$0xff]
        %v311 = vld [vmem:[%s167 + $0x240] sm:$0xff]
        %v312 = vld [vmem:[%s167 + $0x248] sm:$0xff]
        %v313 = vld [vmem:[%s167 + $0x250] sm:$0xff]
        %v314 = vld [vmem:[%s167 + $0x258] sm:$0xff]
        %v315 = vld [vmem:[%s167 + $0x260] sm:$0xff]
        %v316 = vld [vmem:[%s167 + $0x268] sm:$0xff]
        %v317 = vld [vmem:[%s167 + $0x270] sm:$0xff]
        %v318 = vld [vmem:[%s167 + $0x278] sm:$0xff]
        %v319 = vld [vmem:[%s167 + $0x280] sm:$0xff]
        %v320 = vld [vmem:[%s167 + $0x288] sm:$0xff]
        %v321 = vld [vmem:[%s167 + $0x290] sm:$0xff]
        %v322 = vld [vmem:[%s167 + $0x298] sm:$0xff]
        %v323 = vld [vmem:[%s167 + $0x2a0] sm:$0xff]
        %v324 = vld [vmem:[%s167 + $0x2a8] sm:$0xff]
        %v325 = vld [vmem:[%s167 + $0x2b0] sm:$0xff]
        %v326 = vld [vmem:[%s167 + $0x2b8] sm:$0xff]
        %v327 = vld [vmem:[%s167 + $0x2c0] sm:$0xff]
        %v328 = vld [vmem:[%s167 + $0x2c8] sm:$0xff]
        %v329 = vld [vmem:[%s167 + $0x2d0] sm:$0xff]
        %v330 = vld [vmem:[%s167 + $0x2d8] sm:$0xff]
        %v331 = vld [vmem:[%s167 + $0x2e0] sm:$0xff]
        %v332 = vld [vmem:[%s167 + $0x2e8] sm:$0xff]
        %v333 = vld [vmem:[%s167 + $0x2f0] sm:$0xff]
        %v334 = vld [vmem:[%s167 + $0x2f8] sm:$0xff]
        %v335 = vld [vmem:[%s167 + $0x300] sm:$0xff]
        %v336 = vld [vmem:[%s167 + $0x308] sm:$0xff]
        %v337 = vld [vmem:[%s167 + $0x310] sm:$0xff]
        %v338 = vld [vmem:[%s167 + $0x318] sm:$0xff]
        %v339 = vld [vmem:[%s167 + $0x320] sm:$0xff]
        %v340 = vld [vmem:[%s167 + $0x328] sm:$0xff]
        %v341 = vld [vmem:[%s167 + $0x330] sm:$0xff]
        %v342 = vld [vmem:[%s167 + $0x338] sm:$0xff]
        %v343 = vld [vmem:[%s167 + $0x340] sm:$0xff]
        %v344 = vld [vmem:[%s167 + $0x348] sm:$0xff]
        %v345 = vld [vmem:[%s167 + $0x350] sm:$0xff]
        %v346 = vld [vmem:[%s167 + $0x358] sm:$0xff]
        %v347 = vld [vmem:[%s167 + $0x360] sm:$0xff]
        %v348 = vld [vmem:[%s167 + $0x368] sm:$0xff]
        %v349 = vld [vmem:[%s167 + $0x370] sm:$0xff]
        %v350 = vld [vmem:[%s167 + $0x378] sm:$0xff]
        %v351 = vld [vmem:[%s167 + $0x380] sm:$0xff]
        %v352 = vld [vmem:[%s167 + $0x388] sm:$0xff]
        %v353 = vld [vmem:[%s167 + $0x390] sm:$0xff]
        %v354 = vld [vmem:[%s167 + $0x398] sm:$0xff]
        %v355 = vld [vmem:[%s167 + $0x3a0] sm:$0xff]
        %v356 = vld [vmem:[%s167 + $0x3a8] sm:$0xff]
        %v357 = vld [vmem:[%s167 + $0x3b0] sm:$0xff]
        %v358 = vld [vmem:[%s167 + $0x3b8] sm:$0xff]
        %v359 = vld [vmem:[%s167 + $0x3c0] sm:$0xff]
        %v360 = vld [vmem:[%s167 + $0x3c8] sm:$0xff]
        %v361 = vld [vmem:[%s167 + $0x3d0] sm:$0xff]
        %v362 = vld [vmem:[%s167 + $0x3d8] sm:$0xff]
        %v363 = vld [vmem:[%s167 + $0x3e0] sm:$0xff]
        %v364 = vld [vmem:[%s167 + $0x3e8] sm:$0xff]
        %v365 = vld [vmem:[%s167 + $0x3f0] sm:$0xff]
        %v366 = vld [vmem:[%s167 + $0x3f8] sm:$0xff]
        %v367 = vld [vmem:[%s167 + $0x400] sm:$0xff]
        %v368 = vld [vmem:[%s167 + $0x408] sm:$0xff]
        %v369 = vld [vmem:[%s167 + $0x410] sm:$0xff]
        %v370 = vld [vmem:[%s167 + $0x418] sm:$0xff]
        %v371 = vld [vmem:[%s167 + $0x420] sm:$0xff]
        %v372 = vld [vmem:[%s167 + $0x428] sm:$0xff]
        %v373 = vld [vmem:[%s167 + $0x430] sm:$0xff]
        %v374 = vld [vmem:[%s167 + $0x438] sm:$0xff]
        %v375 = vld [vmem:[%s167 + $0x440] sm:$0xff]
        %v376 = vld [vmem:[%s167 + $0x448] sm:$0xff]
        %v377 = vld [vmem:[%s167 + $0x450] sm:$0xff]
        %v378 = vld [vmem:[%s167 + $0x458] sm:$0xff]
        %v379 = vld [vmem:[%s167 + $0x460] sm:$0xff]
        %v380 = vld [vmem:[%s167 + $0x468] sm:$0xff]
        %v381 = vld [vmem:[%s167 + $0x470] sm:$0xff]
        %v382 = vld [vmem:[%s167 + $0x478] sm:$0xff]
        %v383 = vld [vmem:[%s167 + $0x480] sm:$0xff]
        %v384 = vld [vmem:[%s167 + $0x488] sm:$0xff]
        %v385 = vld [vmem:[%s167 + $0x490] sm:$0xff]
        %v386 = vld [vmem:[%s167 + $0x498] sm:$0xff]
        %v387 = vld [vmem:[%s167 + $0x4a0] sm:$0xff]
        %v388 = vld [vmem:[%s167 + $0x4a8] sm:$0xff]
        %v389 = vld [vmem:[%s167 + $0x4b0] sm:$0xff]
        %v390 = vld [vmem:[%s167 + $0x4b8] sm:$0xff]
        %v391 = vld [vmem:[%s167 + $0x4c0] sm:$0xff]
        %v392 = vld [vmem:[%s167 + $0x4c8] sm:$0xff]
        %v393 = vld [vmem:[%s167 + $0x4d0] sm:$0xff]
        %v394 = vld [vmem:[%s167 + $0x4d8] sm:$0xff]
        %v395 = vld [vmem:[%s167 + $0x4e0] sm:$0xff]
        %v396 = vld [vmem:[%s167 + $0x4e8] sm:$0xff]
        %v397 = vld [vmem:[%s167 + $0x4f0] sm:$0xff]
        %v398 = vld [vmem:[%s167 + $0x4f8] sm:$0xff]
        %v399 = vld [vmem:[%s167 + $0x500] sm:$0xff]
        %v400 = vld [vmem:[%s167 + $0x508] sm:$0xff]
        %v401 = vld [vmem:[%s167 + $0x510] sm:$0xff]
        %v402 = vld [vmem:[%s167 + $0x518] sm:$0xff]
        %v403 = vld [vmem:[%s167 + $0x520] sm:$0xff]
        %v404 = vld [vmem:[%s167 + $0x528] sm:$0xff]
        %v405 = vld [vmem:[%s167 + $0x530] sm:$0xff]
        %v406 = vld [vmem:[%s167 + $0x538] sm:$0xff]
        %v407 = vld [vmem:[%s167 + $0x540] sm:$0xff]
        %v408 = vld [vmem:[%s167 + $0x548] sm:$0xff]
        %v409 = vld [vmem:[%s167 + $0x550] sm:$0xff]
        %v410 = vld [vmem:[%s167 + $0x558] sm:$0xff]
        %v411 = vld [vmem:[%s167 + $0x560] sm:$0xff]
        %v412 = vld [vmem:[%s167 + $0x568] sm:$0xff]
        %v413 = vld [vmem:[%s167 + $0x570] sm:$0xff]
        %v414 = vld [vmem:[%s167 + $0x578] sm:$0xff]
        %v415 = vld [vmem:[%s167 + $0x580] sm:$0xff]
        %v416 = vld [vmem:[%s167 + $0x588] sm:$0xff]
        %v417 = vld [vmem:[%s167 + $0x590] sm:$0xff]
        %v418 = vld [vmem:[%s167 + $0x598] sm:$0xff]
        %v419 = vld [vmem:[%s167 + $0x5a0] sm:$0xff]
        %v420 = vld [vmem:[%s167 + $0x5a8] sm:$0xff]
        %v421 = vld [vmem:[%s167 + $0x5b0] sm:$0xff]
        %v422 = vld [vmem:[%s167 + $0x5b8] sm:$0xff]
        %v423 = vld [vmem:[%s167 + $0x5c0] sm:$0xff]
        %v424 = vld [vmem:[%s167 + $0x5c8] sm:$0xff]
        %v425 = vld [vmem:[%s167 + $0x5d0] sm:$0xff]
        %v426 = vld [vmem:[%s167 + $0x5d8] sm:$0xff]
        %v427 = vld [vmem:[%s167 + $0x5e0] sm:$0xff]
        %v428 = vld [vmem:[%s167 + $0x5e8] sm:$0xff]
        %v429 = vld [vmem:[%s167 + $0x5f0] sm:$0xff]
        %v430 = vld [vmem:[%s167 + $0x5f8] sm:$0xff]
        %v431 = vld [vmem:[%s167 + $0x600] sm:$0xff]
        %v432 = vld [vmem:[%s167 + $0x608] sm:$0xff]
        %v433 = vld [vmem:[%s167 + $0x610] sm:$0xff]
        %v434 = vld [vmem:[%s167 + $0x618] sm:$0xff]
        %v435 = vld [vmem:[%s167 + $0x620] sm:$0xff]
        %v436 = vld [vmem:[%s167 + $0x628] sm:$0xff]
        %v437 = vld [vmem:[%s167 + $0x630] sm:$0xff]
        %v438 = vld [vmem:[%s167 + $0x638] sm:$0xff]
        %v439 = vld [vmem:[%s167 + $0x640] sm:$0xff]
        %v440 = vld [vmem:[%s167 + $0x648] sm:$0xff]
        %v441 = vld [vmem:[%s167 + $0x650] sm:$0xff]
        %v442 = vld [vmem:[%s167 + $0x658] sm:$0xff]
        %v443 = vld [vmem:[%s167 + $0x660] sm:$0xff]
        %v444 = vld [vmem:[%s167 + $0x668] sm:$0xff]
        %v445 = vld [vmem:[%s167 + $0x670] sm:$0xff]
        %v446 = vld [vmem:[%s167 + $0x678] sm:$0xff]
        %v447 = vld [vmem:[%s167 + $0x680] sm:$0xff]
        %v448 = vld [vmem:[%s167 + $0x688] sm:$0xff]
        %v449 = vld [vmem:[%s167 + $0x690] sm:$0xff]
        %v450 = vld [vmem:[%s167 + $0x698] sm:$0xff]
        %v451 = vld [vmem:[%s167 + $0x6a0] sm:$0xff]
        %v452 = vld [vmem:[%s167 + $0x6a8] sm:$0xff]
        %v453 = vld [vmem:[%s167 + $0x6b0] sm:$0xff]
        %v454 = vld [vmem:[%s167 + $0x6b8] sm:$0xff]
        %v455 = vld [vmem:[%s167 + $0x6c0] sm:$0xff]
        %v456 = vld [vmem:[%s167 + $0x6c8] sm:$0xff]
        %v457 = vld [vmem:[%s167 + $0x6d0] sm:$0xff]
        %v458 = vld [vmem:[%s167 + $0x6d8] sm:$0xff]
        %v459 = vld [vmem:[%s167 + $0x6e0] sm:$0xff]
        %v460 = vld [vmem:[%s167 + $0x6e8] sm:$0xff]
        %v461 = vld [vmem:[%s167 + $0x6f0] sm:$0xff]
        %v462 = vld [vmem:[%s167 + $0x6f8] sm:$0xff]
        %v463 = vld [vmem:[%s167 + $0x700] sm:$0xff]
        %v464 = vld [vmem:[%s167 + $0x708] sm:$0xff]
        %v465 = vld [vmem:[%s167 + $0x710] sm:$0xff]
        %v466 = vld [vmem:[%s167 + $0x718] sm:$0xff]
        %v467 = vld [vmem:[%s167 + $0x720] sm:$0xff]
        %v468 = vld [vmem:[%s167 + $0x728] sm:$0xff]
        %v469 = vld [vmem:[%s167 + $0x730] sm:$0xff]
        %v470 = vld [vmem:[%s167 + $0x738] sm:$0xff]
        %v471 = vld [vmem:[%s167 + $0x740] sm:$0xff]
        %v472 = vld [vmem:[%s167 + $0x748] sm:$0xff]
        %v473 = vld [vmem:[%s167 + $0x750] sm:$0xff]
        %v474 = vld [vmem:[%s167 + $0x758] sm:$0xff]
        %v475 = vld [vmem:[%s167 + $0x760] sm:$0xff]
        %v476 = vld [vmem:[%s167 + $0x768] sm:$0xff]
        %v477 = vld [vmem:[%s167 + $0x770] sm:$0xff]
        %v478 = vld [vmem:[%s167 + $0x778] sm:$0xff]
        %v479 = vld [vmem:[%s167 + $0x780] sm:$0xff]
        %v480 = vld [vmem:[%s167 + $0x788] sm:$0xff]
        %v481 = vld [vmem:[%s167 + $0x790] sm:$0xff]
        %v482 = vld [vmem:[%s167 + $0x798] sm:$0xff]
        %v483 = vld [vmem:[%s167 + $0x7a0] sm:$0xff]
        %v484 = vld [vmem:[%s167 + $0x7a8] sm:$0xff]
        %v485 = vld [vmem:[%s167 + $0x7b0] sm:$0xff]
        %v486 = vld [vmem:[%s167 + $0x7b8] sm:$0xff]
        %v487 = vld [vmem:[%s167 + $0x7c0] sm:$0xff]
        %v488 = vld [vmem:[%s167 + $0x7c8] sm:$0xff]
        %v489 = vld [vmem:[%s167 + $0x7d0] sm:$0xff]
        %v490 = vld [vmem:[%s167 + $0x7d8] sm:$0xff]
        %v491 = vld [vmem:[%s167 + $0x7e0] sm:$0xff]
        %v492 = vld [vmem:[%s167 + $0x7e8] sm:$0xff]
        %v493 = vld [vmem:[%s167 + $0x7f0] sm:$0xff]
        %v494 = vld [vmem:[%s167 + $0x7f8] sm:$0xff]
        %v495 = vld [vmem:[%s167 + $0x800] sm:$0xff]
        %v496 = vld [vmem:[%s167 + $0x808] sm:$0xff]
        %v497 = vld [vmem:[%s167 + $0x810] sm:$0xff]
        %v498 = vld [vmem:[%s167 + $0x818] sm:$0xff]
        %v499 = vld [vmem:[%s167 + $0x820] sm:$0xff]
        %v500 = vld [vmem:[%s167 + $0x828] sm:$0xff]
        %v501 = vld [vmem:[%s167 + $0x830] sm:$0xff]
        %v502 = vld [vmem:[%s167 + $0x838] sm:$0xff]
        %v503 = vld [vmem:[%s167 + $0x840] sm:$0xff]
        %v504 = vld [vmem:[%s167 + $0x848] sm:$0xff]
        %v505 = vld [vmem:[%s167 + $0x850] sm:$0xff]
        %v506 = vld [vmem:[%s167 + $0x858] sm:$0xff]
        %v507 = vld [vmem:[%s167 + $0x860] sm:$0xff]
        %v508 = vld [vmem:[%s167 + $0x868] sm:$0xff]
        %v509 = vld [vmem:[%s167 + $0x870] sm:$0xff]
        %v510 = vld [vmem:[%s167 + $0x878] sm:$0xff]
        %v511 = vld [vmem:[%s167 + $0x880] sm:$0xff]
        %v512 = vld [vmem:[%s167 + $0x888] sm:$0xff]
        %v513 = vld [vmem:[%s167 + $0x890] sm:$0xff]
        %v514 = vld [vmem:[%s167 + $0x898] sm:$0xff]
        %v515 = vld [vmem:[%s167 + $0x8a0] sm:$0xff]
        %v516 = vld [vmem:[%s167 + $0x8a8] sm:$0xff]
        %v517 = vld [vmem:[%s167 + $0x8b0] sm:$0xff]
        %v518 = vld [vmem:[%s167 + $0x8b8] sm:$0xff]
        %v519 = vld [vmem:[%s167 + $0x8c0] sm:$0xff]
        %v520 = vld [vmem:[%s167 + $0x8c8] sm:$0xff]
        %v521 = vld [vmem:[%s167 + $0x8d0] sm:$0xff]
        %v522 = vld [vmem:[%s167 + $0x8d8] sm:$0xff]
        %v523 = vld [vmem:[%s167 + $0x8e0] sm:$0xff]
        %v524 = vld [vmem:[%s167 + $0x8e8] sm:$0xff]
        %v525 = vld [vmem:[%s167 + $0x8f0] sm:$0xff]
        %v526 = vld [vmem:[%s167 + $0x8f8] sm:$0xff]
        %v527 = vld [vmem:[%s167 + $0x900] sm:$0xff]
        %v528 = vld [vmem:[%s167 + $0x908] sm:$0xff]
        %v529 = vld [vmem:[%s167 + $0x910] sm:$0xff]
        %v530 = vld [vmem:[%s167 + $0x918] sm:$0xff]
        %v531 = vld [vmem:[%s167 + $0x920] sm:$0xff]
        %v532 = vld [vmem:[%s167 + $0x928] sm:$0xff]
        %v533 = vld [vmem:[%s167 + $0x930] sm:$0xff]
        %v534 = vld [vmem:[%s167 + $0x938] sm:$0xff]
        %v535 = vld [vmem:[%s167 + $0x940] sm:$0xff]
        %v536 = vld [vmem:[%s167 + $0x948] sm:$0xff]
        %v537 = vld [vmem:[%s167 + $0x950] sm:$0xff]
        %v538 = vld [vmem:[%s167 + $0x958] sm:$0xff]
        %v539 = vld [vmem:[%s167 + $0x960] sm:$0xff]
        %v540 = vld [vmem:[%s167 + $0x968] sm:$0xff]
        %v541 = vld [vmem:[%s167 + $0x970] sm:$0xff]
        %v542 = vld [vmem:[%s167 + $0x978] sm:$0xff]
        %v543 = vld [vmem:[%s167 + $0x980] sm:$0xff]
        %v544 = vld [vmem:[%s167 + $0x988] sm:$0xff]
        %v545 = vld [vmem:[%s167 + $0x990] sm:$0xff]
        %v546 = vld [vmem:[%s167 + $0x998] sm:$0xff]
        %v547 = vld [vmem:[%s167 + $0x9a0] sm:$0xff]
        %v548 = vld [vmem:[%s167 + $0x9a8] sm:$0xff]
        %v549 = vld [vmem:[%s167 + $0x9b0] sm:$0xff]
        %v550 = vld [vmem:[%s167 + $0x9b8] sm:$0xff]
        %v551 = vld [vmem:[%s167 + $0x9c0] sm:$0xff]
        %v552 = vld [vmem:[%s167 + $0x9c8] sm:$0xff]
        %v553 = vld [vmem:[%s167 + $0x9d0] sm:$0xff]
        %v554 = vld [vmem:[%s167 + $0x9d8] sm:$0xff]
        %v555 = vld [vmem:[%s167 + $0x9e0] sm:$0xff]
        %v556 = vld [vmem:[%s167 + $0x9e8] sm:$0xff]
        %v557 = vld [vmem:[%s167 + $0x9f0] sm:$0xff]
        %v558 = vld [vmem:[%s167 + $0x9f8] sm:$0xff]
        %v559 = vld [vmem:[%s167 + $0xa00] sm:$0xff]
        %v560 = vld [vmem:[%s167 + $0xa08] sm:$0xff]
        %v561 = vld [vmem:[%s167 + $0xa10] sm:$0xff]
        %v562 = vld [vmem:[%s167 + $0xa18] sm:$0xff]
        %v563 = vld [vmem:[%s167 + $0xa20] sm:$0xff]
        %v564 = vld [vmem:[%s167 + $0xa28] sm:$0xff]
        %v565 = vld [vmem:[%s167 + $0xa30] sm:$0xff]
        %v566 = vld [vmem:[%s167 + $0xa38] sm:$0xff]
        %v567 = vld [vmem:[%s167 + $0xa40] sm:$0xff]
        %v568 = vld [vmem:[%s167 + $0xa48] sm:$0xff]
        %v569 = vld [vmem:[%s167 + $0xa50] sm:$0xff]
        %v570 = vld [vmem:[%s167 + $0xa58] sm:$0xff]
        %v571 = vld [vmem:[%s167 + $0xa60] sm:$0xff]
        %v572 = vld [vmem:[%s167 + $0xa68] sm:$0xff]
        %v573 = vld [vmem:[%s167 + $0xa70] sm:$0xff]
        %v574 = vld [vmem:[%s167 + $0xa78] sm:$0xff]
        %v575 = vld [vmem:[%s167 + $0xa80] sm:$0xff]
        %v576 = vld [vmem:[%s167 + $0xa88] sm:$0xff]
        %v577 = vld [vmem:[%s167 + $0xa90] sm:$0xff]
        %v578 = vld [vmem:[%s167 + $0xa98] sm:$0xff]
        %v579 = vld [vmem:[%s167 + $0xaa0] sm:$0xff]
        %v580 = vld [vmem:[%s167 + $0xaa8] sm:$0xff]
        %v581 = vld [vmem:[%s167 + $0xab0] sm:$0xff]
        %v582 = vld [vmem:[%s167 + $0xab8] sm:$0xff]
        %v583 = vld [vmem:[%s167 + $0xac0] sm:$0xff]
        %v584 = vld [vmem:[%s167 + $0xac8] sm:$0xff]
        %v585 = vld [vmem:[%s167 + $0xad0] sm:$0xff]
        %v586 = vld [vmem:[%s167 + $0xad8] sm:$0xff]
        %v587 = vld [vmem:[%s167 + $0xae0] sm:$0xff]
        %v588 = vld [vmem:[%s167 + $0xae8] sm:$0xff]
        %v589 = vld [vmem:[%s167 + $0xaf0] sm:$0xff]
        %v590 = vld [vmem:[%s167 + $0xaf8] sm:$0xff]
        %v591 = vld [vmem:[%s167 + $0xb00] sm:$0xff]
        %v592 = vld [vmem:[%s167 + $0xb08] sm:$0xff]
        %v593 = vld [vmem:[%s167 + $0xb10] sm:$0xff]
        %v594 = vld [vmem:[%s167 + $0xb18] sm:$0xff]
        %v595 = vld [vmem:[%s167 + $0xb20] sm:$0xff]
        %v596 = vld [vmem:[%s167 + $0xb28] sm:$0xff]
        %v597 = vld [vmem:[%s167 + $0xb30] sm:$0xff]
        %v598 = vld [vmem:[%s167 + $0xb38] sm:$0xff]
        %v599 = vld [vmem:[%s167 + $0xb40] sm:$0xff]
        %v600 = vld [vmem:[%s167 + $0xb48] sm:$0xff]
        %v601 = vld [vmem:[%s167 + $0xb50] sm:$0xff]
        %v602 = vld [vmem:[%s167 + $0xb58] sm:$0xff]
        %v603 = vld [vmem:[%s167 + $0xb60] sm:$0xff]
        %v604 = vld [vmem:[%s167 + $0xb68] sm:$0xff]
        %v605 = vld [vmem:[%s167 + $0xb70] sm:$0xff]
        %v606 = vld [vmem:[%s167 + $0xb78] sm:$0xff]
        %v607 = vld [vmem:[%s167 + $0xb80] sm:$0xff]
        %v608 = vld [vmem:[%s167 + $0xb88] sm:$0xff]
        %v609 = vld [vmem:[%s167 + $0xb90] sm:$0xff]
        %v610 = vld [vmem:[%s167 + $0xb98] sm:$0xff]
        %v611 = vld [vmem:[%s167 + $0xba0] sm:$0xff]
        %v612 = vld [vmem:[%s167 + $0xba8] sm:$0xff]
        %v613 = vld [vmem:[%s167 + $0xbb0] sm:$0xff]
        %v614 = vld [vmem:[%s167 + $0xbb8] sm:$0xff]
        %v615 = vld [vmem:[%s167 + $0xbc0] sm:$0xff]
        %v616 = vld [vmem:[%s167 + $0xbc8] sm:$0xff]
        %v617 = vld [vmem:[%s167 + $0xbd0] sm:$0xff]
        %v618 = vld [vmem:[%s167 + $0xbd8] sm:$0xff]
        %v619 = vld [vmem:[%s167 + $0xbe0] sm:$0xff]
        %v620 = vld [vmem:[%s167 + $0xbe8] sm:$0xff]
        %v621 = vld [vmem:[%s167 + $0xbf0] sm:$0xff]
        %v622 = vld [vmem:[%s167 + $0xbf8] sm:$0xff]
        %v623 = vld [vmem:[%s167 + $0xc00] sm:$0xff]
        %v624 = vld [vmem:[%s167 + $0xc08] sm:$0xff]
        %v625 = vld [vmem:[%s167 + $0xc10] sm:$0xff]
        %v626 = vld [vmem:[%s167 + $0xc18] sm:$0xff]
        %v627 = vld [vmem:[%s167 + $0xc20] sm:$0xff]
        %v628 = vld [vmem:[%s167 + $0xc28] sm:$0xff]
        %v629 = vld [vmem:[%s167 + $0xc30] sm:$0xff]
        %v630 = vld [vmem:[%s167 + $0xc38] sm:$0xff]
        %v631 = vld [vmem:[%s167 + $0xc40] sm:$0xff]
        %v632 = vld [vmem:[%s167 + $0xc48] sm:$0xff]
        %v633 = vld [vmem:[%s167 + $0xc50] sm:$0xff]
        %v634 = vld [vmem:[%s167 + $0xc58] sm:$0xff]
        %v635 = vld [vmem:[%s167 + $0xc60] sm:$0xff]
        %v636 = vld [vmem:[%s167 + $0xc68] sm:$0xff]
        %v637 = vld [vmem:[%s167 + $0xc70] sm:$0xff]
        %v638 = vld [vmem:[%s167 + $0xc78] sm:$0xff]
        %v639 = vld [vmem:[%s167 + $0xc80] sm:$0xff]
        %v640 = vld [vmem:[%s167 + $0xc88] sm:$0xff]
        %v641 = vld [vmem:[%s167 + $0xc90] sm:$0xff]
        %v642 = vld [vmem:[%s167 + $0xc98] sm:$0xff]
        %v643 = vld [vmem:[%s167 + $0xca0] sm:$0xff]
        %v644 = vld [vmem:[%s167 + $0xca8] sm:$0xff]
        %v645 = vld [vmem:[%s167 + $0xcb0] sm:$0xff]
        %v646 = vld [vmem:[%s167 + $0xcb8] sm:$0xff]
        %v647 = vld [vmem:[%s167 + $0xcc0] sm:$0xff]
        %v648 = vld [vmem:[%s167 + $0xcc8] sm:$0xff]
        %v649 = vld [vmem:[%s167 + $0xcd0] sm:$0xff]
        %v650 = vld [vmem:[%s167 + $0xcd8] sm:$0xff]
        %v651 = vld [vmem:[%s167 + $0xce0] sm:$0xff]
        %v652 = vld [vmem:[%s167 + $0xce8] sm:$0xff]
        %v653 = vld [vmem:[%s167 + $0xcf0] sm:$0xff]
        %v654 = vld [vmem:[%s167 + $0xcf8] sm:$0xff]
        %v655 = vld [vmem:[%s167 + $0xd00] sm:$0xff]
        %v656 = vld [vmem:[%s167 + $0xd08] sm:$0xff]
        %v657 = vld [vmem:[%s167 + $0xd10] sm:$0xff]
        %v658 = vld [vmem:[%s167 + $0xd18] sm:$0xff]
        %v659 = vld [vmem:[%s167 + $0xd20] sm:$0xff]
        %v660 = vld [vmem:[%s167 + $0xd28] sm:$0xff]
        %v661 = vld [vmem:[%s167 + $0xd30] sm:$0xff]
        %v662 = vld [vmem:[%s167 + $0xd38] sm:$0xff]
        %v663 = vld [vmem:[%s167 + $0xd40] sm:$0xff]
        %v664 = vld [vmem:[%s167 + $0xd48] sm:$0xff]
        %v665 = vld [vmem:[%s167 + $0xd50] sm:$0xff]
        %v666 = vld [vmem:[%s167 + $0xd58] sm:$0xff]
        %v667 = vld [vmem:[%s167 + $0xd60] sm:$0xff]
        %v668 = vld [vmem:[%s167 + $0xd68] sm:$0xff]
        %v669 = vld [vmem:[%s167 + $0xd70] sm:$0xff]
        %v670 = vld [vmem:[%s167 + $0xd78] sm:$0xff]
        %v671 = vld [vmem:[%s167 + $0xd80] sm:$0xff]
        %v672 = vld [vmem:[%s167 + $0xd88] sm:$0xff]
        %v673 = vld [vmem:[%s167 + $0xd90] sm:$0xff]
        %v674 = vld [vmem:[%s167 + $0xd98] sm:$0xff]
        %v675 = vld [vmem:[%s167 + $0xda0] sm:$0xff]
        %v676 = vld [vmem:[%s167 + $0xda8] sm:$0xff]
        %v677 = vld [vmem:[%s167 + $0xdb0] sm:$0xff]
        %v678 = vld [vmem:[%s167 + $0xdb8] sm:$0xff]
        %v679 = vld [vmem:[%s167 + $0xdc0] sm:$0xff]
        %v680 = vld [vmem:[%s167 + $0xdc8] sm:$0xff]
        %v681 = vld [vmem:[%s167 + $0xdd0] sm:$0xff]
        %v682 = vld [vmem:[%s167 + $0xdd8] sm:$0xff]
        %v683 = vld [vmem:[%s167 + $0xde0] sm:$0xff]
        %v684 = vld [vmem:[%s167 + $0xde8] sm:$0xff]
        %v685 = vld [vmem:[%s167 + $0xdf0] sm:$0xff]
        %v686 = vld [vmem:[%s167 + $0xdf8] sm:$0xff]
        %v687 = vld [vmem:[%s167 + $0xe00] sm:$0xff]
        %v688 = vld [vmem:[%s167 + $0xe08] sm:$0xff]
        %v689 = vld [vmem:[%s167 + $0xe10] sm:$0xff]
        %v690 = vld [vmem:[%s167 + $0xe18] sm:$0xff]
        %v691 = vld [vmem:[%s167 + $0xe20] sm:$0xff]
        %v692 = vld [vmem:[%s167 + $0xe28] sm:$0xff]
        %v693 = vld [vmem:[%s167 + $0xe30] sm:$0xff]
        %v694 = vld [vmem:[%s167 + $0xe38] sm:$0xff]
        %v695 = vld [vmem:[%s167 + $0xe40] sm:$0xff]
        %v696 = vld [vmem:[%s167 + $0xe48] sm:$0xff]
        %v697 = vld [vmem:[%s167 + $0xe50] sm:$0xff]
        %v698 = vld [vmem:[%s167 + $0xe58] sm:$0xff]
        %v699 = vld [vmem:[%s167 + $0xe60] sm:$0xff]
        %v700 = vld [vmem:[%s167 + $0xe68] sm:$0xff]
        %v701 = vld [vmem:[%s167 + $0xe70] sm:$0xff]
        %v702 = vld [vmem:[%s167 + $0xe78] sm:$0xff]
        %v703 = vld [vmem:[%s167 + $0xe80] sm:$0xff]
        %v704 = vld [vmem:[%s167 + $0xe88] sm:$0xff]
        %v705 = vld [vmem:[%s167 + $0xe90] sm:$0xff]
        %v706 = vld [vmem:[%s167 + $0xe98] sm:$0xff]
        %v707 = vld [vmem:[%s167 + $0xea0] sm:$0xff]
        %v708 = vld [vmem:[%s167 + $0xea8] sm:$0xff]
        %v709 = vld [vmem:[%s167 + $0xeb0] sm:$0xff]
        %v710 = vld [vmem:[%s167 + $0xeb8] sm:$0xff]
        %v711 = vld [vmem:[%s167 + $0xec0] sm:$0xff]
        %v712 = vld [vmem:[%s167 + $0xec8] sm:$0xff]
        %v713 = vld [vmem:[%s167 + $0xed0] sm:$0xff]
        %v714 = vld [vmem:[%s167 + $0xed8] sm:$0xff]
        %v715 = vld [vmem:[%s167 + $0xee0] sm:$0xff]
        %v716 = vld [vmem:[%s167 + $0xee8] sm:$0xff]
        %v717 = vld [vmem:[%s167 + $0xef0] sm:$0xff]
        %v718 = vld [vmem:[%s167 + $0xef8] sm:$0xff]
        %v719 = vld [vmem:[%s167 + $0xf00] sm:$0xff]
        %v720 = vld [vmem:[%s167 + $0xf08] sm:$0xff]
        %v721 = vld [vmem:[%s167 + $0xf10] sm:$0xff]
        %v722 = vld [vmem:[%s167 + $0xf18] sm:$0xff]
        %v723 = vld [vmem:[%s167 + $0xf20] sm:$0xff]
        %v724 = vld [vmem:[%s167 + $0xf28] sm:$0xff]
        %v725 = vld [vmem:[%s167 + $0xf30] sm:$0xff]
        %v726 = vld [vmem:[%s167 + $0xf38] sm:$0xff]
        %v727 = vld [vmem:[%s167 + $0xf40] sm:$0xff]
        %v728 = vld [vmem:[%s167 + $0xf48] sm:$0xff]
        %v729 = vld [vmem:[%s167 + $0xf50] sm:$0xff]
        %v730 = vld [vmem:[%s167 + $0xf58] sm:$0xff]
        %v731 = vld [vmem:[%s167 + $0xf60] sm:$0xff]
        %v732 = vld [vmem:[%s167 + $0xf68] sm:$0xff]
        %v733 = vld [vmem:[%s167 + $0xf70] sm:$0xff]
        %v734 = vld [vmem:[%s167 + $0xf78] sm:$0xff]
        %v735 = vld [vmem:[%s167 + $0xf80] sm:$0xff]
        %v736 = vld [vmem:[%s167 + $0xf88] sm:$0xff]
        %v737 = vld [vmem:[%s167 + $0xf90] sm:$0xff]
        %v738 = vld [vmem:[%s167 + $0xf98] sm:$0xff]
        %v739 = vld [vmem:[%s167 + $0xfa0] sm:$0xff]
        %v740 = vld [vmem:[%s167 + $0xfa8] sm:$0xff]
        %v741 = vld [vmem:[%s167 + $0xfb0] sm:$0xff]
        %v742 = vld [vmem:[%s167 + $0xfb8] sm:$0xff]
        %v743 = vld [vmem:[%s167 + $0xfc0] sm:$0xff]
        %v744 = vld [vmem:[%s167 + $0xfc8] sm:$0xff]
        %v745 = vld [vmem:[%s167 + $0xfd0] sm:$0xff]
        %v746 = vld [vmem:[%s167 + $0xfd8] sm:$0xff]
        %v747 = vld [vmem:[%s167 + $0xfe0] sm:$0xff]
        %v748 = vld [vmem:[%s167 + $0xfe8] sm:$0xff]
        %v749 = vld [vmem:[%s167 + $0xff0] sm:$0xff]
        %v750 = vld [vmem:[%s167 + $0xff8] sm:$0xff]
        %v751 = vld [vmem:[%s167 + $0x1000] sm:$0xff]
        %v752 = vld [vmem:[%s167 + $0x1008] sm:$0xff]
        %v753 = vld [vmem:[%s167 + $0x1010] sm:$0xff]
        %v754 = vld [vmem:[%s167 + $0x1018] sm:$0xff]
        %v755 = vld [vmem:[%s167 + $0x1020] sm:$0xff]
        %v756 = vld [vmem:[%s167 + $0x1028] sm:$0xff]
        %v757 = vld [vmem:[%s167 + $0x1030] sm:$0xff]
        %v758 = vld [vmem:[%s167 + $0x1038] sm:$0xff]
        %v759 = vld [vmem:[%s167 + $0x1040] sm:$0xff]
        %v760 = vld [vmem:[%s167 + $0x1048] sm:$0xff]
        %v761 = vld [vmem:[%s167 + $0x1050] sm:$0xff]
        %v762 = vld [vmem:[%s167 + $0x1058] sm:$0xff]
        %v763 = vld [vmem:[%s167 + $0x1060] sm:$0xff]
        %v764 = vld [vmem:[%s167 + $0x1068] sm:$0xff]
        %v765 = vld [vmem:[%s167 + $0x1070] sm:$0xff]
        %v766 = vld [vmem:[%s167 + $0x1078] sm:$0xff]
        %v767 = vld [vmem:[%s167 + $0x1080] sm:$0xff]
        %v768 = vld [vmem:[%s167 + $0x1088] sm:$0xff]
        %v769 = vld [vmem:[%s167 + $0x1090] sm:$0xff]
        %v770 = vld [vmem:[%s167 + $0x1098] sm:$0xff]
        %v771 = vld [vmem:[%s167 + $0x10a0] sm:$0xff]
        %v772 = vld [vmem:[%s167 + $0x10a8] sm:$0xff]
        %v773 = vld [vmem:[%s167 + $0x10b0] sm:$0xff]
        %v774 = vld [vmem:[%s167 + $0x10b8] sm:$0xff]
        %v775 = vld [vmem:[%s167 + $0x10c0] sm:$0xff]
        %v776 = vld [vmem:[%s167 + $0x10c8] sm:$0xff]
        %v777 = vld [vmem:[%s167 + $0x10d0] sm:$0xff]
        %v778 = vld [vmem:[%s167 + $0x10d8] sm:$0xff]
        %v779 = vld [vmem:[%s167 + $0x10e0] sm:$0xff]
        %v780 = vld [vmem:[%s167 + $0x10e8] sm:$0xff]
        %v781 = vld [vmem:[%s167 + $0x10f0] sm:$0xff]
        %v782 = vld [vmem:[%s167 + $0x10f8] sm:$0xff]
        %v783 = vld [vmem:[%s167 + $0x1100] sm:$0xff]
        %v784 = vld [vmem:[%s167 + $0x1108] sm:$0xff]
        %v785 = vld [vmem:[%s167 + $0x1110] sm:$0xff]
        %v786 = vld [vmem:[%s167 + $0x1118] sm:$0xff]
        %v787 = vld [vmem:[%s167 + $0x1120] sm:$0xff]
        %v788 = vld [vmem:[%s167 + $0x1128] sm:$0xff]
        %v789 = vld [vmem:[%s167 + $0x1130] sm:$0xff]
        %v790 = vld [vmem:[%s167 + $0x1138] sm:$0xff]
        %v791 = vld [vmem:[%s167 + $0x1140] sm:$0xff]
        %v792 = vld [vmem:[%s167 + $0x1148] sm:$0xff]
        %v793 = vld [vmem:[%s167 + $0x1150] sm:$0xff]
        %v794 = vld [vmem:[%s167 + $0x1158] sm:$0xff]
        %v795 = vld [vmem:[%s167 + $0x1160] sm:$0xff]
        %v796 = vld [vmem:[%s167 + $0x1168] sm:$0xff]
        %v797 = vld [vmem:[%s167 + $0x1170] sm:$0xff]
        %v798 = vld [vmem:[%s167 + $0x1178] sm:$0xff]
        %v799 = vld [vmem:[%s167 + $0x1180] sm:$0xff]
        %v800 = vld [vmem:[%s167 + $0x1188] sm:$0xff]
        %v801 = vld [vmem:[%s167 + $0x1190] sm:$0xff]
        %v802 = vld [vmem:[%s167 + $0x1198] sm:$0xff]
        %v803 = vld [vmem:[%s167 + $0x11a0] sm:$0xff]
        %v804 = vld [vmem:[%s167 + $0x11a8] sm:$0xff]
        %v805 = vld [vmem:[%s167 + $0x11b0] sm:$0xff]
        %v806 = vld [vmem:[%s167 + $0x11b8] sm:$0xff]
        %v807 = vld [vmem:[%s167 + $0x11c0] sm:$0xff]
        %v808 = vld [vmem:[%s167 + $0x11c8] sm:$0xff]
        %v809 = vld [vmem:[%s167 + $0x11d0] sm:$0xff]
        %v810 = vld [vmem:[%s167 + $0x11d8] sm:$0xff]
        %v811 = vld [vmem:[%s167 + $0x11e0] sm:$0xff]
        %v812 = vld [vmem:[%s167 + $0x11e8] sm:$0xff]
        %v813 = vld [vmem:[%s167 + $0x11f0] sm:$0xff]
        %v814 = vld [vmem:[%s167 + $0x11f8] sm:$0xff]
        %v815 = vld [vmem:[%s167 + $0x1200] sm:$0xff]
        %v816 = vld [vmem:[%s167 + $0x1208] sm:$0xff]
        %v817 = vld [vmem:[%s167 + $0x1210] sm:$0xff]
        %v818 = vld [vmem:[%s167 + $0x1218] sm:$0xff]
        %v819 = vld [vmem:[%s167 + $0x1220] sm:$0xff]
        %v820 = vld [vmem:[%s167 + $0x1228] sm:$0xff]
        %v821 = vld [vmem:[%s167 + $0x1230] sm:$0xff]
        %v822 = vld [vmem:[%s167 + $0x1238] sm:$0xff]
        %v823 = vld [vmem:[%s167 + $0x1240] sm:$0xff]
        %v824 = vld [vmem:[%s167 + $0x1248] sm:$0xff]
        %v825 = vld [vmem:[%s167 + $0x1250] sm:$0xff]
        %v826 = vld [vmem:[%s167 + $0x1258] sm:$0xff]
        %v827 = vld [vmem:[%s167 + $0x1260] sm:$0xff]
        %v828 = vld [vmem:[%s167 + $0x1268] sm:$0xff]
        %v829 = vld [vmem:[%s167 + $0x1270] sm:$0xff]
        %v830 = vld [vmem:[%s167 + $0x1278] sm:$0xff]
        %v831 = vld [vmem:[%s167 + $0x1280] sm:$0xff]
        %v832 = vld [vmem:[%s167 + $0x1288] sm:$0xff]
        %v833 = vld [vmem:[%s167 + $0x1290] sm:$0xff]
        %v834 = vld [vmem:[%s167 + $0x1298] sm:$0xff]
        %v835 = vld [vmem:[%s167 + $0x12a0] sm:$0xff]
        %v836 = vld [vmem:[%s167 + $0x12a8] sm:$0xff]
        %v837 = vld [vmem:[%s167 + $0x12b0] sm:$0xff]
        %v838 = vld [vmem:[%s167 + $0x12b8] sm:$0xff]
        %v839 = vld [vmem:[%s167 + $0x12c0] sm:$0xff]
        %v840 = vld [vmem:[%s167 + $0x12c8] sm:$0xff]
        %v841 = vld [vmem:[%s167 + $0x12d0] sm:$0xff]
        %v842 = vld [vmem:[%s167 + $0x12d8] sm:$0xff]
        %v843 = vld [vmem:[%s167 + $0x12e0] sm:$0xff]
        %v844 = vld [vmem:[%s167 + $0x12e8] sm:$0xff]
        %v845 = vld [vmem:[%s167 + $0x12f0] sm:$0xff]
        %v846 = vld [vmem:[%s167 + $0x12f8] sm:$0xff]
        %v847 = vld [vmem:[%s167 + $0x1300] sm:$0xff]
        %v848 = vld [vmem:[%s167 + $0x1308] sm:$0xff]
        %v849 = vld [vmem:[%s167 + $0x1310] sm:$0xff]
        %v850 = vld [vmem:[%s167 + $0x1318] sm:$0xff]
        %v851 = vld [vmem:[%s167 + $0x1320] sm:$0xff]
        %v852 = vld [vmem:[%s167 + $0x1328] sm:$0xff]
        %v853 = vld [vmem:[%s167 + $0x1330] sm:$0xff]
        %v854 = vld [vmem:[%s167 + $0x1338] sm:$0xff]
        %v855 = vld [vmem:[%s167 + $0x1340] sm:$0xff]
        %v856 = vld [vmem:[%s167 + $0x1348] sm:$0xff]
        %v857 = vld [vmem:[%s167 + $0x1350] sm:$0xff]
        %v858 = vld [vmem:[%s167 + $0x1358] sm:$0xff]
        %v859 = vld [vmem:[%s167 + $0x1360] sm:$0xff]
        %v860 = vld [vmem:[%s167 + $0x1368] sm:$0xff]
        %v861 = vld [vmem:[%s167 + $0x1370] sm:$0xff]
        %v862 = vld [vmem:[%s167 + $0x1378] sm:$0xff]
        %v863 = vld [vmem:[%s167 + $0x1380] sm:$0xff]
        %v864 = vld [vmem:[%s167 + $0x1388] sm:$0xff]
        %v865 = vld [vmem:[%s167 + $0x1390] sm:$0xff]
        %v866 = vld [vmem:[%s167 + $0x1398] sm:$0xff]
        %v867 = vld [vmem:[%s167 + $0x13a0] sm:$0xff]
        %v868 = vld [vmem:[%s167 + $0x13a8] sm:$0xff]
        %v869 = vld [vmem:[%s167 + $0x13b0] sm:$0xff]
        %v870 = vld [vmem:[%s167 + $0x13b8] sm:$0xff]
        %v871 = vld [vmem:[%s167 + $0x13c0] sm:$0xff]
        %v872 = vld [vmem:[%s167 + $0x13c8] sm:$0xff]
        %v873 = vld [vmem:[%s167 + $0x13d0] sm:$0xff]
        %v874 = vld [vmem:[%s167 + $0x13d8] sm:$0xff]
        %v875 = vld [vmem:[%s167 + $0x13e0] sm:$0xff]
        %v876 = vld [vmem:[%s167 + $0x13e8] sm:$0xff]
        %v877 = vld [vmem:[%s167 + $0x13f0] sm:$0xff]
        %v878 = vld [vmem:[%s167 + $0x13f8] sm:$0xff]
        %v879 = vld [vmem:[%s167 + $0x1400] sm:$0xff]
        %v880 = vld [vmem:[%s167 + $0x1408] sm:$0xff]
        %v881 = vld [vmem:[%s167 + $0x1410] sm:$0xff]
        %v882 = vld [vmem:[%s167 + $0x1418] sm:$0xff]
        %v883 = vld [vmem:[%s167 + $0x1420] sm:$0xff]
        %v884 = vld [vmem:[%s167 + $0x1428] sm:$0xff]
        %v885 = vld [vmem:[%s167 + $0x1430] sm:$0xff]
        %v886 = vld [vmem:[%s167 + $0x1438] sm:$0xff]
        %v887 = vld [vmem:[%s167 + $0x1440] sm:$0xff]
        %v888 = vld [vmem:[%s167 + $0x1448] sm:$0xff]
        %v889 = vld [vmem:[%s167 + $0x1450] sm:$0xff]
        %v890 = vld [vmem:[%s167 + $0x1458] sm:$0xff]
        %v891 = vld [vmem:[%s167 + $0x1460] sm:$0xff]
        %v892 = vld [vmem:[%s167 + $0x1468] sm:$0xff]
        %v893 = vld [vmem:[%s167 + $0x1470] sm:$0xff]
        %v894 = vld [vmem:[%s167 + $0x1478] sm:$0xff]
        %v895 = vld [vmem:[%s167 + $0x1480] sm:$0xff]
        %v896 = vld [vmem:[%s167 + $0x1488] sm:$0xff]
        %v897 = vld [vmem:[%s167 + $0x1490] sm:$0xff]
        %v898 = vld [vmem:[%s167 + $0x1498] sm:$0xff]
        %v899 = vld [vmem:[%s167 + $0x14a0] sm:$0xff]
        %v900 = vld [vmem:[%s167 + $0x14a8] sm:$0xff]
        %v901 = vld [vmem:[%s167 + $0x14b0] sm:$0xff]
        %v902 = vld [vmem:[%s167 + $0x14b8] sm:$0xff]
        %v903 = vld [vmem:[%s167 + $0x14c0] sm:$0xff]
        %v904 = vld [vmem:[%s167 + $0x14c8] sm:$0xff]
        %v905 = vld [vmem:[%s167 + $0x14d0] sm:$0xff]
        %v906 = vld [vmem:[%s167 + $0x14d8] sm:$0xff]
        %v907 = vld [vmem:[%s167 + $0x14e0] sm:$0xff]
        %v908 = vld [vmem:[%s167 + $0x14e8] sm:$0xff]
        %v909 = vld [vmem:[%s167 + $0x14f0] sm:$0xff]
        %v910 = vld [vmem:[%s167 + $0x14f8] sm:$0xff]
        %v911 = vld [vmem:[%s167 + $0x1500] sm:$0xff]
        %v912 = vld [vmem:[%s167 + $0x1508] sm:$0xff]
        %v913 = vld [vmem:[%s167 + $0x1510] sm:$0xff]
        %v914 = vld [vmem:[%s167 + $0x1518] sm:$0xff]
        %v915 = vld [vmem:[%s167 + $0x1520] sm:$0xff]
        %v916 = vld [vmem:[%s167 + $0x1528] sm:$0xff]
        %v917 = vld [vmem:[%s167 + $0x1530] sm:$0xff]
        %v918 = vld [vmem:[%s167 + $0x1538] sm:$0xff]
        %v919 = vld [vmem:[%s167 + $0x1540] sm:$0xff]
        %v920 = vld [vmem:[%s167 + $0x1548] sm:$0xff]
        %v921 = vld [vmem:[%s167 + $0x1550] sm:$0xff]
        %v922 = vld [vmem:[%s167 + $0x1558] sm:$0xff]
        %v923 = vld [vmem:[%s167 + $0x1560] sm:$0xff]
        %v924 = vld [vmem:[%s167 + $0x1568] sm:$0xff]
        %v925 = vld [vmem:[%s167 + $0x1570] sm:$0xff]
        %v926 = vld [vmem:[%s167 + $0x1578] sm:$0xff]
        %v927 = vld [vmem:[%s167 + $0x1580] sm:$0xff]
        %v928 = vld [vmem:[%s167 + $0x1588] sm:$0xff]
        %v929 = vld [vmem:[%s167 + $0x1590] sm:$0xff]
        %v930 = vld [vmem:[%s167 + $0x1598] sm:$0xff]
        %v931 = vld [vmem:[%s167 + $0x15a0] sm:$0xff]
        %v932 = vld [vmem:[%s167 + $0x15a8] sm:$0xff]
        %v933 = vld [vmem:[%s167 + $0x15b0] sm:$0xff]
        %v934 = vld [vmem:[%s167 + $0x15b8] sm:$0xff]
        %v935 = vld [vmem:[%s167 + $0x15c0] sm:$0xff]
        %v936 = vld [vmem:[%s167 + $0x15c8] sm:$0xff]
        %v937 = vld [vmem:[%s167 + $0x15d0] sm:$0xff]
        %v938 = vld [vmem:[%s167 + $0x15d8] sm:$0xff]
        %v939 = vld [vmem:[%s167 + $0x15e0] sm:$0xff]
        %v940 = vld [vmem:[%s167 + $0x15e8] sm:$0xff]
        %v941 = vld [vmem:[%s167 + $0x15f0] sm:$0xff]
        %v942 = vld [vmem:[%s167 + $0x15f8] sm:$0xff]
        %v943 = vld [vmem:[%s167 + $0x1600] sm:$0xff]
        %v944 = vld [vmem:[%s167 + $0x1608] sm:$0xff]
        %v945 = vld [vmem:[%s167 + $0x1610] sm:$0xff]
        %v946 = vld [vmem:[%s167 + $0x1618] sm:$0xff]
        %v947 = vld [vmem:[%s167 + $0x1620] sm:$0xff]
        %v948 = vld [vmem:[%s167 + $0x1628] sm:$0xff]
        %v949 = vld [vmem:[%s167 + $0x1630] sm:$0xff]
        %v950 = vld [vmem:[%s167 + $0x1638] sm:$0xff]
        %v951 = vld [vmem:[%s167 + $0x1640] sm:$0xff]
        %v952 = vld [vmem:[%s167 + $0x1648] sm:$0xff]
        %v953 = vld [vmem:[%s167 + $0x1650] sm:$0xff]
        %v954 = vld [vmem:[%s167 + $0x1658] sm:$0xff]
        %v955 = vld [vmem:[%s167 + $0x1660] sm:$0xff]
        %v956 = vld [vmem:[%s167 + $0x1668] sm:$0xff]
        %v957 = vld [vmem:[%s167 + $0x1670] sm:$0xff]
        %v958 = vld [vmem:[%s167 + $0x1678] sm:$0xff]
        %v959 = vld [vmem:[%s167 + $0x1680] sm:$0xff]
        %v960 = vld [vmem:[%s167 + $0x1688] sm:$0xff]
        %v961 = vld [vmem:[%s167 + $0x1690] sm:$0xff]
        %v962 = vld [vmem:[%s167 + $0x1698] sm:$0xff]
        %v963 = vld [vmem:[%s167 + $0x16a0] sm:$0xff]
        %v964 = vld [vmem:[%s167 + $0x16a8] sm:$0xff]
        %v965 = vld [vmem:[%s167 + $0x16b0] sm:$0xff]
        %v966 = vld [vmem:[%s167 + $0x16b8] sm:$0xff]
        %v967 = vld [vmem:[%s167 + $0x16c0] sm:$0xff]
        %v968 = vld [vmem:[%s167 + $0x16c8] sm:$0xff]
        %v969 = vld [vmem:[%s167 + $0x16d0] sm:$0xff]
        %v970 = vld [vmem:[%s167 + $0x16d8] sm:$0xff]
        %v971 = vld [vmem:[%s167 + $0x16e0] sm:$0xff]
        %v972 = vld [vmem:[%s167 + $0x16e8] sm:$0xff]
        %v973 = vld [vmem:[%s167 + $0x16f0] sm:$0xff]
        %v974 = vld [vmem:[%s167 + $0x16f8] sm:$0xff]
        %v975 = vld [vmem:[%s167 + $0x1700] sm:$0xff]
        %v976 = vld [vmem:[%s167 + $0x1708] sm:$0xff]
        %v977 = vld [vmem:[%s167 + $0x1710] sm:$0xff]
        %v978 = vld [vmem:[%s167 + $0x1718] sm:$0xff]
        %v979 = vld [vmem:[%s167 + $0x1720] sm:$0xff]
        %v980 = vld [vmem:[%s167 + $0x1728] sm:$0xff]
        %v981 = vld [vmem:[%s167 + $0x1730] sm:$0xff]
        %v982 = vld [vmem:[%s167 + $0x1738] sm:$0xff]
        %v983 = vld [vmem:[%s167 + $0x1740] sm:$0xff]
        %v984 = vld [vmem:[%s167 + $0x1748] sm:$0xff]
        %v985 = vld [vmem:[%s167 + $0x1750] sm:$0xff]
        %v986 = vld [vmem:[%s167 + $0x1758] sm:$0xff]
        %v987 = vld [vmem:[%s167 + $0x1760] sm:$0xff]
        %v988 = vld [vmem:[%s167 + $0x1768] sm:$0xff]
        %v989 = vld [vmem:[%s167 + $0x1770] sm:$0xff]
        %v990 = vld [vmem:[%s167 + $0x1778] sm:$0xff]
        %v991 = vld [vmem:[%s167 + $0x1780] sm:$0xff]
        %v992 = vld [vmem:[%s167 + $0x1788] sm:$0xff]
        %v993 = vld [vmem:[%s167 + $0x1790] sm:$0xff]
        %v994 = vld [vmem:[%s167 + $0x1798] sm:$0xff]
        %v995 = vld [vmem:[%s167 + $0x17a0] sm:$0xff]
        %v996 = vld [vmem:[%s167 + $0x17a8] sm:$0xff]
        %v997 = vld [vmem:[%s167 + $0x17b0] sm:$0xff]
        %v998 = vld [vmem:[%s167 + $0x17b8] sm:$0xff]
        %v999 = vld [vmem:[%s167 + $0x17c0] sm:$0xff]
        %v1000 = vld [vmem:[%s167 + $0x17c8] sm:$0xff]
        %v1001 = vld [vmem:[%s167 + $0x17d0] sm:$0xff]
        %v1002 = vld [vmem:[%s167 + $0x17d8] sm:$0xff]
        %v1003 = vld [vmem:[%s167 + $0x17e0] sm:$0xff]
        %v1004 = vld [vmem:[%s167 + $0x17e8] sm:$0xff]
        %v1005 = vld [vmem:[%s167 + $0x17f0] sm:$0xff]
        %v1006 = vld [vmem:[%s167 + $0x17f8] sm:$0xff]
        %v1007 = vld [vmem:[%s167 + $0x1800] sm:$0xff]
        %v1008 = vld [vmem:[%s167 + $0x1808] sm:$0xff]
        %v1009 = vld [vmem:[%s167 + $0x1810] sm:$0xff]
        %v1010 = vld [vmem:[%s167 + $0x1818] sm:$0xff]
        %v1011 = vld [vmem:[%s167 + $0x1820] sm:$0xff]
        %v1012 = vld [vmem:[%s167 + $0x1828] sm:$0xff]
        %v1013 = vld [vmem:[%s167 + $0x1830] sm:$0xff]
        %v1014 = vld [vmem:[%s167 + $0x1838] sm:$0xff]
        %v1015 = vld [vmem:[%s167 + $0x1840] sm:$0xff]
        %v1016 = vld [vmem:[%s167 + $0x1848] sm:$0xff]
        %v1017 = vld [vmem:[%s167 + $0x1850] sm:$0xff]
        %v1018 = vld [vmem:[%s167 + $0x1858] sm:$0xff]
        %v1019 = vld [vmem:[%s167 + $0x1860] sm:$0xff]
        %v1020 = vld [vmem:[%s167 + $0x1868] sm:$0xff]
        %v1021 = vld [vmem:[%s167 + $0x1870] sm:$0xff]
        %v1022 = vld [vmem:[%s167 + $0x1878] sm:$0xff]
        %v1023 = vld [vmem:[%s167 + $0x1880] sm:$0xff]
        %v1024 = vld [vmem:[%s167 + $0x1888] sm:$0xff]
        %v1025 = vld [vmem:[%s167 + $0x1890] sm:$0xff]
        %v1026 = vld [vmem:[%s167 + $0x1898] sm:$0xff]
        %v1027 = vld [vmem:[%s167 + $0x18a0] sm:$0xff]
        %v1028 = vld [vmem:[%s167 + $0x18a8] sm:$0xff]
        %v1029 = vld [vmem:[%s167 + $0x18b0] sm:$0xff]
        %v1030 = vld [vmem:[%s167 + $0x18b8] sm:$0xff]
        %v1031 = vld [vmem:[%s167 + $0x18c0] sm:$0xff]
        %v1032 = vld [vmem:[%s167 + $0x18c8] sm:$0xff]
        %v1033 = vld [vmem:[%s167 + $0x18d0] sm:$0xff]
        %v1034 = vld [vmem:[%s167 + $0x18d8] sm:$0xff]
        %v1035 = vld [vmem:[%s167 + $0x18e0] sm:$0xff]
        %v1036 = vld [vmem:[%s167 + $0x18e8] sm:$0xff]
        %v1037 = vld [vmem:[%s167 + $0x18f0] sm:$0xff]
        %v1038 = vld [vmem:[%s167 + $0x18f8] sm:$0xff]
        %v1039 = vld [vmem:[%s167 + $0x1900] sm:$0xff]
        %v1040 = vld [vmem:[%s167 + $0x1908] sm:$0xff]
        %v1041 = vld [vmem:[%s167 + $0x1910] sm:$0xff]
        %v1042 = vld [vmem:[%s167 + $0x1918] sm:$0xff]
        %v1043 = vld [vmem:[%s167 + $0x1920] sm:$0xff]
        %v1044 = vld [vmem:[%s167 + $0x1928] sm:$0xff]
        %v1045 = vld [vmem:[%s167 + $0x1930] sm:$0xff]
        %v1046 = vld [vmem:[%s167 + $0x1938] sm:$0xff]
        %v1047 = vld [vmem:[%s167 + $0x1940] sm:$0xff]
        %v1048 = vld [vmem:[%s167 + $0x1948] sm:$0xff]
        %v1049 = vld [vmem:[%s167 + $0x1950] sm:$0xff]
        %v1050 = vld [vmem:[%s167 + $0x1958] sm:$0xff]
        %v1051 = vld [vmem:[%s167 + $0x1960] sm:$0xff]
        %v1052 = vld [vmem:[%s167 + $0x1968] sm:$0xff]
        %v1053 = vld [vmem:[%s167 + $0x1970] sm:$0xff]
        %v1054 = vld [vmem:[%s167 + $0x1978] sm:$0xff]
        %v1055 = vld [vmem:[%s167 + $0x1980] sm:$0xff]
        %v1056 = vld [vmem:[%s167 + $0x1988] sm:$0xff]
        %v1057 = vld [vmem:[%s167 + $0x1990] sm:$0xff]
        %v1058 = vld [vmem:[%s167 + $0x1998] sm:$0xff]
        %v1059 = vld [vmem:[%s167 + $0x19a0] sm:$0xff]
        %v1060 = vld [vmem:[%s167 + $0x19a8] sm:$0xff]
        %v1061 = vld [vmem:[%s167 + $0x19b0] sm:$0xff]
        %v1062 = vld [vmem:[%s167 + $0x19b8] sm:$0xff]
        %v1063 = vld [vmem:[%s167 + $0x19c0] sm:$0xff]
        %v1064 = vld [vmem:[%s167 + $0x19c8] sm:$0xff]
        %v1065 = vld [vmem:[%s167 + $0x19d0] sm:$0xff]
        %v1066 = vld [vmem:[%s167 + $0x19d8] sm:$0xff]
        %v1067 = vld [vmem:[%s167 + $0x19e0] sm:$0xff]
        %v1068 = vld [vmem:[%s167 + $0x19e8] sm:$0xff]
        %v1069 = vld [vmem:[%s167 + $0x19f0] sm:$0xff]
        %v1070 = vld [vmem:[%s167 + $0x19f8] sm:$0xff]
        %v1071 = vld [vmem:[%s167 + $0x1a00] sm:$0xff]
        %v1072 = vld [vmem:[%s167 + $0x1a08] sm:$0xff]
        %v1073 = vld [vmem:[%s167 + $0x1a10] sm:$0xff]
        %v1074 = vld [vmem:[%s167 + $0x1a18] sm:$0xff]
        %v1075 = vld [vmem:[%s167 + $0x1a20] sm:$0xff]
        %v1076 = vld [vmem:[%s167 + $0x1a28] sm:$0xff]
        %v1077 = vld [vmem:[%s167 + $0x1a30] sm:$0xff]
        %v1078 = vld [vmem:[%s167 + $0x1a38] sm:$0xff]
        %v1079 = vld [vmem:[%s167 + $0x1a40] sm:$0xff]
        %v1080 = vld [vmem:[%s167 + $0x1a48] sm:$0xff]
        %v1081 = vld [vmem:[%s167 + $0x1a50] sm:$0xff]
        %v1082 = vld [vmem:[%s167 + $0x1a58] sm:$0xff]
        %v1083 = vld [vmem:[%s167 + $0x1a60] sm:$0xff]
        %v1084 = vld [vmem:[%s167 + $0x1a68] sm:$0xff]
        %v1085 = vld [vmem:[%s167 + $0x1a70] sm:$0xff]
        %v1086 = vld [vmem:[%s167 + $0x1a78] sm:$0xff]
        %v1087 = vld [vmem:[%s167 + $0x1a80] sm:$0xff]
        %v1088 = vld [vmem:[%s167 + $0x1a88] sm:$0xff]
        %v1089 = vld [vmem:[%s167 + $0x1a90] sm:$0xff]
        %v1090 = vld [vmem:[%s167 + $0x1a98] sm:$0xff]
        %v1091 = vld [vmem:[%s167 + $0x1aa0] sm:$0xff]
        %v1092 = vld [vmem:[%s167 + $0x1aa8] sm:$0xff]
        %v1093 = vld [vmem:[%s167 + $0x1ab0] sm:$0xff]
        %v1094 = vld [vmem:[%s167 + $0x1ab8] sm:$0xff]
        %v1095 = vld [vmem:[%s167 + $0x1ac0] sm:$0xff]
        %v1096 = vld [vmem:[%s167 + $0x1ac8] sm:$0xff]
        %v1097 = vld [vmem:[%s167 + $0x1ad0] sm:$0xff]
        %v1098 = vld [vmem:[%s167 + $0x1ad8] sm:$0xff]
        %v1099 = vld [vmem:[%s167 + $0x1ae0] sm:$0xff]
        %v1100 = vld [vmem:[%s167 + $0x1ae8] sm:$0xff]
        %v1101 = vld [vmem:[%s167 + $0x1af0] sm:$0xff]
        %v1102 = vld [vmem:[%s167 + $0x1af8] sm:$0xff]
        %v1103 = vld [vmem:[%s167 + $0x1b00] sm:$0xff]
        %v1104 = vld [vmem:[%s167 + $0x1b08] sm:$0xff]
        %v1105 = vld [vmem:[%s167 + $0x1b10] sm:$0xff]
        %v1106 = vld [vmem:[%s167 + $0x1b18] sm:$0xff]
        %v1107 = vld [vmem:[%s167 + $0x1b20] sm:$0xff]
        %v1108 = vld [vmem:[%s167 + $0x1b28] sm:$0xff]
        %v1109 = vld [vmem:[%s167 + $0x1b30] sm:$0xff]
        %v1110 = vld [vmem:[%s167 + $0x1b38] sm:$0xff]
        %v1111 = vld [vmem:[%s167 + $0x1b40] sm:$0xff]
        %v1112 = vld [vmem:[%s167 + $0x1b48] sm:$0xff]
        %v1113 = vld [vmem:[%s167 + $0x1b50] sm:$0xff]
        %v1114 = vld [vmem:[%s167 + $0x1b58] sm:$0xff]
        %v1115 = vld [vmem:[%s167 + $0x1b60] sm:$0xff]
        %v1116 = vld [vmem:[%s167 + $0x1b68] sm:$0xff]
        %v1117 = vld [vmem:[%s167 + $0x1b70] sm:$0xff]
        %v1118 = vld [vmem:[%s167 + $0x1b78] sm:$0xff]
        %v1119 = vld [vmem:[%s167 + $0x1b80] sm:$0xff]
        %v1120 = vld [vmem:[%s167 + $0x1b88] sm:$0xff]
        %v1121 = vld [vmem:[%s167 + $0x1b90] sm:$0xff]
        %v1122 = vld [vmem:[%s167 + $0x1b98] sm:$0xff]
        %v1123 = vld [vmem:[%s167 + $0x1ba0] sm:$0xff]
        %v1124 = vld [vmem:[%s167 + $0x1ba8] sm:$0xff]
        %v1125 = vld [vmem:[%s167 + $0x1bb0] sm:$0xff]
        %v1126 = vld [vmem:[%s167 + $0x1bb8] sm:$0xff]
        %v1127 = vld [vmem:[%s167 + $0x1bc0] sm:$0xff]
        %v1128 = vld [vmem:[%s167 + $0x1bc8] sm:$0xff]
        %v1129 = vld [vmem:[%s167 + $0x1bd0] sm:$0xff]
        %v1130 = vld [vmem:[%s167 + $0x1bd8] sm:$0xff]
        %v1131 = vld [vmem:[%s167 + $0x1be0] sm:$0xff]
        %v1132 = vld [vmem:[%s167 + $0x1be8] sm:$0xff]
        %v1133 = vld [vmem:[%s167 + $0x1bf0] sm:$0xff]
        %v1134 = vld [vmem:[%s167 + $0x1bf8] sm:$0xff]
        %v1135 = vld [vmem:[%s167 + $0x1c00] sm:$0xff]
        %v1136 = vld [vmem:[%s167 + $0x1c08] sm:$0xff]
        %v1137 = vld [vmem:[%s167 + $0x1c10] sm:$0xff]
        %v1138 = vld [vmem:[%s167 + $0x1c18] sm:$0xff]
        %v1139 = vld [vmem:[%s167 + $0x1c20] sm:$0xff]
        %v1140 = vld [vmem:[%s167 + $0x1c28] sm:$0xff]
        %v1141 = vld [vmem:[%s167 + $0x1c30] sm:$0xff]
        %v1142 = vld [vmem:[%s167 + $0x1c38] sm:$0xff]
        %v1143 = vld [vmem:[%s167 + $0x1c40] sm:$0xff]
        %v1144 = vld [vmem:[%s167 + $0x1c48] sm:$0xff]
        %v1145 = vld [vmem:[%s167 + $0x1c50] sm:$0xff]
        %v1146 = vld [vmem:[%s167 + $0x1c58] sm:$0xff]
        %v1147 = vld [vmem:[%s167 + $0x1c60] sm:$0xff]
        %v1148 = vld [vmem:[%s167 + $0x1c68] sm:$0xff]
        %v1149 = vld [vmem:[%s167 + $0x1c70] sm:$0xff]
        %v1150 = vld [vmem:[%s167 + $0x1c78] sm:$0xff]
        %v1151 = vld [vmem:[%s167 + $0x1c80] sm:$0xff]
        %v1152 = vld [vmem:[%s167 + $0x1c88] sm:$0xff]
        %v1153 = vld [vmem:[%s167 + $0x1c90] sm:$0xff]
        %v1154 = vld [vmem:[%s167 + $0x1c98] sm:$0xff]
        %v1155 = vld [vmem:[%s167 + $0x1ca0] sm:$0xff]
        %v1156 = vld [vmem:[%s167 + $0x1ca8] sm:$0xff]
        %v1157 = vld [vmem:[%s167 + $0x1cb0] sm:$0xff]
        %v1158 = vld [vmem:[%s167 + $0x1cb8] sm:$0xff]
        %v1159 = vld [vmem:[%s167 + $0x1cc0] sm:$0xff]
        %v1160 = vld [vmem:[%s167 + $0x1cc8] sm:$0xff]
        %v1161 = vld [vmem:[%s167 + $0x1cd0] sm:$0xff]
        %v1162 = vld [vmem:[%s167 + $0x1cd8] sm:$0xff]
        %v1163 = vld [vmem:[%s167 + $0x1ce0] sm:$0xff]
        %v1164 = vld [vmem:[%s167 + $0x1ce8] sm:$0xff]
        %v1165 = vld [vmem:[%s167 + $0x1cf0] sm:$0xff]
        %v1166 = vld [vmem:[%s167 + $0x1cf8] sm:$0xff]
        %v1167 = vld [vmem:[%s167 + $0x1d00] sm:$0xff]
        %v1168 = vld [vmem:[%s167 + $0x1d08] sm:$0xff]
        %v1169 = vld [vmem:[%s167 + $0x1d10] sm:$0xff]
        %v1170 = vld [vmem:[%s167 + $0x1d18] sm:$0xff]
        %v1171 = vld [vmem:[%s167 + $0x1d20] sm:$0xff]
        %v1172 = vld [vmem:[%s167 + $0x1d28] sm:$0xff]
        %v1173 = vld [vmem:[%s167 + $0x1d30] sm:$0xff]
        %v1174 = vld [vmem:[%s167 + $0x1d38] sm:$0xff]
        %v1175 = vld [vmem:[%s167 + $0x1d40] sm:$0xff]
        %v1176 = vld [vmem:[%s167 + $0x1d48] sm:$0xff]
        %v1177 = vld [vmem:[%s167 + $0x1d50] sm:$0xff]
        %v1178 = vld [vmem:[%s167 + $0x1d58] sm:$0xff]
        %v1179 = vld [vmem:[%s167 + $0x1d60] sm:$0xff]
        %v1180 = vld [vmem:[%s167 + $0x1d68] sm:$0xff]
        %v1181 = vld [vmem:[%s167 + $0x1d70] sm:$0xff]
        %v1182 = vld [vmem:[%s167 + $0x1d78] sm:$0xff]
        %v1183 = vld [vmem:[%s167 + $0x1d80] sm:$0xff]
        %v1184 = vld [vmem:[%s167 + $0x1d88] sm:$0xff]
        %v1185 = vld [vmem:[%s167 + $0x1d90] sm:$0xff]
        %v1186 = vld [vmem:[%s167 + $0x1d98] sm:$0xff]
        %v1187 = vld [vmem:[%s167 + $0x1da0] sm:$0xff]
        %v1188 = vld [vmem:[%s167 + $0x1da8] sm:$0xff]
        %v1189 = vld [vmem:[%s167 + $0x1db0] sm:$0xff]
        %v1190 = vld [vmem:[%s167 + $0x1db8] sm:$0xff]
        %v1191 = vld [vmem:[%s167 + $0x1dc0] sm:$0xff]
        %v1192 = vld [vmem:[%s167 + $0x1dc8] sm:$0xff]
        %v1193 = vld [vmem:[%s167 + $0x1dd0] sm:$0xff]
        %v1194 = vld [vmem:[%s167 + $0x1dd8] sm:$0xff]
        %v1195 = vld [vmem:[%s167 + $0x1de0] sm:$0xff]
        %v1196 = vld [vmem:[%s167 + $0x1de8] sm:$0xff]
        %v1197 = vld [vmem:[%s167 + $0x1df0] sm:$0xff]
        %v1198 = vld [vmem:[%s167 + $0x1df8] sm:$0xff]
        %v1199 = vld [vmem:[%s167 + $0x1e00] sm:$0xff]
        %v1200 = vld [vmem:[%s167 + $0x1e08] sm:$0xff]
        %v1201 = vld [vmem:[%s167 + $0x1e10] sm:$0xff]
        %v1202 = vld [vmem:[%s167 + $0x1e18] sm:$0xff]
        %v1203 = vld [vmem:[%s167 + $0x1e20] sm:$0xff]
        %v1204 = vld [vmem:[%s167 + $0x1e28] sm:$0xff]
        %v1205 = vld [vmem:[%s167 + $0x1e30] sm:$0xff]
        %v1206 = vld [vmem:[%s167 + $0x1e38] sm:$0xff]
        %v1207 = vld [vmem:[%s167 + $0x1e40] sm:$0xff]
        %v1208 = vld [vmem:[%s167 + $0x1e48] sm:$0xff]
        %v1209 = vld [vmem:[%s167 + $0x1e50] sm:$0xff]
        %v1210 = vld [vmem:[%s167 + $0x1e58] sm:$0xff]
        %v1211 = vld [vmem:[%s167 + $0x1e60] sm:$0xff]
        %v1212 = vld [vmem:[%s167 + $0x1e68] sm:$0xff]
        %v1213 = vld [vmem:[%s167 + $0x1e70] sm:$0xff]
        %v1214 = vld [vmem:[%s167 + $0x1e78] sm:$0xff]
        %v1215 = vld [vmem:[%s167 + $0x1e80] sm:$0xff]
        %v1216 = vld [vmem:[%s167 + $0x1e88] sm:$0xff]
        %v1217 = vld [vmem:[%s167 + $0x1e90] sm:$0xff]
        %v1218 = vld [vmem:[%s167 + $0x1e98] sm:$0xff]
        %v1219 = vld [vmem:[%s167 + $0x1ea0] sm:$0xff]
        %v1220 = vld [vmem:[%s167 + $0x1ea8] sm:$0xff]
        %v1221 = vld [vmem:[%s167 + $0x1eb0] sm:$0xff]
        %v1222 = vld [vmem:[%s167 + $0x1eb8] sm:$0xff]
        %v1223 = vld [vmem:[%s167 + $0x1ec0] sm:$0xff]
        %v1224 = vld [vmem:[%s167 + $0x1ec8] sm:$0xff]
        %v1225 = vld [vmem:[%s167 + $0x1ed0] sm:$0xff]
        %v1226 = vld [vmem:[%s167 + $0x1ed8] sm:$0xff]
        %v1227 = vld [vmem:[%s167 + $0x1ee0] sm:$0xff]
        %v1228 = vld [vmem:[%s167 + $0x1ee8] sm:$0xff]
        %v1229 = vld [vmem:[%s167 + $0x1ef0] sm:$0xff]
        %v1230 = vld [vmem:[%s167 + $0x1ef8] sm:$0xff]
        %v1231 = vld [vmem:[%s167 + $0x1f00] sm:$0xff]
        %v1232 = vld [vmem:[%s167 + $0x1f08] sm:$0xff]
        %v1233 = vld [vmem:[%s167 + $0x1f10] sm:$0xff]
        %v1234 = vld [vmem:[%s167 + $0x1f18] sm:$0xff]
        %v1235 = vld [vmem:[%s167 + $0x1f20] sm:$0xff]
        %v1236 = vld [vmem:[%s167 + $0x1f28] sm:$0xff]
        %v1237 = vld [vmem:[%s167 + $0x1f30] sm:$0xff]
        %v1238 = vld [vmem:[%s167 + $0x1f38] sm:$0xff]
        %v1239 = vld [vmem:[%s167 + $0x1f40] sm:$0xff]
        %v1240 = vld [vmem:[%s167 + $0x1f48] sm:$0xff]
        %v1241 = vld [vmem:[%s167 + $0x1f50] sm:$0xff]
        %v1242 = vld [vmem:[%s167 + $0x1f58] sm:$0xff]
        %v1243 = vld [vmem:[%s167 + $0x1f60] sm:$0xff]
        %v1244 = vld [vmem:[%s167 + $0x1f68] sm:$0xff]
        %v1245 = vld [vmem:[%s167 + $0x1f70] sm:$0xff]
        %v1246 = vld [vmem:[%s167 + $0x1f78] sm:$0xff]
        %v1247 = vld [vmem:[%s167 + $0x1f80] sm:$0xff]
        %v1248 = vld [vmem:[%s167 + $0x1f88] sm:$0xff]
        %v1249 = vld [vmem:[%s167 + $0x1f90] sm:$0xff]
        %v1250 = vld [vmem:[%s167 + $0x1f98] sm:$0xff]
        %v1251 = vld [vmem:[%s167 + $0x1fa0] sm:$0xff]
        %v1252 = vld [vmem:[%s167 + $0x1fa8] sm:$0xff]
        %v1253 = vld [vmem:[%s167 + $0x1fb0] sm:$0xff]
        %v1254 = vld [vmem:[%s167 + $0x1fb8] sm:$0xff]
        %v1255 = vld [vmem:[%s167 + $0x1fc0] sm:$0xff]
        %v1256 = vld [vmem:[%s167 + $0x1fc8] sm:$0xff]
        %v1257 = vld [vmem:[%s167 + $0x1fd0] sm:$0xff]
        %v1258 = vld [vmem:[%s167 + $0x1fd8] sm:$0xff]
        %v1259 = vld [vmem:[%s167 + $0x1fe0] sm:$0xff]
        %v1260 = vld [vmem:[%s167 + $0x1fe8] sm:$0xff]
        %v1261 = vld [vmem:[%s167 + $0x1ff0] sm:$0xff]
        %v1262 = vld [vmem:[%s167 + $0x1ff8] sm:$0xff]
        %v1263 = vld [vmem:[%s167 + $0x2000] sm:$0xff]
        %v1264 = vld [vmem:[%s167 + $0x2008] sm:$0xff]
        %v1265 = vld [vmem:[%s167 + $0x2010] sm:$0xff]
        %v1266 = vld [vmem:[%s167 + $0x2018] sm:$0xff]
        %v1267 = vld [vmem:[%s167 + $0x2020] sm:$0xff]
        %v1268 = vld [vmem:[%s167 + $0x2028] sm:$0xff]
        %v1269 = vld [vmem:[%s167 + $0x2030] sm:$0xff]
        %v1270 = vld [vmem:[%s167 + $0x2038] sm:$0xff]
        %v1271 = vld [vmem:[%s167 + $0x2040] sm:$0xff]
        %v1272 = vld [vmem:[%s167 + $0x2048] sm:$0xff]
        %v1273 = vld [vmem:[%s167 + $0x2050] sm:$0xff]
        %v1274 = vld [vmem:[%s167 + $0x2058] sm:$0xff]
        %v1275 = vld [vmem:[%s167 + $0x2060] sm:$0xff]
        %v1276 = vld [vmem:[%s167 + $0x2068] sm:$0xff]
        %v1277 = vld [vmem:[%s167 + $0x2070] sm:$0xff]
        %v1278 = vld [vmem:[%s167 + $0x2078] sm:$0xff]
        %v1279 = vld [vmem:[%s167 + $0x2080] sm:$0xff]
        %v1280 = vld [vmem:[%s167 + $0x2088] sm:$0xff]
        %v1281 = vld [vmem:[%s167 + $0x2090] sm:$0xff]
        %v1282 = vld [vmem:[%s167 + $0x2098] sm:$0xff]
        %v1283 = vld [vmem:[%s167 + $0x20a0] sm:$0xff]
        %v1284 = vld [vmem:[%s167 + $0x20a8] sm:$0xff]
        %v1285 = vld [vmem:[%s167 + $0x20b0] sm:$0xff]
        %v1286 = vld [vmem:[%s167 + $0x20b8] sm:$0xff]
        %v1287 = vld [vmem:[%s167 + $0x20c0] sm:$0xff]
        %v1288 = vld [vmem:[%s167 + $0x20c8] sm:$0xff]
        %v1289 = vld [vmem:[%s167 + $0x20d0] sm:$0xff]
        %v1290 = vld [vmem:[%s167 + $0x20d8] sm:$0xff]
        %v1291 = vld [vmem:[%s167 + $0x20e0] sm:$0xff]
        %v1292 = vld [vmem:[%s167 + $0x20e8] sm:$0xff]
        %v1293 = vld [vmem:[%s167 + $0x20f0] sm:$0xff]
        %v1294 = vld [vmem:[%s167 + $0x20f8] sm:$0xff]
        %v1295 = vld [vmem:[%s167 + $0x2100] sm:$0xff]
        %v1296 = vld [vmem:[%s167 + $0x2108] sm:$0xff]
        %v1297 = vld [vmem:[%s167 + $0x2110] sm:$0xff]
        %v1298 = vld [vmem:[%s167 + $0x2118] sm:$0xff]
        %v1299 = vld [vmem:[%s167 + $0x2120] sm:$0xff]
        %v1300 = vld [vmem:[%s167 + $0x2128] sm:$0xff]
        %v1301 = vld [vmem:[%s167 + $0x2130] sm:$0xff]
        %v1302 = vld [vmem:[%s167 + $0x2138] sm:$0xff]
        %v1303 = vld [vmem:[%s167 + $0x2140] sm:$0xff]
        %v1304 = vld [vmem:[%s167 + $0x2148] sm:$0xff]
        %v1305 = vld [vmem:[%s167 + $0x2150] sm:$0xff]
        %v1306 = vld [vmem:[%s167 + $0x2158] sm:$0xff]
        %v1307 = vld [vmem:[%s167 + $0x2160] sm:$0xff]
        %v1308 = vld [vmem:[%s167 + $0x2168] sm:$0xff]
        %v1309 = vld [vmem:[%s167 + $0x2170] sm:$0xff]
        %v1310 = vld [vmem:[%s167 + $0x2178] sm:$0xff]
        %v1311 = vld [vmem:[%s167 + $0x2180] sm:$0xff]
        %v1312 = vld [vmem:[%s167 + $0x2188] sm:$0xff]
        %v1313 = vld [vmem:[%s167 + $0x2190] sm:$0xff]
        %v1314 = vld [vmem:[%s167 + $0x2198] sm:$0xff]
        %v1315 = vld [vmem:[%s167 + $0x21a0] sm:$0xff]
        %v1316 = vld [vmem:[%s167 + $0x21a8] sm:$0xff]
        %v1317 = vld [vmem:[%s167 + $0x21b0] sm:$0xff]
        %v1318 = vld [vmem:[%s167 + $0x21b8] sm:$0xff]
        %v1319 = vld [vmem:[%s167 + $0x21c0] sm:$0xff]
        %v1320 = vld [vmem:[%s167 + $0x21c8] sm:$0xff]
        %v1321 = vld [vmem:[%s167 + $0x21d0] sm:$0xff]
        %v1322 = vld [vmem:[%s167 + $0x21d8] sm:$0xff]
        %v1323 = vld [vmem:[%s167 + $0x21e0] sm:$0xff]
        %v1324 = vld [vmem:[%s167 + $0x21e8] sm:$0xff]
        %v1325 = vld [vmem:[%s167 + $0x21f0] sm:$0xff]
        %v1326 = vld [vmem:[%s167 + $0x21f8] sm:$0xff]
        %v1327 = vld [vmem:[%s167 + $0x2200] sm:$0xff]
        %v1328 = vld [vmem:[%s167 + $0x2208] sm:$0xff]
        %v1329 = vld [vmem:[%s167 + $0x2210] sm:$0xff]
        %v1330 = vld [vmem:[%s167 + $0x2218] sm:$0xff]
        %v1331 = vld [vmem:[%s167 + $0x2220] sm:$0xff]
        %v1332 = vld [vmem:[%s167 + $0x2228] sm:$0xff]
        %v1333 = vld [vmem:[%s167 + $0x2230] sm:$0xff]
        %v1334 = vld [vmem:[%s167 + $0x2238] sm:$0xff]
        %v1335 = vld [vmem:[%s167 + $0x2240] sm:$0xff]
        %v1336 = vld [vmem:[%s167 + $0x2248] sm:$0xff]
        %v1337 = vld [vmem:[%s167 + $0x2250] sm:$0xff]
        %v1338 = vld [vmem:[%s167 + $0x2258] sm:$0xff]
        %v1339 = vld [vmem:[%s167 + $0x2260] sm:$0xff]
        %v1340 = vld [vmem:[%s167 + $0x2268] sm:$0xff]
        %v1341 = vld [vmem:[%s167 + $0x2270] sm:$0xff]
        %v1342 = vld [vmem:[%s167 + $0x2278] sm:$0xff]
        %v1343 = vld [vmem:[%s167 + $0x2280] sm:$0xff]
        %v1344 = vld [vmem:[%s167 + $0x2288] sm:$0xff]
        %v1345 = vld [vmem:[%s167 + $0x2290] sm:$0xff]
        %v1346 = vld [vmem:[%s167 + $0x2298] sm:$0xff]
        %v1347 = vld [vmem:[%s167 + $0x22a0] sm:$0xff]
        %v1348 = vld [vmem:[%s167 + $0x22a8] sm:$0xff]
        %v1349 = vld [vmem:[%s167 + $0x22b0] sm:$0xff]
        %v1350 = vld [vmem:[%s167 + $0x22b8] sm:$0xff]
        %v1351 = vld [vmem:[%s167 + $0x22c0] sm:$0xff]
        %v1352 = vld [vmem:[%s167 + $0x22c8] sm:$0xff]
        %v1353 = vld [vmem:[%s167 + $0x22d0] sm:$0xff]
        %v1354 = vld [vmem:[%s167 + $0x22d8] sm:$0xff]
        %v1355 = vld [vmem:[%s167 + $0x22e0] sm:$0xff]
        %v1356 = vld [vmem:[%s167 + $0x22e8] sm:$0xff]
        %v1357 = vld [vmem:[%s167 + $0x22f0] sm:$0xff]
        %v1358 = vld [vmem:[%s167 + $0x22f8] sm:$0xff]
        %v1359 = vld [vmem:[%s167 + $0x2300] sm:$0xff]
        %v1360 = vld [vmem:[%s167 + $0x2308] sm:$0xff]
        %v1361 = vld [vmem:[%s167 + $0x2310] sm:$0xff]
        %v1362 = vld [vmem:[%s167 + $0x2318] sm:$0xff]
        %v1363 = vld [vmem:[%s167 + $0x2320] sm:$0xff]
        %v1364 = vld [vmem:[%s167 + $0x2328] sm:$0xff]
        %v1365 = vld [vmem:[%s167 + $0x2330] sm:$0xff]
        %v1366 = vld [vmem:[%s167 + $0x2338] sm:$0xff]
        %v1367 = vld [vmem:[%s167 + $0x2340] sm:$0xff]
        %v1368 = vld [vmem:[%s167 + $0x2348] sm:$0xff]
        %v1369 = vld [vmem:[%s167 + $0x2350] sm:$0xff]
        %v1370 = vld [vmem:[%s167 + $0x2358] sm:$0xff]
        %v1371 = vld [vmem:[%s167 + $0x2360] sm:$0xff]
        %v1372 = vld [vmem:[%s167 + $0x2368] sm:$0xff]
        %v1373 = vld [vmem:[%s167 + $0x2370] sm:$0xff]
        %v1374 = vld [vmem:[%s167 + $0x2378] sm:$0xff]
        %v1375 = vld [vmem:[%s167 + $0x2380] sm:$0xff]
        %v1376 = vld [vmem:[%s167 + $0x2388] sm:$0xff]
        %v1377 = vld [vmem:[%s167 + $0x2390] sm:$0xff]
        %v1378 = vld [vmem:[%s167 + $0x2398] sm:$0xff]
        %v1379 = vld [vmem:[%s167 + $0x23a0] sm:$0xff]
        %v1380 = vld [vmem:[%s167 + $0x23a8] sm:$0xff]
        %v1381 = vld [vmem:[%s167 + $0x23b0] sm:$0xff]
        %v1382 = vld [vmem:[%s167 + $0x23b8] sm:$0xff]
        %v1383 = vld [vmem:[%s167 + $0x23c0] sm:$0xff]
        %v1384 = vld [vmem:[%s167 + $0x23c8] sm:$0xff]
        %v1385 = vld [vmem:[%s167 + $0x23d0] sm:$0xff]
        %v1386 = vld [vmem:[%s167 + $0x23d8] sm:$0xff]
        %v1387 = vld [vmem:[%s167 + $0x23e0] sm:$0xff]
        %v1388 = vld [vmem:[%s167 + $0x23e8] sm:$0xff]
        %v1389 = vld [vmem:[%s167 + $0x23f0] sm:$0xff]
        %v1390 = vld [vmem:[%s167 + $0x23f8] sm:$0xff]
        %v1391 = vld [vmem:[%s167 + $0x2400] sm:$0xff]
        %v1392 = vld [vmem:[%s167 + $0x2408] sm:$0xff]
        %v1393 = vld [vmem:[%s167 + $0x2410] sm:$0xff]
        %v1394 = vld [vmem:[%s167 + $0x2418] sm:$0xff]
        %v1395 = vld [vmem:[%s167 + $0x2420] sm:$0xff]
        %v1396 = vld [vmem:[%s167 + $0x2428] sm:$0xff]
        %v1397 = vld [vmem:[%s167 + $0x2430] sm:$0xff]
        %v1398 = vld [vmem:[%s167 + $0x2438] sm:$0xff]
        %v1399 = vld [vmem:[%s167 + $0x2440] sm:$0xff]
        %v1400 = vld [vmem:[%s167 + $0x2448] sm:$0xff]
        %v1401 = vld [vmem:[%s167 + $0x2450] sm:$0xff]
        %v1402 = vld [vmem:[%s167 + $0x2458] sm:$0xff]
        %v1403 = vld [vmem:[%s167 + $0x2460] sm:$0xff]
        %v1404 = vld [vmem:[%s167 + $0x2468] sm:$0xff]
        %v1405 = vld [vmem:[%s167 + $0x2470] sm:$0xff]
        %v1406 = vld [vmem:[%s167 + $0x2478] sm:$0xff]
        %v1407 = vld [vmem:[%s167 + $0x2480] sm:$0xff]
        %v1408 = vld [vmem:[%s167 + $0x2488] sm:$0xff]
        %v1409 = vld [vmem:[%s167 + $0x2490] sm:$0xff]
        %v1410 = vld [vmem:[%s167 + $0x2498] sm:$0xff]
        %v1411 = vld [vmem:[%s167 + $0x24a0] sm:$0xff]
        %v1412 = vld [vmem:[%s167 + $0x24a8] sm:$0xff]
        %v1413 = vld [vmem:[%s167 + $0x24b0] sm:$0xff]
        %v1414 = vld [vmem:[%s167 + $0x24b8] sm:$0xff]
        %v1415 = vld [vmem:[%s167 + $0x24c0] sm:$0xff]
        %v1416 = vld [vmem:[%s167 + $0x24c8] sm:$0xff]
        %v1417 = vld [vmem:[%s167 + $0x24d0] sm:$0xff]
        %v1418 = vld [vmem:[%s167 + $0x24d8] sm:$0xff]
        %v1419 = vld [vmem:[%s167 + $0x24e0] sm:$0xff]
        %v1420 = vld [vmem:[%s167 + $0x24e8] sm:$0xff]
        %v1421 = vld [vmem:[%s167 + $0x24f0] sm:$0xff]
        %v1422 = vld [vmem:[%s167 + $0x24f8] sm:$0xff]
        %v1423 = vld [vmem:[%s167 + $0x2500] sm:$0xff]
        %v1424 = vld [vmem:[%s167 + $0x2508] sm:$0xff]
        %v1425 = vld [vmem:[%s167 + $0x2510] sm:$0xff]
        %v1426 = vld [vmem:[%s167 + $0x2518] sm:$0xff]
        %v1427 = vld [vmem:[%s167 + $0x2520] sm:$0xff]
        %v1428 = vld [vmem:[%s167 + $0x2528] sm:$0xff]
        %v1429 = vld [vmem:[%s167 + $0x2530] sm:$0xff]
        %v1430 = vld [vmem:[%s167 + $0x2538] sm:$0xff]
        %v1431 = vld [vmem:[%s167 + $0x2540] sm:$0xff]
        %v1432 = vld [vmem:[%s167 + $0x2548] sm:$0xff]
        %v1433 = vld [vmem:[%s167 + $0x2550] sm:$0xff]
        %v1434 = vld [vmem:[%s167 + $0x2558] sm:$0xff]
        %v1435 = vld [vmem:[%s167 + $0x2560] sm:$0xff]
        %v1436 = vld [vmem:[%s167 + $0x2568] sm:$0xff]
        %v1437 = vld [vmem:[%s167 + $0x2570] sm:$0xff]
        %v1438 = vld [vmem:[%s167 + $0x2578] sm:$0xff]
        %v1439 = vld [vmem:[%s167 + $0x2580] sm:$0xff]
        %v1440 = vld [vmem:[%s167 + $0x2588] sm:$0xff]
        %v1441 = vld [vmem:[%s167 + $0x2590] sm:$0xff]
        %v1442 = vld [vmem:[%s167 + $0x2598] sm:$0xff]
        %v1443 = vld [vmem:[%s167 + $0x25a0] sm:$0xff]
        %v1444 = vld [vmem:[%s167 + $0x25a8] sm:$0xff]
        %v1445 = vld [vmem:[%s167 + $0x25b0] sm:$0xff]
        %v1446 = vld [vmem:[%s167 + $0x25b8] sm:$0xff]
        %v1447 = vld [vmem:[%s167 + $0x25c0] sm:$0xff]
        %v1448 = vld [vmem:[%s167 + $0x25c8] sm:$0xff]
        %v1449 = vld [vmem:[%s167 + $0x25d0] sm:$0xff]
        %v1450 = vld [vmem:[%s167 + $0x25d8] sm:$0xff]
        %v1451 = vld [vmem:[%s167 + $0x25e0] sm:$0xff]
        %v1452 = vld [vmem:[%s167 + $0x25e8] sm:$0xff]
        %v1453 = vld [vmem:[%s167 + $0x25f0] sm:$0xff]
        %v1454 = vld [vmem:[%s167 + $0x25f8] sm:$0xff]
        %v1455 = vld [vmem:[%s167 + $0x2600] sm:$0xff]
        %v1456 = vld [vmem:[%s167 + $0x2608] sm:$0xff]
        %v1457 = vld [vmem:[%s167 + $0x2610] sm:$0xff]
        %v1458 = vld [vmem:[%s167 + $0x2618] sm:$0xff]
        %v1459 = vld [vmem:[%s167 + $0x2620] sm:$0xff]
        %v1460 = vld [vmem:[%s167 + $0x2628] sm:$0xff]
        %v1461 = vld [vmem:[%s167 + $0x2630] sm:$0xff]
        %v1462 = vld [vmem:[%s167 + $0x2638] sm:$0xff]
        %v1463 = vld [vmem:[%s167 + $0x2640] sm:$0xff]
        %v1464 = vld [vmem:[%s167 + $0x2648] sm:$0xff]
        %v1465 = vld [vmem:[%s167 + $0x2650] sm:$0xff]
        %v1466 = vld [vmem:[%s167 + $0x2658] sm:$0xff]
        %v1467 = vld [vmem:[%s167 + $0x2660] sm:$0xff]
        %v1468 = vld [vmem:[%s167 + $0x2668] sm:$0xff]
        %v1469 = vld [vmem:[%s167 + $0x2670] sm:$0xff]
        %v1470 = vld [vmem:[%s167 + $0x2678] sm:$0xff]
        %v1471 = vld [vmem:[%s167 + $0x2680] sm:$0xff]
        %v1472 = vld [vmem:[%s167 + $0x2688] sm:$0xff]
        %v1473 = vld [vmem:[%s167 + $0x2690] sm:$0xff]
        %v1474 = vld [vmem:[%s167 + $0x2698] sm:$0xff]
        %v1475 = vld [vmem:[%s167 + $0x26a0] sm:$0xff]
        %v1476 = vld [vmem:[%s167 + $0x26a8] sm:$0xff]
        %v1477 = vld [vmem:[%s167 + $0x26b0] sm:$0xff]
        %v1478 = vld [vmem:[%s167 + $0x26b8] sm:$0xff]
        %v1479 = vld [vmem:[%s167 + $0x26c0] sm:$0xff]
        %v1480 = vld [vmem:[%s167 + $0x26c8] sm:$0xff]
        %v1481 = vld [vmem:[%s167 + $0x26d0] sm:$0xff]
        %v1482 = vld [vmem:[%s167 + $0x26d8] sm:$0xff]
        %v1483 = vld [vmem:[%s167 + $0x26e0] sm:$0xff]
        %v1484 = vld [vmem:[%s167 + $0x26e8] sm:$0xff]
        %v1485 = vld [vmem:[%s167 + $0x26f0] sm:$0xff]
        %v1486 = vld [vmem:[%s167 + $0x26f8] sm:$0xff]
        %v1487 = vld [vmem:[%s167 + $0x2700] sm:$0xff]
        %v1488 = vld [vmem:[%s167 + $0x2708] sm:$0xff]
        %v1489 = vld [vmem:[%s167 + $0x2710] sm:$0xff]
        %v1490 = vld [vmem:[%s167 + $0x2718] sm:$0xff]
        %v1491 = vld [vmem:[%s167 + $0x2720] sm:$0xff]
        %v1492 = vld [vmem:[%s167 + $0x2728] sm:$0xff]
        %v1493 = vld [vmem:[%s167 + $0x2730] sm:$0xff]
        %v1494 = vld [vmem:[%s167 + $0x2738] sm:$0xff]
        %v1495 = vld [vmem:[%s167 + $0x2740] sm:$0xff]
        %v1496 = vld [vmem:[%s167 + $0x2748] sm:$0xff]
        %v1497 = vld [vmem:[%s167 + $0x2750] sm:$0xff]
        %v1498 = vld [vmem:[%s167 + $0x2758] sm:$0xff]
        %v1499 = vld [vmem:[%s167 + $0x2760] sm:$0xff]
        %v1500 = vld [vmem:[%s167 + $0x2768] sm:$0xff]
        %v1501 = vld [vmem:[%s167 + $0x2770] sm:$0xff]
        %v1502 = vld [vmem:[%s167 + $0x2778] sm:$0xff]
        %v1503 = vld [vmem:[%s167 + $0x2780] sm:$0xff]
        %v1504 = vld [vmem:[%s167 + $0x2788] sm:$0xff]
        %v1505 = vld [vmem:[%s167 + $0x2790] sm:$0xff]
        %v1506 = vld [vmem:[%s167 + $0x2798] sm:$0xff]
        %v1507 = vld [vmem:[%s167 + $0x27a0] sm:$0xff]
        %v1508 = vld [vmem:[%s167 + $0x27a8] sm:$0xff]
        %v1509 = vld [vmem:[%s167 + $0x27b0] sm:$0xff]
        %v1510 = vld [vmem:[%s167 + $0x27b8] sm:$0xff]
        %v1511 = vld [vmem:[%s167 + $0x27c0] sm:$0xff]
        %v1512 = vld [vmem:[%s167 + $0x27c8] sm:$0xff]
        %v1513 = vld [vmem:[%s167 + $0x27d0] sm:$0xff]
        %v1514 = vld [vmem:[%s167 + $0x27d8] sm:$0xff]
        %v1515 = vld [vmem:[%s167 + $0x27e0] sm:$0xff]
        %v1516 = vld [vmem:[%s167 + $0x27e8] sm:$0xff]
        %v1517 = vld [vmem:[%s167 + $0x27f0] sm:$0xff]
        %v1518 = vld [vmem:[%s167 + $0x27f8] sm:$0xff]
        %v1519 = vld [vmem:[%s167 + $0x2800] sm:$0xff]
        %v1520 = vld [vmem:[%s167 + $0x2808] sm:$0xff]
        %v1521 = vld [vmem:[%s167 + $0x2810] sm:$0xff]
        %v1522 = vld [vmem:[%s167 + $0x2818] sm:$0xff]
        %v1523 = vld [vmem:[%s167 + $0x2820] sm:$0xff]
        %v1524 = vld [vmem:[%s167 + $0x2828] sm:$0xff]
        %v1525 = vld [vmem:[%s167 + $0x2830] sm:$0xff]
        %v1526 = vld [vmem:[%s167 + $0x2838] sm:$0xff]
        %v1527 = vld [vmem:[%s167 + $0x2840] sm:$0xff]
        %v1528 = vld [vmem:[%s167 + $0x2848] sm:$0xff]
        %v1529 = vld [vmem:[%s167 + $0x2850] sm:$0xff]
        %v1530 = vld [vmem:[%s167 + $0x2858] sm:$0xff]
        %v1531 = vld [vmem:[%s167 + $0x2860] sm:$0xff]
        %v1532 = vld [vmem:[%s167 + $0x2868] sm:$0xff]
        %v1533 = vld [vmem:[%s167 + $0x2870] sm:$0xff]
        %v1534 = vld [vmem:[%s167 + $0x2878] sm:$0xff]
        %v1535 = vld [vmem:[%s167 + $0x2880] sm:$0xff]
        %v1536 = vld [vmem:[%s167 + $0x2888] sm:$0xff]
        %v1537 = vld [vmem:[%s167 + $0x2890] sm:$0xff]
        %v1538 = vld [vmem:[%s167 + $0x2898] sm:$0xff]
        %v1539 = vld [vmem:[%s167 + $0x28a0] sm:$0xff]
        %v1540 = vld [vmem:[%s167 + $0x28a8] sm:$0xff]
        %v1541 = vld [vmem:[%s167 + $0x28b0] sm:$0xff]
        %v1542 = vld [vmem:[%s167 + $0x28b8] sm:$0xff]
        %v1543 = vld [vmem:[%s167 + $0x28c0] sm:$0xff]
        %v1544 = vld [vmem:[%s167 + $0x28c8] sm:$0xff]
        %v1545 = vld [vmem:[%s167 + $0x28d0] sm:$0xff]
        %v1546 = vld [vmem:[%s167 + $0x28d8] sm:$0xff]
        %v1547 = vld [vmem:[%s167 + $0x28e0] sm:$0xff]
        %v1548 = vld [vmem:[%s167 + $0x28e8] sm:$0xff]
        %v1549 = vld [vmem:[%s167 + $0x28f0] sm:$0xff]
        %v1550 = vld [vmem:[%s167 + $0x28f8] sm:$0xff]
        %v1551 = vld [vmem:[%s167 + $0x2900] sm:$0xff]
        %v1552 = vld [vmem:[%s167 + $0x2908] sm:$0xff]
        %v1553 = vld [vmem:[%s167 + $0x2910] sm:$0xff]
        %v1554 = vld [vmem:[%s167 + $0x2918] sm:$0xff]
        %v1555 = vld [vmem:[%s167 + $0x2920] sm:$0xff]
        %v1556 = vld [vmem:[%s167 + $0x2928] sm:$0xff]
        %v1557 = vld [vmem:[%s167 + $0x2930] sm:$0xff]
        %v1558 = vld [vmem:[%s167 + $0x2938] sm:$0xff]
        %v1559 = vld [vmem:[%s167 + $0x2940] sm:$0xff]
        %v1560 = vld [vmem:[%s167 + $0x2948] sm:$0xff]
        %v1561 = vld [vmem:[%s167 + $0x2950] sm:$0xff]
        %v1562 = vld [vmem:[%s167 + $0x2958] sm:$0xff]
        %v1563 = vld [vmem:[%s167 + $0x2960] sm:$0xff]
        %v1564 = vld [vmem:[%s167 + $0x2968] sm:$0xff]
        %v1565 = vld [vmem:[%s167 + $0x2970] sm:$0xff]
        %v1566 = vld [vmem:[%s167 + $0x2978] sm:$0xff]
        %v1567 = vld [vmem:[%s167 + $0x2980] sm:$0xff]
        %v1568 = vld [vmem:[%s167 + $0x2988] sm:$0xff]
        %v1569 = vld [vmem:[%s167 + $0x2990] sm:$0xff]
        %v1570 = vld [vmem:[%s167 + $0x2998] sm:$0xff]
        %v1571 = vld [vmem:[%s167 + $0x29a0] sm:$0xff]
        %v1572 = vld [vmem:[%s167 + $0x29a8] sm:$0xff]
        %v1573 = vld [vmem:[%s167 + $0x29b0] sm:$0xff]
        %v1574 = vld [vmem:[%s167 + $0x29b8] sm:$0xff]
        %v1575 = vld [vmem:[%s167 + $0x29c0] sm:$0xff]
        %v1576 = vld [vmem:[%s167 + $0x29c8] sm:$0xff]
        %v1577 = vld [vmem:[%s167 + $0x29d0] sm:$0xff]
        %v1578 = vld [vmem:[%s167 + $0x29d8] sm:$0xff]
        %v1579 = vld [vmem:[%s167 + $0x29e0] sm:$0xff]
        %v1580 = vld [vmem:[%s167 + $0x29e8] sm:$0xff]
        %v1581 = vld [vmem:[%s167 + $0x29f0] sm:$0xff]
        %v1582 = vld [vmem:[%s167 + $0x29f8] sm:$0xff]
        %v1583 = vld [vmem:[%s167 + $0x2a00] sm:$0xff]
        %v1584 = vld [vmem:[%s167 + $0x2a08] sm:$0xff]
        %v1585 = vld [vmem:[%s167 + $0x2a10] sm:$0xff]
        %v1586 = vld [vmem:[%s167 + $0x2a18] sm:$0xff]
        %v1587 = vld [vmem:[%s167 + $0x2a20] sm:$0xff]
        %v1588 = vld [vmem:[%s167 + $0x2a28] sm:$0xff]
        %v1589 = vld [vmem:[%s167 + $0x2a30] sm:$0xff]
        %v1590 = vld [vmem:[%s167 + $0x2a38] sm:$0xff]
        %v1591 = vld [vmem:[%s167 + $0x2a40] sm:$0xff]
        %v1592 = vld [vmem:[%s167 + $0x2a48] sm:$0xff]
        %v1593 = vld [vmem:[%s167 + $0x2a50] sm:$0xff]
        %v1594 = vld [vmem:[%s167 + $0x2a58] sm:$0xff]
        %v1595 = vld [vmem:[%s167 + $0x2a60] sm:$0xff]
        %v1596 = vld [vmem:[%s167 + $0x2a68] sm:$0xff]
        %v1597 = vld [vmem:[%s167 + $0x2a70] sm:$0xff]
        %v1598 = vld [vmem:[%s167 + $0x2a78] sm:$0xff]
        %v1599 = vld [vmem:[%s167 + $0x2a80] sm:$0xff]
        %v1600 = vld [vmem:[%s167 + $0x2a88] sm:$0xff]
        %v1601 = vld [vmem:[%s167 + $0x2a90] sm:$0xff]
        %v1602 = vld [vmem:[%s167 + $0x2a98] sm:$0xff]
        %v1603 = vld [vmem:[%s167 + $0x2aa0] sm:$0xff]
        %v1604 = vld [vmem:[%s167 + $0x2aa8] sm:$0xff]
        %v1605 = vld [vmem:[%s167 + $0x2ab0] sm:$0xff]
        %v1606 = vld [vmem:[%s167 + $0x2ab8] sm:$0xff]
        %v1607 = vld [vmem:[%s167 + $0x2ac0] sm:$0xff]
        %v1608 = vld [vmem:[%s167 + $0x2ac8] sm:$0xff]
        %v1609 = vld [vmem:[%s167 + $0x2ad0] sm:$0xff]
        %v1610 = vld [vmem:[%s167 + $0x2ad8] sm:$0xff]
        %v1611 = vld [vmem:[%s167 + $0x2ae0] sm:$0xff]
        %v1612 = vld [vmem:[%s167 + $0x2ae8] sm:$0xff]
        %v1613 = vld [vmem:[%s167 + $0x2af0] sm:$0xff]
        %v1614 = vld [vmem:[%s167 + $0x2af8] sm:$0xff]
        %v1615 = vld [vmem:[%s167 + $0x2b00] sm:$0xff]
        %v1616 = vld [vmem:[%s167 + $0x2b08] sm:$0xff]
        %v1617 = vld [vmem:[%s167 + $0x2b10] sm:$0xff]
        %v1618 = vld [vmem:[%s167 + $0x2b18] sm:$0xff]
        %v1619 = vld [vmem:[%s167 + $0x2b20] sm:$0xff]
        %v1620 = vld [vmem:[%s167 + $0x2b28] sm:$0xff]
        %v1621 = vld [vmem:[%s167 + $0x2b30] sm:$0xff]
        %v1622 = vld [vmem:[%s167 + $0x2b38] sm:$0xff]
        %v1623 = vld [vmem:[%s167 + $0x2b40] sm:$0xff]
        %v1624 = vld [vmem:[%s167 + $0x2b48] sm:$0xff]
        %v1625 = vld [vmem:[%s167 + $0x2b50] sm:$0xff]
        %v1626 = vld [vmem:[%s167 + $0x2b58] sm:$0xff]
        %v1627 = vld [vmem:[%s167 + $0x2b60] sm:$0xff]
        %v1628 = vld [vmem:[%s167 + $0x2b68] sm:$0xff]
        %v1629 = vld [vmem:[%s167 + $0x2b70] sm:$0xff]
        %v1630 = vld [vmem:[%s167 + $0x2b78] sm:$0xff]
        %v1631 = vld [vmem:[%s167 + $0x2b80] sm:$0xff]
        %v1632 = vld [vmem:[%s167 + $0x2b88] sm:$0xff]
        %v1633 = vld [vmem:[%s167 + $0x2b90] sm:$0xff]
        %v1634 = vld [vmem:[%s167 + $0x2b98] sm:$0xff]
        %v1635 = vld [vmem:[%s167 + $0x2ba0] sm:$0xff]
        %v1636 = vld [vmem:[%s167 + $0x2ba8] sm:$0xff]
        %v1637 = vld [vmem:[%s167 + $0x2bb0] sm:$0xff]
        %v1638 = vld [vmem:[%s167 + $0x2bb8] sm:$0xff]
        %v1639 = vld [vmem:[%s167 + $0x2bc0] sm:$0xff]
        %v1640 = vld [vmem:[%s167 + $0x2bc8] sm:$0xff]
        %v1641 = vld [vmem:[%s167 + $0x2bd0] sm:$0xff]
        %v1642 = vld [vmem:[%s167 + $0x2bd8] sm:$0xff]
        %v1643 = vld [vmem:[%s167 + $0x2be0] sm:$0xff]
        %v1644 = vld [vmem:[%s167 + $0x2be8] sm:$0xff]
        %v1645 = vld [vmem:[%s167 + $0x2bf0] sm:$0xff]
        %v1646 = vld [vmem:[%s167 + $0x2bf8] sm:$0xff]
        %v1647 = vld [vmem:[%s167 + $0x2c00] sm:$0xff]
        %v1648 = vld [vmem:[%s167 + $0x2c08] sm:$0xff]
        %v1649 = vld [vmem:[%s167 + $0x2c10] sm:$0xff]
        %v1650 = vld [vmem:[%s167 + $0x2c18] sm:$0xff]
        %v1651 = vld [vmem:[%s167 + $0x2c20] sm:$0xff]
        %v1652 = vld [vmem:[%s167 + $0x2c28] sm:$0xff]
        %v1653 = vld [vmem:[%s167 + $0x2c30] sm:$0xff]
        %v1654 = vld [vmem:[%s167 + $0x2c38] sm:$0xff]
        %v1655 = vld [vmem:[%s167 + $0x2c40] sm:$0xff]
        %v1656 = vld [vmem:[%s167 + $0x2c48] sm:$0xff]
        %v1657 = vld [vmem:[%s167 + $0x2c50] sm:$0xff]
        %v1658 = vld [vmem:[%s167 + $0x2c58] sm:$0xff]
        %v1659 = vld [vmem:[%s167 + $0x2c60] sm:$0xff]
        %v1660 = vld [vmem:[%s167 + $0x2c68] sm:$0xff]
        %v1661 = vld [vmem:[%s167 + $0x2c70] sm:$0xff]
        %v1662 = vld [vmem:[%s167 + $0x2c78] sm:$0xff]
        %v1663 = vld [vmem:[%s167 + $0x2c80] sm:$0xff]
        %v1664 = vld [vmem:[%s167 + $0x2c88] sm:$0xff]
        %v1665 = vld [vmem:[%s167 + $0x2c90] sm:$0xff]
        %v1666 = vld [vmem:[%s167 + $0x2c98] sm:$0xff]
        %v1667 = vld [vmem:[%s167 + $0x2ca0] sm:$0xff]
        %v1668 = vld [vmem:[%s167 + $0x2ca8] sm:$0xff]
        %v1669 = vld [vmem:[%s167 + $0x2cb0] sm:$0xff]
        %v1670 = vld [vmem:[%s167 + $0x2cb8] sm:$0xff]
        %v1671 = vld [vmem:[%s167 + $0x2cc0] sm:$0xff]
        %v1672 = vld [vmem:[%s167 + $0x2cc8] sm:$0xff]
        %v1673 = vld [vmem:[%s167 + $0x2cd0] sm:$0xff]
        %v1674 = vld [vmem:[%s167 + $0x2cd8] sm:$0xff]
        %v1675 = vld [vmem:[%s167 + $0x2ce0] sm:$0xff]
        %v1676 = vld [vmem:[%s167 + $0x2ce8] sm:$0xff]
        %v1677 = vld [vmem:[%s167 + $0x2cf0] sm:$0xff]
        %v1678 = vld [vmem:[%s167 + $0x2cf8] sm:$0xff]
        %v1679 = vld [vmem:[%s167 + $0x2d00] sm:$0xff]
        %v1680 = vld [vmem:[%s167 + $0x2d08] sm:$0xff]
        %v1681 = vld [vmem:[%s167 + $0x2d10] sm:$0xff]
        %v1682 = vld [vmem:[%s167 + $0x2d18] sm:$0xff]
        %v1683 = vld [vmem:[%s167 + $0x2d20] sm:$0xff]
        %v1684 = vld [vmem:[%s167 + $0x2d28] sm:$0xff]
        %v1685 = vld [vmem:[%s167 + $0x2d30] sm:$0xff]
        %v1686 = vld [vmem:[%s167 + $0x2d38] sm:$0xff]
        %v1687 = vld [vmem:[%s167 + $0x2d40] sm:$0xff]
        %v1688 = vld [vmem:[%s167 + $0x2d48] sm:$0xff]
        %v1689 = vld [vmem:[%s167 + $0x2d50] sm:$0xff]
        %v1690 = vld [vmem:[%s167 + $0x2d58] sm:$0xff]
        %v1691 = vld [vmem:[%s167 + $0x2d60] sm:$0xff]
        %v1692 = vld [vmem:[%s167 + $0x2d68] sm:$0xff]
        %v1693 = vld [vmem:[%s167 + $0x2d70] sm:$0xff]
        %v1694 = vld [vmem:[%s167 + $0x2d78] sm:$0xff]
        %v1695 = vld [vmem:[%s167 + $0x2d80] sm:$0xff]
        %v1696 = vld [vmem:[%s167 + $0x2d88] sm:$0xff]
        %v1697 = vld [vmem:[%s167 + $0x2d90] sm:$0xff]
        %v1698 = vld [vmem:[%s167 + $0x2d98] sm:$0xff]
        %v1699 = vld [vmem:[%s167 + $0x2da0] sm:$0xff]
        %v1700 = vld [vmem:[%s167 + $0x2da8] sm:$0xff]
        %v1701 = vld [vmem:[%s167 + $0x2db0] sm:$0xff]
        %v1702 = vld [vmem:[%s167 + $0x2db8] sm:$0xff]
        %v1703 = vld [vmem:[%s167 + $0x2dc0] sm:$0xff]
        %v1704 = vld [vmem:[%s167 + $0x2dc8] sm:$0xff]
        %v1705 = vld [vmem:[%s167 + $0x2dd0] sm:$0xff]
        %v1706 = vld [vmem:[%s167 + $0x2dd8] sm:$0xff]
        %v1707 = vld [vmem:[%s167 + $0x2de0] sm:$0xff]
        %v1708 = vld [vmem:[%s167 + $0x2de8] sm:$0xff]
        %v1709 = vld [vmem:[%s167 + $0x2df0] sm:$0xff]
        %v1710 = vld [vmem:[%s167 + $0x2df8] sm:$0xff]
        %v1711 = vld [vmem:[%s167 + $0x2e00] sm:$0xff]
        %v1712 = vld [vmem:[%s167 + $0x2e08] sm:$0xff]
        %v1713 = vld [vmem:[%s167 + $0x2e10] sm:$0xff]
        %v1714 = vld [vmem:[%s167 + $0x2e18] sm:$0xff]
        %v1715 = vld [vmem:[%s167 + $0x2e20] sm:$0xff]
        %v1716 = vld [vmem:[%s167 + $0x2e28] sm:$0xff]
        %v1717 = vld [vmem:[%s167 + $0x2e30] sm:$0xff]
        %v1718 = vld [vmem:[%s167 + $0x2e38] sm:$0xff]
        %v1719 = vld [vmem:[%s167 + $0x2e40] sm:$0xff]
        %v1720 = vld [vmem:[%s167 + $0x2e48] sm:$0xff]
        %v1721 = vld [vmem:[%s167 + $0x2e50] sm:$0xff]
        %v1722 = vld [vmem:[%s167 + $0x2e58] sm:$0xff]
        %v1723 = vld [vmem:[%s167 + $0x2e60] sm:$0xff]
        %v1724 = vld [vmem:[%s167 + $0x2e68] sm:$0xff]
        %v1725 = vld [vmem:[%s167 + $0x2e70] sm:$0xff]
        %v1726 = vld [vmem:[%s167 + $0x2e78] sm:$0xff]
        %v1727 = vld [vmem:[%s167 + $0x2e80] sm:$0xff]
        %v1728 = vld [vmem:[%s167 + $0x2e88] sm:$0xff]
        %v1729 = vld [vmem:[%s167 + $0x2e90] sm:$0xff]
        %v1730 = vld [vmem:[%s167 + $0x2e98] sm:$0xff]
        %v1731 = vld [vmem:[%s167 + $0x2ea0] sm:$0xff]
        %v1732 = vld [vmem:[%s167 + $0x2ea8] sm:$0xff]
        %v1733 = vld [vmem:[%s167 + $0x2eb0] sm:$0xff]
        %v1734 = vld [vmem:[%s167 + $0x2eb8] sm:$0xff]
        %v1735 = vld [vmem:[%s167 + $0x2ec0] sm:$0xff]
        %v1736 = vld [vmem:[%s167 + $0x2ec8] sm:$0xff]
        %v1737 = vld [vmem:[%s167 + $0x2ed0] sm:$0xff]
        %v1738 = vld [vmem:[%s167 + $0x2ed8] sm:$0xff]
        %v1739 = vld [vmem:[%s167 + $0x2ee0] sm:$0xff]
        %v1740 = vld [vmem:[%s167 + $0x2ee8] sm:$0xff]
        %v1741 = vld [vmem:[%s167 + $0x2ef0] sm:$0xff]
        %v1742 = vld [vmem:[%s167 + $0x2ef8] sm:$0xff]
        %v1743 = vld [vmem:[%s167 + $0x2f00] sm:$0xff]
        %v1744 = vld [vmem:[%s167 + $0x2f08] sm:$0xff]
        %v1745 = vld [vmem:[%s167 + $0x2f10] sm:$0xff]
        %v1746 = vld [vmem:[%s167 + $0x2f18] sm:$0xff]
        %v1747 = vld [vmem:[%s167 + $0x2f20] sm:$0xff]
        %v1748 = vld [vmem:[%s167 + $0x2f28] sm:$0xff]
        %v1749 = vld [vmem:[%s167 + $0x2f30] sm:$0xff]
        %v1750 = vld [vmem:[%s167 + $0x2f38] sm:$0xff]
        %v1751 = vld [vmem:[%s167 + $0x2f40] sm:$0xff]
        %v1752 = vld [vmem:[%s167 + $0x2f48] sm:$0xff]
        %v1753 = vld [vmem:[%s167 + $0x2f50] sm:$0xff]
        %v1754 = vld [vmem:[%s167 + $0x2f58] sm:$0xff]
        %v1755 = vld [vmem:[%s167 + $0x2f60] sm:$0xff]
        %v1756 = vld [vmem:[%s167 + $0x2f68] sm:$0xff]
        %v1757 = vld [vmem:[%s167 + $0x2f70] sm:$0xff]
        %v1758 = vld [vmem:[%s167 + $0x2f78] sm:$0xff]
        %v1759 = vld [vmem:[%s167 + $0x2f80] sm:$0xff]
        %v1760 = vld [vmem:[%s167 + $0x2f88] sm:$0xff]
        %v1761 = vld [vmem:[%s167 + $0x2f90] sm:$0xff]
        %v1762 = vld [vmem:[%s167 + $0x2f98] sm:$0xff]
        %v1763 = vld [vmem:[%s167 + $0x2fa0] sm:$0xff]
        %v1764 = vld [vmem:[%s167 + $0x2fa8] sm:$0xff]
        %v1765 = vld [vmem:[%s167 + $0x2fb0] sm:$0xff]
        %v1766 = vld [vmem:[%s167 + $0x2fb8] sm:$0xff]
        %v1767 = vld [vmem:[%s167 + $0x2fc0] sm:$0xff]
        %v1768 = vld [vmem:[%s167 + $0x2fc8] sm:$0xff]
        %v1769 = vld [vmem:[%s167 + $0x2fd0] sm:$0xff]
        %v1770 = vld [vmem:[%s167 + $0x2fd8] sm:$0xff]
        %v1771 = vld [vmem:[%s167 + $0x2fe0] sm:$0xff]
        %v1772 = vld [vmem:[%s167 + $0x2fe8] sm:$0xff]
        %v1773 = vld [vmem:[%s167 + $0x2ff0] sm:$0xff]
        %v1774 = vld [vmem:[%s167 + $0x2ff8] sm:$0xff]
        %v1775 = vld [vmem:[%s167 + $0x3000] sm:$0xff]
        %v1776 = vld [vmem:[%s167 + $0x3008] sm:$0xff]
        %v1777 = vld [vmem:[%s167 + $0x3010] sm:$0xff]
        %v1778 = vld [vmem:[%s167 + $0x3018] sm:$0xff]
        %v1779 = vld [vmem:[%s167 + $0x3020] sm:$0xff]
        %v1780 = vld [vmem:[%s167 + $0x3028] sm:$0xff]
        %v1781 = vld [vmem:[%s167 + $0x3030] sm:$0xff]
        %v1782 = vld [vmem:[%s167 + $0x3038] sm:$0xff]
        %v1783 = vld [vmem:[%s167 + $0x3040] sm:$0xff]
        %v1784 = vld [vmem:[%s167 + $0x3048] sm:$0xff]
        %v1785 = vld [vmem:[%s167 + $0x3050] sm:$0xff]
        %v1786 = vld [vmem:[%s167 + $0x3058] sm:$0xff]
        %v1787 = vld [vmem:[%s167 + $0x3060] sm:$0xff]
        %v1788 = vld [vmem:[%s167 + $0x3068] sm:$0xff]
        %v1789 = vld [vmem:[%s167 + $0x3070] sm:$0xff]
        %v1790 = vld [vmem:[%s167 + $0x3078] sm:$0xff]
        %v1791 = vld [vmem:[%s167 + $0x3080] sm:$0xff]
        %v1792 = vld [vmem:[%s167 + $0x3088] sm:$0xff]
        %v1793 = vld [vmem:[%s167 + $0x3090] sm:$0xff]
        %v1794 = vld [vmem:[%s167 + $0x3098] sm:$0xff]
        %v1795 = vld [vmem:[%s167 + $0x30a0] sm:$0xff]
        %v1796 = vld [vmem:[%s167 + $0x30a8] sm:$0xff]
        %v1797 = vld [vmem:[%s167 + $0x30b0] sm:$0xff]
        %v1798 = vld [vmem:[%s167 + $0x30b8] sm:$0xff]
        %v1799 = vld [vmem:[%s167 + $0x30c0] sm:$0xff]
        %v1800 = vld [vmem:[%s167 + $0x30c8] sm:$0xff]
        %v1801 = vld [vmem:[%s167 + $0x30d0] sm:$0xff]
        %v1802 = vld [vmem:[%s167 + $0x30d8] sm:$0xff]
        %v1803 = vld [vmem:[%s167 + $0x30e0] sm:$0xff]
        %v1804 = vld [vmem:[%s167 + $0x30e8] sm:$0xff]
        %v1805 = vld [vmem:[%s167 + $0x30f0] sm:$0xff]
        %v1806 = vld [vmem:[%s167 + $0x30f8] sm:$0xff]
        %1808 = vst [vmem:[#allocation1] ss:$4 sm:$0xff] %v214
        %s1810 = scalar_lea.vmem [#allocation1], 32
        %1811 = vst [vmem:[%s1810] ss:$4 sm:$0xff] %v215
        %v1812 = vld.sshfl [vmem:[#allocation1] sm:$0xff pattern:$0x73625140]
        %v1813 = vld.sshfl [vmem:[#allocation1 + $0x8] sm:$0xff pattern:$0x73625140]
        %v1814 = vld.sshfl [vmem:[#allocation1 + $0x10] sm:$0xff pattern:$0x73625140]
        %v1815 = vld.sshfl [vmem:[#allocation1 + $0x18] sm:$0xff pattern:$0x73625140]
        %v1816 = vld.sshfl [vmem:[#allocation1 + $0x20] sm:$0xff pattern:$0x73625140]
        %v1817 = vld.sshfl [vmem:[#allocation1 + $0x28] sm:$0xff pattern:$0x73625140]
        %v1818 = vld.sshfl [vmem:[#allocation1 + $0x30] sm:$0xff pattern:$0x73625140]
        %v1819 = vld.sshfl [vmem:[#allocation1 + $0x38] sm:$0xff pattern:$0x73625140]
        %1821 = vst [vmem:[#allocation1] ss:$4 sm:$0xff] %v216
        %1823 = vst [vmem:[%s1810] ss:$4 sm:$0xff] %v217
        %v1824 = vld.sshfl [vmem:[#allocation1] sm:$0xff pattern:$0x73625140]
        %v1825 = vld.sshfl [vmem:[#allocation1 + $0x8] sm:$0xff pattern:$0x73625140]
        %v1826 = vld.sshfl [vmem:[#allocation1 + $0x10] sm:$0xff pattern:$0x73625140]
        %v1827 = vld.sshfl [vmem:[#allocation1 + $0x18] sm:$0xff pattern:$0x73625140]
        %v1828 = vld.sshfl [vmem:[#allocation1 + $0x20] sm:$0xff pattern:$0x73625140]
        %v1829 = vld.sshfl [vmem:[#allocation1 + $0x28] sm:$0xff pattern:$0x73625140]
        %v1830 = vld.sshfl [vmem:[#allocation1 + $0x30] sm:$0xff pattern:$0x73625140]
        %v1831 = vld.sshfl [vmem:[#allocation1 + $0x38] sm:$0xff pattern:$0x73625140]
        %1833 = vst [vmem:[#allocation1] ss:$4 sm:$0xff] %v218
        %1835 = vst [vmem:[%s1810] ss:$4 sm:$0xff] %v219
        %v1836 = vld.sshfl [vmem:[#allocation1] sm:$0xff pattern:$0x73625140]
        %v1837 = vld.sshfl [vmem:[#allocation1 + $0x8] sm:$0xff pattern:$0x73625140]
        %v1838 = vld.sshfl [vmem:[#allocation1 + $0x10] sm:$0xff pattern:$0x73625140]
        %v1839 = vld.sshfl [vmem:[#allocation1 + $0x18] sm:$0xff pattern:$0x73625140]
        %v1840 = vld.sshfl [vmem:[#allocation1 + $0x20] sm:$0xff pattern:$0x73625140]
        %v1841 = vld.sshfl [vmem:[#allocation1 + $0x28] sm:$0xff pattern:$0x73625140]
        %v1842 = vld.sshfl [vmem:[#allocation1 + $0x30] sm:$0xff pattern:$0x73625140]
        %v1843 = vld.sshfl [vmem:[#allocation1 + $0x38] sm:$0xff pattern:$0x73625140]
        %1845 = vst [vmem:[#allocation1] ss:$4 sm:$0xff] %v220
        %1847 = vst [vmem:[%s1810] ss:$4 sm:$0xff] %v221
        %v1848 = vld.sshfl [vmem:[#allocation1] sm:$0xff pattern:$0x73625140]
        %v1849 = vld.sshfl [vmem:[#allocation1 + $0x8] sm:$0xff pattern:$0x73625140]
        %v1850 = vld.sshfl [vmem:[#allocation1 + $0x10] sm:$0xff pattern:$0x73625140]
        %v1851 = vld.sshfl [vmem:[#allocation1 + $0x18] sm:$0xff pattern:$0x73625140]
        %v1852 = vld.sshfl [vmem:[#allocation1 + $0x20] sm:$0xff pattern:$0x73625140]
        %v1853 = vld.sshfl [vmem:[#allocation1 + $0x28] sm:$0xff pattern:$0x73625140]
        %v1854 = vld.sshfl [vmem:[#allocation1 + $0x30] sm:$0xff pattern:$0x73625140]
        %v1855 = vld.sshfl [vmem:[#allocation1 + $0x38] sm:$0xff pattern:$0x73625140]
        %1857 = vst [vmem:[#allocation1] ss:$4 sm:$0xff] %v222
        %1859 = vst [vmem:[%s1810] ss:$4 sm:$0xff] %v223
        %v1860 = vld.sshfl [vmem:[#allocation1] sm:$0xff pattern:$0x73625140]
        %v1861 = vld.sshfl [vmem:[#allocation1 + $0x8] sm:$0xff pattern:$0x73625140]
        %v1862 = vld.sshfl [vmem:[#allocation1 + $0x10] sm:$0xff pattern:$0x73625140]
        %v1863 = vld.sshfl [vmem:[#allocation1 + $0x18] sm:$0xff pattern:$0x73625140]
        %v1864 = vld.sshfl [vmem:[#allocation1 + $0x20] sm:$0xff pattern:$0x73625140]
        %v1865 = vld.sshfl [vmem:[#allocation1 + $0x28] sm:$0xff pattern:$0x73625140]
        %v1866 = vld.sshfl [vmem:[#allocation1 + $0x30] sm:$0xff pattern:$0x73625140]
        %v1867 = vld.sshfl [vmem:[#allocation1 + $0x38] sm:$0xff pattern:$0x73625140]
        %1869 = vst [vmem:[#allocation1] ss:$4 sm:$0xff] %v224
        %1871 = vst [vmem:[%s1810] ss:$4 sm:$0xff] %v225
        %v1872 = vld.sshfl [vmem:[#allocation1] sm:$0xff pattern:$0x73625140]
        %v1873 = vld.sshfl [vmem:[#allocation1 + $0x8] sm:$0xff pattern:$0x73625140]
        %v1874 = vld.sshfl [vmem:[#allocation1 + $0x10] sm:$0xff pattern:$0x73625140]
        %v1875 = vld.sshfl [vmem:[#allocation1 + $0x18] sm:$0xff pattern:$0x73625140]
        %v1876 = vld.sshfl [vmem:[#allocation1 + $0x20] sm:$0xff pattern:$0x73625140]
        %v1877 = vld.sshfl [vmem:[#allocation1 + $0x28] sm:$0xff pattern:$0x73625140]
        %v1878 = vld.sshfl [vmem:[#allocation1 + $0x30] sm:$0xff pattern:$0x73625140]
        %v1879 = vld.sshfl [vmem:[#allocation1 + $0x38] sm:$0xff pattern:$0x73625140]
        %1881 = vst [vmem:[#allocation1] ss:$4 sm:$0xff] %v226
        %1883 = vst [vmem:[%s1810] ss:$4 sm:$0xff] %v227
        %v1884 = vld.sshfl [vmem:[#allocation1] sm:$0xff pattern:$0x73625140]
        %v1885 = vld.sshfl [vmem:[#allocation1 + $0x8] sm:$0xff pattern:$0x73625140]
        %v1886 = vld.sshfl [vmem:[#allocation1 + $0x10] sm:$0xff pattern:$0x73625140]
        %v1887 = vld.sshfl [vmem:[#allocation1 + $0x18] sm:$0xff pattern:$0x73625140]
        %v1888 = vld.sshfl [vmem:[#allocation1 + $0x20] sm:$0xff pattern:$0x73625140]
        %v1889 = vld.sshfl [vmem:[#allocation1 + $0x28] sm:$0xff pattern:$0x73625140]
        %v1890 = vld.sshfl [vmem:[#allocation1 + $0x30] sm:$0xff pattern:$0x73625140]
        %v1891 = vld.sshfl [vmem:[#allocation1 + $0x38] sm:$0xff pattern:$0x73625140]
        %1893 = vst [vmem:[#allocation1] ss:$4 sm:$0xff] %v228
        %1895 = vst [vmem:[%s1810] ss:$4 sm:$0xff] %v229
        %v1896 = vld.sshfl [vmem:[#allocation1] sm:$0xff pattern:$0x73625140]
        %v1897 = vld.sshfl [vmem:[#allocation1 + $0x8] sm:$0xff pattern:$0x73625140]
        %v1898 = vld.sshfl [vmem:[#allocation1 + $0x10] sm:$0xff pattern:$0x73625140]
        %v1899 = vld.sshfl [vmem:[#allocation1 + $0x18] sm:$0xff pattern:$0x73625140]
        %v1900 = vld.sshfl [vmem:[#allocation1 + $0x20] sm:$0xff pattern:$0x73625140]
        %v1901 = vld.sshfl [vmem:[#allocation1 + $0x28] sm:$0xff pattern:$0x73625140]
        %v1902 = vld.sshfl [vmem:[#allocation1 + $0x30] sm:$0xff pattern:$0x73625140]
        %v1903 = vld.sshfl [vmem:[#allocation1 + $0x38] sm:$0xff pattern:$0x73625140]
        %1905 = vst [vmem:[#allocation1] ss:$4 sm:$0xff] %v230
        %1907 = vst [vmem:[%s1810] ss:$4 sm:$0xff] %v231
        %v1908 = vld.sshfl [vmem:[#allocation1] sm:$0xff pattern:$0x73625140]
        %v1909 = vld.sshfl [vmem:[#allocation1 + $0x8] sm:$0xff pattern:$0x73625140]
        %v1910 = vld.sshfl [vmem:[#allocation1 + $0x10] sm:$0xff pattern:$0x73625140]
        %v1911 = vld.sshfl [vmem:[#allocation1 + $0x18] sm:$0xff pattern:$0x73625140]
        %v1912 = vld.sshfl [vmem:[#allocation1 + $0x20] sm:$0xff pattern:$0x73625140]
        %v1913 = vld.sshfl [vmem:[#allocation1 + $0x28] sm:$0xff pattern:$0x73625140]
        %v1914 = vld.sshfl [vmem:[#allocation1 + $0x30] sm:$0xff pattern:$0x73625140]
        %v1915 = vld.sshfl [vmem:[#allocation1 + $0x38] sm:$0xff pattern:$0x73625140]
        %1917 = vst [vmem:[#allocation1] ss:$4 sm:$0xff] %v232
        %1919 = vst [vmem:[%s1810] ss:$4 sm:$0xff] %v233
        %v1920 = vld.sshfl [vmem:[#allocation1] sm:$0xff pattern:$0x73625140]
        %v1921 = vld.sshfl [vmem:[#allocation1 + $0x8] sm:$0xff pattern:$0x73625140]
        %v1922 = vld.sshfl [vmem:[#allocation1 + $0x10] sm:$0xff pattern:$0x73625140]
        %v1923 = vld.sshfl [vmem:[#allocation1 + $0x18] sm:$0xff pattern:$0x73625140]
        %v1924 = vld.sshfl [vmem:[#allocation1 + $0x20] sm:$0xff pattern:$0x73625140]
        %v1925 = vld.sshfl [vmem:[#allocation1 + $0x28] sm:$0xff pattern:$0x73625140]
        %v1926 = vld.sshfl [vmem:[#allocation1 + $0x30] sm:$0xff pattern:$0x73625140]
        %v1927 = vld.sshfl [vmem:[#allocation1 + $0x38] sm:$0xff pattern:$0x73625140]
        %1929 = vst [vmem:[#allocation1] ss:$4 sm:$0xff] %v234
        %1931 = vst [vmem:[%s1810] ss:$4 sm:$0xff] %v235
        %v1932 = vld.sshfl [vmem:[#allocation1] sm:$0xff pattern:$0x73625140]
        %v1933 = vld.sshfl [vmem:[#allocation1 + $0x8] sm:$0xff pattern:$0x73625140]
        %v1934 = vld.sshfl [vmem:[#allocation1 + $0x10] sm:$0xff pattern:$0x73625140]
        %v1935 = vld.sshfl [vmem:[#allocation1 + $0x18] sm:$0xff pattern:$0x73625140]
        %v1936 = vld.sshfl [vmem:[#allocation1 + $0x20] sm:$0xff pattern:$0x73625140]
        %v1937 = vld.sshfl [vmem:[#allocation1 + $0x28] sm:$0xff pattern:$0x73625140]
        %v1938 = vld.sshfl [vmem:[#allocation1 + $0x30] sm:$0xff pattern:$0x73625140]
        %v1939 = vld.sshfl [vmem:[#allocation1 + $0x38] sm:$0xff pattern:$0x73625140]
        %1941 = vst [vmem:[#allocation1] ss:$4 sm:$0xff] %v236
        %1943 = vst [vmem:[%s1810] ss:$4 sm:$0xff] %v237
        %v1944 = vld.sshfl [vmem:[#allocation1] sm:$0xff pattern:$0x73625140]
        %v1945 = vld.sshfl [vmem:[#allocation1 + $0x8] sm:$0xff pattern:$0x73625140]
        %v1946 = vld.sshfl [vmem:[#allocation1 + $0x10] sm:$0xff pattern:$0x73625140]
        %v1947 = vld.sshfl [vmem:[#allocation1 + $0x18] sm:$0xff pattern:$0x73625140]
        %v1948 = vld.sshfl [vmem:[#allocation1 + $0x20] sm:$0xff pattern:$0x73625140]
        %v1949 = vld.sshfl [vmem:[#allocation1 + $0x28] sm:$0xff pattern:$0x73625140]
        %v1950 = vld.sshfl [vmem:[#allocation1 + $0x30] sm:$0xff pattern:$0x73625140]
        %v1951 = vld.sshfl [vmem:[#allocation1 + $0x38] sm:$0xff pattern:$0x73625140]
        %1953 = vst [vmem:[#allocation1] ss:$4 sm:$0xff] %v238
        %v1954 = vld.sshfl [vmem:[#allocation1] sm:$0xff pattern:$0x73625140]
        %v1955 = vld.sshfl [vmem:[#allocation1 + $0x8] sm:$0xff pattern:$0x73625140]
        %v3622 = vunpack.c.l.b16 %v239
        %v3623 = vunpack.c.h.b16 %v239
        %v3624 = vunpack.c.l.b16 %v240
        %v3625 = vunpack.c.h.b16 %v240
        %v3626 = vunpack.c.l.b16 %v241
        %v3627 = vunpack.c.h.b16 %v241
        %v3628 = vunpack.c.l.b16 %v242
        %v3629 = vunpack.c.h.b16 %v242
        %v3630 = vunpack.c.l.b16 %v243
        %v3631 = vunpack.c.h.b16 %v243
        %v3632 = vunpack.c.l.b16 %v244
        %v3633 = vunpack.c.h.b16 %v244
        %v3634 = vunpack.c.l.b16 %v245
        %v3635 = vunpack.c.h.b16 %v245
        %v3636 = vunpack.c.l.b16 %v246
        %v3637 = vunpack.c.h.b16 %v246
        %v3638 = vunpack.c.l.b16 %v247
        %v3639 = vunpack.c.h.b16 %v247
        %v3640 = vunpack.c.l.b16 %v248
        %v3641 = vunpack.c.h.b16 %v248
        %v3642 = vunpack.c.l.b16 %v249
        %v3643 = vunpack.c.h.b16 %v249
        %v3644 = vunpack.c.l.b16 %v250
        %v3645 = vunpack.c.h.b16 %v250
        %v3646 = vunpack.c.l.b16 %v251
        %v3647 = vunpack.c.h.b16 %v251
        %v3648 = vunpack.c.l.b16 %v252
        %v3649 = vunpack.c.h.b16 %v252
        %v3650 = vunpack.c.l.b16 %v253
        %v3651 = vunpack.c.h.b16 %v253
        %v3652 = vunpack.c.l.b16 %v254
        %v3653 = vunpack.c.h.b16 %v254
        %v3654 = vunpack.c.l.b16 %v255
        %v3655 = vunpack.c.h.b16 %v255
        %v3656 = vunpack.c.l.b16 %v256
        %v3657 = vunpack.c.h.b16 %v256
        %v3658 = vunpack.c.l.b16 %v257
        %v3659 = vunpack.c.h.b16 %v257
        %v3660 = vunpack.c.l.b16 %v258
        %v3661 = vunpack.c.h.b16 %v258
        %v3662 = vunpack.c.l.b16 %v259
        %v3663 = vunpack.c.h.b16 %v259
        %v3664 = vunpack.c.l.b16 %v260
        %v3665 = vunpack.c.h.b16 %v260
        %v3666 = vunpack.c.l.b16 %v261
        %v3667 = vunpack.c.h.b16 %v261
        %v3668 = vunpack.c.l.b16 %v262
        %v3669 = vunpack.c.h.b16 %v262
        %v3670 = vunpack.c.l.b16 %v263
        %v3671 = vunpack.c.h.b16 %v263
        %v3672 = vunpack.c.l.b16 %v264
        %v3673 = vunpack.c.h.b16 %v264
        %v3674 = vunpack.c.l.b16 %v265
        %v3675 = vunpack.c.h.b16 %v265
        %v3676 = vunpack.c.l.b16 %v266
        %v3677 = vunpack.c.h.b16 %v266
        %v3678 = vunpack.c.l.b16 %v267
        %v3679 = vunpack.c.h.b16 %v267
        %v3680 = vunpack.c.l.b16 %v268
        %v3681 = vunpack.c.h.b16 %v268
        %v3682 = vunpack.c.l.b16 %v269
        %v3683 = vunpack.c.h.b16 %v269
        %v3684 = vunpack.c.l.b16 %v270
        %v3685 = vunpack.c.h.b16 %v270
        %v3686 = vunpack.c.l.b16 %v271
        %v3687 = vunpack.c.h.b16 %v271
        %v3688 = vunpack.c.l.b16 %v272
        %v3689 = vunpack.c.h.b16 %v272
        %v3690 = vunpack.c.l.b16 %v273
        %v3691 = vunpack.c.h.b16 %v273
        %v3692 = vunpack.c.l.b16 %v274
        %v3693 = vunpack.c.h.b16 %v274
        %v3694 = vunpack.c.l.b16 %v275
        %v3695 = vunpack.c.h.b16 %v275
        %v3696 = vunpack.c.l.b16 %v276
        %v3697 = vunpack.c.h.b16 %v276
        %v3698 = vunpack.c.l.b16 %v277
        %v3699 = vunpack.c.h.b16 %v277
        %v3700 = vunpack.c.l.b16 %v278
        %v3701 = vunpack.c.h.b16 %v278
        %v3702 = vunpack.c.l.b16 %v279
        %v3703 = vunpack.c.h.b16 %v279
        %v3704 = vunpack.c.l.b16 %v280
        %v3705 = vunpack.c.h.b16 %v280
        %v3706 = vunpack.c.l.b16 %v281
        %v3707 = vunpack.c.h.b16 %v281
        %v3708 = vunpack.c.l.b16 %v282
        %v3709 = vunpack.c.h.b16 %v282
        %v3710 = vunpack.c.l.b16 %v283
        %v3711 = vunpack.c.h.b16 %v283
        %v3712 = vunpack.c.l.b16 %v284
        %v3713 = vunpack.c.h.b16 %v284
        %v3714 = vunpack.c.l.b16 %v285
        %v3715 = vunpack.c.h.b16 %v285
        %v3716 = vunpack.c.l.b16 %v286
        %v3717 = vunpack.c.h.b16 %v286
        %v3718 = vunpack.c.l.b16 %v287
        %v3719 = vunpack.c.h.b16 %v287
        %v3720 = vunpack.c.l.b16 %v288
        %v3721 = vunpack.c.h.b16 %v288
        %v3722 = vunpack.c.l.b16 %v289
        %v3723 = vunpack.c.h.b16 %v289
        %v3724 = vunpack.c.l.b16 %v290
        %v3725 = vunpack.c.h.b16 %v290
        %v3726 = vunpack.c.l.b16 %v291
        %v3727 = vunpack.c.h.b16 %v291
        %v3728 = vunpack.c.l.b16 %v292
        %v3729 = vunpack.c.h.b16 %v292
        %v3730 = vunpack.c.l.b16 %v293
        %v3731 = vunpack.c.h.b16 %v293
        %v3732 = vunpack.c.l.b16 %v294
        %v3733 = vunpack.c.h.b16 %v294
        %v3734 = vunpack.c.l.b16 %v295
        %v3735 = vunpack.c.h.b16 %v295
        %v3736 = vunpack.c.l.b16 %v296
        %v3737 = vunpack.c.h.b16 %v296
        %v3738 = vunpack.c.l.b16 %v297
        %v3739 = vunpack.c.h.b16 %v297
        %v3740 = vunpack.c.l.b16 %v298
        %v3741 = vunpack.c.h.b16 %v298
        %v3742 = vunpack.c.l.b16 %v299
        %v3743 = vunpack.c.h.b16 %v299
        %v3744 = vunpack.c.l.b16 %v300
        %v3745 = vunpack.c.h.b16 %v300
        %v3746 = vunpack.c.l.b16 %v301
        %v3747 = vunpack.c.h.b16 %v301
        %v3748 = vunpack.c.l.b16 %v302
        %v3749 = vunpack.c.h.b16 %v302
        %v3750 = vunpack.c.l.b16 %v303
        %v3751 = vunpack.c.h.b16 %v303
        %v3752 = vunpack.c.l.b16 %v304
        %v3753 = vunpack.c.h.b16 %v304
        %v3754 = vunpack.c.l.b16 %v305
        %v3755 = vunpack.c.h.b16 %v305
        %v3756 = vunpack.c.l.b16 %v306
        %v3757 = vunpack.c.h.b16 %v306
        %v3758 = vunpack.c.l.b16 %v307
        %v3759 = vunpack.c.h.b16 %v307
        %v3760 = vunpack.c.l.b16 %v308
        %v3761 = vunpack.c.h.b16 %v308
        %v3762 = vunpack.c.l.b16 %v309
        %v3763 = vunpack.c.h.b16 %v309
        %v3764 = vunpack.c.l.b16 %v310
        %v3765 = vunpack.c.h.b16 %v310
        %v3766 = vunpack.c.l.b16 %v311
        %v3767 = vunpack.c.h.b16 %v311
        %v3768 = vunpack.c.l.b16 %v312
        %v3769 = vunpack.c.h.b16 %v312
        %v3770 = vunpack.c.l.b16 %v313
        %v3771 = vunpack.c.h.b16 %v313
        %v3772 = vunpack.c.l.b16 %v314
        %v3773 = vunpack.c.h.b16 %v314
        %v3774 = vunpack.c.l.b16 %v315
        %v3775 = vunpack.c.h.b16 %v315
        %v3776 = vunpack.c.l.b16 %v316
        %v3777 = vunpack.c.h.b16 %v316
        %v3778 = vunpack.c.l.b16 %v317
        %v3779 = vunpack.c.h.b16 %v317
        %v3780 = vunpack.c.l.b16 %v318
        %v3781 = vunpack.c.h.b16 %v318
        %v3782 = vunpack.c.l.b16 %v319
        %v3783 = vunpack.c.h.b16 %v319
        %v3784 = vunpack.c.l.b16 %v320
        %v3785 = vunpack.c.h.b16 %v320
        %v3786 = vunpack.c.l.b16 %v321
        %v3787 = vunpack.c.h.b16 %v321
        %v3788 = vunpack.c.l.b16 %v322
        %v3789 = vunpack.c.h.b16 %v322
        %v3790 = vunpack.c.l.b16 %v323
        %v3791 = vunpack.c.h.b16 %v323
        %v3792 = vunpack.c.l.b16 %v324
        %v3793 = vunpack.c.h.b16 %v324
        %v3794 = vunpack.c.l.b16 %v325
        %v3795 = vunpack.c.h.b16 %v325
        %v3796 = vunpack.c.l.b16 %v326
        %v3797 = vunpack.c.h.b16 %v326
        %v3798 = vunpack.c.l.b16 %v327
        %v3799 = vunpack.c.h.b16 %v327
        %v3800 = vunpack.c.l.b16 %v328
        %v3801 = vunpack.c.h.b16 %v328
        %v3802 = vunpack.c.l.b16 %v329
        %v3803 = vunpack.c.h.b16 %v329
        %v3804 = vunpack.c.l.b16 %v330
        %v3805 = vunpack.c.h.b16 %v330
        %v3806 = vunpack.c.l.b16 %v331
        %v3807 = vunpack.c.h.b16 %v331
        %v3808 = vunpack.c.l.b16 %v332
        %v3809 = vunpack.c.h.b16 %v332
        %v3810 = vunpack.c.l.b16 %v333
        %v3811 = vunpack.c.h.b16 %v333
        %v3812 = vunpack.c.l.b16 %v334
        %v3813 = vunpack.c.h.b16 %v334
        %v3814 = vunpack.c.l.b16 %v335
        %v3815 = vunpack.c.h.b16 %v335
        %v3816 = vunpack.c.l.b16 %v336
        %v3817 = vunpack.c.h.b16 %v336
        %v3818 = vunpack.c.l.b16 %v337
        %v3819 = vunpack.c.h.b16 %v337
        %v3820 = vunpack.c.l.b16 %v338
        %v3821 = vunpack.c.h.b16 %v338
        %v3822 = vunpack.c.l.b16 %v339
        %v3823 = vunpack.c.h.b16 %v339
        %v3824 = vunpack.c.l.b16 %v340
        %v3825 = vunpack.c.h.b16 %v340
        %v3826 = vunpack.c.l.b16 %v341
        %v3827 = vunpack.c.h.b16 %v341
        %v3828 = vunpack.c.l.b16 %v342
        %v3829 = vunpack.c.h.b16 %v342
        %v3830 = vunpack.c.l.b16 %v343
        %v3831 = vunpack.c.h.b16 %v343
        %v3832 = vunpack.c.l.b16 %v344
        %v3833 = vunpack.c.h.b16 %v344
        %v3834 = vunpack.c.l.b16 %v345
        %v3835 = vunpack.c.h.b16 %v345
        %v3836 = vunpack.c.l.b16 %v346
        %v3837 = vunpack.c.h.b16 %v346
        %v3838 = vunpack.c.l.b16 %v347
        %v3839 = vunpack.c.h.b16 %v347
        %v3840 = vunpack.c.l.b16 %v348
        %v3841 = vunpack.c.h.b16 %v348
        %v3842 = vunpack.c.l.b16 %v349
        %v3843 = vunpack.c.h.b16 %v349
        %v3844 = vunpack.c.l.b16 %v350
        %v3845 = vunpack.c.h.b16 %v350
        %v3846 = vunpack.c.l.b16 %v351
        %v3847 = vunpack.c.h.b16 %v351
        %v3848 = vunpack.c.l.b16 %v352
        %v3849 = vunpack.c.h.b16 %v352
        %v3850 = vunpack.c.l.b16 %v353
        %v3851 = vunpack.c.h.b16 %v353
        %v3852 = vunpack.c.l.b16 %v354
        %v3853 = vunpack.c.h.b16 %v354
        %v3854 = vunpack.c.l.b16 %v355
        %v3855 = vunpack.c.h.b16 %v355
        %v3856 = vunpack.c.l.b16 %v356
        %v3857 = vunpack.c.h.b16 %v356
        %v3858 = vunpack.c.l.b16 %v357
        %v3859 = vunpack.c.h.b16 %v357
        %v3860 = vunpack.c.l.b16 %v358
        %v3861 = vunpack.c.h.b16 %v358
        %v3862 = vunpack.c.l.b16 %v359
        %v3863 = vunpack.c.h.b16 %v359
        %v3864 = vunpack.c.l.b16 %v360
        %v3865 = vunpack.c.h.b16 %v360
        %v3866 = vunpack.c.l.b16 %v361
        %v3867 = vunpack.c.h.b16 %v361
        %v3868 = vunpack.c.l.b16 %v362
        %v3869 = vunpack.c.h.b16 %v362
        %v3870 = vunpack.c.l.b16 %v363
        %v3871 = vunpack.c.h.b16 %v363
        %v3872 = vunpack.c.l.b16 %v364
        %v3873 = vunpack.c.h.b16 %v364
        %v3874 = vunpack.c.l.b16 %v365
        %v3875 = vunpack.c.h.b16 %v365
        %v3876 = vunpack.c.l.b16 %v366
        %v3877 = vunpack.c.h.b16 %v366
        %v3878 = vunpack.c.l.b16 %v367
        %v3879 = vunpack.c.h.b16 %v367
        %v3880 = vunpack.c.l.b16 %v368
        %v3881 = vunpack.c.h.b16 %v368
        %v3882 = vunpack.c.l.b16 %v369
        %v3883 = vunpack.c.h.b16 %v369
        %v3884 = vunpack.c.l.b16 %v370
        %v3885 = vunpack.c.h.b16 %v370
        %v3886 = vunpack.c.l.b16 %v371
        %v3887 = vunpack.c.h.b16 %v371
        %v3888 = vunpack.c.l.b16 %v372
        %v3889 = vunpack.c.h.b16 %v372
        %v3890 = vunpack.c.l.b16 %v373
        %v3891 = vunpack.c.h.b16 %v373
        %v3892 = vunpack.c.l.b16 %v374
        %v3893 = vunpack.c.h.b16 %v374
        %v3894 = vunpack.c.l.b16 %v375
        %v3895 = vunpack.c.h.b16 %v375
        %v3896 = vunpack.c.l.b16 %v376
        %v3897 = vunpack.c.h.b16 %v376
        %v3898 = vunpack.c.l.b16 %v377
        %v3899 = vunpack.c.h.b16 %v377
        %v3900 = vunpack.c.l.b16 %v378
        %v3901 = vunpack.c.h.b16 %v378
        %v3902 = vunpack.c.l.b16 %v379
        %v3903 = vunpack.c.h.b16 %v379
        %v3904 = vunpack.c.l.b16 %v380
        %v3905 = vunpack.c.h.b16 %v380
        %v3906 = vunpack.c.l.b16 %v381
        %v3907 = vunpack.c.h.b16 %v381
        %v3908 = vunpack.c.l.b16 %v382
        %v3909 = vunpack.c.h.b16 %v382
        %v3910 = vunpack.c.l.b16 %v383
        %v3911 = vunpack.c.h.b16 %v383
        %v3912 = vunpack.c.l.b16 %v384
        %v3913 = vunpack.c.h.b16 %v384
        %v3914 = vunpack.c.l.b16 %v385
        %v3915 = vunpack.c.h.b16 %v385
        %v3916 = vunpack.c.l.b16 %v386
        %v3917 = vunpack.c.h.b16 %v386
        %v3918 = vunpack.c.l.b16 %v387
        %v3919 = vunpack.c.h.b16 %v387
        %v3920 = vunpack.c.l.b16 %v388
        %v3921 = vunpack.c.h.b16 %v388
        %v3922 = vunpack.c.l.b16 %v389
        %v3923 = vunpack.c.h.b16 %v389
        %v3924 = vunpack.c.l.b16 %v390
        %v3925 = vunpack.c.h.b16 %v390
        %v3926 = vunpack.c.l.b16 %v391
        %v3927 = vunpack.c.h.b16 %v391
        %v3928 = vunpack.c.l.b16 %v392
        %v3929 = vunpack.c.h.b16 %v392
        %v3930 = vunpack.c.l.b16 %v393
        %v3931 = vunpack.c.h.b16 %v393
        %v3932 = vunpack.c.l.b16 %v394
        %v3933 = vunpack.c.h.b16 %v394
        %v3934 = vunpack.c.l.b16 %v395
        %v3935 = vunpack.c.h.b16 %v395
        %v3936 = vunpack.c.l.b16 %v396
        %v3937 = vunpack.c.h.b16 %v396
        %v3938 = vunpack.c.l.b16 %v397
        %v3939 = vunpack.c.h.b16 %v397
        %v3940 = vunpack.c.l.b16 %v398
        %v3941 = vunpack.c.h.b16 %v398
        %v3942 = vunpack.c.l.b16 %v399
        %v3943 = vunpack.c.h.b16 %v399
        %v3944 = vunpack.c.l.b16 %v400
        %v3945 = vunpack.c.h.b16 %v400
        %v3946 = vunpack.c.l.b16 %v401
        %v3947 = vunpack.c.h.b16 %v401
        %v3948 = vunpack.c.l.b16 %v402
        %v3949 = vunpack.c.h.b16 %v402
        %v3950 = vunpack.c.l.b16 %v403
        %v3951 = vunpack.c.h.b16 %v403
        %v3952 = vunpack.c.l.b16 %v404
        %v3953 = vunpack.c.h.b16 %v404
        %v3954 = vunpack.c.l.b16 %v405
        %v3955 = vunpack.c.h.b16 %v405
        %v3956 = vunpack.c.l.b16 %v406
        %v3957 = vunpack.c.h.b16 %v406
        %v3958 = vunpack.c.l.b16 %v407
        %v3959 = vunpack.c.h.b16 %v407
        %v3960 = vunpack.c.l.b16 %v408
        %v3961 = vunpack.c.h.b16 %v408
        %v3962 = vunpack.c.l.b16 %v409
        %v3963 = vunpack.c.h.b16 %v409
        %v3964 = vunpack.c.l.b16 %v410
        %v3965 = vunpack.c.h.b16 %v410
        %v3966 = vunpack.c.l.b16 %v411
        %v3967 = vunpack.c.h.b16 %v411
        %v3968 = vunpack.c.l.b16 %v412
        %v3969 = vunpack.c.h.b16 %v412
        %v3970 = vunpack.c.l.b16 %v413
        %v3971 = vunpack.c.h.b16 %v413
        %v3972 = vunpack.c.l.b16 %v414
        %v3973 = vunpack.c.h.b16 %v414
        %v3974 = vunpack.c.l.b16 %v415
        %v3975 = vunpack.c.h.b16 %v415
        %v3976 = vunpack.c.l.b16 %v416
        %v3977 = vunpack.c.h.b16 %v416
        %v3978 = vunpack.c.l.b16 %v417
        %v3979 = vunpack.c.h.b16 %v417
        %v3980 = vunpack.c.l.b16 %v418
        %v3981 = vunpack.c.h.b16 %v418
        %v3982 = vunpack.c.l.b16 %v419
        %v3983 = vunpack.c.h.b16 %v419
        %v3984 = vunpack.c.l.b16 %v420
        %v3985 = vunpack.c.h.b16 %v420
        %v3986 = vunpack.c.l.b16 %v421
        %v3987 = vunpack.c.h.b16 %v421
        %v3988 = vunpack.c.l.b16 %v422
        %v3989 = vunpack.c.h.b16 %v422
        %v3990 = vunpack.c.l.b16 %v423
        %v3991 = vunpack.c.h.b16 %v423
        %v3992 = vunpack.c.l.b16 %v424
        %v3993 = vunpack.c.h.b16 %v424
        %v3994 = vunpack.c.l.b16 %v425
        %v3995 = vunpack.c.h.b16 %v425
        %v3996 = vunpack.c.l.b16 %v426
        %v3997 = vunpack.c.h.b16 %v426
        %v3998 = vunpack.c.l.b16 %v427
        %v3999 = vunpack.c.h.b16 %v427
        %v4000 = vunpack.c.l.b16 %v428
        %v4001 = vunpack.c.h.b16 %v428
        %v4002 = vunpack.c.l.b16 %v429
        %v4003 = vunpack.c.h.b16 %v429
        %v4004 = vunpack.c.l.b16 %v430
        %v4005 = vunpack.c.h.b16 %v430
        %v4006 = vunpack.c.l.b16 %v431
        %v4007 = vunpack.c.h.b16 %v431
        %v4008 = vunpack.c.l.b16 %v432
        %v4009 = vunpack.c.h.b16 %v432
        %v4010 = vunpack.c.l.b16 %v433
        %v4011 = vunpack.c.h.b16 %v433
        %v4012 = vunpack.c.l.b16 %v434
        %v4013 = vunpack.c.h.b16 %v434
        %v4014 = vunpack.c.l.b16 %v435
        %v4015 = vunpack.c.h.b16 %v435
        %v4016 = vunpack.c.l.b16 %v436
        %v4017 = vunpack.c.h.b16 %v436
        %v4018 = vunpack.c.l.b16 %v437
        %v4019 = vunpack.c.h.b16 %v437
        %v4020 = vunpack.c.l.b16 %v438
        %v4021 = vunpack.c.h.b16 %v438
        %v4022 = vunpack.c.l.b16 %v439
        %v4023 = vunpack.c.h.b16 %v439
        %v4024 = vunpack.c.l.b16 %v440
        %v4025 = vunpack.c.h.b16 %v440
        %v4026 = vunpack.c.l.b16 %v441
        %v4027 = vunpack.c.h.b16 %v441
        %v4028 = vunpack.c.l.b16 %v442
        %v4029 = vunpack.c.h.b16 %v442
        %v4030 = vunpack.c.l.b16 %v443
        %v4031 = vunpack.c.h.b16 %v443
        %v4032 = vunpack.c.l.b16 %v444
        %v4033 = vunpack.c.h.b16 %v444
        %v4034 = vunpack.c.l.b16 %v445
        %v4035 = vunpack.c.h.b16 %v445
        %v4036 = vunpack.c.l.b16 %v446
        %v4037 = vunpack.c.h.b16 %v446
        %v4038 = vunpack.c.l.b16 %v447
        %v4039 = vunpack.c.h.b16 %v447
        %v4040 = vunpack.c.l.b16 %v448
        %v4041 = vunpack.c.h.b16 %v448
        %v4042 = vunpack.c.l.b16 %v449
        %v4043 = vunpack.c.h.b16 %v449
        %v4044 = vunpack.c.l.b16 %v450
        %v4045 = vunpack.c.h.b16 %v450
        %v4046 = vunpack.c.l.b16 %v451
        %v4047 = vunpack.c.h.b16 %v451
        %v4048 = vunpack.c.l.b16 %v452
        %v4049 = vunpack.c.h.b16 %v452
        %v4050 = vunpack.c.l.b16 %v453
        %v4051 = vunpack.c.h.b16 %v453
        %v4052 = vunpack.c.l.b16 %v454
        %v4053 = vunpack.c.h.b16 %v454
        %v4054 = vunpack.c.l.b16 %v455
        %v4055 = vunpack.c.h.b16 %v455
        %v4056 = vunpack.c.l.b16 %v456
        %v4057 = vunpack.c.h.b16 %v456
        %v4058 = vunpack.c.l.b16 %v457
        %v4059 = vunpack.c.h.b16 %v457
        %v4060 = vunpack.c.l.b16 %v458
        %v4061 = vunpack.c.h.b16 %v458
        %v4062 = vunpack.c.l.b16 %v459
        %v4063 = vunpack.c.h.b16 %v459
        %v4064 = vunpack.c.l.b16 %v460
        %v4065 = vunpack.c.h.b16 %v460
        %v4066 = vunpack.c.l.b16 %v461
        %v4067 = vunpack.c.h.b16 %v461
        %v4068 = vunpack.c.l.b16 %v462
        %v4069 = vunpack.c.h.b16 %v462
        %v4070 = vunpack.c.l.b16 %v463
        %v4071 = vunpack.c.h.b16 %v463
        %v4072 = vunpack.c.l.b16 %v464
        %v4073 = vunpack.c.h.b16 %v464
        %v4074 = vunpack.c.l.b16 %v465
        %v4075 = vunpack.c.h.b16 %v465
        %v4076 = vunpack.c.l.b16 %v466
        %v4077 = vunpack.c.h.b16 %v466
        %v4078 = vunpack.c.l.b16 %v467
        %v4079 = vunpack.c.h.b16 %v467
        %v4080 = vunpack.c.l.b16 %v468
        %v4081 = vunpack.c.h.b16 %v468
        %v4082 = vunpack.c.l.b16 %v469
        %v4083 = vunpack.c.h.b16 %v469
        %v4084 = vunpack.c.l.b16 %v470
        %v4085 = vunpack.c.h.b16 %v470
        %v4086 = vunpack.c.l.b16 %v471
        %v4087 = vunpack.c.h.b16 %v471
        %v4088 = vunpack.c.l.b16 %v472
        %v4089 = vunpack.c.h.b16 %v472
        %v4090 = vunpack.c.l.b16 %v473
        %v4091 = vunpack.c.h.b16 %v473
        %v4092 = vunpack.c.l.b16 %v474
        %v4093 = vunpack.c.h.b16 %v474
        %v4094 = vunpack.c.l.b16 %v475
        %v4095 = vunpack.c.h.b16 %v475
        %v4096 = vunpack.c.l.b16 %v476
        %v4097 = vunpack.c.h.b16 %v476
        %v4098 = vunpack.c.l.b16 %v477
        %v4099 = vunpack.c.h.b16 %v477
        %v4100 = vunpack.c.l.b16 %v478
        %v4101 = vunpack.c.h.b16 %v478
        %v4102 = vunpack.c.l.b16 %v479
        %v4103 = vunpack.c.h.b16 %v479
        %v4104 = vunpack.c.l.b16 %v480
        %v4105 = vunpack.c.h.b16 %v480
        %v4106 = vunpack.c.l.b16 %v481
        %v4107 = vunpack.c.h.b16 %v481
        %v4108 = vunpack.c.l.b16 %v482
        %v4109 = vunpack.c.h.b16 %v482
        %v4110 = vunpack.c.l.b16 %v483
        %v4111 = vunpack.c.h.b16 %v483
        %v4112 = vunpack.c.l.b16 %v484
        %v4113 = vunpack.c.h.b16 %v484
        %v4114 = vunpack.c.l.b16 %v485
        %v4115 = vunpack.c.h.b16 %v485
        %v4116 = vunpack.c.l.b16 %v486
        %v4117 = vunpack.c.h.b16 %v486
        %v4118 = vunpack.c.l.b16 %v487
        %v4119 = vunpack.c.h.b16 %v487
        %v4120 = vunpack.c.l.b16 %v488
        %v4121 = vunpack.c.h.b16 %v488
        %v4122 = vunpack.c.l.b16 %v489
        %v4123 = vunpack.c.h.b16 %v489
        %v4124 = vunpack.c.l.b16 %v490
        %v4125 = vunpack.c.h.b16 %v490
        %v4126 = vunpack.c.l.b16 %v491
        %v4127 = vunpack.c.h.b16 %v491
        %v4128 = vunpack.c.l.b16 %v492
        %v4129 = vunpack.c.h.b16 %v492
        %v4130 = vunpack.c.l.b16 %v493
        %v4131 = vunpack.c.h.b16 %v493
        %v4132 = vunpack.c.l.b16 %v494
        %v4133 = vunpack.c.h.b16 %v494
        %v4134 = vunpack.c.l.b16 %v495
        %v4135 = vunpack.c.h.b16 %v495
        %v4136 = vunpack.c.l.b16 %v496
        %v4137 = vunpack.c.h.b16 %v496
        %v4138 = vunpack.c.l.b16 %v497
        %v4139 = vunpack.c.h.b16 %v497
        %v4140 = vunpack.c.l.b16 %v498
        %v4141 = vunpack.c.h.b16 %v498
        %v4142 = vunpack.c.l.b16 %v499
        %v4143 = vunpack.c.h.b16 %v499
        %v4144 = vunpack.c.l.b16 %v500
        %v4145 = vunpack.c.h.b16 %v500
        %v4146 = vunpack.c.l.b16 %v501
        %v4147 = vunpack.c.h.b16 %v501
        %v4148 = vunpack.c.l.b16 %v502
        %v4149 = vunpack.c.h.b16 %v502
        %v4150 = vunpack.c.l.b16 %v503
        %v4151 = vunpack.c.h.b16 %v503
        %v4152 = vunpack.c.l.b16 %v504
        %v4153 = vunpack.c.h.b16 %v504
        %v4154 = vunpack.c.l.b16 %v505
        %v4155 = vunpack.c.h.b16 %v505
        %v4156 = vunpack.c.l.b16 %v506
        %v4157 = vunpack.c.h.b16 %v506
        %v4158 = vunpack.c.l.b16 %v507
        %v4159 = vunpack.c.h.b16 %v507
        %v4160 = vunpack.c.l.b16 %v508
        %v4161 = vunpack.c.h.b16 %v508
        %v4162 = vunpack.c.l.b16 %v509
        %v4163 = vunpack.c.h.b16 %v509
        %v4164 = vunpack.c.l.b16 %v510
        %v4165 = vunpack.c.h.b16 %v510
        %v4166 = vunpack.c.l.b16 %v511
        %v4167 = vunpack.c.h.b16 %v511
        %v4168 = vunpack.c.l.b16 %v512
        %v4169 = vunpack.c.h.b16 %v512
        %v4170 = vunpack.c.l.b16 %v513
        %v4171 = vunpack.c.h.b16 %v513
        %v4172 = vunpack.c.l.b16 %v514
        %v4173 = vunpack.c.h.b16 %v514
        %v4174 = vunpack.c.l.b16 %v515
        %v4175 = vunpack.c.h.b16 %v515
        %v4176 = vunpack.c.l.b16 %v516
        %v4177 = vunpack.c.h.b16 %v516
        %v4178 = vunpack.c.l.b16 %v517
        %v4179 = vunpack.c.h.b16 %v517
        %v4180 = vunpack.c.l.b16 %v518
        %v4181 = vunpack.c.h.b16 %v518
        %v4182 = vunpack.c.l.b16 %v519
        %v4183 = vunpack.c.h.b16 %v519
        %v4184 = vunpack.c.l.b16 %v520
        %v4185 = vunpack.c.h.b16 %v520
        %v4186 = vunpack.c.l.b16 %v521
        %v4187 = vunpack.c.h.b16 %v521
        %v4188 = vunpack.c.l.b16 %v522
        %v4189 = vunpack.c.h.b16 %v522
        %v4190 = vunpack.c.l.b16 %v523
        %v4191 = vunpack.c.h.b16 %v523
        %v4192 = vunpack.c.l.b16 %v524
        %v4193 = vunpack.c.h.b16 %v524
        %v4194 = vunpack.c.l.b16 %v525
        %v4195 = vunpack.c.h.b16 %v525
        %v4196 = vunpack.c.l.b16 %v526
        %v4197 = vunpack.c.h.b16 %v526
        %v4198 = vunpack.c.l.b16 %v527
        %v4199 = vunpack.c.h.b16 %v527
        %v4200 = vunpack.c.l.b16 %v528
        %v4201 = vunpack.c.h.b16 %v528
        %v4202 = vunpack.c.l.b16 %v529
        %v4203 = vunpack.c.h.b16 %v529
        %v4204 = vunpack.c.l.b16 %v530
        %v4205 = vunpack.c.h.b16 %v530
        %v4206 = vunpack.c.l.b16 %v531
        %v4207 = vunpack.c.h.b16 %v531
        %v4208 = vunpack.c.l.b16 %v532
        %v4209 = vunpack.c.h.b16 %v532
        %v4210 = vunpack.c.l.b16 %v533
        %v4211 = vunpack.c.h.b16 %v533
        %v4212 = vunpack.c.l.b16 %v534
        %v4213 = vunpack.c.h.b16 %v534
        %v4214 = vunpack.c.l.b16 %v535
        %v4215 = vunpack.c.h.b16 %v535
        %v4216 = vunpack.c.l.b16 %v536
        %v4217 = vunpack.c.h.b16 %v536
        %v4218 = vunpack.c.l.b16 %v537
        %v4219 = vunpack.c.h.b16 %v537
        %v4220 = vunpack.c.l.b16 %v538
        %v4221 = vunpack.c.h.b16 %v538
        %v4222 = vunpack.c.l.b16 %v539
        %v4223 = vunpack.c.h.b16 %v539
        %v4224 = vunpack.c.l.b16 %v540
        %v4225 = vunpack.c.h.b16 %v540
        %v4226 = vunpack.c.l.b16 %v541
        %v4227 = vunpack.c.h.b16 %v541
        %v4228 = vunpack.c.l.b16 %v542
        %v4229 = vunpack.c.h.b16 %v542
        %v4230 = vunpack.c.l.b16 %v543
        %v4231 = vunpack.c.h.b16 %v543
        %v4232 = vunpack.c.l.b16 %v544
        %v4233 = vunpack.c.h.b16 %v544
        %v4234 = vunpack.c.l.b16 %v545
        %v4235 = vunpack.c.h.b16 %v545
        %v4236 = vunpack.c.l.b16 %v546
        %v4237 = vunpack.c.h.b16 %v546
        %v4238 = vunpack.c.l.b16 %v547
        %v4239 = vunpack.c.h.b16 %v547
        %v4240 = vunpack.c.l.b16 %v548
        %v4241 = vunpack.c.h.b16 %v548
        %v4242 = vunpack.c.l.b16 %v549
        %v4243 = vunpack.c.h.b16 %v549
        %v4244 = vunpack.c.l.b16 %v550
        %v4245 = vunpack.c.h.b16 %v550
        %v4246 = vunpack.c.l.b16 %v551
        %v4247 = vunpack.c.h.b16 %v551
        %v4248 = vunpack.c.l.b16 %v552
        %v4249 = vunpack.c.h.b16 %v552
        %v4250 = vunpack.c.l.b16 %v553
        %v4251 = vunpack.c.h.b16 %v553
        %v4252 = vunpack.c.l.b16 %v554
        %v4253 = vunpack.c.h.b16 %v554
        %v4254 = vunpack.c.l.b16 %v555
        %v4255 = vunpack.c.h.b16 %v555
        %v4256 = vunpack.c.l.b16 %v556
        %v4257 = vunpack.c.h.b16 %v556
        %v4258 = vunpack.c.l.b16 %v557
        %v4259 = vunpack.c.h.b16 %v557
        %v4260 = vunpack.c.l.b16 %v558
        %v4261 = vunpack.c.h.b16 %v558
        %v4262 = vunpack.c.l.b16 %v559
        %v4263 = vunpack.c.h.b16 %v559
        %v4264 = vunpack.c.l.b16 %v560
        %v4265 = vunpack.c.h.b16 %v560
        %v4266 = vunpack.c.l.b16 %v561
        %v4267 = vunpack.c.h.b16 %v561
        %v4268 = vunpack.c.l.b16 %v562
        %v4269 = vunpack.c.h.b16 %v562
        %v4270 = vunpack.c.l.b16 %v563
        %v4271 = vunpack.c.h.b16 %v563
        %v4272 = vunpack.c.l.b16 %v564
        %v4273 = vunpack.c.h.b16 %v564
        %v4274 = vunpack.c.l.b16 %v565
        %v4275 = vunpack.c.h.b16 %v565
        %v4276 = vunpack.c.l.b16 %v566
        %v4277 = vunpack.c.h.b16 %v566
        %v4278 = vunpack.c.l.b16 %v567
        %v4279 = vunpack.c.h.b16 %v567
        %v4280 = vunpack.c.l.b16 %v568
        %v4281 = vunpack.c.h.b16 %v568
        %v4282 = vunpack.c.l.b16 %v569
        %v4283 = vunpack.c.h.b16 %v569
        %v4284 = vunpack.c.l.b16 %v570
        %v4285 = vunpack.c.h.b16 %v570
        %v4286 = vunpack.c.l.b16 %v571
        %v4287 = vunpack.c.h.b16 %v571
        %v4288 = vunpack.c.l.b16 %v572
        %v4289 = vunpack.c.h.b16 %v572
        %v4290 = vunpack.c.l.b16 %v573
        %v4291 = vunpack.c.h.b16 %v573
        %v4292 = vunpack.c.l.b16 %v574
        %v4293 = vunpack.c.h.b16 %v574
        %v4294 = vunpack.c.l.b16 %v575
        %v4295 = vunpack.c.h.b16 %v575
        %v4296 = vunpack.c.l.b16 %v576
        %v4297 = vunpack.c.h.b16 %v576
        %v4298 = vunpack.c.l.b16 %v577
        %v4299 = vunpack.c.h.b16 %v577
        %v4300 = vunpack.c.l.b16 %v578
        %v4301 = vunpack.c.h.b16 %v578
        %v4302 = vunpack.c.l.b16 %v579
        %v4303 = vunpack.c.h.b16 %v579
        %v4304 = vunpack.c.l.b16 %v580
        %v4305 = vunpack.c.h.b16 %v580
        %v4306 = vunpack.c.l.b16 %v581
        %v4307 = vunpack.c.h.b16 %v581
        %v4308 = vunpack.c.l.b16 %v582
        %v4309 = vunpack.c.h.b16 %v582
        %v4310 = vunpack.c.l.b16 %v583
        %v4311 = vunpack.c.h.b16 %v583
        %v4312 = vunpack.c.l.b16 %v584
        %v4313 = vunpack.c.h.b16 %v584
        %v4314 = vunpack.c.l.b16 %v585
        %v4315 = vunpack.c.h.b16 %v585
        %v4316 = vunpack.c.l.b16 %v586
        %v4317 = vunpack.c.h.b16 %v586
        %v4318 = vunpack.c.l.b16 %v587
        %v4319 = vunpack.c.h.b16 %v587
        %v4320 = vunpack.c.l.b16 %v588
        %v4321 = vunpack.c.h.b16 %v588
        %v4322 = vunpack.c.l.b16 %v589
        %v4323 = vunpack.c.h.b16 %v589
        %v4324 = vunpack.c.l.b16 %v590
        %v4325 = vunpack.c.h.b16 %v590
        %v4326 = vunpack.c.l.b16 %v591
        %v4327 = vunpack.c.h.b16 %v591
        %v4328 = vunpack.c.l.b16 %v592
        %v4329 = vunpack.c.h.b16 %v592
        %v4330 = vunpack.c.l.b16 %v593
        %v4331 = vunpack.c.h.b16 %v593
        %v4332 = vunpack.c.l.b16 %v594
        %v4333 = vunpack.c.h.b16 %v594
        %v4334 = vunpack.c.l.b16 %v595
        %v4335 = vunpack.c.h.b16 %v595
        %v4336 = vunpack.c.l.b16 %v596
        %v4337 = vunpack.c.h.b16 %v596
        %v4338 = vunpack.c.l.b16 %v597
        %v4339 = vunpack.c.h.b16 %v597
        %v4340 = vunpack.c.l.b16 %v598
        %v4341 = vunpack.c.h.b16 %v598
        %v4342 = vunpack.c.l.b16 %v599
        %v4343 = vunpack.c.h.b16 %v599
        %v4344 = vunpack.c.l.b16 %v600
        %v4345 = vunpack.c.h.b16 %v600
        %v4346 = vunpack.c.l.b16 %v601
        %v4347 = vunpack.c.h.b16 %v601
        %v4348 = vunpack.c.l.b16 %v602
        %v4349 = vunpack.c.h.b16 %v602
        %v4350 = vunpack.c.l.b16 %v603
        %v4351 = vunpack.c.h.b16 %v603
        %v4352 = vunpack.c.l.b16 %v604
        %v4353 = vunpack.c.h.b16 %v604
        %v4354 = vunpack.c.l.b16 %v605
        %v4355 = vunpack.c.h.b16 %v605
        %v4356 = vunpack.c.l.b16 %v606
        %v4357 = vunpack.c.h.b16 %v606
        %v4358 = vunpack.c.l.b16 %v607
        %v4359 = vunpack.c.h.b16 %v607
        %v4360 = vunpack.c.l.b16 %v608
        %v4361 = vunpack.c.h.b16 %v608
        %v4362 = vunpack.c.l.b16 %v609
        %v4363 = vunpack.c.h.b16 %v609
        %v4364 = vunpack.c.l.b16 %v610
        %v4365 = vunpack.c.h.b16 %v610
        %v4366 = vunpack.c.l.b16 %v611
        %v4367 = vunpack.c.h.b16 %v611
        %v4368 = vunpack.c.l.b16 %v612
        %v4369 = vunpack.c.h.b16 %v612
        %v4370 = vunpack.c.l.b16 %v613
        %v4371 = vunpack.c.h.b16 %v613
        %v4372 = vunpack.c.l.b16 %v614
        %v4373 = vunpack.c.h.b16 %v614
        %v4374 = vunpack.c.l.b16 %v615
        %v4375 = vunpack.c.h.b16 %v615
        %v4376 = vunpack.c.l.b16 %v616
        %v4377 = vunpack.c.h.b16 %v616
        %v4378 = vunpack.c.l.b16 %v617
        %v4379 = vunpack.c.h.b16 %v617
        %v4380 = vunpack.c.l.b16 %v618
        %v4381 = vunpack.c.h.b16 %v618
        %v4382 = vunpack.c.l.b16 %v619
        %v4383 = vunpack.c.h.b16 %v619
        %v4384 = vunpack.c.l.b16 %v620
        %v4385 = vunpack.c.h.b16 %v620
        %v4386 = vunpack.c.l.b16 %v621
        %v4387 = vunpack.c.h.b16 %v621
        %v4388 = vunpack.c.l.b16 %v622
        %v4389 = vunpack.c.h.b16 %v622
        %v4390 = vunpack.c.l.b16 %v623
        %v4391 = vunpack.c.h.b16 %v623
        %v4392 = vunpack.c.l.b16 %v624
        %v4393 = vunpack.c.h.b16 %v624
        %v4394 = vunpack.c.l.b16 %v625
        %v4395 = vunpack.c.h.b16 %v625
        %v4396 = vunpack.c.l.b16 %v626
        %v4397 = vunpack.c.h.b16 %v626
        %v4398 = vunpack.c.l.b16 %v627
        %v4399 = vunpack.c.h.b16 %v627
        %v4400 = vunpack.c.l.b16 %v628
        %v4401 = vunpack.c.h.b16 %v628
        %v4402 = vunpack.c.l.b16 %v629
        %v4403 = vunpack.c.h.b16 %v629
        %v4404 = vunpack.c.l.b16 %v630
        %v4405 = vunpack.c.h.b16 %v630
        %v4406 = vunpack.c.l.b16 %v631
        %v4407 = vunpack.c.h.b16 %v631
        %v4408 = vunpack.c.l.b16 %v632
        %v4409 = vunpack.c.h.b16 %v632
        %v4410 = vunpack.c.l.b16 %v633
        %v4411 = vunpack.c.h.b16 %v633
        %v4412 = vunpack.c.l.b16 %v634
        %v4413 = vunpack.c.h.b16 %v634
        %v4414 = vunpack.c.l.b16 %v635
        %v4415 = vunpack.c.h.b16 %v635
        %v4416 = vunpack.c.l.b16 %v636
        %v4417 = vunpack.c.h.b16 %v636
        %v4418 = vunpack.c.l.b16 %v637
        %v4419 = vunpack.c.h.b16 %v637
        %v4420 = vunpack.c.l.b16 %v638
        %v4421 = vunpack.c.h.b16 %v638
        %v4422 = vunpack.c.l.b16 %v639
        %v4423 = vunpack.c.h.b16 %v639
        %v4424 = vunpack.c.l.b16 %v640
        %v4425 = vunpack.c.h.b16 %v640
        %v4426 = vunpack.c.l.b16 %v641
        %v4427 = vunpack.c.h.b16 %v641
        %v4428 = vunpack.c.l.b16 %v642
        %v4429 = vunpack.c.h.b16 %v642
        %v4430 = vunpack.c.l.b16 %v643
        %v4431 = vunpack.c.h.b16 %v643
        %v4432 = vunpack.c.l.b16 %v644
        %v4433 = vunpack.c.h.b16 %v644
        %v4434 = vunpack.c.l.b16 %v645
        %v4435 = vunpack.c.h.b16 %v645
        %v4436 = vunpack.c.l.b16 %v646
        %v4437 = vunpack.c.h.b16 %v646
        %v4438 = vunpack.c.l.b16 %v647
        %v4439 = vunpack.c.h.b16 %v647
        %v4440 = vunpack.c.l.b16 %v648
        %v4441 = vunpack.c.h.b16 %v648
        %v4442 = vunpack.c.l.b16 %v649
        %v4443 = vunpack.c.h.b16 %v649
        %v4444 = vunpack.c.l.b16 %v650
        %v4445 = vunpack.c.h.b16 %v650
        %v4446 = vunpack.c.l.b16 %v651
        %v4447 = vunpack.c.h.b16 %v651
        %v4448 = vunpack.c.l.b16 %v652
        %v4449 = vunpack.c.h.b16 %v652
        %v4450 = vunpack.c.l.b16 %v653
        %v4451 = vunpack.c.h.b16 %v653
        %v4452 = vunpack.c.l.b16 %v654
        %v4453 = vunpack.c.h.b16 %v654
        %v4454 = vunpack.c.l.b16 %v655
        %v4455 = vunpack.c.h.b16 %v655
        %v4456 = vunpack.c.l.b16 %v656
        %v4457 = vunpack.c.h.b16 %v656
        %v4458 = vunpack.c.l.b16 %v657
        %v4459 = vunpack.c.h.b16 %v657
        %v4460 = vunpack.c.l.b16 %v658
        %v4461 = vunpack.c.h.b16 %v658
        %v4462 = vunpack.c.l.b16 %v659
        %v4463 = vunpack.c.h.b16 %v659
        %v4464 = vunpack.c.l.b16 %v660
        %v4465 = vunpack.c.h.b16 %v660
        %v4466 = vunpack.c.l.b16 %v661
        %v4467 = vunpack.c.h.b16 %v661
        %v4468 = vunpack.c.l.b16 %v662
        %v4469 = vunpack.c.h.b16 %v662
        %v4470 = vunpack.c.l.b16 %v663
        %v4471 = vunpack.c.h.b16 %v663
        %v4472 = vunpack.c.l.b16 %v664
        %v4473 = vunpack.c.h.b16 %v664
        %v4474 = vunpack.c.l.b16 %v665
        %v4475 = vunpack.c.h.b16 %v665
        %v4476 = vunpack.c.l.b16 %v666
        %v4477 = vunpack.c.h.b16 %v666
        %v4478 = vunpack.c.l.b16 %v667
        %v4479 = vunpack.c.h.b16 %v667
        %v4480 = vunpack.c.l.b16 %v668
        %v4481 = vunpack.c.h.b16 %v668
        %v4482 = vunpack.c.l.b16 %v669
        %v4483 = vunpack.c.h.b16 %v669
        %v4484 = vunpack.c.l.b16 %v670
        %v4485 = vunpack.c.h.b16 %v670
        %v4486 = vunpack.c.l.b16 %v671
        %v4487 = vunpack.c.h.b16 %v671
        %v4488 = vunpack.c.l.b16 %v672
        %v4489 = vunpack.c.h.b16 %v672
        %v4490 = vunpack.c.l.b16 %v673
        %v4491 = vunpack.c.h.b16 %v673
        %v4492 = vunpack.c.l.b16 %v674
        %v4493 = vunpack.c.h.b16 %v674
        %v4494 = vunpack.c.l.b16 %v675
        %v4495 = vunpack.c.h.b16 %v675
        %v4496 = vunpack.c.l.b16 %v676
        %v4497 = vunpack.c.h.b16 %v676
        %v4498 = vunpack.c.l.b16 %v677
        %v4499 = vunpack.c.h.b16 %v677
        %v4500 = vunpack.c.l.b16 %v678
        %v4501 = vunpack.c.h.b16 %v678
        %v4502 = vunpack.c.l.b16 %v679
        %v4503 = vunpack.c.h.b16 %v679
        %v4504 = vunpack.c.l.b16 %v680
        %v4505 = vunpack.c.h.b16 %v680
        %v4506 = vunpack.c.l.b16 %v681
        %v4507 = vunpack.c.h.b16 %v681
        %v4508 = vunpack.c.l.b16 %v682
        %v4509 = vunpack.c.h.b16 %v682
        %v4510 = vunpack.c.l.b16 %v683
        %v4511 = vunpack.c.h.b16 %v683
        %v4512 = vunpack.c.l.b16 %v684
        %v4513 = vunpack.c.h.b16 %v684
        %v4514 = vunpack.c.l.b16 %v685
        %v4515 = vunpack.c.h.b16 %v685
        %v4516 = vunpack.c.l.b16 %v686
        %v4517 = vunpack.c.h.b16 %v686
        %v4518 = vunpack.c.l.b16 %v687
        %v4519 = vunpack.c.h.b16 %v687
        %v4520 = vunpack.c.l.b16 %v688
        %v4521 = vunpack.c.h.b16 %v688
        %v4522 = vunpack.c.l.b16 %v689
        %v4523 = vunpack.c.h.b16 %v689
        %v4524 = vunpack.c.l.b16 %v690
        %v4525 = vunpack.c.h.b16 %v690
        %v4526 = vunpack.c.l.b16 %v691
        %v4527 = vunpack.c.h.b16 %v691
        %v4528 = vunpack.c.l.b16 %v692
        %v4529 = vunpack.c.h.b16 %v692
        %v4530 = vunpack.c.l.b16 %v693
        %v4531 = vunpack.c.h.b16 %v693
        %v4532 = vunpack.c.l.b16 %v694
        %v4533 = vunpack.c.h.b16 %v694
        %v4534 = vunpack.c.l.b16 %v695
        %v4535 = vunpack.c.h.b16 %v695
        %v4536 = vunpack.c.l.b16 %v696
        %v4537 = vunpack.c.h.b16 %v696
        %v4538 = vunpack.c.l.b16 %v697
        %v4539 = vunpack.c.h.b16 %v697
        %v4540 = vunpack.c.l.b16 %v698
        %v4541 = vunpack.c.h.b16 %v698
        %v4542 = vunpack.c.l.b16 %v699
        %v4543 = vunpack.c.h.b16 %v699
        %v4544 = vunpack.c.l.b16 %v700
        %v4545 = vunpack.c.h.b16 %v700
        %v4546 = vunpack.c.l.b16 %v701
        %v4547 = vunpack.c.h.b16 %v701
        %v4548 = vunpack.c.l.b16 %v702
        %v4549 = vunpack.c.h.b16 %v702
        %v4550 = vunpack.c.l.b16 %v703
        %v4551 = vunpack.c.h.b16 %v703
        %v4552 = vunpack.c.l.b16 %v704
        %v4553 = vunpack.c.h.b16 %v704
        %v4554 = vunpack.c.l.b16 %v705
        %v4555 = vunpack.c.h.b16 %v705
        %v4556 = vunpack.c.l.b16 %v706
        %v4557 = vunpack.c.h.b16 %v706
        %v4558 = vunpack.c.l.b16 %v707
        %v4559 = vunpack.c.h.b16 %v707
        %v4560 = vunpack.c.l.b16 %v708
        %v4561 = vunpack.c.h.b16 %v708
        %v4562 = vunpack.c.l.b16 %v709
        %v4563 = vunpack.c.h.b16 %v709
        %v4564 = vunpack.c.l.b16 %v710
        %v4565 = vunpack.c.h.b16 %v710
        %v4566 = vunpack.c.l.b16 %v711
        %v4567 = vunpack.c.h.b16 %v711
        %v4568 = vunpack.c.l.b16 %v712
        %v4569 = vunpack.c.h.b16 %v712
        %v4570 = vunpack.c.l.b16 %v713
        %v4571 = vunpack.c.h.b16 %v713
        %v4572 = vunpack.c.l.b16 %v714
        %v4573 = vunpack.c.h.b16 %v714
        %v4574 = vunpack.c.l.b16 %v715
        %v4575 = vunpack.c.h.b16 %v715
        %v4576 = vunpack.c.l.b16 %v716
        %v4577 = vunpack.c.h.b16 %v716
        %v4578 = vunpack.c.l.b16 %v717
        %v4579 = vunpack.c.h.b16 %v717
        %v4580 = vunpack.c.l.b16 %v718
        %v4581 = vunpack.c.h.b16 %v718
        %v4582 = vunpack.c.l.b16 %v719
        %v4583 = vunpack.c.h.b16 %v719
        %v4584 = vunpack.c.l.b16 %v720
        %v4585 = vunpack.c.h.b16 %v720
        %v4586 = vunpack.c.l.b16 %v721
        %v4587 = vunpack.c.h.b16 %v721
        %v4588 = vunpack.c.l.b16 %v722
        %v4589 = vunpack.c.h.b16 %v722
        %v4590 = vunpack.c.l.b16 %v723
        %v4591 = vunpack.c.h.b16 %v723
        %v4592 = vunpack.c.l.b16 %v724
        %v4593 = vunpack.c.h.b16 %v724
        %v4594 = vunpack.c.l.b16 %v725
        %v4595 = vunpack.c.h.b16 %v725
        %v4596 = vunpack.c.l.b16 %v726
        %v4597 = vunpack.c.h.b16 %v726
        %v4598 = vunpack.c.l.b16 %v727
        %v4599 = vunpack.c.h.b16 %v727
        %v4600 = vunpack.c.l.b16 %v728
        %v4601 = vunpack.c.h.b16 %v728
        %v4602 = vunpack.c.l.b16 %v729
        %v4603 = vunpack.c.h.b16 %v729
        %v4604 = vunpack.c.l.b16 %v730
        %v4605 = vunpack.c.h.b16 %v730
        %v4606 = vunpack.c.l.b16 %v731
        %v4607 = vunpack.c.h.b16 %v731
        %v4608 = vunpack.c.l.b16 %v732
        %v4609 = vunpack.c.h.b16 %v732
        %v4610 = vunpack.c.l.b16 %v733
        %v4611 = vunpack.c.h.b16 %v733
        %v4612 = vunpack.c.l.b16 %v734
        %v4613 = vunpack.c.h.b16 %v734
        %v4614 = vunpack.c.l.b16 %v735
        %v4615 = vunpack.c.h.b16 %v735
        %v4616 = vunpack.c.l.b16 %v736
        %v4617 = vunpack.c.h.b16 %v736
        %v4618 = vunpack.c.l.b16 %v737
        %v4619 = vunpack.c.h.b16 %v737
        %v4620 = vunpack.c.l.b16 %v738
        %v4621 = vunpack.c.h.b16 %v738
        %v4622 = vunpack.c.l.b16 %v739
        %v4623 = vunpack.c.h.b16 %v739
        %v4624 = vunpack.c.l.b16 %v740
        %v4625 = vunpack.c.h.b16 %v740
        %v4626 = vunpack.c.l.b16 %v741
        %v4627 = vunpack.c.h.b16 %v741
        %v4628 = vunpack.c.l.b16 %v742
        %v4629 = vunpack.c.h.b16 %v742
        %v4630 = vunpack.c.l.b16 %v743
        %v4631 = vunpack.c.h.b16 %v743
        %v4632 = vunpack.c.l.b16 %v744
        %v4633 = vunpack.c.h.b16 %v744
        %v4634 = vunpack.c.l.b16 %v745
        %v4635 = vunpack.c.h.b16 %v745
        %v4636 = vunpack.c.l.b16 %v746
        %v4637 = vunpack.c.h.b16 %v746
        %v4638 = vunpack.c.l.b16 %v747
        %v4639 = vunpack.c.h.b16 %v747
        %v4640 = vunpack.c.l.b16 %v748
        %v4641 = vunpack.c.h.b16 %v748
        %v4642 = vunpack.c.l.b16 %v749
        %v4643 = vunpack.c.h.b16 %v749
        %v4644 = vunpack.c.l.b16 %v750
        %v4645 = vunpack.c.h.b16 %v750
        %v4646 = vunpack.c.l.b16 %v751
        %v4647 = vunpack.c.h.b16 %v751
        %v4648 = vunpack.c.l.b16 %v752
        %v4649 = vunpack.c.h.b16 %v752
        %v4650 = vunpack.c.l.b16 %v753
        %v4651 = vunpack.c.h.b16 %v753
        %v4652 = vunpack.c.l.b16 %v754
        %v4653 = vunpack.c.h.b16 %v754
        %v4654 = vunpack.c.l.b16 %v755
        %v4655 = vunpack.c.h.b16 %v755
        %v4656 = vunpack.c.l.b16 %v756
        %v4657 = vunpack.c.h.b16 %v756
        %v4658 = vunpack.c.l.b16 %v757
        %v4659 = vunpack.c.h.b16 %v757
        %v4660 = vunpack.c.l.b16 %v758
        %v4661 = vunpack.c.h.b16 %v758
        %v4662 = vunpack.c.l.b16 %v759
        %v4663 = vunpack.c.h.b16 %v759
        %v4664 = vunpack.c.l.b16 %v760
        %v4665 = vunpack.c.h.b16 %v760
        %v4666 = vunpack.c.l.b16 %v761
        %v4667 = vunpack.c.h.b16 %v761
        %v4668 = vunpack.c.l.b16 %v762
        %v4669 = vunpack.c.h.b16 %v762
        %v4670 = vunpack.c.l.b16 %v763
        %v4671 = vunpack.c.h.b16 %v763
        %v4672 = vunpack.c.l.b16 %v764
        %v4673 = vunpack.c.h.b16 %v764
        %v4674 = vunpack.c.l.b16 %v765
        %v4675 = vunpack.c.h.b16 %v765
        %v4676 = vunpack.c.l.b16 %v766
        %v4677 = vunpack.c.h.b16 %v766
        %v4678 = vunpack.c.l.b16 %v767
        %v4679 = vunpack.c.h.b16 %v767
        %v4680 = vunpack.c.l.b16 %v768
        %v4681 = vunpack.c.h.b16 %v768
        %v4682 = vunpack.c.l.b16 %v769
        %v4683 = vunpack.c.h.b16 %v769
        %v4684 = vunpack.c.l.b16 %v770
        %v4685 = vunpack.c.h.b16 %v770
        %v4686 = vunpack.c.l.b16 %v771
        %v4687 = vunpack.c.h.b16 %v771
        %v4688 = vunpack.c.l.b16 %v772
        %v4689 = vunpack.c.h.b16 %v772
        %v4690 = vunpack.c.l.b16 %v773
        %v4691 = vunpack.c.h.b16 %v773
        %v4692 = vunpack.c.l.b16 %v774
        %v4693 = vunpack.c.h.b16 %v774
        %v4694 = vunpack.c.l.b16 %v775
        %v4695 = vunpack.c.h.b16 %v775
        %v4696 = vunpack.c.l.b16 %v776
        %v4697 = vunpack.c.h.b16 %v776
        %v4698 = vunpack.c.l.b16 %v777
        %v4699 = vunpack.c.h.b16 %v777
        %v4700 = vunpack.c.l.b16 %v778
        %v4701 = vunpack.c.h.b16 %v778
        %v4702 = vunpack.c.l.b16 %v779
        %v4703 = vunpack.c.h.b16 %v779
        %v4704 = vunpack.c.l.b16 %v780
        %v4705 = vunpack.c.h.b16 %v780
        %v4706 = vunpack.c.l.b16 %v781
        %v4707 = vunpack.c.h.b16 %v781
        %v4708 = vunpack.c.l.b16 %v782
        %v4709 = vunpack.c.h.b16 %v782
        %v4710 = vunpack.c.l.b16 %v783
        %v4711 = vunpack.c.h.b16 %v783
        %v4712 = vunpack.c.l.b16 %v784
        %v4713 = vunpack.c.h.b16 %v784
        %v4714 = vunpack.c.l.b16 %v785
        %v4715 = vunpack.c.h.b16 %v785
        %v4716 = vunpack.c.l.b16 %v786
        %v4717 = vunpack.c.h.b16 %v786
        %v4718 = vunpack.c.l.b16 %v787
        %v4719 = vunpack.c.h.b16 %v787
        %v4720 = vunpack.c.l.b16 %v788
        %v4721 = vunpack.c.h.b16 %v788
        %v4722 = vunpack.c.l.b16 %v789
        %v4723 = vunpack.c.h.b16 %v789
        %v4724 = vunpack.c.l.b16 %v790
        %v4725 = vunpack.c.h.b16 %v790
        %v4726 = vunpack.c.l.b16 %v791
        %v4727 = vunpack.c.h.b16 %v791
        %v4728 = vunpack.c.l.b16 %v792
        %v4729 = vunpack.c.h.b16 %v792
        %v4730 = vunpack.c.l.b16 %v793
        %v4731 = vunpack.c.h.b16 %v793
        %v4732 = vunpack.c.l.b16 %v794
        %v4733 = vunpack.c.h.b16 %v794
        %v4734 = vunpack.c.l.b16 %v795
        %v4735 = vunpack.c.h.b16 %v795
        %v4736 = vunpack.c.l.b16 %v796
        %v4737 = vunpack.c.h.b16 %v796
        %v4738 = vunpack.c.l.b16 %v797
        %v4739 = vunpack.c.h.b16 %v797
        %v4740 = vunpack.c.l.b16 %v798
        %v4741 = vunpack.c.h.b16 %v798
        %v4742 = vunpack.c.l.b16 %v799
        %v4743 = vunpack.c.h.b16 %v799
        %v4744 = vunpack.c.l.b16 %v800
        %v4745 = vunpack.c.h.b16 %v800
        %v4746 = vunpack.c.l.b16 %v801
        %v4747 = vunpack.c.h.b16 %v801
        %v4748 = vunpack.c.l.b16 %v802
        %v4749 = vunpack.c.h.b16 %v802
        %v4750 = vunpack.c.l.b16 %v803
        %v4751 = vunpack.c.h.b16 %v803
        %v4752 = vunpack.c.l.b16 %v804
        %v4753 = vunpack.c.h.b16 %v804
        %v4754 = vunpack.c.l.b16 %v805
        %v4755 = vunpack.c.h.b16 %v805
        %v4756 = vunpack.c.l.b16 %v806
        %v4757 = vunpack.c.h.b16 %v806
        %v4758 = vunpack.c.l.b16 %v807
        %v4759 = vunpack.c.h.b16 %v807
        %v4760 = vunpack.c.l.b16 %v808
        %v4761 = vunpack.c.h.b16 %v808
        %v4762 = vunpack.c.l.b16 %v809
        %v4763 = vunpack.c.h.b16 %v809
        %v4764 = vunpack.c.l.b16 %v810
        %v4765 = vunpack.c.h.b16 %v810
        %v4766 = vunpack.c.l.b16 %v811
        %v4767 = vunpack.c.h.b16 %v811
        %v4768 = vunpack.c.l.b16 %v812
        %v4769 = vunpack.c.h.b16 %v812
        %v4770 = vunpack.c.l.b16 %v813
        %v4771 = vunpack.c.h.b16 %v813
        %v4772 = vunpack.c.l.b16 %v814
        %v4773 = vunpack.c.h.b16 %v814
        %v4774 = vunpack.c.l.b16 %v815
        %v4775 = vunpack.c.h.b16 %v815
        %v4776 = vunpack.c.l.b16 %v816
        %v4777 = vunpack.c.h.b16 %v816
        %v4778 = vunpack.c.l.b16 %v817
        %v4779 = vunpack.c.h.b16 %v817
        %v4780 = vunpack.c.l.b16 %v818
        %v4781 = vunpack.c.h.b16 %v818
        %v4782 = vunpack.c.l.b16 %v819
        %v4783 = vunpack.c.h.b16 %v819
        %v4784 = vunpack.c.l.b16 %v820
        %v4785 = vunpack.c.h.b16 %v820
        %v4786 = vunpack.c.l.b16 %v821
        %v4787 = vunpack.c.h.b16 %v821
        %v4788 = vunpack.c.l.b16 %v822
        %v4789 = vunpack.c.h.b16 %v822
        %v4790 = vunpack.c.l.b16 %v823
        %v4791 = vunpack.c.h.b16 %v823
        %v4792 = vunpack.c.l.b16 %v824
        %v4793 = vunpack.c.h.b16 %v824
        %v4794 = vunpack.c.l.b16 %v825
        %v4795 = vunpack.c.h.b16 %v825
        %v4796 = vunpack.c.l.b16 %v826
        %v4797 = vunpack.c.h.b16 %v826
        %v4798 = vunpack.c.l.b16 %v827
        %v4799 = vunpack.c.h.b16 %v827
        %v4800 = vunpack.c.l.b16 %v828
        %v4801 = vunpack.c.h.b16 %v828
        %v4802 = vunpack.c.l.b16 %v829
        %v4803 = vunpack.c.h.b16 %v829
        %v4804 = vunpack.c.l.b16 %v830
        %v4805 = vunpack.c.h.b16 %v830
        %v4806 = vunpack.c.l.b16 %v831
        %v4807 = vunpack.c.h.b16 %v831
        %v4808 = vunpack.c.l.b16 %v832
        %v4809 = vunpack.c.h.b16 %v832
        %v4810 = vunpack.c.l.b16 %v833
        %v4811 = vunpack.c.h.b16 %v833
        %v4812 = vunpack.c.l.b16 %v834
        %v4813 = vunpack.c.h.b16 %v834
        %v4814 = vunpack.c.l.b16 %v835
        %v4815 = vunpack.c.h.b16 %v835
        %v4816 = vunpack.c.l.b16 %v836
        %v4817 = vunpack.c.h.b16 %v836
        %v4818 = vunpack.c.l.b16 %v837
        %v4819 = vunpack.c.h.b16 %v837
        %v4820 = vunpack.c.l.b16 %v838
        %v4821 = vunpack.c.h.b16 %v838
        %v4822 = vunpack.c.l.b16 %v839
        %v4823 = vunpack.c.h.b16 %v839
        %v4824 = vunpack.c.l.b16 %v840
        %v4825 = vunpack.c.h.b16 %v840
        %v4826 = vunpack.c.l.b16 %v841
        %v4827 = vunpack.c.h.b16 %v841
        %v4828 = vunpack.c.l.b16 %v842
        %v4829 = vunpack.c.h.b16 %v842
        %v4830 = vunpack.c.l.b16 %v843
        %v4831 = vunpack.c.h.b16 %v843
        %v4832 = vunpack.c.l.b16 %v844
        %v4833 = vunpack.c.h.b16 %v844
        %v4834 = vunpack.c.l.b16 %v845
        %v4835 = vunpack.c.h.b16 %v845
        %v4836 = vunpack.c.l.b16 %v846
        %v4837 = vunpack.c.h.b16 %v846
        %v4838 = vunpack.c.l.b16 %v847
        %v4839 = vunpack.c.h.b16 %v847
        %v4840 = vunpack.c.l.b16 %v848
        %v4841 = vunpack.c.h.b16 %v848
        %v4842 = vunpack.c.l.b16 %v849
        %v4843 = vunpack.c.h.b16 %v849
        %v4844 = vunpack.c.l.b16 %v850
        %v4845 = vunpack.c.h.b16 %v850
        %v4846 = vunpack.c.l.b16 %v851
        %v4847 = vunpack.c.h.b16 %v851
        %v4848 = vunpack.c.l.b16 %v852
        %v4849 = vunpack.c.h.b16 %v852
        %v4850 = vunpack.c.l.b16 %v853
        %v4851 = vunpack.c.h.b16 %v853
        %v4852 = vunpack.c.l.b16 %v854
        %v4853 = vunpack.c.h.b16 %v854
        %v4854 = vunpack.c.l.b16 %v855
        %v4855 = vunpack.c.h.b16 %v855
        %v4856 = vunpack.c.l.b16 %v856
        %v4857 = vunpack.c.h.b16 %v856
        %v4858 = vunpack.c.l.b16 %v857
        %v4859 = vunpack.c.h.b16 %v857
        %v4860 = vunpack.c.l.b16 %v858
        %v4861 = vunpack.c.h.b16 %v858
        %v4862 = vunpack.c.l.b16 %v859
        %v4863 = vunpack.c.h.b16 %v859
        %v4864 = vunpack.c.l.b16 %v860
        %v4865 = vunpack.c.h.b16 %v860
        %v4866 = vunpack.c.l.b16 %v861
        %v4867 = vunpack.c.h.b16 %v861
        %v4868 = vunpack.c.l.b16 %v862
        %v4869 = vunpack.c.h.b16 %v862
        %v4870 = vunpack.c.l.b16 %v863
        %v4871 = vunpack.c.h.b16 %v863
        %v4872 = vunpack.c.l.b16 %v864
        %v4873 = vunpack.c.h.b16 %v864
        %v4874 = vunpack.c.l.b16 %v865
        %v4875 = vunpack.c.h.b16 %v865
        %v4876 = vunpack.c.l.b16 %v866
        %v4877 = vunpack.c.h.b16 %v866
        %v4878 = vunpack.c.l.b16 %v867
        %v4879 = vunpack.c.h.b16 %v867
        %v4880 = vunpack.c.l.b16 %v868
        %v4881 = vunpack.c.h.b16 %v868
        %v4882 = vunpack.c.l.b16 %v869
        %v4883 = vunpack.c.h.b16 %v869
        %v4884 = vunpack.c.l.b16 %v870
        %v4885 = vunpack.c.h.b16 %v870
        %v4886 = vunpack.c.l.b16 %v871
        %v4887 = vunpack.c.h.b16 %v871
        %v4888 = vunpack.c.l.b16 %v872
        %v4889 = vunpack.c.h.b16 %v872
        %v4890 = vunpack.c.l.b16 %v873
        %v4891 = vunpack.c.h.b16 %v873
        %v4892 = vunpack.c.l.b16 %v874
        %v4893 = vunpack.c.h.b16 %v874
        %v4894 = vunpack.c.l.b16 %v875
        %v4895 = vunpack.c.h.b16 %v875
        %v4896 = vunpack.c.l.b16 %v876
        %v4897 = vunpack.c.h.b16 %v876
        %v4898 = vunpack.c.l.b16 %v877
        %v4899 = vunpack.c.h.b16 %v877
        %v4900 = vunpack.c.l.b16 %v878
        %v4901 = vunpack.c.h.b16 %v878
        %v4902 = vunpack.c.l.b16 %v879
        %v4903 = vunpack.c.h.b16 %v879
        %v4904 = vunpack.c.l.b16 %v880
        %v4905 = vunpack.c.h.b16 %v880
        %v4906 = vunpack.c.l.b16 %v881
        %v4907 = vunpack.c.h.b16 %v881
        %v4908 = vunpack.c.l.b16 %v882
        %v4909 = vunpack.c.h.b16 %v882
        %v4910 = vunpack.c.l.b16 %v883
        %v4911 = vunpack.c.h.b16 %v883
        %v4912 = vunpack.c.l.b16 %v884
        %v4913 = vunpack.c.h.b16 %v884
        %v4914 = vunpack.c.l.b16 %v885
        %v4915 = vunpack.c.h.b16 %v885
        %v4916 = vunpack.c.l.b16 %v886
        %v4917 = vunpack.c.h.b16 %v886
        %v4918 = vunpack.c.l.b16 %v887
        %v4919 = vunpack.c.h.b16 %v887
        %v4920 = vunpack.c.l.b16 %v888
        %v4921 = vunpack.c.h.b16 %v888
        %v4922 = vunpack.c.l.b16 %v889
        %v4923 = vunpack.c.h.b16 %v889
        %v4924 = vunpack.c.l.b16 %v890
        %v4925 = vunpack.c.h.b16 %v890
        %v4926 = vunpack.c.l.b16 %v891
        %v4927 = vunpack.c.h.b16 %v891
        %v4928 = vunpack.c.l.b16 %v892
        %v4929 = vunpack.c.h.b16 %v892
        %v4930 = vunpack.c.l.b16 %v893
        %v4931 = vunpack.c.h.b16 %v893
        %v4932 = vunpack.c.l.b16 %v894
        %v4933 = vunpack.c.h.b16 %v894
        %v4934 = vunpack.c.l.b16 %v895
        %v4935 = vunpack.c.h.b16 %v895
        %v4936 = vunpack.c.l.b16 %v896
        %v4937 = vunpack.c.h.b16 %v896
        %v4938 = vunpack.c.l.b16 %v897
        %v4939 = vunpack.c.h.b16 %v897
        %v4940 = vunpack.c.l.b16 %v898
        %v4941 = vunpack.c.h.b16 %v898
        %v4942 = vunpack.c.l.b16 %v899
        %v4943 = vunpack.c.h.b16 %v899
        %v4944 = vunpack.c.l.b16 %v900
        %v4945 = vunpack.c.h.b16 %v900
        %v4946 = vunpack.c.l.b16 %v901
        %v4947 = vunpack.c.h.b16 %v901
        %v4948 = vunpack.c.l.b16 %v902
        %v4949 = vunpack.c.h.b16 %v902
        %v4950 = vunpack.c.l.b16 %v903
        %v4951 = vunpack.c.h.b16 %v903
        %v4952 = vunpack.c.l.b16 %v904
        %v4953 = vunpack.c.h.b16 %v904
        %v4954 = vunpack.c.l.b16 %v905
        %v4955 = vunpack.c.h.b16 %v905
        %v4956 = vunpack.c.l.b16 %v906
        %v4957 = vunpack.c.h.b16 %v906
        %v4958 = vunpack.c.l.b16 %v907
        %v4959 = vunpack.c.h.b16 %v907
        %v4960 = vunpack.c.l.b16 %v908
        %v4961 = vunpack.c.h.b16 %v908
        %v4962 = vunpack.c.l.b16 %v909
        %v4963 = vunpack.c.h.b16 %v909
        %v4964 = vunpack.c.l.b16 %v910
        %v4965 = vunpack.c.h.b16 %v910
        %v4966 = vunpack.c.l.b16 %v911
        %v4967 = vunpack.c.h.b16 %v911
        %v4968 = vunpack.c.l.b16 %v912
        %v4969 = vunpack.c.h.b16 %v912
        %v4970 = vunpack.c.l.b16 %v913
        %v4971 = vunpack.c.h.b16 %v913
        %v4972 = vunpack.c.l.b16 %v914
        %v4973 = vunpack.c.h.b16 %v914
        %v4974 = vunpack.c.l.b16 %v915
        %v4975 = vunpack.c.h.b16 %v915
        %v4976 = vunpack.c.l.b16 %v916
        %v4977 = vunpack.c.h.b16 %v916
        %v4978 = vunpack.c.l.b16 %v917
        %v4979 = vunpack.c.h.b16 %v917
        %v4980 = vunpack.c.l.b16 %v918
        %v4981 = vunpack.c.h.b16 %v918
        %v4982 = vunpack.c.l.b16 %v919
        %v4983 = vunpack.c.h.b16 %v919
        %v4984 = vunpack.c.l.b16 %v920
        %v4985 = vunpack.c.h.b16 %v920
        %v4986 = vunpack.c.l.b16 %v921
        %v4987 = vunpack.c.h.b16 %v921
        %v4988 = vunpack.c.l.b16 %v922
        %v4989 = vunpack.c.h.b16 %v922
        %v4990 = vunpack.c.l.b16 %v923
        %v4991 = vunpack.c.h.b16 %v923
        %v4992 = vunpack.c.l.b16 %v924
        %v4993 = vunpack.c.h.b16 %v924
        %v4994 = vunpack.c.l.b16 %v925
        %v4995 = vunpack.c.h.b16 %v925
        %v4996 = vunpack.c.l.b16 %v926
        %v4997 = vunpack.c.h.b16 %v926
        %v4998 = vunpack.c.l.b16 %v927
        %v4999 = vunpack.c.h.b16 %v927
        %v5000 = vunpack.c.l.b16 %v928
        %v5001 = vunpack.c.h.b16 %v928
        %v5002 = vunpack.c.l.b16 %v929
        %v5003 = vunpack.c.h.b16 %v929
        %v5004 = vunpack.c.l.b16 %v930
        %v5005 = vunpack.c.h.b16 %v930
        %v5006 = vunpack.c.l.b16 %v931
        %v5007 = vunpack.c.h.b16 %v931
        %v5008 = vunpack.c.l.b16 %v932
        %v5009 = vunpack.c.h.b16 %v932
        %v5010 = vunpack.c.l.b16 %v933
        %v5011 = vunpack.c.h.b16 %v933
        %v5012 = vunpack.c.l.b16 %v934
        %v5013 = vunpack.c.h.b16 %v934
        %v5014 = vunpack.c.l.b16 %v935
        %v5015 = vunpack.c.h.b16 %v935
        %v5016 = vunpack.c.l.b16 %v936
        %v5017 = vunpack.c.h.b16 %v936
        %v5018 = vunpack.c.l.b16 %v937
        %v5019 = vunpack.c.h.b16 %v937
        %v5020 = vunpack.c.l.b16 %v938
        %v5021 = vunpack.c.h.b16 %v938
        %v5022 = vunpack.c.l.b16 %v939
        %v5023 = vunpack.c.h.b16 %v939
        %v5024 = vunpack.c.l.b16 %v940
        %v5025 = vunpack.c.h.b16 %v940
        %v5026 = vunpack.c.l.b16 %v941
        %v5027 = vunpack.c.h.b16 %v941
        %v5028 = vunpack.c.l.b16 %v942
        %v5029 = vunpack.c.h.b16 %v942
        %v5030 = vunpack.c.l.b16 %v943
        %v5031 = vunpack.c.h.b16 %v943
        %v5032 = vunpack.c.l.b16 %v944
        %v5033 = vunpack.c.h.b16 %v944
        %v5034 = vunpack.c.l.b16 %v945
        %v5035 = vunpack.c.h.b16 %v945
        %v5036 = vunpack.c.l.b16 %v946
        %v5037 = vunpack.c.h.b16 %v946
        %v5038 = vunpack.c.l.b16 %v947
        %v5039 = vunpack.c.h.b16 %v947
        %v5040 = vunpack.c.l.b16 %v948
        %v5041 = vunpack.c.h.b16 %v948
        %v5042 = vunpack.c.l.b16 %v949
        %v5043 = vunpack.c.h.b16 %v949
        %v5044 = vunpack.c.l.b16 %v950
        %v5045 = vunpack.c.h.b16 %v950
        %v5046 = vunpack.c.l.b16 %v951
        %v5047 = vunpack.c.h.b16 %v951
        %v5048 = vunpack.c.l.b16 %v952
        %v5049 = vunpack.c.h.b16 %v952
        %v5050 = vunpack.c.l.b16 %v953
        %v5051 = vunpack.c.h.b16 %v953
        %v5052 = vunpack.c.l.b16 %v954
        %v5053 = vunpack.c.h.b16 %v954
        %v5054 = vunpack.c.l.b16 %v955
        %v5055 = vunpack.c.h.b16 %v955
        %v5056 = vunpack.c.l.b16 %v956
        %v5057 = vunpack.c.h.b16 %v956
        %v5058 = vunpack.c.l.b16 %v957
        %v5059 = vunpack.c.h.b16 %v957
        %v5060 = vunpack.c.l.b16 %v958
        %v5061 = vunpack.c.h.b16 %v958
        %v5062 = vunpack.c.l.b16 %v959
        %v5063 = vunpack.c.h.b16 %v959
        %v5064 = vunpack.c.l.b16 %v960
        %v5065 = vunpack.c.h.b16 %v960
        %v5066 = vunpack.c.l.b16 %v961
        %v5067 = vunpack.c.h.b16 %v961
        %v5068 = vunpack.c.l.b16 %v962
        %v5069 = vunpack.c.h.b16 %v962
        %v5070 = vunpack.c.l.b16 %v963
        %v5071 = vunpack.c.h.b16 %v963
        %v5072 = vunpack.c.l.b16 %v964
        %v5073 = vunpack.c.h.b16 %v964
        %v5074 = vunpack.c.l.b16 %v965
        %v5075 = vunpack.c.h.b16 %v965
        %v5076 = vunpack.c.l.b16 %v966
        %v5077 = vunpack.c.h.b16 %v966
        %v5078 = vunpack.c.l.b16 %v967
        %v5079 = vunpack.c.h.b16 %v967
        %v5080 = vunpack.c.l.b16 %v968
        %v5081 = vunpack.c.h.b16 %v968
        %v5082 = vunpack.c.l.b16 %v969
        %v5083 = vunpack.c.h.b16 %v969
        %v5084 = vunpack.c.l.b16 %v970
        %v5085 = vunpack.c.h.b16 %v970
        %v5086 = vunpack.c.l.b16 %v971
        %v5087 = vunpack.c.h.b16 %v971
        %v5088 = vunpack.c.l.b16 %v972
        %v5089 = vunpack.c.h.b16 %v972
        %v5090 = vunpack.c.l.b16 %v973
        %v5091 = vunpack.c.h.b16 %v973
        %v5092 = vunpack.c.l.b16 %v974
        %v5093 = vunpack.c.h.b16 %v974
        %v5094 = vunpack.c.l.b16 %v975
        %v5095 = vunpack.c.h.b16 %v975
        %v5096 = vunpack.c.l.b16 %v976
        %v5097 = vunpack.c.h.b16 %v976
        %v5098 = vunpack.c.l.b16 %v977
        %v5099 = vunpack.c.h.b16 %v977
        %v5100 = vunpack.c.l.b16 %v978
        %v5101 = vunpack.c.h.b16 %v978
        %v5102 = vunpack.c.l.b16 %v979
        %v5103 = vunpack.c.h.b16 %v979
        %v5104 = vunpack.c.l.b16 %v980
        %v5105 = vunpack.c.h.b16 %v980
        %v5106 = vunpack.c.l.b16 %v981
        %v5107 = vunpack.c.h.b16 %v981
        %v5108 = vunpack.c.l.b16 %v982
        %v5109 = vunpack.c.h.b16 %v982
        %v5110 = vunpack.c.l.b16 %v983
        %v5111 = vunpack.c.h.b16 %v983
        %v5112 = vunpack.c.l.b16 %v984
        %v5113 = vunpack.c.h.b16 %v984
        %v5114 = vunpack.c.l.b16 %v985
        %v5115 = vunpack.c.h.b16 %v985
        %v5116 = vunpack.c.l.b16 %v986
        %v5117 = vunpack.c.h.b16 %v986
        %v5118 = vunpack.c.l.b16 %v987
        %v5119 = vunpack.c.h.b16 %v987
        %v5120 = vunpack.c.l.b16 %v988
        %v5121 = vunpack.c.h.b16 %v988
        %v5122 = vunpack.c.l.b16 %v989
        %v5123 = vunpack.c.h.b16 %v989
        %v5124 = vunpack.c.l.b16 %v990
        %v5125 = vunpack.c.h.b16 %v990
        %v5126 = vunpack.c.l.b16 %v991
        %v5127 = vunpack.c.h.b16 %v991
        %v5128 = vunpack.c.l.b16 %v992
        %v5129 = vunpack.c.h.b16 %v992
        %v5130 = vunpack.c.l.b16 %v993
        %v5131 = vunpack.c.h.b16 %v993
        %v5132 = vunpack.c.l.b16 %v994
        %v5133 = vunpack.c.h.b16 %v994
        %v5134 = vunpack.c.l.b16 %v995
        %v5135 = vunpack.c.h.b16 %v995
        %v5136 = vunpack.c.l.b16 %v996
        %v5137 = vunpack.c.h.b16 %v996
        %v5138 = vunpack.c.l.b16 %v997
        %v5139 = vunpack.c.h.b16 %v997
        %v5140 = vunpack.c.l.b16 %v998
        %v5141 = vunpack.c.h.b16 %v998
        %v5142 = vunpack.c.l.b16 %v999
        %v5143 = vunpack.c.h.b16 %v999
        %v5144 = vunpack.c.l.b16 %v1000
        %v5145 = vunpack.c.h.b16 %v1000
        %v5146 = vunpack.c.l.b16 %v1001
        %v5147 = vunpack.c.h.b16 %v1001
        %v5148 = vunpack.c.l.b16 %v1002
        %v5149 = vunpack.c.h.b16 %v1002
        %v5150 = vunpack.c.l.b16 %v1003
        %v5151 = vunpack.c.h.b16 %v1003
        %v5152 = vunpack.c.l.b16 %v1004
        %v5153 = vunpack.c.h.b16 %v1004
        %v5154 = vunpack.c.l.b16 %v1005
        %v5155 = vunpack.c.h.b16 %v1005
        %v5156 = vunpack.c.l.b16 %v1006
        %v5157 = vunpack.c.h.b16 %v1006
        %v5158 = vunpack.c.l.b16 %v1007
        %v5159 = vunpack.c.h.b16 %v1007
        %v5160 = vunpack.c.l.b16 %v1008
        %v5161 = vunpack.c.h.b16 %v1008
        %v5162 = vunpack.c.l.b16 %v1009
        %v5163 = vunpack.c.h.b16 %v1009
        %v5164 = vunpack.c.l.b16 %v1010
        %v5165 = vunpack.c.h.b16 %v1010
        %v5166 = vunpack.c.l.b16 %v1011
        %v5167 = vunpack.c.h.b16 %v1011
        %v5168 = vunpack.c.l.b16 %v1012
        %v5169 = vunpack.c.h.b16 %v1012
        %v5170 = vunpack.c.l.b16 %v1013
        %v5171 = vunpack.c.h.b16 %v1013
        %v5172 = vunpack.c.l.b16 %v1014
        %v5173 = vunpack.c.h.b16 %v1014
        %v5174 = vunpack.c.l.b16 %v1015
        %v5175 = vunpack.c.h.b16 %v1015
        %v5176 = vunpack.c.l.b16 %v1016
        %v5177 = vunpack.c.h.b16 %v1016
        %v5178 = vunpack.c.l.b16 %v1017
        %v5179 = vunpack.c.h.b16 %v1017
        %v5180 = vunpack.c.l.b16 %v1018
        %v5181 = vunpack.c.h.b16 %v1018
        %v5182 = vunpack.c.l.b16 %v1019
        %v5183 = vunpack.c.h.b16 %v1019
        %v5184 = vunpack.c.l.b16 %v1020
        %v5185 = vunpack.c.h.b16 %v1020
        %v5186 = vunpack.c.l.b16 %v1021
        %v5187 = vunpack.c.h.b16 %v1021
        %v5188 = vunpack.c.l.b16 %v1022
        %v5189 = vunpack.c.h.b16 %v1022
        %v5190 = vunpack.c.l.b16 %v1023
        %v5191 = vunpack.c.h.b16 %v1023
        %v5192 = vunpack.c.l.b16 %v1024
        %v5193 = vunpack.c.h.b16 %v1024
        %v5194 = vunpack.c.l.b16 %v1025
        %v5195 = vunpack.c.h.b16 %v1025
        %v5196 = vunpack.c.l.b16 %v1026
        %v5197 = vunpack.c.h.b16 %v1026
        %v5198 = vunpack.c.l.b16 %v1027
        %v5199 = vunpack.c.h.b16 %v1027
        %v5200 = vunpack.c.l.b16 %v1028
        %v5201 = vunpack.c.h.b16 %v1028
        %v5202 = vunpack.c.l.b16 %v1029
        %v5203 = vunpack.c.h.b16 %v1029
        %v5204 = vunpack.c.l.b16 %v1030
        %v5205 = vunpack.c.h.b16 %v1030
        %v5206 = vunpack.c.l.b16 %v1031
        %v5207 = vunpack.c.h.b16 %v1031
        %v5208 = vunpack.c.l.b16 %v1032
        %v5209 = vunpack.c.h.b16 %v1032
        %v5210 = vunpack.c.l.b16 %v1033
        %v5211 = vunpack.c.h.b16 %v1033
        %v5212 = vunpack.c.l.b16 %v1034
        %v5213 = vunpack.c.h.b16 %v1034
        %v5214 = vunpack.c.l.b16 %v1035
        %v5215 = vunpack.c.h.b16 %v1035
        %v5216 = vunpack.c.l.b16 %v1036
        %v5217 = vunpack.c.h.b16 %v1036
        %v5218 = vunpack.c.l.b16 %v1037
        %v5219 = vunpack.c.h.b16 %v1037
        %v5220 = vunpack.c.l.b16 %v1038
        %v5221 = vunpack.c.h.b16 %v1038
        %v5222 = vunpack.c.l.b16 %v1039
        %v5223 = vunpack.c.h.b16 %v1039
        %v5224 = vunpack.c.l.b16 %v1040
        %v5225 = vunpack.c.h.b16 %v1040
        %v5226 = vunpack.c.l.b16 %v1041
        %v5227 = vunpack.c.h.b16 %v1041
        %v5228 = vunpack.c.l.b16 %v1042
        %v5229 = vunpack.c.h.b16 %v1042
        %v5230 = vunpack.c.l.b16 %v1043
        %v5231 = vunpack.c.h.b16 %v1043
        %v5232 = vunpack.c.l.b16 %v1044
        %v5233 = vunpack.c.h.b16 %v1044
        %v5234 = vunpack.c.l.b16 %v1045
        %v5235 = vunpack.c.h.b16 %v1045
        %v5236 = vunpack.c.l.b16 %v1046
        %v5237 = vunpack.c.h.b16 %v1046
        %v5238 = vunpack.c.l.b16 %v1047
        %v5239 = vunpack.c.h.b16 %v1047
        %v5240 = vunpack.c.l.b16 %v1048
        %v5241 = vunpack.c.h.b16 %v1048
        %v5242 = vunpack.c.l.b16 %v1049
        %v5243 = vunpack.c.h.b16 %v1049
        %v5244 = vunpack.c.l.b16 %v1050
        %v5245 = vunpack.c.h.b16 %v1050
        %v5246 = vunpack.c.l.b16 %v1051
        %v5247 = vunpack.c.h.b16 %v1051
        %v5248 = vunpack.c.l.b16 %v1052
        %v5249 = vunpack.c.h.b16 %v1052
        %v5250 = vunpack.c.l.b16 %v1053
        %v5251 = vunpack.c.h.b16 %v1053
        %v5252 = vunpack.c.l.b16 %v1054
        %v5253 = vunpack.c.h.b16 %v1054
        %v5254 = vunpack.c.l.b16 %v1055
        %v5255 = vunpack.c.h.b16 %v1055
        %v5256 = vunpack.c.l.b16 %v1056
        %v5257 = vunpack.c.h.b16 %v1056
        %v5258 = vunpack.c.l.b16 %v1057
        %v5259 = vunpack.c.h.b16 %v1057
        %v5260 = vunpack.c.l.b16 %v1058
        %v5261 = vunpack.c.h.b16 %v1058
        %v5262 = vunpack.c.l.b16 %v1059
        %v5263 = vunpack.c.h.b16 %v1059
        %v5264 = vunpack.c.l.b16 %v1060
        %v5265 = vunpack.c.h.b16 %v1060
        %v5266 = vunpack.c.l.b16 %v1061
        %v5267 = vunpack.c.h.b16 %v1061
        %v5268 = vunpack.c.l.b16 %v1062
        %v5269 = vunpack.c.h.b16 %v1062
        %v5270 = vunpack.c.l.b16 %v1063
        %v5271 = vunpack.c.h.b16 %v1063
        %v5272 = vunpack.c.l.b16 %v1064
        %v5273 = vunpack.c.h.b16 %v1064
        %v5274 = vunpack.c.l.b16 %v1065
        %v5275 = vunpack.c.h.b16 %v1065
        %v5276 = vunpack.c.l.b16 %v1066
        %v5277 = vunpack.c.h.b16 %v1066
        %v5278 = vunpack.c.l.b16 %v1067
        %v5279 = vunpack.c.h.b16 %v1067
        %v5280 = vunpack.c.l.b16 %v1068
        %v5281 = vunpack.c.h.b16 %v1068
        %v5282 = vunpack.c.l.b16 %v1069
        %v5283 = vunpack.c.h.b16 %v1069
        %v5284 = vunpack.c.l.b16 %v1070
        %v5285 = vunpack.c.h.b16 %v1070
        %v5286 = vunpack.c.l.b16 %v1071
        %v5287 = vunpack.c.h.b16 %v1071
        %v5288 = vunpack.c.l.b16 %v1072
        %v5289 = vunpack.c.h.b16 %v1072
        %v5290 = vunpack.c.l.b16 %v1073
        %v5291 = vunpack.c.h.b16 %v1073
        %v5292 = vunpack.c.l.b16 %v1074
        %v5293 = vunpack.c.h.b16 %v1074
        %v5294 = vunpack.c.l.b16 %v1075
        %v5295 = vunpack.c.h.b16 %v1075
        %v5296 = vunpack.c.l.b16 %v1076
        %v5297 = vunpack.c.h.b16 %v1076
        %v5298 = vunpack.c.l.b16 %v1077
        %v5299 = vunpack.c.h.b16 %v1077
        %v5300 = vunpack.c.l.b16 %v1078
        %v5301 = vunpack.c.h.b16 %v1078
        %v5302 = vunpack.c.l.b16 %v1079
        %v5303 = vunpack.c.h.b16 %v1079
        %v5304 = vunpack.c.l.b16 %v1080
        %v5305 = vunpack.c.h.b16 %v1080
        %v5306 = vunpack.c.l.b16 %v1081
        %v5307 = vunpack.c.h.b16 %v1081
        %v5308 = vunpack.c.l.b16 %v1082
        %v5309 = vunpack.c.h.b16 %v1082
        %v5310 = vunpack.c.l.b16 %v1083
        %v5311 = vunpack.c.h.b16 %v1083
        %v5312 = vunpack.c.l.b16 %v1084
        %v5313 = vunpack.c.h.b16 %v1084
        %v5314 = vunpack.c.l.b16 %v1085
        %v5315 = vunpack.c.h.b16 %v1085
        %v5316 = vunpack.c.l.b16 %v1086
        %v5317 = vunpack.c.h.b16 %v1086
        %v5318 = vunpack.c.l.b16 %v1087
        %v5319 = vunpack.c.h.b16 %v1087
        %v5320 = vunpack.c.l.b16 %v1088
        %v5321 = vunpack.c.h.b16 %v1088
        %v5322 = vunpack.c.l.b16 %v1089
        %v5323 = vunpack.c.h.b16 %v1089
        %v5324 = vunpack.c.l.b16 %v1090
        %v5325 = vunpack.c.h.b16 %v1090
        %v5326 = vunpack.c.l.b16 %v1091
        %v5327 = vunpack.c.h.b16 %v1091
        %v5328 = vunpack.c.l.b16 %v1092
        %v5329 = vunpack.c.h.b16 %v1092
        %v5330 = vunpack.c.l.b16 %v1093
        %v5331 = vunpack.c.h.b16 %v1093
        %v5332 = vunpack.c.l.b16 %v1094
        %v5333 = vunpack.c.h.b16 %v1094
        %v5334 = vunpack.c.l.b16 %v1095
        %v5335 = vunpack.c.h.b16 %v1095
        %v5336 = vunpack.c.l.b16 %v1096
        %v5337 = vunpack.c.h.b16 %v1096
        %v5338 = vunpack.c.l.b16 %v1097
        %v5339 = vunpack.c.h.b16 %v1097
        %v5340 = vunpack.c.l.b16 %v1098
        %v5341 = vunpack.c.h.b16 %v1098
        %v5342 = vunpack.c.l.b16 %v1099
        %v5343 = vunpack.c.h.b16 %v1099
        %v5344 = vunpack.c.l.b16 %v1100
        %v5345 = vunpack.c.h.b16 %v1100
        %v5346 = vunpack.c.l.b16 %v1101
        %v5347 = vunpack.c.h.b16 %v1101
        %v5348 = vunpack.c.l.b16 %v1102
        %v5349 = vunpack.c.h.b16 %v1102
        %v5350 = vunpack.c.l.b16 %v1103
        %v5351 = vunpack.c.h.b16 %v1103
        %v5352 = vunpack.c.l.b16 %v1104
        %v5353 = vunpack.c.h.b16 %v1104
        %v5354 = vunpack.c.l.b16 %v1105
        %v5355 = vunpack.c.h.b16 %v1105
        %v5356 = vunpack.c.l.b16 %v1106
        %v5357 = vunpack.c.h.b16 %v1106
        %v5358 = vunpack.c.l.b16 %v1107
        %v5359 = vunpack.c.h.b16 %v1107
        %v5360 = vunpack.c.l.b16 %v1108
        %v5361 = vunpack.c.h.b16 %v1108
        %v5362 = vunpack.c.l.b16 %v1109
        %v5363 = vunpack.c.h.b16 %v1109
        %v5364 = vunpack.c.l.b16 %v1110
        %v5365 = vunpack.c.h.b16 %v1110
        %v5366 = vunpack.c.l.b16 %v1111
        %v5367 = vunpack.c.h.b16 %v1111
        %v5368 = vunpack.c.l.b16 %v1112
        %v5369 = vunpack.c.h.b16 %v1112
        %v5370 = vunpack.c.l.b16 %v1113
        %v5371 = vunpack.c.h.b16 %v1113
        %v5372 = vunpack.c.l.b16 %v1114
        %v5373 = vunpack.c.h.b16 %v1114
        %v5374 = vunpack.c.l.b16 %v1115
        %v5375 = vunpack.c.h.b16 %v1115
        %v5376 = vunpack.c.l.b16 %v1116
        %v5377 = vunpack.c.h.b16 %v1116
        %v5378 = vunpack.c.l.b16 %v1117
        %v5379 = vunpack.c.h.b16 %v1117
        %v5380 = vunpack.c.l.b16 %v1118
        %v5381 = vunpack.c.h.b16 %v1118
        %v5382 = vunpack.c.l.b16 %v1119
        %v5383 = vunpack.c.h.b16 %v1119
        %v5384 = vunpack.c.l.b16 %v1120
        %v5385 = vunpack.c.h.b16 %v1120
        %v5386 = vunpack.c.l.b16 %v1121
        %v5387 = vunpack.c.h.b16 %v1121
        %v5388 = vunpack.c.l.b16 %v1122
        %v5389 = vunpack.c.h.b16 %v1122
        %v5390 = vunpack.c.l.b16 %v1123
        %v5391 = vunpack.c.h.b16 %v1123
        %v5392 = vunpack.c.l.b16 %v1124
        %v5393 = vunpack.c.h.b16 %v1124
        %v5394 = vunpack.c.l.b16 %v1125
        %v5395 = vunpack.c.h.b16 %v1125
        %v5396 = vunpack.c.l.b16 %v1126
        %v5397 = vunpack.c.h.b16 %v1126
        %v5398 = vunpack.c.l.b16 %v1127
        %v5399 = vunpack.c.h.b16 %v1127
        %v5400 = vunpack.c.l.b16 %v1128
        %v5401 = vunpack.c.h.b16 %v1128
        %v5402 = vunpack.c.l.b16 %v1129
        %v5403 = vunpack.c.h.b16 %v1129
        %v5404 = vunpack.c.l.b16 %v1130
        %v5405 = vunpack.c.h.b16 %v1130
        %v5406 = vunpack.c.l.b16 %v1131
        %v5407 = vunpack.c.h.b16 %v1131
        %v5408 = vunpack.c.l.b16 %v1132
        %v5409 = vunpack.c.h.b16 %v1132
        %v5410 = vunpack.c.l.b16 %v1133
        %v5411 = vunpack.c.h.b16 %v1133
        %v5412 = vunpack.c.l.b16 %v1134
        %v5413 = vunpack.c.h.b16 %v1134
        %v5414 = vunpack.c.l.b16 %v1135
        %v5415 = vunpack.c.h.b16 %v1135
        %v5416 = vunpack.c.l.b16 %v1136
        %v5417 = vunpack.c.h.b16 %v1136
        %v5418 = vunpack.c.l.b16 %v1137
        %v5419 = vunpack.c.h.b16 %v1137
        %v5420 = vunpack.c.l.b16 %v1138
        %v5421 = vunpack.c.h.b16 %v1138
        %v5422 = vunpack.c.l.b16 %v1139
        %v5423 = vunpack.c.h.b16 %v1139
        %v5424 = vunpack.c.l.b16 %v1140
        %v5425 = vunpack.c.h.b16 %v1140
        %v5426 = vunpack.c.l.b16 %v1141
        %v5427 = vunpack.c.h.b16 %v1141
        %v5428 = vunpack.c.l.b16 %v1142
        %v5429 = vunpack.c.h.b16 %v1142
        %v5430 = vunpack.c.l.b16 %v1143
        %v5431 = vunpack.c.h.b16 %v1143
        %v5432 = vunpack.c.l.b16 %v1144
        %v5433 = vunpack.c.h.b16 %v1144
        %v5434 = vunpack.c.l.b16 %v1145
        %v5435 = vunpack.c.h.b16 %v1145
        %v5436 = vunpack.c.l.b16 %v1146
        %v5437 = vunpack.c.h.b16 %v1146
        %v5438 = vunpack.c.l.b16 %v1147
        %v5439 = vunpack.c.h.b16 %v1147
        %v5440 = vunpack.c.l.b16 %v1148
        %v5441 = vunpack.c.h.b16 %v1148
        %v5442 = vunpack.c.l.b16 %v1149
        %v5443 = vunpack.c.h.b16 %v1149
        %v5444 = vunpack.c.l.b16 %v1150
        %v5445 = vunpack.c.h.b16 %v1150
        %v5446 = vunpack.c.l.b16 %v1151
        %v5447 = vunpack.c.h.b16 %v1151
        %v5448 = vunpack.c.l.b16 %v1152
        %v5449 = vunpack.c.h.b16 %v1152
        %v5450 = vunpack.c.l.b16 %v1153
        %v5451 = vunpack.c.h.b16 %v1153
        %v5452 = vunpack.c.l.b16 %v1154
        %v5453 = vunpack.c.h.b16 %v1154
        %v5454 = vunpack.c.l.b16 %v1155
        %v5455 = vunpack.c.h.b16 %v1155
        %v5456 = vunpack.c.l.b16 %v1156
        %v5457 = vunpack.c.h.b16 %v1156
        %v5458 = vunpack.c.l.b16 %v1157
        %v5459 = vunpack.c.h.b16 %v1157
        %v5460 = vunpack.c.l.b16 %v1158
        %v5461 = vunpack.c.h.b16 %v1158
        %v5462 = vunpack.c.l.b16 %v1159
        %v5463 = vunpack.c.h.b16 %v1159
        %v5464 = vunpack.c.l.b16 %v1160
        %v5465 = vunpack.c.h.b16 %v1160
        %v5466 = vunpack.c.l.b16 %v1161
        %v5467 = vunpack.c.h.b16 %v1161
        %v5468 = vunpack.c.l.b16 %v1162
        %v5469 = vunpack.c.h.b16 %v1162
        %v5470 = vunpack.c.l.b16 %v1163
        %v5471 = vunpack.c.h.b16 %v1163
        %v5472 = vunpack.c.l.b16 %v1164
        %v5473 = vunpack.c.h.b16 %v1164
        %v5474 = vunpack.c.l.b16 %v1165
        %v5475 = vunpack.c.h.b16 %v1165
        %v5476 = vunpack.c.l.b16 %v1166
        %v5477 = vunpack.c.h.b16 %v1166
        %v5478 = vunpack.c.l.b16 %v1167
        %v5479 = vunpack.c.h.b16 %v1167
        %v5480 = vunpack.c.l.b16 %v1168
        %v5481 = vunpack.c.h.b16 %v1168
        %v5482 = vunpack.c.l.b16 %v1169
        %v5483 = vunpack.c.h.b16 %v1169
        %v5484 = vunpack.c.l.b16 %v1170
        %v5485 = vunpack.c.h.b16 %v1170
        %v5486 = vunpack.c.l.b16 %v1171
        %v5487 = vunpack.c.h.b16 %v1171
        %v5488 = vunpack.c.l.b16 %v1172
        %v5489 = vunpack.c.h.b16 %v1172
        %v5490 = vunpack.c.l.b16 %v1173
        %v5491 = vunpack.c.h.b16 %v1173
        %v5492 = vunpack.c.l.b16 %v1174
        %v5493 = vunpack.c.h.b16 %v1174
        %v5494 = vunpack.c.l.b16 %v1175
        %v5495 = vunpack.c.h.b16 %v1175
        %v5496 = vunpack.c.l.b16 %v1176
        %v5497 = vunpack.c.h.b16 %v1176
        %v5498 = vunpack.c.l.b16 %v1177
        %v5499 = vunpack.c.h.b16 %v1177
        %v5500 = vunpack.c.l.b16 %v1178
        %v5501 = vunpack.c.h.b16 %v1178
        %v5502 = vunpack.c.l.b16 %v1179
        %v5503 = vunpack.c.h.b16 %v1179
        %v5504 = vunpack.c.l.b16 %v1180
        %v5505 = vunpack.c.h.b16 %v1180
        %v5506 = vunpack.c.l.b16 %v1181
        %v5507 = vunpack.c.h.b16 %v1181
        %v5508 = vunpack.c.l.b16 %v1182
        %v5509 = vunpack.c.h.b16 %v1182
        %v5510 = vunpack.c.l.b16 %v1183
        %v5511 = vunpack.c.h.b16 %v1183
        %v5512 = vunpack.c.l.b16 %v1184
        %v5513 = vunpack.c.h.b16 %v1184
        %v5514 = vunpack.c.l.b16 %v1185
        %v5515 = vunpack.c.h.b16 %v1185
        %v5516 = vunpack.c.l.b16 %v1186
        %v5517 = vunpack.c.h.b16 %v1186
        %v5518 = vunpack.c.l.b16 %v1187
        %v5519 = vunpack.c.h.b16 %v1187
        %v5520 = vunpack.c.l.b16 %v1188
        %v5521 = vunpack.c.h.b16 %v1188
        %v5522 = vunpack.c.l.b16 %v1189
        %v5523 = vunpack.c.h.b16 %v1189
        %v5524 = vunpack.c.l.b16 %v1190
        %v5525 = vunpack.c.h.b16 %v1190
        %v5526 = vunpack.c.l.b16 %v1191
        %v5527 = vunpack.c.h.b16 %v1191
        %v5528 = vunpack.c.l.b16 %v1192
        %v5529 = vunpack.c.h.b16 %v1192
        %v5530 = vunpack.c.l.b16 %v1193
        %v5531 = vunpack.c.h.b16 %v1193
        %v5532 = vunpack.c.l.b16 %v1194
        %v5533 = vunpack.c.h.b16 %v1194
        %v5534 = vunpack.c.l.b16 %v1195
        %v5535 = vunpack.c.h.b16 %v1195
        %v5536 = vunpack.c.l.b16 %v1196
        %v5537 = vunpack.c.h.b16 %v1196
        %v5538 = vunpack.c.l.b16 %v1197
        %v5539 = vunpack.c.h.b16 %v1197
        %v5540 = vunpack.c.l.b16 %v1198
        %v5541 = vunpack.c.h.b16 %v1198
        %v5542 = vunpack.c.l.b16 %v1199
        %v5543 = vunpack.c.h.b16 %v1199
        %v5544 = vunpack.c.l.b16 %v1200
        %v5545 = vunpack.c.h.b16 %v1200
        %v5546 = vunpack.c.l.b16 %v1201
        %v5547 = vunpack.c.h.b16 %v1201
        %v5548 = vunpack.c.l.b16 %v1202
        %v5549 = vunpack.c.h.b16 %v1202
        %v5550 = vunpack.c.l.b16 %v1203
        %v5551 = vunpack.c.h.b16 %v1203
        %v5552 = vunpack.c.l.b16 %v1204
        %v5553 = vunpack.c.h.b16 %v1204
        %v5554 = vunpack.c.l.b16 %v1205
        %v5555 = vunpack.c.h.b16 %v1205
        %v5556 = vunpack.c.l.b16 %v1206
        %v5557 = vunpack.c.h.b16 %v1206
        %v5558 = vunpack.c.l.b16 %v1207
        %v5559 = vunpack.c.h.b16 %v1207
        %v5560 = vunpack.c.l.b16 %v1208
        %v5561 = vunpack.c.h.b16 %v1208
        %v5562 = vunpack.c.l.b16 %v1209
        %v5563 = vunpack.c.h.b16 %v1209
        %v5564 = vunpack.c.l.b16 %v1210
        %v5565 = vunpack.c.h.b16 %v1210
        %v5566 = vunpack.c.l.b16 %v1211
        %v5567 = vunpack.c.h.b16 %v1211
        %v5568 = vunpack.c.l.b16 %v1212
        %v5569 = vunpack.c.h.b16 %v1212
        %v5570 = vunpack.c.l.b16 %v1213
        %v5571 = vunpack.c.h.b16 %v1213
        %v5572 = vunpack.c.l.b16 %v1214
        %v5573 = vunpack.c.h.b16 %v1214
        %v5574 = vunpack.c.l.b16 %v1215
        %v5575 = vunpack.c.h.b16 %v1215
        %v5576 = vunpack.c.l.b16 %v1216
        %v5577 = vunpack.c.h.b16 %v1216
        %v5578 = vunpack.c.l.b16 %v1217
        %v5579 = vunpack.c.h.b16 %v1217
        %v5580 = vunpack.c.l.b16 %v1218
        %v5581 = vunpack.c.h.b16 %v1218
        %v5582 = vunpack.c.l.b16 %v1219
        %v5583 = vunpack.c.h.b16 %v1219
        %v5584 = vunpack.c.l.b16 %v1220
        %v5585 = vunpack.c.h.b16 %v1220
        %v5586 = vunpack.c.l.b16 %v1221
        %v5587 = vunpack.c.h.b16 %v1221
        %v5588 = vunpack.c.l.b16 %v1222
        %v5589 = vunpack.c.h.b16 %v1222
        %v5590 = vunpack.c.l.b16 %v1223
        %v5591 = vunpack.c.h.b16 %v1223
        %v5592 = vunpack.c.l.b16 %v1224
        %v5593 = vunpack.c.h.b16 %v1224
        %v5594 = vunpack.c.l.b16 %v1225
        %v5595 = vunpack.c.h.b16 %v1225
        %v5596 = vunpack.c.l.b16 %v1226
        %v5597 = vunpack.c.h.b16 %v1226
        %v5598 = vunpack.c.l.b16 %v1227
        %v5599 = vunpack.c.h.b16 %v1227
        %v5600 = vunpack.c.l.b16 %v1228
        %v5601 = vunpack.c.h.b16 %v1228
        %v5602 = vunpack.c.l.b16 %v1229
        %v5603 = vunpack.c.h.b16 %v1229
        %v5604 = vunpack.c.l.b16 %v1230
        %v5605 = vunpack.c.h.b16 %v1230
        %v5606 = vunpack.c.l.b16 %v1231
        %v5607 = vunpack.c.h.b16 %v1231
        %v5608 = vunpack.c.l.b16 %v1232
        %v5609 = vunpack.c.h.b16 %v1232
        %v5610 = vunpack.c.l.b16 %v1233
        %v5611 = vunpack.c.h.b16 %v1233
        %v5612 = vunpack.c.l.b16 %v1234
        %v5613 = vunpack.c.h.b16 %v1234
        %v5614 = vunpack.c.l.b16 %v1235
        %v5615 = vunpack.c.h.b16 %v1235
        %v5616 = vunpack.c.l.b16 %v1236
        %v5617 = vunpack.c.h.b16 %v1236
        %v5618 = vunpack.c.l.b16 %v1237
        %v5619 = vunpack.c.h.b16 %v1237
        %v5620 = vunpack.c.l.b16 %v1238
        %v5621 = vunpack.c.h.b16 %v1238
        %v5622 = vunpack.c.l.b16 %v1239
        %v5623 = vunpack.c.h.b16 %v1239
        %v5624 = vunpack.c.l.b16 %v1240
        %v5625 = vunpack.c.h.b16 %v1240
        %v5626 = vunpack.c.l.b16 %v1241
        %v5627 = vunpack.c.h.b16 %v1241
        %v5628 = vunpack.c.l.b16 %v1242
        %v5629 = vunpack.c.h.b16 %v1242
        %v5630 = vunpack.c.l.b16 %v1243
        %v5631 = vunpack.c.h.b16 %v1243
        %v5632 = vunpack.c.l.b16 %v1244
        %v5633 = vunpack.c.h.b16 %v1244
        %v5634 = vunpack.c.l.b16 %v1245
        %v5635 = vunpack.c.h.b16 %v1245
        %v5636 = vunpack.c.l.b16 %v1246
        %v5637 = vunpack.c.h.b16 %v1246
        %v5638 = vunpack.c.l.b16 %v1247
        %v5639 = vunpack.c.h.b16 %v1247
        %v5640 = vunpack.c.l.b16 %v1248
        %v5641 = vunpack.c.h.b16 %v1248
        %v5642 = vunpack.c.l.b16 %v1249
        %v5643 = vunpack.c.h.b16 %v1249
        %v5644 = vunpack.c.l.b16 %v1250
        %v5645 = vunpack.c.h.b16 %v1250
        %v5646 = vunpack.c.l.b16 %v1251
        %v5647 = vunpack.c.h.b16 %v1251
        %v5648 = vunpack.c.l.b16 %v1252
        %v5649 = vunpack.c.h.b16 %v1252
        %v5650 = vunpack.c.l.b16 %v1253
        %v5651 = vunpack.c.h.b16 %v1253
        %v5652 = vunpack.c.l.b16 %v1254
        %v5653 = vunpack.c.h.b16 %v1254
        %v5654 = vunpack.c.l.b16 %v1255
        %v5655 = vunpack.c.h.b16 %v1255
        %v5656 = vunpack.c.l.b16 %v1256
        %v5657 = vunpack.c.h.b16 %v1256
        %v5658 = vunpack.c.l.b16 %v1257
        %v5659 = vunpack.c.h.b16 %v1257
        %v5660 = vunpack.c.l.b16 %v1258
        %v5661 = vunpack.c.h.b16 %v1258
        %v5662 = vunpack.c.l.b16 %v1259
        %v5663 = vunpack.c.h.b16 %v1259
        %v5664 = vunpack.c.l.b16 %v1260
        %v5665 = vunpack.c.h.b16 %v1260
        %v5666 = vunpack.c.l.b16 %v1261
        %v5667 = vunpack.c.h.b16 %v1261
        %v5668 = vunpack.c.l.b16 %v1262
        %v5669 = vunpack.c.h.b16 %v1262
        %v5670 = vunpack.c.l.b16 %v1263
        %v5671 = vunpack.c.h.b16 %v1263
        %v5672 = vunpack.c.l.b16 %v1264
        %v5673 = vunpack.c.h.b16 %v1264
        %v5674 = vunpack.c.l.b16 %v1265
        %v5675 = vunpack.c.h.b16 %v1265
        %v5676 = vunpack.c.l.b16 %v1266
        %v5677 = vunpack.c.h.b16 %v1266
        %v5678 = vunpack.c.l.b16 %v1267
        %v5679 = vunpack.c.h.b16 %v1267
        %v5680 = vunpack.c.l.b16 %v1268
        %v5681 = vunpack.c.h.b16 %v1268
        %v5682 = vunpack.c.l.b16 %v1269
        %v5683 = vunpack.c.h.b16 %v1269
        %v5684 = vunpack.c.l.b16 %v1270
        %v5685 = vunpack.c.h.b16 %v1270
        %v5686 = vunpack.c.l.b16 %v1271
        %v5687 = vunpack.c.h.b16 %v1271
        %v5688 = vunpack.c.l.b16 %v1272
        %v5689 = vunpack.c.h.b16 %v1272
        %v5690 = vunpack.c.l.b16 %v1273
        %v5691 = vunpack.c.h.b16 %v1273
        %v5692 = vunpack.c.l.b16 %v1274
        %v5693 = vunpack.c.h.b16 %v1274
        %v5694 = vunpack.c.l.b16 %v1275
        %v5695 = vunpack.c.h.b16 %v1275
        %v5696 = vunpack.c.l.b16 %v1276
        %v5697 = vunpack.c.h.b16 %v1276
        %v5698 = vunpack.c.l.b16 %v1277
        %v5699 = vunpack.c.h.b16 %v1277
        %v5700 = vunpack.c.l.b16 %v1278
        %v5701 = vunpack.c.h.b16 %v1278
        %v5702 = vunpack.c.l.b16 %v1279
        %v5703 = vunpack.c.h.b16 %v1279
        %v5704 = vunpack.c.l.b16 %v1280
        %v5705 = vunpack.c.h.b16 %v1280
        %v5706 = vunpack.c.l.b16 %v1281
        %v5707 = vunpack.c.h.b16 %v1281
        %v5708 = vunpack.c.l.b16 %v1282
        %v5709 = vunpack.c.h.b16 %v1282
        %v5710 = vunpack.c.l.b16 %v1283
        %v5711 = vunpack.c.h.b16 %v1283
        %v5712 = vunpack.c.l.b16 %v1284
        %v5713 = vunpack.c.h.b16 %v1284
        %v5714 = vunpack.c.l.b16 %v1285
        %v5715 = vunpack.c.h.b16 %v1285
        %v5716 = vunpack.c.l.b16 %v1286
        %v5717 = vunpack.c.h.b16 %v1286
        %v5718 = vunpack.c.l.b16 %v1287
        %v5719 = vunpack.c.h.b16 %v1287
        %v5720 = vunpack.c.l.b16 %v1288
        %v5721 = vunpack.c.h.b16 %v1288
        %v5722 = vunpack.c.l.b16 %v1289
        %v5723 = vunpack.c.h.b16 %v1289
        %v5724 = vunpack.c.l.b16 %v1290
        %v5725 = vunpack.c.h.b16 %v1290
        %v5726 = vunpack.c.l.b16 %v1291
        %v5727 = vunpack.c.h.b16 %v1291
        %v5728 = vunpack.c.l.b16 %v1292
        %v5729 = vunpack.c.h.b16 %v1292
        %v5730 = vunpack.c.l.b16 %v1293
        %v5731 = vunpack.c.h.b16 %v1293
        %v5732 = vunpack.c.l.b16 %v1294
        %v5733 = vunpack.c.h.b16 %v1294
        %v5734 = vunpack.c.l.b16 %v1295
        %v5735 = vunpack.c.h.b16 %v1295
        %v5736 = vunpack.c.l.b16 %v1296
        %v5737 = vunpack.c.h.b16 %v1296
        %v5738 = vunpack.c.l.b16 %v1297
        %v5739 = vunpack.c.h.b16 %v1297
        %v5740 = vunpack.c.l.b16 %v1298
        %v5741 = vunpack.c.h.b16 %v1298
        %v5742 = vunpack.c.l.b16 %v1299
        %v5743 = vunpack.c.h.b16 %v1299
        %v5744 = vunpack.c.l.b16 %v1300
        %v5745 = vunpack.c.h.b16 %v1300
        %v5746 = vunpack.c.l.b16 %v1301
        %v5747 = vunpack.c.h.b16 %v1301
        %v5748 = vunpack.c.l.b16 %v1302
        %v5749 = vunpack.c.h.b16 %v1302
        %v5750 = vunpack.c.l.b16 %v1303
        %v5751 = vunpack.c.h.b16 %v1303
        %v5752 = vunpack.c.l.b16 %v1304
        %v5753 = vunpack.c.h.b16 %v1304
        %v5754 = vunpack.c.l.b16 %v1305
        %v5755 = vunpack.c.h.b16 %v1305
        %v5756 = vunpack.c.l.b16 %v1306
        %v5757 = vunpack.c.h.b16 %v1306
        %v5758 = vunpack.c.l.b16 %v1307
        %v5759 = vunpack.c.h.b16 %v1307
        %v5760 = vunpack.c.l.b16 %v1308
        %v5761 = vunpack.c.h.b16 %v1308
        %v5762 = vunpack.c.l.b16 %v1309
        %v5763 = vunpack.c.h.b16 %v1309
        %v5764 = vunpack.c.l.b16 %v1310
        %v5765 = vunpack.c.h.b16 %v1310
        %v5766 = vunpack.c.l.b16 %v1311
        %v5767 = vunpack.c.h.b16 %v1311
        %v5768 = vunpack.c.l.b16 %v1312
        %v5769 = vunpack.c.h.b16 %v1312
        %v5770 = vunpack.c.l.b16 %v1313
        %v5771 = vunpack.c.h.b16 %v1313
        %v5772 = vunpack.c.l.b16 %v1314
        %v5773 = vunpack.c.h.b16 %v1314
        %v5774 = vunpack.c.l.b16 %v1315
        %v5775 = vunpack.c.h.b16 %v1315
        %v5776 = vunpack.c.l.b16 %v1316
        %v5777 = vunpack.c.h.b16 %v1316
        %v5778 = vunpack.c.l.b16 %v1317
        %v5779 = vunpack.c.h.b16 %v1317
        %v5780 = vunpack.c.l.b16 %v1318
        %v5781 = vunpack.c.h.b16 %v1318
        %v5782 = vunpack.c.l.b16 %v1319
        %v5783 = vunpack.c.h.b16 %v1319
        %v5784 = vunpack.c.l.b16 %v1320
        %v5785 = vunpack.c.h.b16 %v1320
        %v5786 = vunpack.c.l.b16 %v1321
        %v5787 = vunpack.c.h.b16 %v1321
        %v5788 = vunpack.c.l.b16 %v1322
        %v5789 = vunpack.c.h.b16 %v1322
        %v5790 = vunpack.c.l.b16 %v1323
        %v5791 = vunpack.c.h.b16 %v1323
        %v5792 = vunpack.c.l.b16 %v1324
        %v5793 = vunpack.c.h.b16 %v1324
        %v5794 = vunpack.c.l.b16 %v1325
        %v5795 = vunpack.c.h.b16 %v1325
        %v5796 = vunpack.c.l.b16 %v1326
        %v5797 = vunpack.c.h.b16 %v1326
        %v5798 = vunpack.c.l.b16 %v1327
        %v5799 = vunpack.c.h.b16 %v1327
        %v5800 = vunpack.c.l.b16 %v1328
        %v5801 = vunpack.c.h.b16 %v1328
        %v5802 = vunpack.c.l.b16 %v1329
        %v5803 = vunpack.c.h.b16 %v1329
        %v5804 = vunpack.c.l.b16 %v1330
        %v5805 = vunpack.c.h.b16 %v1330
        %v5806 = vunpack.c.l.b16 %v1331
        %v5807 = vunpack.c.h.b16 %v1331
        %v5808 = vunpack.c.l.b16 %v1332
        %v5809 = vunpack.c.h.b16 %v1332
        %v5810 = vunpack.c.l.b16 %v1333
        %v5811 = vunpack.c.h.b16 %v1333
        %v5812 = vunpack.c.l.b16 %v1334
        %v5813 = vunpack.c.h.b16 %v1334
        %v5814 = vunpack.c.l.b16 %v1335
        %v5815 = vunpack.c.h.b16 %v1335
        %v5816 = vunpack.c.l.b16 %v1336
        %v5817 = vunpack.c.h.b16 %v1336
        %v5818 = vunpack.c.l.b16 %v1337
        %v5819 = vunpack.c.h.b16 %v1337
        %v5820 = vunpack.c.l.b16 %v1338
        %v5821 = vunpack.c.h.b16 %v1338
        %v5822 = vunpack.c.l.b16 %v1339
        %v5823 = vunpack.c.h.b16 %v1339
        %v5824 = vunpack.c.l.b16 %v1340
        %v5825 = vunpack.c.h.b16 %v1340
        %v5826 = vunpack.c.l.b16 %v1341
        %v5827 = vunpack.c.h.b16 %v1341
        %v5828 = vunpack.c.l.b16 %v1342
        %v5829 = vunpack.c.h.b16 %v1342
        %v5830 = vunpack.c.l.b16 %v1343
        %v5831 = vunpack.c.h.b16 %v1343
        %v5832 = vunpack.c.l.b16 %v1344
        %v5833 = vunpack.c.h.b16 %v1344
        %v5834 = vunpack.c.l.b16 %v1345
        %v5835 = vunpack.c.h.b16 %v1345
        %v5836 = vunpack.c.l.b16 %v1346
        %v5837 = vunpack.c.h.b16 %v1346
        %v5838 = vunpack.c.l.b16 %v1347
        %v5839 = vunpack.c.h.b16 %v1347
        %v5840 = vunpack.c.l.b16 %v1348
        %v5841 = vunpack.c.h.b16 %v1348
        %v5842 = vunpack.c.l.b16 %v1349
        %v5843 = vunpack.c.h.b16 %v1349
        %v5844 = vunpack.c.l.b16 %v1350
        %v5845 = vunpack.c.h.b16 %v1350
        %v5846 = vunpack.c.l.b16 %v1351
        %v5847 = vunpack.c.h.b16 %v1351
        %v5848 = vunpack.c.l.b16 %v1352
        %v5849 = vunpack.c.h.b16 %v1352
        %v5850 = vunpack.c.l.b16 %v1353
        %v5851 = vunpack.c.h.b16 %v1353
        %v5852 = vunpack.c.l.b16 %v1354
        %v5853 = vunpack.c.h.b16 %v1354
        %v5854 = vunpack.c.l.b16 %v1355
        %v5855 = vunpack.c.h.b16 %v1355
        %v5856 = vunpack.c.l.b16 %v1356
        %v5857 = vunpack.c.h.b16 %v1356
        %v5858 = vunpack.c.l.b16 %v1357
        %v5859 = vunpack.c.h.b16 %v1357
        %v5860 = vunpack.c.l.b16 %v1358
        %v5861 = vunpack.c.h.b16 %v1358
        %v5862 = vunpack.c.l.b16 %v1359
        %v5863 = vunpack.c.h.b16 %v1359
        %v5864 = vunpack.c.l.b16 %v1360
        %v5865 = vunpack.c.h.b16 %v1360
        %v5866 = vunpack.c.l.b16 %v1361
        %v5867 = vunpack.c.h.b16 %v1361
        %v5868 = vunpack.c.l.b16 %v1362
        %v5869 = vunpack.c.h.b16 %v1362
        %v5870 = vunpack.c.l.b16 %v1363
        %v5871 = vunpack.c.h.b16 %v1363
        %v5872 = vunpack.c.l.b16 %v1364
        %v5873 = vunpack.c.h.b16 %v1364
        %v5874 = vunpack.c.l.b16 %v1365
        %v5875 = vunpack.c.h.b16 %v1365
        %v5876 = vunpack.c.l.b16 %v1366
        %v5877 = vunpack.c.h.b16 %v1366
        %v5878 = vunpack.c.l.b16 %v1367
        %v5879 = vunpack.c.h.b16 %v1367
        %v5880 = vunpack.c.l.b16 %v1368
        %v5881 = vunpack.c.h.b16 %v1368
        %v5882 = vunpack.c.l.b16 %v1369
        %v5883 = vunpack.c.h.b16 %v1369
        %v5884 = vunpack.c.l.b16 %v1370
        %v5885 = vunpack.c.h.b16 %v1370
        %v5886 = vunpack.c.l.b16 %v1371
        %v5887 = vunpack.c.h.b16 %v1371
        %v5888 = vunpack.c.l.b16 %v1372
        %v5889 = vunpack.c.h.b16 %v1372
        %v5890 = vunpack.c.l.b16 %v1373
        %v5891 = vunpack.c.h.b16 %v1373
        %v5892 = vunpack.c.l.b16 %v1374
        %v5893 = vunpack.c.h.b16 %v1374
        %v5894 = vunpack.c.l.b16 %v1375
        %v5895 = vunpack.c.h.b16 %v1375
        %v5896 = vunpack.c.l.b16 %v1376
        %v5897 = vunpack.c.h.b16 %v1376
        %v5898 = vunpack.c.l.b16 %v1377
        %v5899 = vunpack.c.h.b16 %v1377
        %v5900 = vunpack.c.l.b16 %v1378
        %v5901 = vunpack.c.h.b16 %v1378
        %v5902 = vunpack.c.l.b16 %v1379
        %v5903 = vunpack.c.h.b16 %v1379
        %v5904 = vunpack.c.l.b16 %v1380
        %v5905 = vunpack.c.h.b16 %v1380
        %v5906 = vunpack.c.l.b16 %v1381
        %v5907 = vunpack.c.h.b16 %v1381
        %v5908 = vunpack.c.l.b16 %v1382
        %v5909 = vunpack.c.h.b16 %v1382
        %v5910 = vunpack.c.l.b16 %v1383
        %v5911 = vunpack.c.h.b16 %v1383
        %v5912 = vunpack.c.l.b16 %v1384
        %v5913 = vunpack.c.h.b16 %v1384
        %v5914 = vunpack.c.l.b16 %v1385
        %v5915 = vunpack.c.h.b16 %v1385
        %v5916 = vunpack.c.l.b16 %v1386
        %v5917 = vunpack.c.h.b16 %v1386
        %v5918 = vunpack.c.l.b16 %v1387
        %v5919 = vunpack.c.h.b16 %v1387
        %v5920 = vunpack.c.l.b16 %v1388
        %v5921 = vunpack.c.h.b16 %v1388
        %v5922 = vunpack.c.l.b16 %v1389
        %v5923 = vunpack.c.h.b16 %v1389
        %v5924 = vunpack.c.l.b16 %v1390
        %v5925 = vunpack.c.h.b16 %v1390
        %v5926 = vunpack.c.l.b16 %v1391
        %v5927 = vunpack.c.h.b16 %v1391
        %v5928 = vunpack.c.l.b16 %v1392
        %v5929 = vunpack.c.h.b16 %v1392
        %v5930 = vunpack.c.l.b16 %v1393
        %v5931 = vunpack.c.h.b16 %v1393
        %v5932 = vunpack.c.l.b16 %v1394
        %v5933 = vunpack.c.h.b16 %v1394
        %v5934 = vunpack.c.l.b16 %v1395
        %v5935 = vunpack.c.h.b16 %v1395
        %v5936 = vunpack.c.l.b16 %v1396
        %v5937 = vunpack.c.h.b16 %v1396
        %v5938 = vunpack.c.l.b16 %v1397
        %v5939 = vunpack.c.h.b16 %v1397
        %v5940 = vunpack.c.l.b16 %v1398
        %v5941 = vunpack.c.h.b16 %v1398
        %v5942 = vunpack.c.l.b16 %v1399
        %v5943 = vunpack.c.h.b16 %v1399
        %v5944 = vunpack.c.l.b16 %v1400
        %v5945 = vunpack.c.h.b16 %v1400
        %v5946 = vunpack.c.l.b16 %v1401
        %v5947 = vunpack.c.h.b16 %v1401
        %v5948 = vunpack.c.l.b16 %v1402
        %v5949 = vunpack.c.h.b16 %v1402
        %v5950 = vunpack.c.l.b16 %v1403
        %v5951 = vunpack.c.h.b16 %v1403
        %v5952 = vunpack.c.l.b16 %v1404
        %v5953 = vunpack.c.h.b16 %v1404
        %v5954 = vunpack.c.l.b16 %v1405
        %v5955 = vunpack.c.h.b16 %v1405
        %v5956 = vunpack.c.l.b16 %v1406
        %v5957 = vunpack.c.h.b16 %v1406
        %v5958 = vunpack.c.l.b16 %v1407
        %v5959 = vunpack.c.h.b16 %v1407
        %v5960 = vunpack.c.l.b16 %v1408
        %v5961 = vunpack.c.h.b16 %v1408
        %v5962 = vunpack.c.l.b16 %v1409
        %v5963 = vunpack.c.h.b16 %v1409
        %v5964 = vunpack.c.l.b16 %v1410
        %v5965 = vunpack.c.h.b16 %v1410
        %v5966 = vunpack.c.l.b16 %v1411
        %v5967 = vunpack.c.h.b16 %v1411
        %v5968 = vunpack.c.l.b16 %v1412
        %v5969 = vunpack.c.h.b16 %v1412
        %v5970 = vunpack.c.l.b16 %v1413
        %v5971 = vunpack.c.h.b16 %v1413
        %v5972 = vunpack.c.l.b16 %v1414
        %v5973 = vunpack.c.h.b16 %v1414
        %v5974 = vunpack.c.l.b16 %v1415
        %v5975 = vunpack.c.h.b16 %v1415
        %v5976 = vunpack.c.l.b16 %v1416
        %v5977 = vunpack.c.h.b16 %v1416
        %v5978 = vunpack.c.l.b16 %v1417
        %v5979 = vunpack.c.h.b16 %v1417
        %v5980 = vunpack.c.l.b16 %v1418
        %v5981 = vunpack.c.h.b16 %v1418
        %v5982 = vunpack.c.l.b16 %v1419
        %v5983 = vunpack.c.h.b16 %v1419
        %v5984 = vunpack.c.l.b16 %v1420
        %v5985 = vunpack.c.h.b16 %v1420
        %v5986 = vunpack.c.l.b16 %v1421
        %v5987 = vunpack.c.h.b16 %v1421
        %v5988 = vunpack.c.l.b16 %v1422
        %v5989 = vunpack.c.h.b16 %v1422
        %v5990 = vunpack.c.l.b16 %v1423
        %v5991 = vunpack.c.h.b16 %v1423
        %v5992 = vunpack.c.l.b16 %v1424
        %v5993 = vunpack.c.h.b16 %v1424
        %v5994 = vunpack.c.l.b16 %v1425
        %v5995 = vunpack.c.h.b16 %v1425
        %v5996 = vunpack.c.l.b16 %v1426
        %v5997 = vunpack.c.h.b16 %v1426
        %v5998 = vunpack.c.l.b16 %v1427
        %v5999 = vunpack.c.h.b16 %v1427
        %v6000 = vunpack.c.l.b16 %v1428
        %v6001 = vunpack.c.h.b16 %v1428
        %v6002 = vunpack.c.l.b16 %v1429
        %v6003 = vunpack.c.h.b16 %v1429
        %v6004 = vunpack.c.l.b16 %v1430
        %v6005 = vunpack.c.h.b16 %v1430
        %v6006 = vunpack.c.l.b16 %v1431
        %v6007 = vunpack.c.h.b16 %v1431
        %v6008 = vunpack.c.l.b16 %v1432
        %v6009 = vunpack.c.h.b16 %v1432
        %v6010 = vunpack.c.l.b16 %v1433
        %v6011 = vunpack.c.h.b16 %v1433
        %v6012 = vunpack.c.l.b16 %v1434
        %v6013 = vunpack.c.h.b16 %v1434
        %v6014 = vunpack.c.l.b16 %v1435
        %v6015 = vunpack.c.h.b16 %v1435
        %v6016 = vunpack.c.l.b16 %v1436
        %v6017 = vunpack.c.h.b16 %v1436
        %v6018 = vunpack.c.l.b16 %v1437
        %v6019 = vunpack.c.h.b16 %v1437
        %v6020 = vunpack.c.l.b16 %v1438
        %v6021 = vunpack.c.h.b16 %v1438
        %v6022 = vunpack.c.l.b16 %v1439
        %v6023 = vunpack.c.h.b16 %v1439
        %v6024 = vunpack.c.l.b16 %v1440
        %v6025 = vunpack.c.h.b16 %v1440
        %v6026 = vunpack.c.l.b16 %v1441
        %v6027 = vunpack.c.h.b16 %v1441
        %v6028 = vunpack.c.l.b16 %v1442
        %v6029 = vunpack.c.h.b16 %v1442
        %v6030 = vunpack.c.l.b16 %v1443
        %v6031 = vunpack.c.h.b16 %v1443
        %v6032 = vunpack.c.l.b16 %v1444
        %v6033 = vunpack.c.h.b16 %v1444
        %v6034 = vunpack.c.l.b16 %v1445
        %v6035 = vunpack.c.h.b16 %v1445
        %v6036 = vunpack.c.l.b16 %v1446
        %v6037 = vunpack.c.h.b16 %v1446
        %v6038 = vunpack.c.l.b16 %v1447
        %v6039 = vunpack.c.h.b16 %v1447
        %v6040 = vunpack.c.l.b16 %v1448
        %v6041 = vunpack.c.h.b16 %v1448
        %v6042 = vunpack.c.l.b16 %v1449
        %v6043 = vunpack.c.h.b16 %v1449
        %v6044 = vunpack.c.l.b16 %v1450
        %v6045 = vunpack.c.h.b16 %v1450
        %v6046 = vunpack.c.l.b16 %v1451
        %v6047 = vunpack.c.h.b16 %v1451
        %v6048 = vunpack.c.l.b16 %v1452
        %v6049 = vunpack.c.h.b16 %v1452
        %v6050 = vunpack.c.l.b16 %v1453
        %v6051 = vunpack.c.h.b16 %v1453
        %v6052 = vunpack.c.l.b16 %v1454
        %v6053 = vunpack.c.h.b16 %v1454
        %v6054 = vunpack.c.l.b16 %v1455
        %v6055 = vunpack.c.h.b16 %v1455
        %v6056 = vunpack.c.l.b16 %v1456
        %v6057 = vunpack.c.h.b16 %v1456
        %v6058 = vunpack.c.l.b16 %v1457
        %v6059 = vunpack.c.h.b16 %v1457
        %v6060 = vunpack.c.l.b16 %v1458
        %v6061 = vunpack.c.h.b16 %v1458
        %v6062 = vunpack.c.l.b16 %v1459
        %v6063 = vunpack.c.h.b16 %v1459
        %v6064 = vunpack.c.l.b16 %v1460
        %v6065 = vunpack.c.h.b16 %v1460
        %v6066 = vunpack.c.l.b16 %v1461
        %v6067 = vunpack.c.h.b16 %v1461
        %v6068 = vunpack.c.l.b16 %v1462
        %v6069 = vunpack.c.h.b16 %v1462
        %v6070 = vunpack.c.l.b16 %v1463
        %v6071 = vunpack.c.h.b16 %v1463
        %v6072 = vunpack.c.l.b16 %v1464
        %v6073 = vunpack.c.h.b16 %v1464
        %v6074 = vunpack.c.l.b16 %v1465
        %v6075 = vunpack.c.h.b16 %v1465
        %v6076 = vunpack.c.l.b16 %v1466
        %v6077 = vunpack.c.h.b16 %v1466
        %v6078 = vunpack.c.l.b16 %v1467
        %v6079 = vunpack.c.h.b16 %v1467
        %v6080 = vunpack.c.l.b16 %v1468
        %v6081 = vunpack.c.h.b16 %v1468
        %v6082 = vunpack.c.l.b16 %v1469
        %v6083 = vunpack.c.h.b16 %v1469
        %v6084 = vunpack.c.l.b16 %v1470
        %v6085 = vunpack.c.h.b16 %v1470
        %v6086 = vunpack.c.l.b16 %v1471
        %v6087 = vunpack.c.h.b16 %v1471
        %v6088 = vunpack.c.l.b16 %v1472
        %v6089 = vunpack.c.h.b16 %v1472
        %v6090 = vunpack.c.l.b16 %v1473
        %v6091 = vunpack.c.h.b16 %v1473
        %v6092 = vunpack.c.l.b16 %v1474
        %v6093 = vunpack.c.h.b16 %v1474
        %v6094 = vunpack.c.l.b16 %v1475
        %v6095 = vunpack.c.h.b16 %v1475
        %v6096 = vunpack.c.l.b16 %v1476
        %v6097 = vunpack.c.h.b16 %v1476
        %v6098 = vunpack.c.l.b16 %v1477
        %v6099 = vunpack.c.h.b16 %v1477
        %v6100 = vunpack.c.l.b16 %v1478
        %v6101 = vunpack.c.h.b16 %v1478
        %v6102 = vunpack.c.l.b16 %v1479
        %v6103 = vunpack.c.h.b16 %v1479
        %v6104 = vunpack.c.l.b16 %v1480
        %v6105 = vunpack.c.h.b16 %v1480
        %v6106 = vunpack.c.l.b16 %v1481
        %v6107 = vunpack.c.h.b16 %v1481
        %v6108 = vunpack.c.l.b16 %v1482
        %v6109 = vunpack.c.h.b16 %v1482
        %v6110 = vunpack.c.l.b16 %v1483
        %v6111 = vunpack.c.h.b16 %v1483
        %v6112 = vunpack.c.l.b16 %v1484
        %v6113 = vunpack.c.h.b16 %v1484
        %v6114 = vunpack.c.l.b16 %v1485
        %v6115 = vunpack.c.h.b16 %v1485
        %v6116 = vunpack.c.l.b16 %v1486
        %v6117 = vunpack.c.h.b16 %v1486
        %v6118 = vunpack.c.l.b16 %v1487
        %v6119 = vunpack.c.h.b16 %v1487
        %v6120 = vunpack.c.l.b16 %v1488
        %v6121 = vunpack.c.h.b16 %v1488
        %v6122 = vunpack.c.l.b16 %v1489
        %v6123 = vunpack.c.h.b16 %v1489
        %v6124 = vunpack.c.l.b16 %v1490
        %v6125 = vunpack.c.h.b16 %v1490
        %v6126 = vunpack.c.l.b16 %v1491
        %v6127 = vunpack.c.h.b16 %v1491
        %v6128 = vunpack.c.l.b16 %v1492
        %v6129 = vunpack.c.h.b16 %v1492
        %v6130 = vunpack.c.l.b16 %v1493
        %v6131 = vunpack.c.h.b16 %v1493
        %v6132 = vunpack.c.l.b16 %v1494
        %v6133 = vunpack.c.h.b16 %v1494
        %v6134 = vunpack.c.l.b16 %v1495
        %v6135 = vunpack.c.h.b16 %v1495
        %v6136 = vunpack.c.l.b16 %v1496
        %v6137 = vunpack.c.h.b16 %v1496
        %v6138 = vunpack.c.l.b16 %v1497
        %v6139 = vunpack.c.h.b16 %v1497
        %v6140 = vunpack.c.l.b16 %v1498
        %v6141 = vunpack.c.h.b16 %v1498
        %v6142 = vunpack.c.l.b16 %v1499
        %v6143 = vunpack.c.h.b16 %v1499
        %v6144 = vunpack.c.l.b16 %v1500
        %v6145 = vunpack.c.h.b16 %v1500
        %v6146 = vunpack.c.l.b16 %v1501
        %v6147 = vunpack.c.h.b16 %v1501
        %v6148 = vunpack.c.l.b16 %v1502
        %v6149 = vunpack.c.h.b16 %v1502
        %v6150 = vunpack.c.l.b16 %v1503
        %v6151 = vunpack.c.h.b16 %v1503
        %v6152 = vunpack.c.l.b16 %v1504
        %v6153 = vunpack.c.h.b16 %v1504
        %v6154 = vunpack.c.l.b16 %v1505
        %v6155 = vunpack.c.h.b16 %v1505
        %v6156 = vunpack.c.l.b16 %v1506
        %v6157 = vunpack.c.h.b16 %v1506
        %v6158 = vunpack.c.l.b16 %v1507
        %v6159 = vunpack.c.h.b16 %v1507
        %v6160 = vunpack.c.l.b16 %v1508
        %v6161 = vunpack.c.h.b16 %v1508
        %v6162 = vunpack.c.l.b16 %v1509
        %v6163 = vunpack.c.h.b16 %v1509
        %v6164 = vunpack.c.l.b16 %v1510
        %v6165 = vunpack.c.h.b16 %v1510
        %v6166 = vunpack.c.l.b16 %v1511
        %v6167 = vunpack.c.h.b16 %v1511
        %v6168 = vunpack.c.l.b16 %v1512
        %v6169 = vunpack.c.h.b16 %v1512
        %v6170 = vunpack.c.l.b16 %v1513
        %v6171 = vunpack.c.h.b16 %v1513
        %v6172 = vunpack.c.l.b16 %v1514
        %v6173 = vunpack.c.h.b16 %v1514
        %v6174 = vunpack.c.l.b16 %v1515
        %v6175 = vunpack.c.h.b16 %v1515
        %v6176 = vunpack.c.l.b16 %v1516
        %v6177 = vunpack.c.h.b16 %v1516
        %v6178 = vunpack.c.l.b16 %v1517
        %v6179 = vunpack.c.h.b16 %v1517
        %v6180 = vunpack.c.l.b16 %v1518
        %v6181 = vunpack.c.h.b16 %v1518
        %v6182 = vunpack.c.l.b16 %v1519
        %v6183 = vunpack.c.h.b16 %v1519
        %v6184 = vunpack.c.l.b16 %v1520
        %v6185 = vunpack.c.h.b16 %v1520
        %v6186 = vunpack.c.l.b16 %v1521
        %v6187 = vunpack.c.h.b16 %v1521
        %v6188 = vunpack.c.l.b16 %v1522
        %v6189 = vunpack.c.h.b16 %v1522
        %v6190 = vunpack.c.l.b16 %v1523
        %v6191 = vunpack.c.h.b16 %v1523
        %v6192 = vunpack.c.l.b16 %v1524
        %v6193 = vunpack.c.h.b16 %v1524
        %v6194 = vunpack.c.l.b16 %v1525
        %v6195 = vunpack.c.h.b16 %v1525
        %v6196 = vunpack.c.l.b16 %v1526
        %v6197 = vunpack.c.h.b16 %v1526
        %v6198 = vunpack.c.l.b16 %v1527
        %v6199 = vunpack.c.h.b16 %v1527
        %v6200 = vunpack.c.l.b16 %v1528
        %v6201 = vunpack.c.h.b16 %v1528
        %v6202 = vunpack.c.l.b16 %v1529
        %v6203 = vunpack.c.h.b16 %v1529
        %v6204 = vunpack.c.l.b16 %v1530
        %v6205 = vunpack.c.h.b16 %v1530
        %v6206 = vunpack.c.l.b16 %v1531
        %v6207 = vunpack.c.h.b16 %v1531
        %v6208 = vunpack.c.l.b16 %v1532
        %v6209 = vunpack.c.h.b16 %v1532
        %v6210 = vunpack.c.l.b16 %v1533
        %v6211 = vunpack.c.h.b16 %v1533
        %v6212 = vunpack.c.l.b16 %v1534
        %v6213 = vunpack.c.h.b16 %v1534
        %v6214 = vunpack.c.l.b16 %v1535
        %v6215 = vunpack.c.h.b16 %v1535
        %v6216 = vunpack.c.l.b16 %v1536
        %v6217 = vunpack.c.h.b16 %v1536
        %v6218 = vunpack.c.l.b16 %v1537
        %v6219 = vunpack.c.h.b16 %v1537
        %v6220 = vunpack.c.l.b16 %v1538
        %v6221 = vunpack.c.h.b16 %v1538
        %v6222 = vunpack.c.l.b16 %v1539
        %v6223 = vunpack.c.h.b16 %v1539
        %v6224 = vunpack.c.l.b16 %v1540
        %v6225 = vunpack.c.h.b16 %v1540
        %v6226 = vunpack.c.l.b16 %v1541
        %v6227 = vunpack.c.h.b16 %v1541
        %v6228 = vunpack.c.l.b16 %v1542
        %v6229 = vunpack.c.h.b16 %v1542
        %v6230 = vunpack.c.l.b16 %v1543
        %v6231 = vunpack.c.h.b16 %v1543
        %v6232 = vunpack.c.l.b16 %v1544
        %v6233 = vunpack.c.h.b16 %v1544
        %v6234 = vunpack.c.l.b16 %v1545
        %v6235 = vunpack.c.h.b16 %v1545
        %v6236 = vunpack.c.l.b16 %v1546
        %v6237 = vunpack.c.h.b16 %v1546
        %v6238 = vunpack.c.l.b16 %v1547
        %v6239 = vunpack.c.h.b16 %v1547
        %v6240 = vunpack.c.l.b16 %v1548
        %v6241 = vunpack.c.h.b16 %v1548
        %v6242 = vunpack.c.l.b16 %v1549
        %v6243 = vunpack.c.h.b16 %v1549
        %v6244 = vunpack.c.l.b16 %v1550
        %v6245 = vunpack.c.h.b16 %v1550
        %v6246 = vunpack.c.l.b16 %v1551
        %v6247 = vunpack.c.h.b16 %v1551
        %v6248 = vunpack.c.l.b16 %v1552
        %v6249 = vunpack.c.h.b16 %v1552
        %v6250 = vunpack.c.l.b16 %v1553
        %v6251 = vunpack.c.h.b16 %v1553
        %v6252 = vunpack.c.l.b16 %v1554
        %v6253 = vunpack.c.h.b16 %v1554
        %v6254 = vunpack.c.l.b16 %v1555
        %v6255 = vunpack.c.h.b16 %v1555
        %v6256 = vunpack.c.l.b16 %v1556
        %v6257 = vunpack.c.h.b16 %v1556
        %v6258 = vunpack.c.l.b16 %v1557
        %v6259 = vunpack.c.h.b16 %v1557
        %v6260 = vunpack.c.l.b16 %v1558
        %v6261 = vunpack.c.h.b16 %v1558
        %v6262 = vunpack.c.l.b16 %v1559
        %v6263 = vunpack.c.h.b16 %v1559
        %v6264 = vunpack.c.l.b16 %v1560
        %v6265 = vunpack.c.h.b16 %v1560
        %v6266 = vunpack.c.l.b16 %v1561
        %v6267 = vunpack.c.h.b16 %v1561
        %v6268 = vunpack.c.l.b16 %v1562
        %v6269 = vunpack.c.h.b16 %v1562
        %v6270 = vunpack.c.l.b16 %v1563
        %v6271 = vunpack.c.h.b16 %v1563
        %v6272 = vunpack.c.l.b16 %v1564
        %v6273 = vunpack.c.h.b16 %v1564
        %v6274 = vunpack.c.l.b16 %v1565
        %v6275 = vunpack.c.h.b16 %v1565
        %v6276 = vunpack.c.l.b16 %v1566
        %v6277 = vunpack.c.h.b16 %v1566
        %v6278 = vunpack.c.l.b16 %v1567
        %v6279 = vunpack.c.h.b16 %v1567
        %v6280 = vunpack.c.l.b16 %v1568
        %v6281 = vunpack.c.h.b16 %v1568
        %v6282 = vunpack.c.l.b16 %v1569
        %v6283 = vunpack.c.h.b16 %v1569
        %v6284 = vunpack.c.l.b16 %v1570
        %v6285 = vunpack.c.h.b16 %v1570
        %v6286 = vunpack.c.l.b16 %v1571
        %v6287 = vunpack.c.h.b16 %v1571
        %v6288 = vunpack.c.l.b16 %v1572
        %v6289 = vunpack.c.h.b16 %v1572
        %v6290 = vunpack.c.l.b16 %v1573
        %v6291 = vunpack.c.h.b16 %v1573
        %v6292 = vunpack.c.l.b16 %v1574
        %v6293 = vunpack.c.h.b16 %v1574
        %v6294 = vunpack.c.l.b16 %v1575
        %v6295 = vunpack.c.h.b16 %v1575
        %v6296 = vunpack.c.l.b16 %v1576
        %v6297 = vunpack.c.h.b16 %v1576
        %v6298 = vunpack.c.l.b16 %v1577
        %v6299 = vunpack.c.h.b16 %v1577
        %v6300 = vunpack.c.l.b16 %v1578
        %v6301 = vunpack.c.h.b16 %v1578
        %v6302 = vunpack.c.l.b16 %v1579
        %v6303 = vunpack.c.h.b16 %v1579
        %v6304 = vunpack.c.l.b16 %v1580
        %v6305 = vunpack.c.h.b16 %v1580
        %v6306 = vunpack.c.l.b16 %v1581
        %v6307 = vunpack.c.h.b16 %v1581
        %v6308 = vunpack.c.l.b16 %v1582
        %v6309 = vunpack.c.h.b16 %v1582
        %v6310 = vunpack.c.l.b16 %v1583
        %v6311 = vunpack.c.h.b16 %v1583
        %v6312 = vunpack.c.l.b16 %v1584
        %v6313 = vunpack.c.h.b16 %v1584
        %v6314 = vunpack.c.l.b16 %v1585
        %v6315 = vunpack.c.h.b16 %v1585
        %v6316 = vunpack.c.l.b16 %v1586
        %v6317 = vunpack.c.h.b16 %v1586
        %v6318 = vunpack.c.l.b16 %v1587
        %v6319 = vunpack.c.h.b16 %v1587
        %v6320 = vunpack.c.l.b16 %v1588
        %v6321 = vunpack.c.h.b16 %v1588
        %v6322 = vunpack.c.l.b16 %v1589
        %v6323 = vunpack.c.h.b16 %v1589
        %v6324 = vunpack.c.l.b16 %v1590
        %v6325 = vunpack.c.h.b16 %v1590
        %v6326 = vunpack.c.l.b16 %v1591
        %v6327 = vunpack.c.h.b16 %v1591
        %v6328 = vunpack.c.l.b16 %v1592
        %v6329 = vunpack.c.h.b16 %v1592
        %v6330 = vunpack.c.l.b16 %v1593
        %v6331 = vunpack.c.h.b16 %v1593
        %v6332 = vunpack.c.l.b16 %v1594
        %v6333 = vunpack.c.h.b16 %v1594
        %v6334 = vunpack.c.l.b16 %v1595
        %v6335 = vunpack.c.h.b16 %v1595
        %v6336 = vunpack.c.l.b16 %v1596
        %v6337 = vunpack.c.h.b16 %v1596
        %v6338 = vunpack.c.l.b16 %v1597
        %v6339 = vunpack.c.h.b16 %v1597
        %v6340 = vunpack.c.l.b16 %v1598
        %v6341 = vunpack.c.h.b16 %v1598
        %v6342 = vunpack.c.l.b16 %v1599
        %v6343 = vunpack.c.h.b16 %v1599
        %v6344 = vunpack.c.l.b16 %v1600
        %v6345 = vunpack.c.h.b16 %v1600
        %v6346 = vunpack.c.l.b16 %v1601
        %v6347 = vunpack.c.h.b16 %v1601
        %v6348 = vunpack.c.l.b16 %v1602
        %v6349 = vunpack.c.h.b16 %v1602
        %v6350 = vunpack.c.l.b16 %v1603
        %v6351 = vunpack.c.h.b16 %v1603
        %v6352 = vunpack.c.l.b16 %v1604
        %v6353 = vunpack.c.h.b16 %v1604
        %v6354 = vunpack.c.l.b16 %v1605
        %v6355 = vunpack.c.h.b16 %v1605
        %v6356 = vunpack.c.l.b16 %v1606
        %v6357 = vunpack.c.h.b16 %v1606
        %v6358 = vunpack.c.l.b16 %v1607
        %v6359 = vunpack.c.h.b16 %v1607
        %v6360 = vunpack.c.l.b16 %v1608
        %v6361 = vunpack.c.h.b16 %v1608
        %v6362 = vunpack.c.l.b16 %v1609
        %v6363 = vunpack.c.h.b16 %v1609
        %v6364 = vunpack.c.l.b16 %v1610
        %v6365 = vunpack.c.h.b16 %v1610
        %v6366 = vunpack.c.l.b16 %v1611
        %v6367 = vunpack.c.h.b16 %v1611
        %v6368 = vunpack.c.l.b16 %v1612
        %v6369 = vunpack.c.h.b16 %v1612
        %v6370 = vunpack.c.l.b16 %v1613
        %v6371 = vunpack.c.h.b16 %v1613
        %v6372 = vunpack.c.l.b16 %v1614
        %v6373 = vunpack.c.h.b16 %v1614
        %v6374 = vunpack.c.l.b16 %v1615
        %v6375 = vunpack.c.h.b16 %v1615
        %v6376 = vunpack.c.l.b16 %v1616
        %v6377 = vunpack.c.h.b16 %v1616
        %v6378 = vunpack.c.l.b16 %v1617
        %v6379 = vunpack.c.h.b16 %v1617
        %v6380 = vunpack.c.l.b16 %v1618
        %v6381 = vunpack.c.h.b16 %v1618
        %v6382 = vunpack.c.l.b16 %v1619
        %v6383 = vunpack.c.h.b16 %v1619
        %v6384 = vunpack.c.l.b16 %v1620
        %v6385 = vunpack.c.h.b16 %v1620
        %v6386 = vunpack.c.l.b16 %v1621
        %v6387 = vunpack.c.h.b16 %v1621
        %v6388 = vunpack.c.l.b16 %v1622
        %v6389 = vunpack.c.h.b16 %v1622
        %v6390 = vunpack.c.l.b16 %v1623
        %v6391 = vunpack.c.h.b16 %v1623
        %v6392 = vunpack.c.l.b16 %v1624
        %v6393 = vunpack.c.h.b16 %v1624
        %v6394 = vunpack.c.l.b16 %v1625
        %v6395 = vunpack.c.h.b16 %v1625
        %v6396 = vunpack.c.l.b16 %v1626
        %v6397 = vunpack.c.h.b16 %v1626
        %v6398 = vunpack.c.l.b16 %v1627
        %v6399 = vunpack.c.h.b16 %v1627
        %v6400 = vunpack.c.l.b16 %v1628
        %v6401 = vunpack.c.h.b16 %v1628
        %v6402 = vunpack.c.l.b16 %v1629
        %v6403 = vunpack.c.h.b16 %v1629
        %v6404 = vunpack.c.l.b16 %v1630
        %v6405 = vunpack.c.h.b16 %v1630
        %v6406 = vunpack.c.l.b16 %v1631
        %v6407 = vunpack.c.h.b16 %v1631
        %v6408 = vunpack.c.l.b16 %v1632
        %v6409 = vunpack.c.h.b16 %v1632
        %v6410 = vunpack.c.l.b16 %v1633
        %v6411 = vunpack.c.h.b16 %v1633
        %v6412 = vunpack.c.l.b16 %v1634
        %v6413 = vunpack.c.h.b16 %v1634
        %v6414 = vunpack.c.l.b16 %v1635
        %v6415 = vunpack.c.h.b16 %v1635
        %v6416 = vunpack.c.l.b16 %v1636
        %v6417 = vunpack.c.h.b16 %v1636
        %v6418 = vunpack.c.l.b16 %v1637
        %v6419 = vunpack.c.h.b16 %v1637
        %v6420 = vunpack.c.l.b16 %v1638
        %v6421 = vunpack.c.h.b16 %v1638
        %v6422 = vunpack.c.l.b16 %v1639
        %v6423 = vunpack.c.h.b16 %v1639
        %v6424 = vunpack.c.l.b16 %v1640
        %v6425 = vunpack.c.h.b16 %v1640
        %v6426 = vunpack.c.l.b16 %v1641
        %v6427 = vunpack.c.h.b16 %v1641
        %v6428 = vunpack.c.l.b16 %v1642
        %v6429 = vunpack.c.h.b16 %v1642
        %v6430 = vunpack.c.l.b16 %v1643
        %v6431 = vunpack.c.h.b16 %v1643
        %v6432 = vunpack.c.l.b16 %v1644
        %v6433 = vunpack.c.h.b16 %v1644
        %v6434 = vunpack.c.l.b16 %v1645
        %v6435 = vunpack.c.h.b16 %v1645
        %v6436 = vunpack.c.l.b16 %v1646
        %v6437 = vunpack.c.h.b16 %v1646
        %v6438 = vunpack.c.l.b16 %v1647
        %v6439 = vunpack.c.h.b16 %v1647
        %v6440 = vunpack.c.l.b16 %v1648
        %v6441 = vunpack.c.h.b16 %v1648
        %v6442 = vunpack.c.l.b16 %v1649
        %v6443 = vunpack.c.h.b16 %v1649
        %v6444 = vunpack.c.l.b16 %v1650
        %v6445 = vunpack.c.h.b16 %v1650
        %v6446 = vunpack.c.l.b16 %v1651
        %v6447 = vunpack.c.h.b16 %v1651
        %v6448 = vunpack.c.l.b16 %v1652
        %v6449 = vunpack.c.h.b16 %v1652
        %v6450 = vunpack.c.l.b16 %v1653
        %v6451 = vunpack.c.h.b16 %v1653
        %v6452 = vunpack.c.l.b16 %v1654
        %v6453 = vunpack.c.h.b16 %v1654
        %v6454 = vunpack.c.l.b16 %v1655
        %v6455 = vunpack.c.h.b16 %v1655
        %v6456 = vunpack.c.l.b16 %v1656
        %v6457 = vunpack.c.h.b16 %v1656
        %v6458 = vunpack.c.l.b16 %v1657
        %v6459 = vunpack.c.h.b16 %v1657
        %v6460 = vunpack.c.l.b16 %v1658
        %v6461 = vunpack.c.h.b16 %v1658
        %v6462 = vunpack.c.l.b16 %v1659
        %v6463 = vunpack.c.h.b16 %v1659
        %v6464 = vunpack.c.l.b16 %v1660
        %v6465 = vunpack.c.h.b16 %v1660
        %v6466 = vunpack.c.l.b16 %v1661
        %v6467 = vunpack.c.h.b16 %v1661
        %v6468 = vunpack.c.l.b16 %v1662
        %v6469 = vunpack.c.h.b16 %v1662
        %v6470 = vunpack.c.l.b16 %v1663
        %v6471 = vunpack.c.h.b16 %v1663
        %v6472 = vunpack.c.l.b16 %v1664
        %v6473 = vunpack.c.h.b16 %v1664
        %v6474 = vunpack.c.l.b16 %v1665
        %v6475 = vunpack.c.h.b16 %v1665
        %v6476 = vunpack.c.l.b16 %v1666
        %v6477 = vunpack.c.h.b16 %v1666
        %v6478 = vunpack.c.l.b16 %v1667
        %v6479 = vunpack.c.h.b16 %v1667
        %v6480 = vunpack.c.l.b16 %v1668
        %v6481 = vunpack.c.h.b16 %v1668
        %v6482 = vunpack.c.l.b16 %v1669
        %v6483 = vunpack.c.h.b16 %v1669
        %v6484 = vunpack.c.l.b16 %v1670
        %v6485 = vunpack.c.h.b16 %v1670
        %v6486 = vunpack.c.l.b16 %v1671
        %v6487 = vunpack.c.h.b16 %v1671
        %v6488 = vunpack.c.l.b16 %v1672
        %v6489 = vunpack.c.h.b16 %v1672
        %v6490 = vunpack.c.l.b16 %v1673
        %v6491 = vunpack.c.h.b16 %v1673
        %v6492 = vunpack.c.l.b16 %v1674
        %v6493 = vunpack.c.h.b16 %v1674
        %v6494 = vunpack.c.l.b16 %v1675
        %v6495 = vunpack.c.h.b16 %v1675
        %v6496 = vunpack.c.l.b16 %v1676
        %v6497 = vunpack.c.h.b16 %v1676
        %v6498 = vunpack.c.l.b16 %v1677
        %v6499 = vunpack.c.h.b16 %v1677
        %v6500 = vunpack.c.l.b16 %v1678
        %v6501 = vunpack.c.h.b16 %v1678
        %v6502 = vunpack.c.l.b16 %v1679
        %v6503 = vunpack.c.h.b16 %v1679
        %v6504 = vunpack.c.l.b16 %v1680
        %v6505 = vunpack.c.h.b16 %v1680
        %v6506 = vunpack.c.l.b16 %v1681
        %v6507 = vunpack.c.h.b16 %v1681
        %v6508 = vunpack.c.l.b16 %v1682
        %v6509 = vunpack.c.h.b16 %v1682
        %v6510 = vunpack.c.l.b16 %v1683
        %v6511 = vunpack.c.h.b16 %v1683
        %v6512 = vunpack.c.l.b16 %v1684
        %v6513 = vunpack.c.h.b16 %v1684
        %v6514 = vunpack.c.l.b16 %v1685
        %v6515 = vunpack.c.h.b16 %v1685
        %v6516 = vunpack.c.l.b16 %v1686
        %v6517 = vunpack.c.h.b16 %v1686
        %v6518 = vunpack.c.l.b16 %v1687
        %v6519 = vunpack.c.h.b16 %v1687
        %v6520 = vunpack.c.l.b16 %v1688
        %v6521 = vunpack.c.h.b16 %v1688
        %v6522 = vunpack.c.l.b16 %v1689
        %v6523 = vunpack.c.h.b16 %v1689
        %v6524 = vunpack.c.l.b16 %v1690
        %v6525 = vunpack.c.h.b16 %v1690
        %v6526 = vunpack.c.l.b16 %v1691
        %v6527 = vunpack.c.h.b16 %v1691
        %v6528 = vunpack.c.l.b16 %v1692
        %v6529 = vunpack.c.h.b16 %v1692
        %v6530 = vunpack.c.l.b16 %v1693
        %v6531 = vunpack.c.h.b16 %v1693
        %v6532 = vunpack.c.l.b16 %v1694
        %v6533 = vunpack.c.h.b16 %v1694
        %v6534 = vunpack.c.l.b16 %v1695
        %v6535 = vunpack.c.h.b16 %v1695
        %v6536 = vunpack.c.l.b16 %v1696
        %v6537 = vunpack.c.h.b16 %v1696
        %v6538 = vunpack.c.l.b16 %v1697
        %v6539 = vunpack.c.h.b16 %v1697
        %v6540 = vunpack.c.l.b16 %v1698
        %v6541 = vunpack.c.h.b16 %v1698
        %v6542 = vunpack.c.l.b16 %v1699
        %v6543 = vunpack.c.h.b16 %v1699
        %v6544 = vunpack.c.l.b16 %v1700
        %v6545 = vunpack.c.h.b16 %v1700
        %v6546 = vunpack.c.l.b16 %v1701
        %v6547 = vunpack.c.h.b16 %v1701
        %v6548 = vunpack.c.l.b16 %v1702
        %v6549 = vunpack.c.h.b16 %v1702
        %v6550 = vunpack.c.l.b16 %v1703
        %v6551 = vunpack.c.h.b16 %v1703
        %v6552 = vunpack.c.l.b16 %v1704
        %v6553 = vunpack.c.h.b16 %v1704
        %v6554 = vunpack.c.l.b16 %v1705
        %v6555 = vunpack.c.h.b16 %v1705
        %v6556 = vunpack.c.l.b16 %v1706
        %v6557 = vunpack.c.h.b16 %v1706
        %v6558 = vunpack.c.l.b16 %v1707
        %v6559 = vunpack.c.h.b16 %v1707
        %v6560 = vunpack.c.l.b16 %v1708
        %v6561 = vunpack.c.h.b16 %v1708
        %v6562 = vunpack.c.l.b16 %v1709
        %v6563 = vunpack.c.h.b16 %v1709
        %v6564 = vunpack.c.l.b16 %v1710
        %v6565 = vunpack.c.h.b16 %v1710
        %v6566 = vunpack.c.l.b16 %v1711
        %v6567 = vunpack.c.h.b16 %v1711
        %v6568 = vunpack.c.l.b16 %v1712
        %v6569 = vunpack.c.h.b16 %v1712
        %v6570 = vunpack.c.l.b16 %v1713
        %v6571 = vunpack.c.h.b16 %v1713
        %v6572 = vunpack.c.l.b16 %v1714
        %v6573 = vunpack.c.h.b16 %v1714
        %v6574 = vunpack.c.l.b16 %v1715
        %v6575 = vunpack.c.h.b16 %v1715
        %v6576 = vunpack.c.l.b16 %v1716
        %v6577 = vunpack.c.h.b16 %v1716
        %v6578 = vunpack.c.l.b16 %v1717
        %v6579 = vunpack.c.h.b16 %v1717
        %v6580 = vunpack.c.l.b16 %v1718
        %v6581 = vunpack.c.h.b16 %v1718
        %v6582 = vunpack.c.l.b16 %v1719
        %v6583 = vunpack.c.h.b16 %v1719
        %v6584 = vunpack.c.l.b16 %v1720
        %v6585 = vunpack.c.h.b16 %v1720
        %v6586 = vunpack.c.l.b16 %v1721
        %v6587 = vunpack.c.h.b16 %v1721
        %v6588 = vunpack.c.l.b16 %v1722
        %v6589 = vunpack.c.h.b16 %v1722
        %v6590 = vunpack.c.l.b16 %v1723
        %v6591 = vunpack.c.h.b16 %v1723
        %v6592 = vunpack.c.l.b16 %v1724
        %v6593 = vunpack.c.h.b16 %v1724
        %v6594 = vunpack.c.l.b16 %v1725
        %v6595 = vunpack.c.h.b16 %v1725
        %v6596 = vunpack.c.l.b16 %v1726
        %v6597 = vunpack.c.h.b16 %v1726
        %v6598 = vunpack.c.l.b16 %v1727
        %v6599 = vunpack.c.h.b16 %v1727
        %v6600 = vunpack.c.l.b16 %v1728
        %v6601 = vunpack.c.h.b16 %v1728
        %v6602 = vunpack.c.l.b16 %v1729
        %v6603 = vunpack.c.h.b16 %v1729
        %v6604 = vunpack.c.l.b16 %v1730
        %v6605 = vunpack.c.h.b16 %v1730
        %v6606 = vunpack.c.l.b16 %v1731
        %v6607 = vunpack.c.h.b16 %v1731
        %v6608 = vunpack.c.l.b16 %v1732
        %v6609 = vunpack.c.h.b16 %v1732
        %v6610 = vunpack.c.l.b16 %v1733
        %v6611 = vunpack.c.h.b16 %v1733
        %v6612 = vunpack.c.l.b16 %v1734
        %v6613 = vunpack.c.h.b16 %v1734
        %v6614 = vunpack.c.l.b16 %v1735
        %v6615 = vunpack.c.h.b16 %v1735
        %v6616 = vunpack.c.l.b16 %v1736
        %v6617 = vunpack.c.h.b16 %v1736
        %v6618 = vunpack.c.l.b16 %v1737
        %v6619 = vunpack.c.h.b16 %v1737
        %v6620 = vunpack.c.l.b16 %v1738
        %v6621 = vunpack.c.h.b16 %v1738
        %v6622 = vunpack.c.l.b16 %v1739
        %v6623 = vunpack.c.h.b16 %v1739
        %v6624 = vunpack.c.l.b16 %v1740
        %v6625 = vunpack.c.h.b16 %v1740
        %v6626 = vunpack.c.l.b16 %v1741
        %v6627 = vunpack.c.h.b16 %v1741
        %v6628 = vunpack.c.l.b16 %v1742
        %v6629 = vunpack.c.h.b16 %v1742
        %v6630 = vunpack.c.l.b16 %v1743
        %v6631 = vunpack.c.h.b16 %v1743
        %v6632 = vunpack.c.l.b16 %v1744
        %v6633 = vunpack.c.h.b16 %v1744
        %v6634 = vunpack.c.l.b16 %v1745
        %v6635 = vunpack.c.h.b16 %v1745
        %v6636 = vunpack.c.l.b16 %v1746
        %v6637 = vunpack.c.h.b16 %v1746
        %v6638 = vunpack.c.l.b16 %v1747
        %v6639 = vunpack.c.h.b16 %v1747
        %v6640 = vunpack.c.l.b16 %v1748
        %v6641 = vunpack.c.h.b16 %v1748
        %v6642 = vunpack.c.l.b16 %v1749
        %v6643 = vunpack.c.h.b16 %v1749
        %v6644 = vunpack.c.l.b16 %v1750
        %v6645 = vunpack.c.h.b16 %v1750
        %v6646 = vunpack.c.l.b16 %v1751
        %v6647 = vunpack.c.h.b16 %v1751
        %v6648 = vunpack.c.l.b16 %v1752
        %v6649 = vunpack.c.h.b16 %v1752
        %v6650 = vunpack.c.l.b16 %v1753
        %v6651 = vunpack.c.h.b16 %v1753
        %v6652 = vunpack.c.l.b16 %v1754
        %v6653 = vunpack.c.h.b16 %v1754
        %v6654 = vunpack.c.l.b16 %v1755
        %v6655 = vunpack.c.h.b16 %v1755
        %v6656 = vunpack.c.l.b16 %v1756
        %v6657 = vunpack.c.h.b16 %v1756
        %v6658 = vunpack.c.l.b16 %v1757
        %v6659 = vunpack.c.h.b16 %v1757
        %v6660 = vunpack.c.l.b16 %v1758
        %v6661 = vunpack.c.h.b16 %v1758
        %v6662 = vunpack.c.l.b16 %v1759
        %v6663 = vunpack.c.h.b16 %v1759
        %v6664 = vunpack.c.l.b16 %v1760
        %v6665 = vunpack.c.h.b16 %v1760
        %v6666 = vunpack.c.l.b16 %v1761
        %v6667 = vunpack.c.h.b16 %v1761
        %v6668 = vunpack.c.l.b16 %v1762
        %v6669 = vunpack.c.h.b16 %v1762
        %v6670 = vunpack.c.l.b16 %v1763
        %v6671 = vunpack.c.h.b16 %v1763
        %v6672 = vunpack.c.l.b16 %v1764
        %v6673 = vunpack.c.h.b16 %v1764
        %v6674 = vunpack.c.l.b16 %v1765
        %v6675 = vunpack.c.h.b16 %v1765
        %v6676 = vunpack.c.l.b16 %v1766
        %v6677 = vunpack.c.h.b16 %v1766
        %v6678 = vunpack.c.l.b16 %v1767
        %v6679 = vunpack.c.h.b16 %v1767
        %v6680 = vunpack.c.l.b16 %v1768
        %v6681 = vunpack.c.h.b16 %v1768
        %v6682 = vunpack.c.l.b16 %v1769
        %v6683 = vunpack.c.h.b16 %v1769
        %v6684 = vunpack.c.l.b16 %v1770
        %v6685 = vunpack.c.h.b16 %v1770
        %v6686 = vunpack.c.l.b16 %v1771
        %v6687 = vunpack.c.h.b16 %v1771
        %v6688 = vunpack.c.l.b16 %v1772
        %v6689 = vunpack.c.h.b16 %v1772
        %v6690 = vunpack.c.l.b16 %v1773
        %v6691 = vunpack.c.h.b16 %v1773
        %v6692 = vunpack.c.l.b16 %v1774
        %v6693 = vunpack.c.h.b16 %v1774
        %v6694 = vunpack.c.l.b16 %v1775
        %v6695 = vunpack.c.h.b16 %v1775
        %v6696 = vunpack.c.l.b16 %v1776
        %v6697 = vunpack.c.h.b16 %v1776
        %v6698 = vunpack.c.l.b16 %v1777
        %v6699 = vunpack.c.h.b16 %v1777
        %v6700 = vunpack.c.l.b16 %v1778
        %v6701 = vunpack.c.h.b16 %v1778
        %v6702 = vunpack.c.l.b16 %v1779
        %v6703 = vunpack.c.h.b16 %v1779
        %v6704 = vunpack.c.l.b16 %v1780
        %v6705 = vunpack.c.h.b16 %v1780
        %v6706 = vunpack.c.l.b16 %v1781
        %v6707 = vunpack.c.h.b16 %v1781
        %v6708 = vunpack.c.l.b16 %v1782
        %v6709 = vunpack.c.h.b16 %v1782
        %v6710 = vunpack.c.l.b16 %v1783
        %v6711 = vunpack.c.h.b16 %v1783
        %v6712 = vunpack.c.l.b16 %v1784
        %v6713 = vunpack.c.h.b16 %v1784
        %v6714 = vunpack.c.l.b16 %v1785
        %v6715 = vunpack.c.h.b16 %v1785
        %v6716 = vunpack.c.l.b16 %v1786
        %v6717 = vunpack.c.h.b16 %v1786
        %v6718 = vunpack.c.l.b16 %v1787
        %v6719 = vunpack.c.h.b16 %v1787
        %v6720 = vunpack.c.l.b16 %v1788
        %v6721 = vunpack.c.h.b16 %v1788
        %v6722 = vunpack.c.l.b16 %v1789
        %v6723 = vunpack.c.h.b16 %v1789
        %v6724 = vunpack.c.l.b16 %v1790
        %v6725 = vunpack.c.h.b16 %v1790
        %v6726 = vunpack.c.l.b16 %v1791
        %v6727 = vunpack.c.h.b16 %v1791
        %v6728 = vunpack.c.l.b16 %v1792
        %v6729 = vunpack.c.h.b16 %v1792
        %v6730 = vunpack.c.l.b16 %v1793
        %v6731 = vunpack.c.h.b16 %v1793
        %v6732 = vunpack.c.l.b16 %v1794
        %v6733 = vunpack.c.h.b16 %v1794
        %v6734 = vunpack.c.l.b16 %v1795
        %v6735 = vunpack.c.h.b16 %v1795
        %v6736 = vunpack.c.l.b16 %v1796
        %v6737 = vunpack.c.h.b16 %v1796
        %v6738 = vunpack.c.l.b16 %v1797
        %v6739 = vunpack.c.h.b16 %v1797
        %v6740 = vunpack.c.l.b16 %v1798
        %v6741 = vunpack.c.h.b16 %v1798
        %v6742 = vunpack.c.l.b16 %v1799
        %v6743 = vunpack.c.h.b16 %v1799
        %v6744 = vunpack.c.l.b16 %v1800
        %v6745 = vunpack.c.h.b16 %v1800
        %v6746 = vunpack.c.l.b16 %v1801
        %v6747 = vunpack.c.h.b16 %v1801
        %v6748 = vunpack.c.l.b16 %v1802
        %v6749 = vunpack.c.h.b16 %v1802
        %v6750 = vunpack.c.l.b16 %v1803
        %v6751 = vunpack.c.h.b16 %v1803
        %v6752 = vunpack.c.l.b16 %v1804
        %v6753 = vunpack.c.h.b16 %v1804
        %v6754 = vunpack.c.l.b16 %v1805
        %v6755 = vunpack.c.h.b16 %v1805
        %v6756 = vunpack.c.l.b16 %v1806
        %v6757 = vunpack.c.h.b16 %v1806
        %v6758 = vpack.c.b16 %v3624, %v3622
        %v6759 = vpack.c.b16 %v3625, %v3623
        %v6760 = vpack.c.b16 %v3628, %v3626
        %v6761 = vpack.c.b16 %v3629, %v3627
        %v6762 = vpack.c.b16 %v3632, %v3630
        %v6763 = vpack.c.b16 %v3633, %v3631
        %v6764 = vpack.c.b16 %v3636, %v3634
        %v6765 = vpack.c.b16 %v3637, %v3635
        %v6766 = vpack.c.b16 %v3640, %v3638
        %v6767 = vpack.c.b16 %v3641, %v3639
        %v6768 = vpack.c.b16 %v3644, %v3642
        %v6769 = vpack.c.b16 %v3645, %v3643
        %v6770 = vpack.c.b16 %v3648, %v3646
        %v6771 = vpack.c.b16 %v3649, %v3647
        %v6772 = vpack.c.b16 %v3652, %v3650
        %v6773 = vpack.c.b16 %v3653, %v3651
        %v6774 = vpack.c.b16 %v3656, %v3654
        %v6775 = vpack.c.b16 %v3657, %v3655
        %v6776 = vpack.c.b16 %v3660, %v3658
        %v6777 = vpack.c.b16 %v3661, %v3659
        %v6778 = vpack.c.b16 %v3664, %v3662
        %v6779 = vpack.c.b16 %v3665, %v3663
        %v6780 = vpack.c.b16 %v3668, %v3666
        %v6781 = vpack.c.b16 %v3669, %v3667
        %v6782 = vpack.c.b16 %v3672, %v3670
        %v6783 = vpack.c.b16 %v3673, %v3671
        %v6784 = vpack.c.b16 %v3676, %v3674
        %v6785 = vpack.c.b16 %v3677, %v3675
        %v6786 = vpack.c.b16 %v3680, %v3678
        %v6787 = vpack.c.b16 %v3681, %v3679
        %v6788 = vpack.c.b16 %v3684, %v3682
        %v6789 = vpack.c.b16 %v3685, %v3683
        %v6790 = vpack.c.b16 %v3688, %v3686
        %v6791 = vpack.c.b16 %v3689, %v3687
        %v6792 = vpack.c.b16 %v3692, %v3690
        %v6793 = vpack.c.b16 %v3693, %v3691
        %v6794 = vpack.c.b16 %v3696, %v3694
        %v6795 = vpack.c.b16 %v3697, %v3695
        %v6796 = vpack.c.b16 %v3700, %v3698
        %v6797 = vpack.c.b16 %v3701, %v3699
        %v6798 = vpack.c.b16 %v3704, %v3702
        %v6799 = vpack.c.b16 %v3705, %v3703
        %v6800 = vpack.c.b16 %v3708, %v3706
        %v6801 = vpack.c.b16 %v3709, %v3707
        %v6802 = vpack.c.b16 %v3712, %v3710
        %v6803 = vpack.c.b16 %v3713, %v3711
        %v6804 = vpack.c.b16 %v3716, %v3714
        %v6805 = vpack.c.b16 %v3717, %v3715
        %v6806 = vpack.c.b16 %v3720, %v3718
        %v6807 = vpack.c.b16 %v3721, %v3719
        %v6808 = vpack.c.b16 %v3724, %v3722
        %v6809 = vpack.c.b16 %v3725, %v3723
        %v6810 = vpack.c.b16 %v3728, %v3726
        %v6811 = vpack.c.b16 %v3729, %v3727
        %v6812 = vpack.c.b16 %v3732, %v3730
        %v6813 = vpack.c.b16 %v3733, %v3731
        %v6814 = vpack.c.b16 %v3736, %v3734
        %v6815 = vpack.c.b16 %v3737, %v3735
        %v6816 = vpack.c.b16 %v3740, %v3738
        %v6817 = vpack.c.b16 %v3741, %v3739
        %v6818 = vpack.c.b16 %v3744, %v3742
        %v6819 = vpack.c.b16 %v3745, %v3743
        %v6820 = vpack.c.b16 %v3748, %v3746
        %v6821 = vpack.c.b16 %v3749, %v3747
        %v6822 = vpack.c.b16 %v3752, %v3750
        %v6823 = vpack.c.b16 %v3753, %v3751
        %v6824 = vpack.c.b16 %v3756, %v3754
        %v6825 = vpack.c.b16 %v3757, %v3755
        %v6826 = vpack.c.b16 %v3760, %v3758
        %v6827 = vpack.c.b16 %v3761, %v3759
        %v6828 = vpack.c.b16 %v3764, %v3762
        %v6829 = vpack.c.b16 %v3765, %v3763
        %v6830 = vpack.c.b16 %v3768, %v3766
        %v6831 = vpack.c.b16 %v3769, %v3767
        %v6832 = vpack.c.b16 %v3772, %v3770
        %v6833 = vpack.c.b16 %v3773, %v3771
        %v6834 = vpack.c.b16 %v3776, %v3774
        %v6835 = vpack.c.b16 %v3777, %v3775
        %v6836 = vpack.c.b16 %v3780, %v3778
        %v6837 = vpack.c.b16 %v3781, %v3779
        %v6838 = vpack.c.b16 %v3784, %v3782
        %v6839 = vpack.c.b16 %v3785, %v3783
        %v6840 = vpack.c.b16 %v3788, %v3786
        %v6841 = vpack.c.b16 %v3789, %v3787
        %v6842 = vpack.c.b16 %v3792, %v3790
        %v6843 = vpack.c.b16 %v3793, %v3791
        %v6844 = vpack.c.b16 %v3796, %v3794
        %v6845 = vpack.c.b16 %v3797, %v3795
        %v6846 = vpack.c.b16 %v3800, %v3798
        %v6847 = vpack.c.b16 %v3801, %v3799
        %v6848 = vpack.c.b16 %v3804, %v3802
        %v6849 = vpack.c.b16 %v3805, %v3803
        %v6850 = vpack.c.b16 %v3808, %v3806
        %v6851 = vpack.c.b16 %v3809, %v3807
        %v6852 = vpack.c.b16 %v3812, %v3810
        %v6853 = vpack.c.b16 %v3813, %v3811
        %v6854 = vpack.c.b16 %v3816, %v3814
        %v6855 = vpack.c.b16 %v3817, %v3815
        %v6856 = vpack.c.b16 %v3820, %v3818
        %v6857 = vpack.c.b16 %v3821, %v3819
        %v6858 = vpack.c.b16 %v3824, %v3822
        %v6859 = vpack.c.b16 %v3825, %v3823
        %v6860 = vpack.c.b16 %v3828, %v3826
        %v6861 = vpack.c.b16 %v3829, %v3827
        %v6862 = vpack.c.b16 %v3832, %v3830
        %v6863 = vpack.c.b16 %v3833, %v3831
        %v6864 = vpack.c.b16 %v3836, %v3834
        %v6865 = vpack.c.b16 %v3837, %v3835
        %v6866 = vpack.c.b16 %v3840, %v3838
        %v6867 = vpack.c.b16 %v3841, %v3839
        %v6868 = vpack.c.b16 %v3844, %v3842
        %v6869 = vpack.c.b16 %v3845, %v3843
        %v6870 = vpack.c.b16 %v3848, %v3846
        %v6871 = vpack.c.b16 %v3849, %v3847
        %v6872 = vpack.c.b16 %v3852, %v3850
        %v6873 = vpack.c.b16 %v3853, %v3851
        %v6874 = vpack.c.b16 %v3856, %v3854
        %v6875 = vpack.c.b16 %v3857, %v3855
        %v6876 = vpack.c.b16 %v3860, %v3858
        %v6877 = vpack.c.b16 %v3861, %v3859
        %v6878 = vpack.c.b16 %v3864, %v3862
        %v6879 = vpack.c.b16 %v3865, %v3863
        %v6880 = vpack.c.b16 %v3868, %v3866
        %v6881 = vpack.c.b16 %v3869, %v3867
        %v6882 = vpack.c.b16 %v3872, %v3870
        %v6883 = vpack.c.b16 %v3873, %v3871
        %v6884 = vpack.c.b16 %v3876, %v3874
        %v6885 = vpack.c.b16 %v3877, %v3875
        %v6886 = vpack.c.b16 %v3880, %v3878
        %v6887 = vpack.c.b16 %v3881, %v3879
        %v6888 = vpack.c.b16 %v3884, %v3882
        %v6889 = vpack.c.b16 %v3885, %v3883
        %v6890 = vpack.c.b16 %v3888, %v3886
        %v6891 = vpack.c.b16 %v3889, %v3887
        %v6892 = vpack.c.b16 %v3892, %v3890
        %v6893 = vpack.c.b16 %v3893, %v3891
        %v6894 = vpack.c.b16 %v3896, %v3894
        %v6895 = vpack.c.b16 %v3897, %v3895
        %v6896 = vpack.c.b16 %v3900, %v3898
        %v6897 = vpack.c.b16 %v3901, %v3899
        %v6898 = vpack.c.b16 %v3904, %v3902
        %v6899 = vpack.c.b16 %v3905, %v3903
        %v6900 = vpack.c.b16 %v3908, %v3906
        %v6901 = vpack.c.b16 %v3909, %v3907
        %v6902 = vpack.c.b16 %v3912, %v3910
        %v6903 = vpack.c.b16 %v3913, %v3911
        %v6904 = vpack.c.b16 %v3916, %v3914
        %v6905 = vpack.c.b16 %v3917, %v3915
        %v6906 = vpack.c.b16 %v3920, %v3918
        %v6907 = vpack.c.b16 %v3921, %v3919
        %v6908 = vpack.c.b16 %v3924, %v3922
        %v6909 = vpack.c.b16 %v3925, %v3923
        %v6910 = vpack.c.b16 %v3928, %v3926
        %v6911 = vpack.c.b16 %v3929, %v3927
        %v6912 = vpack.c.b16 %v3932, %v3930
        %v6913 = vpack.c.b16 %v3933, %v3931
        %v6914 = vpack.c.b16 %v3936, %v3934
        %v6915 = vpack.c.b16 %v3937, %v3935
        %v6916 = vpack.c.b16 %v3940, %v3938
        %v6917 = vpack.c.b16 %v3941, %v3939
        %v6918 = vpack.c.b16 %v3944, %v3942
        %v6919 = vpack.c.b16 %v3945, %v3943
        %v6920 = vpack.c.b16 %v3948, %v3946
        %v6921 = vpack.c.b16 %v3949, %v3947
        %v6922 = vpack.c.b16 %v3952, %v3950
        %v6923 = vpack.c.b16 %v3953, %v3951
        %v6924 = vpack.c.b16 %v3956, %v3954
        %v6925 = vpack.c.b16 %v3957, %v3955
        %v6926 = vpack.c.b16 %v3960, %v3958
        %v6927 = vpack.c.b16 %v3961, %v3959
        %v6928 = vpack.c.b16 %v3964, %v3962
        %v6929 = vpack.c.b16 %v3965, %v3963
        %v6930 = vpack.c.b16 %v3968, %v3966
        %v6931 = vpack.c.b16 %v3969, %v3967
        %v6932 = vpack.c.b16 %v3972, %v3970
        %v6933 = vpack.c.b16 %v3973, %v3971
        %v6934 = vpack.c.b16 %v3976, %v3974
        %v6935 = vpack.c.b16 %v3977, %v3975
        %v6936 = vpack.c.b16 %v3980, %v3978
        %v6937 = vpack.c.b16 %v3981, %v3979
        %v6938 = vpack.c.b16 %v3984, %v3982
        %v6939 = vpack.c.b16 %v3985, %v3983
        %v6940 = vpack.c.b16 %v3988, %v3986
        %v6941 = vpack.c.b16 %v3989, %v3987
        %v6942 = vpack.c.b16 %v3992, %v3990
        %v6943 = vpack.c.b16 %v3993, %v3991
        %v6944 = vpack.c.b16 %v3996, %v3994
        %v6945 = vpack.c.b16 %v3997, %v3995
        %v6946 = vpack.c.b16 %v4000, %v3998
        %v6947 = vpack.c.b16 %v4001, %v3999
        %v6948 = vpack.c.b16 %v4004, %v4002
        %v6949 = vpack.c.b16 %v4005, %v4003
        %v6950 = vpack.c.b16 %v4008, %v4006
        %v6951 = vpack.c.b16 %v4009, %v4007
        %v6952 = vpack.c.b16 %v4012, %v4010
        %v6953 = vpack.c.b16 %v4013, %v4011
        %v6954 = vpack.c.b16 %v4016, %v4014
        %v6955 = vpack.c.b16 %v4017, %v4015
        %v6956 = vpack.c.b16 %v4020, %v4018
        %v6957 = vpack.c.b16 %v4021, %v4019
        %v6958 = vpack.c.b16 %v4024, %v4022
        %v6959 = vpack.c.b16 %v4025, %v4023
        %v6960 = vpack.c.b16 %v4028, %v4026
        %v6961 = vpack.c.b16 %v4029, %v4027
        %v6962 = vpack.c.b16 %v4032, %v4030
        %v6963 = vpack.c.b16 %v4033, %v4031
        %v6964 = vpack.c.b16 %v4036, %v4034
        %v6965 = vpack.c.b16 %v4037, %v4035
        %v6966 = vpack.c.b16 %v4040, %v4038
        %v6967 = vpack.c.b16 %v4041, %v4039
        %v6968 = vpack.c.b16 %v4044, %v4042
        %v6969 = vpack.c.b16 %v4045, %v4043
        %v6970 = vpack.c.b16 %v4048, %v4046
        %v6971 = vpack.c.b16 %v4049, %v4047
        %v6972 = vpack.c.b16 %v4052, %v4050
        %v6973 = vpack.c.b16 %v4053, %v4051
        %v6974 = vpack.c.b16 %v4056, %v4054
        %v6975 = vpack.c.b16 %v4057, %v4055
        %v6976 = vpack.c.b16 %v4060, %v4058
        %v6977 = vpack.c.b16 %v4061, %v4059
        %v6978 = vpack.c.b16 %v4064, %v4062
        %v6979 = vpack.c.b16 %v4065, %v4063
        %v6980 = vpack.c.b16 %v4068, %v4066
        %v6981 = vpack.c.b16 %v4069, %v4067
        %v6982 = vpack.c.b16 %v4072, %v4070
        %v6983 = vpack.c.b16 %v4073, %v4071
        %v6984 = vpack.c.b16 %v4076, %v4074
        %v6985 = vpack.c.b16 %v4077, %v4075
        %v6986 = vpack.c.b16 %v4080, %v4078
        %v6987 = vpack.c.b16 %v4081, %v4079
        %v6988 = vpack.c.b16 %v4084, %v4082
        %v6989 = vpack.c.b16 %v4085, %v4083
        %v6990 = vpack.c.b16 %v4088, %v4086
        %v6991 = vpack.c.b16 %v4089, %v4087
        %v6992 = vpack.c.b16 %v4092, %v4090
        %v6993 = vpack.c.b16 %v4093, %v4091
        %v6994 = vpack.c.b16 %v4096, %v4094
        %v6995 = vpack.c.b16 %v4097, %v4095
        %v6996 = vpack.c.b16 %v4100, %v4098
        %v6997 = vpack.c.b16 %v4101, %v4099
        %v6998 = vpack.c.b16 %v4104, %v4102
        %v6999 = vpack.c.b16 %v4105, %v4103
        %v7000 = vpack.c.b16 %v4108, %v4106
        %v7001 = vpack.c.b16 %v4109, %v4107
        %v7002 = vpack.c.b16 %v4112, %v4110
        %v7003 = vpack.c.b16 %v4113, %v4111
        %v7004 = vpack.c.b16 %v4116, %v4114
        %v7005 = vpack.c.b16 %v4117, %v4115
        %v7006 = vpack.c.b16 %v4120, %v4118
        %v7007 = vpack.c.b16 %v4121, %v4119
        %v7008 = vpack.c.b16 %v4124, %v4122
        %v7009 = vpack.c.b16 %v4125, %v4123
        %v7010 = vpack.c.b16 %v4128, %v4126
        %v7011 = vpack.c.b16 %v4129, %v4127
        %v7012 = vpack.c.b16 %v4132, %v4130
        %v7013 = vpack.c.b16 %v4133, %v4131
        %v7014 = vpack.c.b16 %v4136, %v4134
        %v7015 = vpack.c.b16 %v4137, %v4135
        %v7016 = vpack.c.b16 %v4140, %v4138
        %v7017 = vpack.c.b16 %v4141, %v4139
        %v7018 = vpack.c.b16 %v4144, %v4142
        %v7019 = vpack.c.b16 %v4145, %v4143
        %v7020 = vpack.c.b16 %v4148, %v4146
        %v7021 = vpack.c.b16 %v4149, %v4147
        %v7022 = vpack.c.b16 %v4152, %v4150
        %v7023 = vpack.c.b16 %v4153, %v4151
        %v7024 = vpack.c.b16 %v4156, %v4154
        %v7025 = vpack.c.b16 %v4157, %v4155
        %v7026 = vpack.c.b16 %v4160, %v4158
        %v7027 = vpack.c.b16 %v4161, %v4159
        %v7028 = vpack.c.b16 %v4164, %v4162
        %v7029 = vpack.c.b16 %v4165, %v4163
        %v7030 = vpack.c.b16 %v4168, %v4166
        %v7031 = vpack.c.b16 %v4169, %v4167
        %v7032 = vpack.c.b16 %v4172, %v4170
        %v7033 = vpack.c.b16 %v4173, %v4171
        %v7034 = vpack.c.b16 %v4176, %v4174
        %v7035 = vpack.c.b16 %v4177, %v4175
        %v7036 = vpack.c.b16 %v4180, %v4178
        %v7037 = vpack.c.b16 %v4181, %v4179
        %v7038 = vpack.c.b16 %v4184, %v4182
        %v7039 = vpack.c.b16 %v4185, %v4183
        %v7040 = vpack.c.b16 %v4188, %v4186
        %v7041 = vpack.c.b16 %v4189, %v4187
        %v7042 = vpack.c.b16 %v4192, %v4190
        %v7043 = vpack.c.b16 %v4193, %v4191
        %v7044 = vpack.c.b16 %v4196, %v4194
        %v7045 = vpack.c.b16 %v4197, %v4195
        %v7046 = vpack.c.b16 %v4200, %v4198
        %v7047 = vpack.c.b16 %v4201, %v4199
        %v7048 = vpack.c.b16 %v4204, %v4202
        %v7049 = vpack.c.b16 %v4205, %v4203
        %v7050 = vpack.c.b16 %v4208, %v4206
        %v7051 = vpack.c.b16 %v4209, %v4207
        %v7052 = vpack.c.b16 %v4212, %v4210
        %v7053 = vpack.c.b16 %v4213, %v4211
        %v7054 = vpack.c.b16 %v4216, %v4214
        %v7055 = vpack.c.b16 %v4217, %v4215
        %v7056 = vpack.c.b16 %v4220, %v4218
        %v7057 = vpack.c.b16 %v4221, %v4219
        %v7058 = vpack.c.b16 %v4224, %v4222
        %v7059 = vpack.c.b16 %v4225, %v4223
        %v7060 = vpack.c.b16 %v4228, %v4226
        %v7061 = vpack.c.b16 %v4229, %v4227
        %v7062 = vpack.c.b16 %v4232, %v4230
        %v7063 = vpack.c.b16 %v4233, %v4231
        %v7064 = vpack.c.b16 %v4236, %v4234
        %v7065 = vpack.c.b16 %v4237, %v4235
        %v7066 = vpack.c.b16 %v4240, %v4238
        %v7067 = vpack.c.b16 %v4241, %v4239
        %v7068 = vpack.c.b16 %v4244, %v4242
        %v7069 = vpack.c.b16 %v4245, %v4243
        %v7070 = vpack.c.b16 %v4248, %v4246
        %v7071 = vpack.c.b16 %v4249, %v4247
        %v7072 = vpack.c.b16 %v4252, %v4250
        %v7073 = vpack.c.b16 %v4253, %v4251
        %v7074 = vpack.c.b16 %v4256, %v4254
        %v7075 = vpack.c.b16 %v4257, %v4255
        %v7076 = vpack.c.b16 %v4260, %v4258
        %v7077 = vpack.c.b16 %v4261, %v4259
        %v7078 = vpack.c.b16 %v4264, %v4262
        %v7079 = vpack.c.b16 %v4265, %v4263
        %v7080 = vpack.c.b16 %v4268, %v4266
        %v7081 = vpack.c.b16 %v4269, %v4267
        %v7082 = vpack.c.b16 %v4272, %v4270
        %v7083 = vpack.c.b16 %v4273, %v4271
        %v7084 = vpack.c.b16 %v4276, %v4274
        %v7085 = vpack.c.b16 %v4277, %v4275
        %v7086 = vpack.c.b16 %v4280, %v4278
        %v7087 = vpack.c.b16 %v4281, %v4279
        %v7088 = vpack.c.b16 %v4284, %v4282
        %v7089 = vpack.c.b16 %v4285, %v4283
        %v7090 = vpack.c.b16 %v4288, %v4286
        %v7091 = vpack.c.b16 %v4289, %v4287
        %v7092 = vpack.c.b16 %v4292, %v4290
        %v7093 = vpack.c.b16 %v4293, %v4291
        %v7094 = vpack.c.b16 %v4296, %v4294
        %v7095 = vpack.c.b16 %v4297, %v4295
        %v7096 = vpack.c.b16 %v4300, %v4298
        %v7097 = vpack.c.b16 %v4301, %v4299
        %v7098 = vpack.c.b16 %v4304, %v4302
        %v7099 = vpack.c.b16 %v4305, %v4303
        %v7100 = vpack.c.b16 %v4308, %v4306
        %v7101 = vpack.c.b16 %v4309, %v4307
        %v7102 = vpack.c.b16 %v4312, %v4310
        %v7103 = vpack.c.b16 %v4313, %v4311
        %v7104 = vpack.c.b16 %v4316, %v4314
        %v7105 = vpack.c.b16 %v4317, %v4315
        %v7106 = vpack.c.b16 %v4320, %v4318
        %v7107 = vpack.c.b16 %v4321, %v4319
        %v7108 = vpack.c.b16 %v4324, %v4322
        %v7109 = vpack.c.b16 %v4325, %v4323
        %v7110 = vpack.c.b16 %v4328, %v4326
        %v7111 = vpack.c.b16 %v4329, %v4327
        %v7112 = vpack.c.b16 %v4332, %v4330
        %v7113 = vpack.c.b16 %v4333, %v4331
        %v7114 = vpack.c.b16 %v4336, %v4334
        %v7115 = vpack.c.b16 %v4337, %v4335
        %v7116 = vpack.c.b16 %v4340, %v4338
        %v7117 = vpack.c.b16 %v4341, %v4339
        %v7118 = vpack.c.b16 %v4344, %v4342
        %v7119 = vpack.c.b16 %v4345, %v4343
        %v7120 = vpack.c.b16 %v4348, %v4346
        %v7121 = vpack.c.b16 %v4349, %v4347
        %v7122 = vpack.c.b16 %v4352, %v4350
        %v7123 = vpack.c.b16 %v4353, %v4351
        %v7124 = vpack.c.b16 %v4356, %v4354
        %v7125 = vpack.c.b16 %v4357, %v4355
        %v7126 = vpack.c.b16 %v4360, %v4358
        %v7127 = vpack.c.b16 %v4361, %v4359
        %v7128 = vpack.c.b16 %v4364, %v4362
        %v7129 = vpack.c.b16 %v4365, %v4363
        %v7130 = vpack.c.b16 %v4368, %v4366
        %v7131 = vpack.c.b16 %v4369, %v4367
        %v7132 = vpack.c.b16 %v4372, %v4370
        %v7133 = vpack.c.b16 %v4373, %v4371
        %v7134 = vpack.c.b16 %v4376, %v4374
        %v7135 = vpack.c.b16 %v4377, %v4375
        %v7136 = vpack.c.b16 %v4380, %v4378
        %v7137 = vpack.c.b16 %v4381, %v4379
        %v7138 = vpack.c.b16 %v4384, %v4382
        %v7139 = vpack.c.b16 %v4385, %v4383
        %v7140 = vpack.c.b16 %v4388, %v4386
        %v7141 = vpack.c.b16 %v4389, %v4387
        %v7142 = vpack.c.b16 %v4392, %v4390
        %v7143 = vpack.c.b16 %v4393, %v4391
        %v7144 = vpack.c.b16 %v4396, %v4394
        %v7145 = vpack.c.b16 %v4397, %v4395
        %v7146 = vpack.c.b16 %v4400, %v4398
        %v7147 = vpack.c.b16 %v4401, %v4399
        %v7148 = vpack.c.b16 %v4404, %v4402
        %v7149 = vpack.c.b16 %v4405, %v4403
        %v7150 = vpack.c.b16 %v4408, %v4406
        %v7151 = vpack.c.b16 %v4409, %v4407
        %v7152 = vpack.c.b16 %v4412, %v4410
        %v7153 = vpack.c.b16 %v4413, %v4411
        %v7154 = vpack.c.b16 %v4416, %v4414
        %v7155 = vpack.c.b16 %v4417, %v4415
        %v7156 = vpack.c.b16 %v4420, %v4418
        %v7157 = vpack.c.b16 %v4421, %v4419
        %v7158 = vpack.c.b16 %v4424, %v4422
        %v7159 = vpack.c.b16 %v4425, %v4423
        %v7160 = vpack.c.b16 %v4428, %v4426
        %v7161 = vpack.c.b16 %v4429, %v4427
        %v7162 = vpack.c.b16 %v4432, %v4430
        %v7163 = vpack.c.b16 %v4433, %v4431
        %v7164 = vpack.c.b16 %v4436, %v4434
        %v7165 = vpack.c.b16 %v4437, %v4435
        %v7166 = vpack.c.b16 %v4440, %v4438
        %v7167 = vpack.c.b16 %v4441, %v4439
        %v7168 = vpack.c.b16 %v4444, %v4442
        %v7169 = vpack.c.b16 %v4445, %v4443
        %v7170 = vpack.c.b16 %v4448, %v4446
        %v7171 = vpack.c.b16 %v4449, %v4447
        %v7172 = vpack.c.b16 %v4452, %v4450
        %v7173 = vpack.c.b16 %v4453, %v4451
        %v7174 = vpack.c.b16 %v4456, %v4454
        %v7175 = vpack.c.b16 %v4457, %v4455
        %v7176 = vpack.c.b16 %v4460, %v4458
        %v7177 = vpack.c.b16 %v4461, %v4459
        %v7178 = vpack.c.b16 %v4464, %v4462
        %v7179 = vpack.c.b16 %v4465, %v4463
        %v7180 = vpack.c.b16 %v4468, %v4466
        %v7181 = vpack.c.b16 %v4469, %v4467
        %v7182 = vpack.c.b16 %v4472, %v4470
        %v7183 = vpack.c.b16 %v4473, %v4471
        %v7184 = vpack.c.b16 %v4476, %v4474
        %v7185 = vpack.c.b16 %v4477, %v4475
        %v7186 = vpack.c.b16 %v4480, %v4478
        %v7187 = vpack.c.b16 %v4481, %v4479
        %v7188 = vpack.c.b16 %v4484, %v4482
        %v7189 = vpack.c.b16 %v4485, %v4483
        %v7190 = vpack.c.b16 %v4488, %v4486
        %v7191 = vpack.c.b16 %v4489, %v4487
        %v7192 = vpack.c.b16 %v4492, %v4490
        %v7193 = vpack.c.b16 %v4493, %v4491
        %v7194 = vpack.c.b16 %v4496, %v4494
        %v7195 = vpack.c.b16 %v4497, %v4495
        %v7196 = vpack.c.b16 %v4500, %v4498
        %v7197 = vpack.c.b16 %v4501, %v4499
        %v7198 = vpack.c.b16 %v4504, %v4502
        %v7199 = vpack.c.b16 %v4505, %v4503
        %v7200 = vpack.c.b16 %v4508, %v4506
        %v7201 = vpack.c.b16 %v4509, %v4507
        %v7202 = vpack.c.b16 %v4512, %v4510
        %v7203 = vpack.c.b16 %v4513, %v4511
        %v7204 = vpack.c.b16 %v4516, %v4514
        %v7205 = vpack.c.b16 %v4517, %v4515
        %v7206 = vpack.c.b16 %v4520, %v4518
        %v7207 = vpack.c.b16 %v4521, %v4519
        %v7208 = vpack.c.b16 %v4524, %v4522
        %v7209 = vpack.c.b16 %v4525, %v4523
        %v7210 = vpack.c.b16 %v4528, %v4526
        %v7211 = vpack.c.b16 %v4529, %v4527
        %v7212 = vpack.c.b16 %v4532, %v4530
        %v7213 = vpack.c.b16 %v4533, %v4531
        %v7214 = vpack.c.b16 %v4536, %v4534
        %v7215 = vpack.c.b16 %v4537, %v4535
        %v7216 = vpack.c.b16 %v4540, %v4538
        %v7217 = vpack.c.b16 %v4541, %v4539
        %v7218 = vpack.c.b16 %v4544, %v4542
        %v7219 = vpack.c.b16 %v4545, %v4543
        %v7220 = vpack.c.b16 %v4548, %v4546
        %v7221 = vpack.c.b16 %v4549, %v4547
        %v7222 = vpack.c.b16 %v4552, %v4550
        %v7223 = vpack.c.b16 %v4553, %v4551
        %v7224 = vpack.c.b16 %v4556, %v4554
        %v7225 = vpack.c.b16 %v4557, %v4555
        %v7226 = vpack.c.b16 %v4560, %v4558
        %v7227 = vpack.c.b16 %v4561, %v4559
        %v7228 = vpack.c.b16 %v4564, %v4562
        %v7229 = vpack.c.b16 %v4565, %v4563
        %v7230 = vpack.c.b16 %v4568, %v4566
        %v7231 = vpack.c.b16 %v4569, %v4567
        %v7232 = vpack.c.b16 %v4572, %v4570
        %v7233 = vpack.c.b16 %v4573, %v4571
        %v7234 = vpack.c.b16 %v4576, %v4574
        %v7235 = vpack.c.b16 %v4577, %v4575
        %v7236 = vpack.c.b16 %v4580, %v4578
        %v7237 = vpack.c.b16 %v4581, %v4579
        %v7238 = vpack.c.b16 %v4584, %v4582
        %v7239 = vpack.c.b16 %v4585, %v4583
        %v7240 = vpack.c.b16 %v4588, %v4586
        %v7241 = vpack.c.b16 %v4589, %v4587
        %v7242 = vpack.c.b16 %v4592, %v4590
        %v7243 = vpack.c.b16 %v4593, %v4591
        %v7244 = vpack.c.b16 %v4596, %v4594
        %v7245 = vpack.c.b16 %v4597, %v4595
        %v7246 = vpack.c.b16 %v4600, %v4598
        %v7247 = vpack.c.b16 %v4601, %v4599
        %v7248 = vpack.c.b16 %v4604, %v4602
        %v7249 = vpack.c.b16 %v4605, %v4603
        %v7250 = vpack.c.b16 %v4608, %v4606
        %v7251 = vpack.c.b16 %v4609, %v4607
        %v7252 = vpack.c.b16 %v4612, %v4610
        %v7253 = vpack.c.b16 %v4613, %v4611
        %v7254 = vpack.c.b16 %v4616, %v4614
        %v7255 = vpack.c.b16 %v4617, %v4615
        %v7256 = vpack.c.b16 %v4620, %v4618
        %v7257 = vpack.c.b16 %v4621, %v4619
        %v7258 = vpack.c.b16 %v4624, %v4622
        %v7259 = vpack.c.b16 %v4625, %v4623
        %v7260 = vpack.c.b16 %v4628, %v4626
        %v7261 = vpack.c.b16 %v4629, %v4627
        %v7262 = vpack.c.b16 %v4632, %v4630
        %v7263 = vpack.c.b16 %v4633, %v4631
        %v7264 = vpack.c.b16 %v4636, %v4634
        %v7265 = vpack.c.b16 %v4637, %v4635
        %v7266 = vpack.c.b16 %v4640, %v4638
        %v7267 = vpack.c.b16 %v4641, %v4639
        %v7268 = vpack.c.b16 %v4644, %v4642
        %v7269 = vpack.c.b16 %v4645, %v4643
        %v7270 = vpack.c.b16 %v4648, %v4646
        %v7271 = vpack.c.b16 %v4649, %v4647
        %v7272 = vpack.c.b16 %v4652, %v4650
        %v7273 = vpack.c.b16 %v4653, %v4651
        %v7274 = vpack.c.b16 %v4656, %v4654
        %v7275 = vpack.c.b16 %v4657, %v4655
        %v7276 = vpack.c.b16 %v4660, %v4658
        %v7277 = vpack.c.b16 %v4661, %v4659
        %v7278 = vpack.c.b16 %v4664, %v4662
        %v7279 = vpack.c.b16 %v4665, %v4663
        %v7280 = vpack.c.b16 %v4668, %v4666
        %v7281 = vpack.c.b16 %v4669, %v4667
        %v7282 = vpack.c.b16 %v4672, %v4670
        %v7283 = vpack.c.b16 %v4673, %v4671
        %v7284 = vpack.c.b16 %v4676, %v4674
        %v7285 = vpack.c.b16 %v4677, %v4675
        %v7286 = vpack.c.b16 %v4680, %v4678
        %v7287 = vpack.c.b16 %v4681, %v4679
        %v7288 = vpack.c.b16 %v4684, %v4682
        %v7289 = vpack.c.b16 %v4685, %v4683
        %v7290 = vpack.c.b16 %v4688, %v4686
        %v7291 = vpack.c.b16 %v4689, %v4687
        %v7292 = vpack.c.b16 %v4692, %v4690
        %v7293 = vpack.c.b16 %v4693, %v4691
        %v7294 = vpack.c.b16 %v4696, %v4694
        %v7295 = vpack.c.b16 %v4697, %v4695
        %v7296 = vpack.c.b16 %v4700, %v4698
        %v7297 = vpack.c.b16 %v4701, %v4699
        %v7298 = vpack.c.b16 %v4704, %v4702
        %v7299 = vpack.c.b16 %v4705, %v4703
        %v7300 = vpack.c.b16 %v4708, %v4706
        %v7301 = vpack.c.b16 %v4709, %v4707
        %v7302 = vpack.c.b16 %v4712, %v4710
        %v7303 = vpack.c.b16 %v4713, %v4711
        %v7304 = vpack.c.b16 %v4716, %v4714
        %v7305 = vpack.c.b16 %v4717, %v4715
        %v7306 = vpack.c.b16 %v4720, %v4718
        %v7307 = vpack.c.b16 %v4721, %v4719
        %v7308 = vpack.c.b16 %v4724, %v4722
        %v7309 = vpack.c.b16 %v4725, %v4723
        %v7310 = vpack.c.b16 %v4728, %v4726
        %v7311 = vpack.c.b16 %v4729, %v4727
        %v7312 = vpack.c.b16 %v4732, %v4730
        %v7313 = vpack.c.b16 %v4733, %v4731
        %v7314 = vpack.c.b16 %v4736, %v4734
        %v7315 = vpack.c.b16 %v4737, %v4735
        %v7316 = vpack.c.b16 %v4740, %v4738
        %v7317 = vpack.c.b16 %v4741, %v4739
        %v7318 = vpack.c.b16 %v4744, %v4742
        %v7319 = vpack.c.b16 %v4745, %v4743
        %v7320 = vpack.c.b16 %v4748, %v4746
        %v7321 = vpack.c.b16 %v4749, %v4747
        %v7322 = vpack.c.b16 %v4752, %v4750
        %v7323 = vpack.c.b16 %v4753, %v4751
        %v7324 = vpack.c.b16 %v4756, %v4754
        %v7325 = vpack.c.b16 %v4757, %v4755
        %v7326 = vpack.c.b16 %v4760, %v4758
        %v7327 = vpack.c.b16 %v4761, %v4759
        %v7328 = vpack.c.b16 %v4764, %v4762
        %v7329 = vpack.c.b16 %v4765, %v4763
        %v7330 = vpack.c.b16 %v4768, %v4766
        %v7331 = vpack.c.b16 %v4769, %v4767
        %v7332 = vpack.c.b16 %v4772, %v4770
        %v7333 = vpack.c.b16 %v4773, %v4771
        %v7334 = vpack.c.b16 %v4776, %v4774
        %v7335 = vpack.c.b16 %v4777, %v4775
        %v7336 = vpack.c.b16 %v4780, %v4778
        %v7337 = vpack.c.b16 %v4781, %v4779
        %v7338 = vpack.c.b16 %v4784, %v4782
        %v7339 = vpack.c.b16 %v4785, %v4783
        %v7340 = vpack.c.b16 %v4788, %v4786
        %v7341 = vpack.c.b16 %v4789, %v4787
        %v7342 = vpack.c.b16 %v4792, %v4790
        %v7343 = vpack.c.b16 %v4793, %v4791
        %v7344 = vpack.c.b16 %v4796, %v4794
        %v7345 = vpack.c.b16 %v4797, %v4795
        %v7346 = vpack.c.b16 %v4800, %v4798
        %v7347 = vpack.c.b16 %v4801, %v4799
        %v7348 = vpack.c.b16 %v4804, %v4802
        %v7349 = vpack.c.b16 %v4805, %v4803
        %v7350 = vpack.c.b16 %v4808, %v4806
        %v7351 = vpack.c.b16 %v4809, %v4807
        %v7352 = vpack.c.b16 %v4812, %v4810
        %v7353 = vpack.c.b16 %v4813, %v4811
        %v7354 = vpack.c.b16 %v4816, %v4814
        %v7355 = vpack.c.b16 %v4817, %v4815
        %v7356 = vpack.c.b16 %v4820, %v4818
        %v7357 = vpack.c.b16 %v4821, %v4819
        %v7358 = vpack.c.b16 %v4824, %v4822
        %v7359 = vpack.c.b16 %v4825, %v4823
        %v7360 = vpack.c.b16 %v4828, %v4826
        %v7361 = vpack.c.b16 %v4829, %v4827
        %v7362 = vpack.c.b16 %v4832, %v4830
        %v7363 = vpack.c.b16 %v4833, %v4831
        %v7364 = vpack.c.b16 %v4836, %v4834
        %v7365 = vpack.c.b16 %v4837, %v4835
        %v7366 = vpack.c.b16 %v4840, %v4838
        %v7367 = vpack.c.b16 %v4841, %v4839
        %v7368 = vpack.c.b16 %v4844, %v4842
        %v7369 = vpack.c.b16 %v4845, %v4843
        %v7370 = vpack.c.b16 %v4848, %v4846
        %v7371 = vpack.c.b16 %v4849, %v4847
        %v7372 = vpack.c.b16 %v4852, %v4850
        %v7373 = vpack.c.b16 %v4853, %v4851
        %v7374 = vpack.c.b16 %v4856, %v4854
        %v7375 = vpack.c.b16 %v4857, %v4855
        %v7376 = vpack.c.b16 %v4860, %v4858
        %v7377 = vpack.c.b16 %v4861, %v4859
        %v7378 = vpack.c.b16 %v4864, %v4862
        %v7379 = vpack.c.b16 %v4865, %v4863
        %v7380 = vpack.c.b16 %v4868, %v4866
        %v7381 = vpack.c.b16 %v4869, %v4867
        %v7382 = vpack.c.b16 %v4872, %v4870
        %v7383 = vpack.c.b16 %v4873, %v4871
        %v7384 = vpack.c.b16 %v4876, %v4874
        %v7385 = vpack.c.b16 %v4877, %v4875
        %v7386 = vpack.c.b16 %v4880, %v4878
        %v7387 = vpack.c.b16 %v4881, %v4879
        %v7388 = vpack.c.b16 %v4884, %v4882
        %v7389 = vpack.c.b16 %v4885, %v4883
        %v7390 = vpack.c.b16 %v4888, %v4886
        %v7391 = vpack.c.b16 %v4889, %v4887
        %v7392 = vpack.c.b16 %v4892, %v4890
        %v7393 = vpack.c.b16 %v4893, %v4891
        %v7394 = vpack.c.b16 %v4896, %v4894
        %v7395 = vpack.c.b16 %v4897, %v4895
        %v7396 = vpack.c.b16 %v4900, %v4898
        %v7397 = vpack.c.b16 %v4901, %v4899
        %v7398 = vpack.c.b16 %v4904, %v4902
        %v7399 = vpack.c.b16 %v4905, %v4903
        %v7400 = vpack.c.b16 %v4908, %v4906
        %v7401 = vpack.c.b16 %v4909, %v4907
        %v7402 = vpack.c.b16 %v4912, %v4910
        %v7403 = vpack.c.b16 %v4913, %v4911
        %v7404 = vpack.c.b16 %v4916, %v4914
        %v7405 = vpack.c.b16 %v4917, %v4915
        %v7406 = vpack.c.b16 %v4920, %v4918
        %v7407 = vpack.c.b16 %v4921, %v4919
        %v7408 = vpack.c.b16 %v4924, %v4922
        %v7409 = vpack.c.b16 %v4925, %v4923
        %v7410 = vpack.c.b16 %v4928, %v4926
        %v7411 = vpack.c.b16 %v4929, %v4927
        %v7412 = vpack.c.b16 %v4932, %v4930
        %v7413 = vpack.c.b16 %v4933, %v4931
        %v7414 = vpack.c.b16 %v4936, %v4934
        %v7415 = vpack.c.b16 %v4937, %v4935
        %v7416 = vpack.c.b16 %v4940, %v4938
        %v7417 = vpack.c.b16 %v4941, %v4939
        %v7418 = vpack.c.b16 %v4944, %v4942
        %v7419 = vpack.c.b16 %v4945, %v4943
        %v7420 = vpack.c.b16 %v4948, %v4946
        %v7421 = vpack.c.b16 %v4949, %v4947
        %v7422 = vpack.c.b16 %v4952, %v4950
        %v7423 = vpack.c.b16 %v4953, %v4951
        %v7424 = vpack.c.b16 %v4956, %v4954
        %v7425 = vpack.c.b16 %v4957, %v4955
        %v7426 = vpack.c.b16 %v4960, %v4958
        %v7427 = vpack.c.b16 %v4961, %v4959
        %v7428 = vpack.c.b16 %v4964, %v4962
        %v7429 = vpack.c.b16 %v4965, %v4963
        %v7430 = vpack.c.b16 %v4968, %v4966
        %v7431 = vpack.c.b16 %v4969, %v4967
        %v7432 = vpack.c.b16 %v4972, %v4970
        %v7433 = vpack.c.b16 %v4973, %v4971
        %v7434 = vpack.c.b16 %v4976, %v4974
        %v7435 = vpack.c.b16 %v4977, %v4975
        %v7436 = vpack.c.b16 %v4980, %v4978
        %v7437 = vpack.c.b16 %v4981, %v4979
        %v7438 = vpack.c.b16 %v4984, %v4982
        %v7439 = vpack.c.b16 %v4985, %v4983
        %v7440 = vpack.c.b16 %v4988, %v4986
        %v7441 = vpack.c.b16 %v4989, %v4987
        %v7442 = vpack.c.b16 %v4992, %v4990
        %v7443 = vpack.c.b16 %v4993, %v4991
        %v7444 = vpack.c.b16 %v4996, %v4994
        %v7445 = vpack.c.b16 %v4997, %v4995
        %v7446 = vpack.c.b16 %v5000, %v4998
        %v7447 = vpack.c.b16 %v5001, %v4999
        %v7448 = vpack.c.b16 %v5004, %v5002
        %v7449 = vpack.c.b16 %v5005, %v5003
        %v7450 = vpack.c.b16 %v5008, %v5006
        %v7451 = vpack.c.b16 %v5009, %v5007
        %v7452 = vpack.c.b16 %v5012, %v5010
        %v7453 = vpack.c.b16 %v5013, %v5011
        %v7454 = vpack.c.b16 %v5016, %v5014
        %v7455 = vpack.c.b16 %v5017, %v5015
        %v7456 = vpack.c.b16 %v5020, %v5018
        %v7457 = vpack.c.b16 %v5021, %v5019
        %v7458 = vpack.c.b16 %v5024, %v5022
        %v7459 = vpack.c.b16 %v5025, %v5023
        %v7460 = vpack.c.b16 %v5028, %v5026
        %v7461 = vpack.c.b16 %v5029, %v5027
        %v7462 = vpack.c.b16 %v5032, %v5030
        %v7463 = vpack.c.b16 %v5033, %v5031
        %v7464 = vpack.c.b16 %v5036, %v5034
        %v7465 = vpack.c.b16 %v5037, %v5035
        %v7466 = vpack.c.b16 %v5040, %v5038
        %v7467 = vpack.c.b16 %v5041, %v5039
        %v7468 = vpack.c.b16 %v5044, %v5042
        %v7469 = vpack.c.b16 %v5045, %v5043
        %v7470 = vpack.c.b16 %v5048, %v5046
        %v7471 = vpack.c.b16 %v5049, %v5047
        %v7472 = vpack.c.b16 %v5052, %v5050
        %v7473 = vpack.c.b16 %v5053, %v5051
        %v7474 = vpack.c.b16 %v5056, %v5054
        %v7475 = vpack.c.b16 %v5057, %v5055
        %v7476 = vpack.c.b16 %v5060, %v5058
        %v7477 = vpack.c.b16 %v5061, %v5059
        %v7478 = vpack.c.b16 %v5064, %v5062
        %v7479 = vpack.c.b16 %v5065, %v5063
        %v7480 = vpack.c.b16 %v5068, %v5066
        %v7481 = vpack.c.b16 %v5069, %v5067
        %v7482 = vpack.c.b16 %v5072, %v5070
        %v7483 = vpack.c.b16 %v5073, %v5071
        %v7484 = vpack.c.b16 %v5076, %v5074
        %v7485 = vpack.c.b16 %v5077, %v5075
        %v7486 = vpack.c.b16 %v5080, %v5078
        %v7487 = vpack.c.b16 %v5081, %v5079
        %v7488 = vpack.c.b16 %v5084, %v5082
        %v7489 = vpack.c.b16 %v5085, %v5083
        %v7490 = vpack.c.b16 %v5088, %v5086
        %v7491 = vpack.c.b16 %v5089, %v5087
        %v7492 = vpack.c.b16 %v5092, %v5090
        %v7493 = vpack.c.b16 %v5093, %v5091
        %v7494 = vpack.c.b16 %v5096, %v5094
        %v7495 = vpack.c.b16 %v5097, %v5095
        %v7496 = vpack.c.b16 %v5100, %v5098
        %v7497 = vpack.c.b16 %v5101, %v5099
        %v7498 = vpack.c.b16 %v5104, %v5102
        %v7499 = vpack.c.b16 %v5105, %v5103
        %v7500 = vpack.c.b16 %v5108, %v5106
        %v7501 = vpack.c.b16 %v5109, %v5107
        %v7502 = vpack.c.b16 %v5112, %v5110
        %v7503 = vpack.c.b16 %v5113, %v5111
        %v7504 = vpack.c.b16 %v5116, %v5114
        %v7505 = vpack.c.b16 %v5117, %v5115
        %v7506 = vpack.c.b16 %v5120, %v5118
        %v7507 = vpack.c.b16 %v5121, %v5119
        %v7508 = vpack.c.b16 %v5124, %v5122
        %v7509 = vpack.c.b16 %v5125, %v5123
        %v7510 = vpack.c.b16 %v5128, %v5126
        %v7511 = vpack.c.b16 %v5129, %v5127
        %v7512 = vpack.c.b16 %v5132, %v5130
        %v7513 = vpack.c.b16 %v5133, %v5131
        %v7514 = vpack.c.b16 %v5136, %v5134
        %v7515 = vpack.c.b16 %v5137, %v5135
        %v7516 = vpack.c.b16 %v5140, %v5138
        %v7517 = vpack.c.b16 %v5141, %v5139
        %v7518 = vpack.c.b16 %v5144, %v5142
        %v7519 = vpack.c.b16 %v5145, %v5143
        %v7520 = vpack.c.b16 %v5148, %v5146
        %v7521 = vpack.c.b16 %v5149, %v5147
        %v7522 = vpack.c.b16 %v5152, %v5150
        %v7523 = vpack.c.b16 %v5153, %v5151
        %v7524 = vpack.c.b16 %v5156, %v5154
        %v7525 = vpack.c.b16 %v5157, %v5155
        %v7526 = vpack.c.b16 %v5160, %v5158
        %v7527 = vpack.c.b16 %v5161, %v5159
        %v7528 = vpack.c.b16 %v5164, %v5162
        %v7529 = vpack.c.b16 %v5165, %v5163
        %v7530 = vpack.c.b16 %v5168, %v5166
        %v7531 = vpack.c.b16 %v5169, %v5167
        %v7532 = vpack.c.b16 %v5172, %v5170
        %v7533 = vpack.c.b16 %v5173, %v5171
        %v7534 = vpack.c.b16 %v5176, %v5174
        %v7535 = vpack.c.b16 %v5177, %v5175
        %v7536 = vpack.c.b16 %v5180, %v5178
        %v7537 = vpack.c.b16 %v5181, %v5179
        %v7538 = vpack.c.b16 %v5184, %v5182
        %v7539 = vpack.c.b16 %v5185, %v5183
        %v7540 = vpack.c.b16 %v5188, %v5186
        %v7541 = vpack.c.b16 %v5189, %v5187
        %v7542 = vpack.c.b16 %v5192, %v5190
        %v7543 = vpack.c.b16 %v5193, %v5191
        %v7544 = vpack.c.b16 %v5196, %v5194
        %v7545 = vpack.c.b16 %v5197, %v5195
        %v7546 = vpack.c.b16 %v5200, %v5198
        %v7547 = vpack.c.b16 %v5201, %v5199
        %v7548 = vpack.c.b16 %v5204, %v5202
        %v7549 = vpack.c.b16 %v5205, %v5203
        %v7550 = vpack.c.b16 %v5208, %v5206
        %v7551 = vpack.c.b16 %v5209, %v5207
        %v7552 = vpack.c.b16 %v5212, %v5210
        %v7553 = vpack.c.b16 %v5213, %v5211
        %v7554 = vpack.c.b16 %v5216, %v5214
        %v7555 = vpack.c.b16 %v5217, %v5215
        %v7556 = vpack.c.b16 %v5220, %v5218
        %v7557 = vpack.c.b16 %v5221, %v5219
        %v7558 = vpack.c.b16 %v5224, %v5222
        %v7559 = vpack.c.b16 %v5225, %v5223
        %v7560 = vpack.c.b16 %v5228, %v5226
        %v7561 = vpack.c.b16 %v5229, %v5227
        %v7562 = vpack.c.b16 %v5232, %v5230
        %v7563 = vpack.c.b16 %v5233, %v5231
        %v7564 = vpack.c.b16 %v5236, %v5234
        %v7565 = vpack.c.b16 %v5237, %v5235
        %v7566 = vpack.c.b16 %v5240, %v5238
        %v7567 = vpack.c.b16 %v5241, %v5239
        %v7568 = vpack.c.b16 %v5244, %v5242
        %v7569 = vpack.c.b16 %v5245, %v5243
        %v7570 = vpack.c.b16 %v5248, %v5246
        %v7571 = vpack.c.b16 %v5249, %v5247
        %v7572 = vpack.c.b16 %v5252, %v5250
        %v7573 = vpack.c.b16 %v5253, %v5251
        %v7574 = vpack.c.b16 %v5256, %v5254
        %v7575 = vpack.c.b16 %v5257, %v5255
        %v7576 = vpack.c.b16 %v5260, %v5258
        %v7577 = vpack.c.b16 %v5261, %v5259
        %v7578 = vpack.c.b16 %v5264, %v5262
        %v7579 = vpack.c.b16 %v5265, %v5263
        %v7580 = vpack.c.b16 %v5268, %v5266
        %v7581 = vpack.c.b16 %v5269, %v5267
        %v7582 = vpack.c.b16 %v5272, %v5270
        %v7583 = vpack.c.b16 %v5273, %v5271
        %v7584 = vpack.c.b16 %v5276, %v5274
        %v7585 = vpack.c.b16 %v5277, %v5275
        %v7586 = vpack.c.b16 %v5280, %v5278
        %v7587 = vpack.c.b16 %v5281, %v5279
        %v7588 = vpack.c.b16 %v5284, %v5282
        %v7589 = vpack.c.b16 %v5285, %v5283
        %v7590 = vpack.c.b16 %v5288, %v5286
        %v7591 = vpack.c.b16 %v5289, %v5287
        %v7592 = vpack.c.b16 %v5292, %v5290
        %v7593 = vpack.c.b16 %v5293, %v5291
        %v7594 = vpack.c.b16 %v5296, %v5294
        %v7595 = vpack.c.b16 %v5297, %v5295
        %v7596 = vpack.c.b16 %v5300, %v5298
        %v7597 = vpack.c.b16 %v5301, %v5299
        %v7598 = vpack.c.b16 %v5304, %v5302
        %v7599 = vpack.c.b16 %v5305, %v5303
        %v7600 = vpack.c.b16 %v5308, %v5306
        %v7601 = vpack.c.b16 %v5309, %v5307
        %v7602 = vpack.c.b16 %v5312, %v5310
        %v7603 = vpack.c.b16 %v5313, %v5311
        %v7604 = vpack.c.b16 %v5316, %v5314
        %v7605 = vpack.c.b16 %v5317, %v5315
        %v7606 = vpack.c.b16 %v5320, %v5318
        %v7607 = vpack.c.b16 %v5321, %v5319
        %v7608 = vpack.c.b16 %v5324, %v5322
        %v7609 = vpack.c.b16 %v5325, %v5323
        %v7610 = vpack.c.b16 %v5328, %v5326
        %v7611 = vpack.c.b16 %v5329, %v5327
        %v7612 = vpack.c.b16 %v5332, %v5330
        %v7613 = vpack.c.b16 %v5333, %v5331
        %v7614 = vpack.c.b16 %v5336, %v5334
        %v7615 = vpack.c.b16 %v5337, %v5335
        %v7616 = vpack.c.b16 %v5340, %v5338
        %v7617 = vpack.c.b16 %v5341, %v5339
        %v7618 = vpack.c.b16 %v5344, %v5342
        %v7619 = vpack.c.b16 %v5345, %v5343
        %v7620 = vpack.c.b16 %v5348, %v5346
        %v7621 = vpack.c.b16 %v5349, %v5347
        %v7622 = vpack.c.b16 %v5352, %v5350
        %v7623 = vpack.c.b16 %v5353, %v5351
        %v7624 = vpack.c.b16 %v5356, %v5354
        %v7625 = vpack.c.b16 %v5357, %v5355
        %v7626 = vpack.c.b16 %v5360, %v5358
        %v7627 = vpack.c.b16 %v5361, %v5359
        %v7628 = vpack.c.b16 %v5364, %v5362
        %v7629 = vpack.c.b16 %v5365, %v5363
        %v7630 = vpack.c.b16 %v5368, %v5366
        %v7631 = vpack.c.b16 %v5369, %v5367
        %v7632 = vpack.c.b16 %v5372, %v5370
        %v7633 = vpack.c.b16 %v5373, %v5371
        %v7634 = vpack.c.b16 %v5376, %v5374
        %v7635 = vpack.c.b16 %v5377, %v5375
        %v7636 = vpack.c.b16 %v5380, %v5378
        %v7637 = vpack.c.b16 %v5381, %v5379
        %v7638 = vpack.c.b16 %v5384, %v5382
        %v7639 = vpack.c.b16 %v5385, %v5383
        %v7640 = vpack.c.b16 %v5388, %v5386
        %v7641 = vpack.c.b16 %v5389, %v5387
        %v7642 = vpack.c.b16 %v5392, %v5390
        %v7643 = vpack.c.b16 %v5393, %v5391
        %v7644 = vpack.c.b16 %v5396, %v5394
        %v7645 = vpack.c.b16 %v5397, %v5395
        %v7646 = vpack.c.b16 %v5400, %v5398
        %v7647 = vpack.c.b16 %v5401, %v5399
        %v7648 = vpack.c.b16 %v5404, %v5402
        %v7649 = vpack.c.b16 %v5405, %v5403
        %v7650 = vpack.c.b16 %v5408, %v5406
        %v7651 = vpack.c.b16 %v5409, %v5407
        %v7652 = vpack.c.b16 %v5412, %v5410
        %v7653 = vpack.c.b16 %v5413, %v5411
        %v7654 = vpack.c.b16 %v5416, %v5414
        %v7655 = vpack.c.b16 %v5417, %v5415
        %v7656 = vpack.c.b16 %v5420, %v5418
        %v7657 = vpack.c.b16 %v5421, %v5419
        %v7658 = vpack.c.b16 %v5424, %v5422
        %v7659 = vpack.c.b16 %v5425, %v5423
        %v7660 = vpack.c.b16 %v5428, %v5426
        %v7661 = vpack.c.b16 %v5429, %v5427
        %v7662 = vpack.c.b16 %v5432, %v5430
        %v7663 = vpack.c.b16 %v5433, %v5431
        %v7664 = vpack.c.b16 %v5436, %v5434
        %v7665 = vpack.c.b16 %v5437, %v5435
        %v7666 = vpack.c.b16 %v5440, %v5438
        %v7667 = vpack.c.b16 %v5441, %v5439
        %v7668 = vpack.c.b16 %v5444, %v5442
        %v7669 = vpack.c.b16 %v5445, %v5443
        %v7670 = vpack.c.b16 %v5448, %v5446
        %v7671 = vpack.c.b16 %v5449, %v5447
        %v7672 = vpack.c.b16 %v5452, %v5450
        %v7673 = vpack.c.b16 %v5453, %v5451
        %v7674 = vpack.c.b16 %v5456, %v5454
        %v7675 = vpack.c.b16 %v5457, %v5455
        %v7676 = vpack.c.b16 %v5460, %v5458
        %v7677 = vpack.c.b16 %v5461, %v5459
        %v7678 = vpack.c.b16 %v5464, %v5462
        %v7679 = vpack.c.b16 %v5465, %v5463
        %v7680 = vpack.c.b16 %v5468, %v5466
        %v7681 = vpack.c.b16 %v5469, %v5467
        %v7682 = vpack.c.b16 %v5472, %v5470
        %v7683 = vpack.c.b16 %v5473, %v5471
        %v7684 = vpack.c.b16 %v5476, %v5474
        %v7685 = vpack.c.b16 %v5477, %v5475
        %v7686 = vpack.c.b16 %v5480, %v5478
        %v7687 = vpack.c.b16 %v5481, %v5479
        %v7688 = vpack.c.b16 %v5484, %v5482
        %v7689 = vpack.c.b16 %v5485, %v5483
        %v7690 = vpack.c.b16 %v5488, %v5486
        %v7691 = vpack.c.b16 %v5489, %v5487
        %v7692 = vpack.c.b16 %v5492, %v5490
        %v7693 = vpack.c.b16 %v5493, %v5491
        %v7694 = vpack.c.b16 %v5496, %v5494
        %v7695 = vpack.c.b16 %v5497, %v5495
        %v7696 = vpack.c.b16 %v5500, %v5498
        %v7697 = vpack.c.b16 %v5501, %v5499
        %v7698 = vpack.c.b16 %v5504, %v5502
        %v7699 = vpack.c.b16 %v5505, %v5503
        %v7700 = vpack.c.b16 %v5508, %v5506
        %v7701 = vpack.c.b16 %v5509, %v5507
        %v7702 = vpack.c.b16 %v5512, %v5510
        %v7703 = vpack.c.b16 %v5513, %v5511
        %v7704 = vpack.c.b16 %v5516, %v5514
        %v7705 = vpack.c.b16 %v5517, %v5515
        %v7706 = vpack.c.b16 %v5520, %v5518
        %v7707 = vpack.c.b16 %v5521, %v5519
        %v7708 = vpack.c.b16 %v5524, %v5522
        %v7709 = vpack.c.b16 %v5525, %v5523
        %v7710 = vpack.c.b16 %v5528, %v5526
        %v7711 = vpack.c.b16 %v5529, %v5527
        %v7712 = vpack.c.b16 %v5532, %v5530
        %v7713 = vpack.c.b16 %v5533, %v5531
        %v7714 = vpack.c.b16 %v5536, %v5534
        %v7715 = vpack.c.b16 %v5537, %v5535
        %v7716 = vpack.c.b16 %v5540, %v5538
        %v7717 = vpack.c.b16 %v5541, %v5539
        %v7718 = vpack.c.b16 %v5544, %v5542
        %v7719 = vpack.c.b16 %v5545, %v5543
        %v7720 = vpack.c.b16 %v5548, %v5546
        %v7721 = vpack.c.b16 %v5549, %v5547
        %v7722 = vpack.c.b16 %v5552, %v5550
        %v7723 = vpack.c.b16 %v5553, %v5551
        %v7724 = vpack.c.b16 %v5556, %v5554
        %v7725 = vpack.c.b16 %v5557, %v5555
        %v7726 = vpack.c.b16 %v5560, %v5558
        %v7727 = vpack.c.b16 %v5561, %v5559
        %v7728 = vpack.c.b16 %v5564, %v5562
        %v7729 = vpack.c.b16 %v5565, %v5563
        %v7730 = vpack.c.b16 %v5568, %v5566
        %v7731 = vpack.c.b16 %v5569, %v5567
        %v7732 = vpack.c.b16 %v5572, %v5570
        %v7733 = vpack.c.b16 %v5573, %v5571
        %v7734 = vpack.c.b16 %v5576, %v5574
        %v7735 = vpack.c.b16 %v5577, %v5575
        %v7736 = vpack.c.b16 %v5580, %v5578
        %v7737 = vpack.c.b16 %v5581, %v5579
        %v7738 = vpack.c.b16 %v5584, %v5582
        %v7739 = vpack.c.b16 %v5585, %v5583
        %v7740 = vpack.c.b16 %v5588, %v5586
        %v7741 = vpack.c.b16 %v5589, %v5587
        %v7742 = vpack.c.b16 %v5592, %v5590
        %v7743 = vpack.c.b16 %v5593, %v5591
        %v7744 = vpack.c.b16 %v5596, %v5594
        %v7745 = vpack.c.b16 %v5597, %v5595
        %v7746 = vpack.c.b16 %v5600, %v5598
        %v7747 = vpack.c.b16 %v5601, %v5599
        %v7748 = vpack.c.b16 %v5604, %v5602
        %v7749 = vpack.c.b16 %v5605, %v5603
        %v7750 = vpack.c.b16 %v5608, %v5606
        %v7751 = vpack.c.b16 %v5609, %v5607
        %v7752 = vpack.c.b16 %v5612, %v5610
        %v7753 = vpack.c.b16 %v5613, %v5611
        %v7754 = vpack.c.b16 %v5616, %v5614
        %v7755 = vpack.c.b16 %v5617, %v5615
        %v7756 = vpack.c.b16 %v5620, %v5618
        %v7757 = vpack.c.b16 %v5621, %v5619
        %v7758 = vpack.c.b16 %v5624, %v5622
        %v7759 = vpack.c.b16 %v5625, %v5623
        %v7760 = vpack.c.b16 %v5628, %v5626
        %v7761 = vpack.c.b16 %v5629, %v5627
        %v7762 = vpack.c.b16 %v5632, %v5630
        %v7763 = vpack.c.b16 %v5633, %v5631
        %v7764 = vpack.c.b16 %v5636, %v5634
        %v7765 = vpack.c.b16 %v5637, %v5635
        %v7766 = vpack.c.b16 %v5640, %v5638
        %v7767 = vpack.c.b16 %v5641, %v5639
        %v7768 = vpack.c.b16 %v5644, %v5642
        %v7769 = vpack.c.b16 %v5645, %v5643
        %v7770 = vpack.c.b16 %v5648, %v5646
        %v7771 = vpack.c.b16 %v5649, %v5647
        %v7772 = vpack.c.b16 %v5652, %v5650
        %v7773 = vpack.c.b16 %v5653, %v5651
        %v7774 = vpack.c.b16 %v5656, %v5654
        %v7775 = vpack.c.b16 %v5657, %v5655
        %v7776 = vpack.c.b16 %v5660, %v5658
        %v7777 = vpack.c.b16 %v5661, %v5659
        %v7778 = vpack.c.b16 %v5664, %v5662
        %v7779 = vpack.c.b16 %v5665, %v5663
        %v7780 = vpack.c.b16 %v5668, %v5666
        %v7781 = vpack.c.b16 %v5669, %v5667
        %v7782 = vpack.c.b16 %v5672, %v5670
        %v7783 = vpack.c.b16 %v5673, %v5671
        %v7784 = vpack.c.b16 %v5676, %v5674
        %v7785 = vpack.c.b16 %v5677, %v5675
        %v7786 = vpack.c.b16 %v5680, %v5678
        %v7787 = vpack.c.b16 %v5681, %v5679
        %v7788 = vpack.c.b16 %v5684, %v5682
        %v7789 = vpack.c.b16 %v5685, %v5683
        %v7790 = vpack.c.b16 %v5688, %v5686
        %v7791 = vpack.c.b16 %v5689, %v5687
        %v7792 = vpack.c.b16 %v5692, %v5690
        %v7793 = vpack.c.b16 %v5693, %v5691
        %v7794 = vpack.c.b16 %v5696, %v5694
        %v7795 = vpack.c.b16 %v5697, %v5695
        %v7796 = vpack.c.b16 %v5700, %v5698
        %v7797 = vpack.c.b16 %v5701, %v5699
        %v7798 = vpack.c.b16 %v5704, %v5702
        %v7799 = vpack.c.b16 %v5705, %v5703
        %v7800 = vpack.c.b16 %v5708, %v5706
        %v7801 = vpack.c.b16 %v5709, %v5707
        %v7802 = vpack.c.b16 %v5712, %v5710
        %v7803 = vpack.c.b16 %v5713, %v5711
        %v7804 = vpack.c.b16 %v5716, %v5714
        %v7805 = vpack.c.b16 %v5717, %v5715
        %v7806 = vpack.c.b16 %v5720, %v5718
        %v7807 = vpack.c.b16 %v5721, %v5719
        %v7808 = vpack.c.b16 %v5724, %v5722
        %v7809 = vpack.c.b16 %v5725, %v5723
        %v7810 = vpack.c.b16 %v5728, %v5726
        %v7811 = vpack.c.b16 %v5729, %v5727
        %v7812 = vpack.c.b16 %v5732, %v5730
        %v7813 = vpack.c.b16 %v5733, %v5731
        %v7814 = vpack.c.b16 %v5736, %v5734
        %v7815 = vpack.c.b16 %v5737, %v5735
        %v7816 = vpack.c.b16 %v5740, %v5738
        %v7817 = vpack.c.b16 %v5741, %v5739
        %v7818 = vpack.c.b16 %v5744, %v5742
        %v7819 = vpack.c.b16 %v5745, %v5743
        %v7820 = vpack.c.b16 %v5748, %v5746
        %v7821 = vpack.c.b16 %v5749, %v5747
        %v7822 = vpack.c.b16 %v5752, %v5750
        %v7823 = vpack.c.b16 %v5753, %v5751
        %v7824 = vpack.c.b16 %v5756, %v5754
        %v7825 = vpack.c.b16 %v5757, %v5755
        %v7826 = vpack.c.b16 %v5760, %v5758
        %v7827 = vpack.c.b16 %v5761, %v5759
        %v7828 = vpack.c.b16 %v5764, %v5762
        %v7829 = vpack.c.b16 %v5765, %v5763
        %v7830 = vpack.c.b16 %v5768, %v5766
        %v7831 = vpack.c.b16 %v5769, %v5767
        %v7832 = vpack.c.b16 %v5772, %v5770
        %v7833 = vpack.c.b16 %v5773, %v5771
        %v7834 = vpack.c.b16 %v5776, %v5774
        %v7835 = vpack.c.b16 %v5777, %v5775
        %v7836 = vpack.c.b16 %v5780, %v5778
        %v7837 = vpack.c.b16 %v5781, %v5779
        %v7838 = vpack.c.b16 %v5784, %v5782
        %v7839 = vpack.c.b16 %v5785, %v5783
        %v7840 = vpack.c.b16 %v5788, %v5786
        %v7841 = vpack.c.b16 %v5789, %v5787
        %v7842 = vpack.c.b16 %v5792, %v5790
        %v7843 = vpack.c.b16 %v5793, %v5791
        %v7844 = vpack.c.b16 %v5796, %v5794
        %v7845 = vpack.c.b16 %v5797, %v5795
        %v7846 = vpack.c.b16 %v5800, %v5798
        %v7847 = vpack.c.b16 %v5801, %v5799
        %v7848 = vpack.c.b16 %v5804, %v5802
        %v7849 = vpack.c.b16 %v5805, %v5803
        %v7850 = vpack.c.b16 %v5808, %v5806
        %v7851 = vpack.c.b16 %v5809, %v5807
        %v7852 = vpack.c.b16 %v5812, %v5810
        %v7853 = vpack.c.b16 %v5813, %v5811
        %v7854 = vpack.c.b16 %v5816, %v5814
        %v7855 = vpack.c.b16 %v5817, %v5815
        %v7856 = vpack.c.b16 %v5820, %v5818
        %v7857 = vpack.c.b16 %v5821, %v5819
        %v7858 = vpack.c.b16 %v5824, %v5822
        %v7859 = vpack.c.b16 %v5825, %v5823
        %v7860 = vpack.c.b16 %v5828, %v5826
        %v7861 = vpack.c.b16 %v5829, %v5827
        %v7862 = vpack.c.b16 %v5832, %v5830
        %v7863 = vpack.c.b16 %v5833, %v5831
        %v7864 = vpack.c.b16 %v5836, %v5834
        %v7865 = vpack.c.b16 %v5837, %v5835
        %v7866 = vpack.c.b16 %v5840, %v5838
        %v7867 = vpack.c.b16 %v5841, %v5839
        %v7868 = vpack.c.b16 %v5844, %v5842
        %v7869 = vpack.c.b16 %v5845, %v5843
        %v7870 = vpack.c.b16 %v5848, %v5846
        %v7871 = vpack.c.b16 %v5849, %v5847
        %v7872 = vpack.c.b16 %v5852, %v5850
        %v7873 = vpack.c.b16 %v5853, %v5851
        %v7874 = vpack.c.b16 %v5856, %v5854
        %v7875 = vpack.c.b16 %v5857, %v5855
        %v7876 = vpack.c.b16 %v5860, %v5858
        %v7877 = vpack.c.b16 %v5861, %v5859
        %v7878 = vpack.c.b16 %v5864, %v5862
        %v7879 = vpack.c.b16 %v5865, %v5863
        %v7880 = vpack.c.b16 %v5868, %v5866
        %v7881 = vpack.c.b16 %v5869, %v5867
        %v7882 = vpack.c.b16 %v5872, %v5870
        %v7883 = vpack.c.b16 %v5873, %v5871
        %v7884 = vpack.c.b16 %v5876, %v5874
        %v7885 = vpack.c.b16 %v5877, %v5875
        %v7886 = vpack.c.b16 %v5880, %v5878
        %v7887 = vpack.c.b16 %v5881, %v5879
        %v7888 = vpack.c.b16 %v5884, %v5882
        %v7889 = vpack.c.b16 %v5885, %v5883
        %v7890 = vpack.c.b16 %v5888, %v5886
        %v7891 = vpack.c.b16 %v5889, %v5887
        %v7892 = vpack.c.b16 %v5892, %v5890
        %v7893 = vpack.c.b16 %v5893, %v5891
        %v7894 = vpack.c.b16 %v5896, %v5894
        %v7895 = vpack.c.b16 %v5897, %v5895
        %v7896 = vpack.c.b16 %v5900, %v5898
        %v7897 = vpack.c.b16 %v5901, %v5899
        %v7898 = vpack.c.b16 %v5904, %v5902
        %v7899 = vpack.c.b16 %v5905, %v5903
        %v7900 = vpack.c.b16 %v5908, %v5906
        %v7901 = vpack.c.b16 %v5909, %v5907
        %v7902 = vpack.c.b16 %v5912, %v5910
        %v7903 = vpack.c.b16 %v5913, %v5911
        %v7904 = vpack.c.b16 %v5916, %v5914
        %v7905 = vpack.c.b16 %v5917, %v5915
        %v7906 = vpack.c.b16 %v5920, %v5918
        %v7907 = vpack.c.b16 %v5921, %v5919
        %v7908 = vpack.c.b16 %v5924, %v5922
        %v7909 = vpack.c.b16 %v5925, %v5923
        %v7910 = vpack.c.b16 %v5928, %v5926
        %v7911 = vpack.c.b16 %v5929, %v5927
        %v7912 = vpack.c.b16 %v5932, %v5930
        %v7913 = vpack.c.b16 %v5933, %v5931
        %v7914 = vpack.c.b16 %v5936, %v5934
        %v7915 = vpack.c.b16 %v5937, %v5935
        %v7916 = vpack.c.b16 %v5940, %v5938
        %v7917 = vpack.c.b16 %v5941, %v5939
        %v7918 = vpack.c.b16 %v5944, %v5942
        %v7919 = vpack.c.b16 %v5945, %v5943
        %v7920 = vpack.c.b16 %v5948, %v5946
        %v7921 = vpack.c.b16 %v5949, %v5947
        %v7922 = vpack.c.b16 %v5952, %v5950
        %v7923 = vpack.c.b16 %v5953, %v5951
        %v7924 = vpack.c.b16 %v5956, %v5954
        %v7925 = vpack.c.b16 %v5957, %v5955
        %v7926 = vpack.c.b16 %v5960, %v5958
        %v7927 = vpack.c.b16 %v5961, %v5959
        %v7928 = vpack.c.b16 %v5964, %v5962
        %v7929 = vpack.c.b16 %v5965, %v5963
        %v7930 = vpack.c.b16 %v5968, %v5966
        %v7931 = vpack.c.b16 %v5969, %v5967
        %v7932 = vpack.c.b16 %v5972, %v5970
        %v7933 = vpack.c.b16 %v5973, %v5971
        %v7934 = vpack.c.b16 %v5976, %v5974
        %v7935 = vpack.c.b16 %v5977, %v5975
        %v7936 = vpack.c.b16 %v5980, %v5978
        %v7937 = vpack.c.b16 %v5981, %v5979
        %v7938 = vpack.c.b16 %v5984, %v5982
        %v7939 = vpack.c.b16 %v5985, %v5983
        %v7940 = vpack.c.b16 %v5988, %v5986
        %v7941 = vpack.c.b16 %v5989, %v5987
        %v7942 = vpack.c.b16 %v5992, %v5990
        %v7943 = vpack.c.b16 %v5993, %v5991
        %v7944 = vpack.c.b16 %v5996, %v5994
        %v7945 = vpack.c.b16 %v5997, %v5995
        %v7946 = vpack.c.b16 %v6000, %v5998
        %v7947 = vpack.c.b16 %v6001, %v5999
        %v7948 = vpack.c.b16 %v6004, %v6002
        %v7949 = vpack.c.b16 %v6005, %v6003
        %v7950 = vpack.c.b16 %v6008, %v6006
        %v7951 = vpack.c.b16 %v6009, %v6007
        %v7952 = vpack.c.b16 %v6012, %v6010
        %v7953 = vpack.c.b16 %v6013, %v6011
        %v7954 = vpack.c.b16 %v6016, %v6014
        %v7955 = vpack.c.b16 %v6017, %v6015
        %v7956 = vpack.c.b16 %v6020, %v6018
        %v7957 = vpack.c.b16 %v6021, %v6019
        %v7958 = vpack.c.b16 %v6024, %v6022
        %v7959 = vpack.c.b16 %v6025, %v6023
        %v7960 = vpack.c.b16 %v6028, %v6026
        %v7961 = vpack.c.b16 %v6029, %v6027
        %v7962 = vpack.c.b16 %v6032, %v6030
        %v7963 = vpack.c.b16 %v6033, %v6031
        %v7964 = vpack.c.b16 %v6036, %v6034
        %v7965 = vpack.c.b16 %v6037, %v6035
        %v7966 = vpack.c.b16 %v6040, %v6038
        %v7967 = vpack.c.b16 %v6041, %v6039
        %v7968 = vpack.c.b16 %v6044, %v6042
        %v7969 = vpack.c.b16 %v6045, %v6043
        %v7970 = vpack.c.b16 %v6048, %v6046
        %v7971 = vpack.c.b16 %v6049, %v6047
        %v7972 = vpack.c.b16 %v6052, %v6050
        %v7973 = vpack.c.b16 %v6053, %v6051
        %v7974 = vpack.c.b16 %v6056, %v6054
        %v7975 = vpack.c.b16 %v6057, %v6055
        %v7976 = vpack.c.b16 %v6060, %v6058
        %v7977 = vpack.c.b16 %v6061, %v6059
        %v7978 = vpack.c.b16 %v6064, %v6062
        %v7979 = vpack.c.b16 %v6065, %v6063
        %v7980 = vpack.c.b16 %v6068, %v6066
        %v7981 = vpack.c.b16 %v6069, %v6067
        %v7982 = vpack.c.b16 %v6072, %v6070
        %v7983 = vpack.c.b16 %v6073, %v6071
        %v7984 = vpack.c.b16 %v6076, %v6074
        %v7985 = vpack.c.b16 %v6077, %v6075
        %v7986 = vpack.c.b16 %v6080, %v6078
        %v7987 = vpack.c.b16 %v6081, %v6079
        %v7988 = vpack.c.b16 %v6084, %v6082
        %v7989 = vpack.c.b16 %v6085, %v6083
        %v7990 = vpack.c.b16 %v6088, %v6086
        %v7991 = vpack.c.b16 %v6089, %v6087
        %v7992 = vpack.c.b16 %v6092, %v6090
        %v7993 = vpack.c.b16 %v6093, %v6091
        %v7994 = vpack.c.b16 %v6096, %v6094
        %v7995 = vpack.c.b16 %v6097, %v6095
        %v7996 = vpack.c.b16 %v6100, %v6098
        %v7997 = vpack.c.b16 %v6101, %v6099
        %v7998 = vpack.c.b16 %v6104, %v6102
        %v7999 = vpack.c.b16 %v6105, %v6103
        %v8000 = vpack.c.b16 %v6108, %v6106
        %v8001 = vpack.c.b16 %v6109, %v6107
        %v8002 = vpack.c.b16 %v6112, %v6110
        %v8003 = vpack.c.b16 %v6113, %v6111
        %v8004 = vpack.c.b16 %v6116, %v6114
        %v8005 = vpack.c.b16 %v6117, %v6115
        %v8006 = vpack.c.b16 %v6120, %v6118
        %v8007 = vpack.c.b16 %v6121, %v6119
        %v8008 = vpack.c.b16 %v6124, %v6122
        %v8009 = vpack.c.b16 %v6125, %v6123
        %v8010 = vpack.c.b16 %v6128, %v6126
        %v8011 = vpack.c.b16 %v6129, %v6127
        %v8012 = vpack.c.b16 %v6132, %v6130
        %v8013 = vpack.c.b16 %v6133, %v6131
        %v8014 = vpack.c.b16 %v6136, %v6134
        %v8015 = vpack.c.b16 %v6137, %v6135
        %v8016 = vpack.c.b16 %v6140, %v6138
        %v8017 = vpack.c.b16 %v6141, %v6139
        %v8018 = vpack.c.b16 %v6144, %v6142
        %v8019 = vpack.c.b16 %v6145, %v6143
        %v8020 = vpack.c.b16 %v6148, %v6146
        %v8021 = vpack.c.b16 %v6149, %v6147
        %v8022 = vpack.c.b16 %v6152, %v6150
        %v8023 = vpack.c.b16 %v6153, %v6151
        %v8024 = vpack.c.b16 %v6156, %v6154
        %v8025 = vpack.c.b16 %v6157, %v6155
        %v8026 = vpack.c.b16 %v6160, %v6158
        %v8027 = vpack.c.b16 %v6161, %v6159
        %v8028 = vpack.c.b16 %v6164, %v6162
        %v8029 = vpack.c.b16 %v6165, %v6163
        %v8030 = vpack.c.b16 %v6168, %v6166
        %v8031 = vpack.c.b16 %v6169, %v6167
        %v8032 = vpack.c.b16 %v6172, %v6170
        %v8033 = vpack.c.b16 %v6173, %v6171
        %v8034 = vpack.c.b16 %v6176, %v6174
        %v8035 = vpack.c.b16 %v6177, %v6175
        %v8036 = vpack.c.b16 %v6180, %v6178
        %v8037 = vpack.c.b16 %v6181, %v6179
        %v8038 = vpack.c.b16 %v6184, %v6182
        %v8039 = vpack.c.b16 %v6185, %v6183
        %v8040 = vpack.c.b16 %v6188, %v6186
        %v8041 = vpack.c.b16 %v6189, %v6187
        %v8042 = vpack.c.b16 %v6192, %v6190
        %v8043 = vpack.c.b16 %v6193, %v6191
        %v8044 = vpack.c.b16 %v6196, %v6194
        %v8045 = vpack.c.b16 %v6197, %v6195
        %v8046 = vpack.c.b16 %v6200, %v6198
        %v8047 = vpack.c.b16 %v6201, %v6199
        %v8048 = vpack.c.b16 %v6204, %v6202
        %v8049 = vpack.c.b16 %v6205, %v6203
        %v8050 = vpack.c.b16 %v6208, %v6206
        %v8051 = vpack.c.b16 %v6209, %v6207
        %v8052 = vpack.c.b16 %v6212, %v6210
        %v8053 = vpack.c.b16 %v6213, %v6211
        %v8054 = vpack.c.b16 %v6216, %v6214
        %v8055 = vpack.c.b16 %v6217, %v6215
        %v8056 = vpack.c.b16 %v6220, %v6218
        %v8057 = vpack.c.b16 %v6221, %v6219
        %v8058 = vpack.c.b16 %v6224, %v6222
        %v8059 = vpack.c.b16 %v6225, %v6223
        %v8060 = vpack.c.b16 %v6228, %v6226
        %v8061 = vpack.c.b16 %v6229, %v6227
        %v8062 = vpack.c.b16 %v6232, %v6230
        %v8063 = vpack.c.b16 %v6233, %v6231
        %v8064 = vpack.c.b16 %v6236, %v6234
        %v8065 = vpack.c.b16 %v6237, %v6235
        %v8066 = vpack.c.b16 %v6240, %v6238
        %v8067 = vpack.c.b16 %v6241, %v6239
        %v8068 = vpack.c.b16 %v6244, %v6242
        %v8069 = vpack.c.b16 %v6245, %v6243
        %v8070 = vpack.c.b16 %v6248, %v6246
        %v8071 = vpack.c.b16 %v6249, %v6247
        %v8072 = vpack.c.b16 %v6252, %v6250
        %v8073 = vpack.c.b16 %v6253, %v6251
        %v8074 = vpack.c.b16 %v6256, %v6254
        %v8075 = vpack.c.b16 %v6257, %v6255
        %v8076 = vpack.c.b16 %v6260, %v6258
        %v8077 = vpack.c.b16 %v6261, %v6259
        %v8078 = vpack.c.b16 %v6264, %v6262
        %v8079 = vpack.c.b16 %v6265, %v6263
        %v8080 = vpack.c.b16 %v6268, %v6266
        %v8081 = vpack.c.b16 %v6269, %v6267
        %v8082 = vpack.c.b16 %v6272, %v6270
        %v8083 = vpack.c.b16 %v6273, %v6271
        %v8084 = vpack.c.b16 %v6276, %v6274
        %v8085 = vpack.c.b16 %v6277, %v6275
        %v8086 = vpack.c.b16 %v6280, %v6278
        %v8087 = vpack.c.b16 %v6281, %v6279
        %v8088 = vpack.c.b16 %v6284, %v6282
        %v8089 = vpack.c.b16 %v6285, %v6283
        %v8090 = vpack.c.b16 %v6288, %v6286
        %v8091 = vpack.c.b16 %v6289, %v6287
        %v8092 = vpack.c.b16 %v6292, %v6290
        %v8093 = vpack.c.b16 %v6293, %v6291
        %v8094 = vpack.c.b16 %v6296, %v6294
        %v8095 = vpack.c.b16 %v6297, %v6295
        %v8096 = vpack.c.b16 %v6300, %v6298
        %v8097 = vpack.c.b16 %v6301, %v6299
        %v8098 = vpack.c.b16 %v6304, %v6302
        %v8099 = vpack.c.b16 %v6305, %v6303
        %v8100 = vpack.c.b16 %v6308, %v6306
        %v8101 = vpack.c.b16 %v6309, %v6307
        %v8102 = vpack.c.b16 %v6312, %v6310
        %v8103 = vpack.c.b16 %v6313, %v6311
        %v8104 = vpack.c.b16 %v6316, %v6314
        %v8105 = vpack.c.b16 %v6317, %v6315
        %v8106 = vpack.c.b16 %v6320, %v6318
        %v8107 = vpack.c.b16 %v6321, %v6319
        %v8108 = vpack.c.b16 %v6324, %v6322
        %v8109 = vpack.c.b16 %v6325, %v6323
        %v8110 = vpack.c.b16 %v6328, %v6326
        %v8111 = vpack.c.b16 %v6329, %v6327
        %v8112 = vpack.c.b16 %v6332, %v6330
        %v8113 = vpack.c.b16 %v6333, %v6331
        %v8114 = vpack.c.b16 %v6336, %v6334
        %v8115 = vpack.c.b16 %v6337, %v6335
        %v8116 = vpack.c.b16 %v6340, %v6338
        %v8117 = vpack.c.b16 %v6341, %v6339
        %v8118 = vpack.c.b16 %v6344, %v6342
        %v8119 = vpack.c.b16 %v6345, %v6343
        %v8120 = vpack.c.b16 %v6348, %v6346
        %v8121 = vpack.c.b16 %v6349, %v6347
        %v8122 = vpack.c.b16 %v6352, %v6350
        %v8123 = vpack.c.b16 %v6353, %v6351
        %v8124 = vpack.c.b16 %v6356, %v6354
        %v8125 = vpack.c.b16 %v6357, %v6355
        %v8126 = vpack.c.b16 %v6360, %v6358
        %v8127 = vpack.c.b16 %v6361, %v6359
        %v8128 = vpack.c.b16 %v6364, %v6362
        %v8129 = vpack.c.b16 %v6365, %v6363
        %v8130 = vpack.c.b16 %v6368, %v6366
        %v8131 = vpack.c.b16 %v6369, %v6367
        %v8132 = vpack.c.b16 %v6372, %v6370
        %v8133 = vpack.c.b16 %v6373, %v6371
        %v8134 = vpack.c.b16 %v6376, %v6374
        %v8135 = vpack.c.b16 %v6377, %v6375
        %v8136 = vpack.c.b16 %v6380, %v6378
        %v8137 = vpack.c.b16 %v6381, %v6379
        %v8138 = vpack.c.b16 %v6384, %v6382
        %v8139 = vpack.c.b16 %v6385, %v6383
        %v8140 = vpack.c.b16 %v6388, %v6386
        %v8141 = vpack.c.b16 %v6389, %v6387
        %v8142 = vpack.c.b16 %v6392, %v6390
        %v8143 = vpack.c.b16 %v6393, %v6391
        %v8144 = vpack.c.b16 %v6396, %v6394
        %v8145 = vpack.c.b16 %v6397, %v6395
        %v8146 = vpack.c.b16 %v6400, %v6398
        %v8147 = vpack.c.b16 %v6401, %v6399
        %v8148 = vpack.c.b16 %v6404, %v6402
        %v8149 = vpack.c.b16 %v6405, %v6403
        %v8150 = vpack.c.b16 %v6408, %v6406
        %v8151 = vpack.c.b16 %v6409, %v6407
        %v8152 = vpack.c.b16 %v6412, %v6410
        %v8153 = vpack.c.b16 %v6413, %v6411
        %v8154 = vpack.c.b16 %v6416, %v6414
        %v8155 = vpack.c.b16 %v6417, %v6415
        %v8156 = vpack.c.b16 %v6420, %v6418
        %v8157 = vpack.c.b16 %v6421, %v6419
        %v8158 = vpack.c.b16 %v6424, %v6422
        %v8159 = vpack.c.b16 %v6425, %v6423
        %v8160 = vpack.c.b16 %v6428, %v6426
        %v8161 = vpack.c.b16 %v6429, %v6427
        %v8162 = vpack.c.b16 %v6432, %v6430
        %v8163 = vpack.c.b16 %v6433, %v6431
        %v8164 = vpack.c.b16 %v6436, %v6434
        %v8165 = vpack.c.b16 %v6437, %v6435
        %v8166 = vpack.c.b16 %v6440, %v6438
        %v8167 = vpack.c.b16 %v6441, %v6439
        %v8168 = vpack.c.b16 %v6444, %v6442
        %v8169 = vpack.c.b16 %v6445, %v6443
        %v8170 = vpack.c.b16 %v6448, %v6446
        %v8171 = vpack.c.b16 %v6449, %v6447
        %v8172 = vpack.c.b16 %v6452, %v6450
        %v8173 = vpack.c.b16 %v6453, %v6451
        %v8174 = vpack.c.b16 %v6456, %v6454
        %v8175 = vpack.c.b16 %v6457, %v6455
        %v8176 = vpack.c.b16 %v6460, %v6458
        %v8177 = vpack.c.b16 %v6461, %v6459
        %v8178 = vpack.c.b16 %v6464, %v6462
        %v8179 = vpack.c.b16 %v6465, %v6463
        %v8180 = vpack.c.b16 %v6468, %v6466
        %v8181 = vpack.c.b16 %v6469, %v6467
        %v8182 = vpack.c.b16 %v6472, %v6470
        %v8183 = vpack.c.b16 %v6473, %v6471
        %v8184 = vpack.c.b16 %v6476, %v6474
        %v8185 = vpack.c.b16 %v6477, %v6475
        %v8186 = vpack.c.b16 %v6480, %v6478
        %v8187 = vpack.c.b16 %v6481, %v6479
        %v8188 = vpack.c.b16 %v6484, %v6482
        %v8189 = vpack.c.b16 %v6485, %v6483
        %v8190 = vpack.c.b16 %v6488, %v6486
        %v8191 = vpack.c.b16 %v6489, %v6487
        %v8192 = vpack.c.b16 %v6492, %v6490
        %v8193 = vpack.c.b16 %v6493, %v6491
        %v8194 = vpack.c.b16 %v6496, %v6494
        %v8195 = vpack.c.b16 %v6497, %v6495
        %v8196 = vpack.c.b16 %v6500, %v6498
        %v8197 = vpack.c.b16 %v6501, %v6499
        %v8198 = vpack.c.b16 %v6504, %v6502
        %v8199 = vpack.c.b16 %v6505, %v6503
        %v8200 = vpack.c.b16 %v6508, %v6506
        %v8201 = vpack.c.b16 %v6509, %v6507
        %v8202 = vpack.c.b16 %v6512, %v6510
        %v8203 = vpack.c.b16 %v6513, %v6511
        %v8204 = vpack.c.b16 %v6516, %v6514
        %v8205 = vpack.c.b16 %v6517, %v6515
        %v8206 = vpack.c.b16 %v6520, %v6518
        %v8207 = vpack.c.b16 %v6521, %v6519
        %v8208 = vpack.c.b16 %v6524, %v6522
        %v8209 = vpack.c.b16 %v6525, %v6523
        %v8210 = vpack.c.b16 %v6528, %v6526
        %v8211 = vpack.c.b16 %v6529, %v6527
        %v8212 = vpack.c.b16 %v6532, %v6530
        %v8213 = vpack.c.b16 %v6533, %v6531
        %v8214 = vpack.c.b16 %v6536, %v6534
        %v8215 = vpack.c.b16 %v6537, %v6535
        %v8216 = vpack.c.b16 %v6540, %v6538
        %v8217 = vpack.c.b16 %v6541, %v6539
        %v8218 = vpack.c.b16 %v6544, %v6542
        %v8219 = vpack.c.b16 %v6545, %v6543
        %v8220 = vpack.c.b16 %v6548, %v6546
        %v8221 = vpack.c.b16 %v6549, %v6547
        %v8222 = vpack.c.b16 %v6552, %v6550
        %v8223 = vpack.c.b16 %v6553, %v6551
        %v8224 = vpack.c.b16 %v6556, %v6554
        %v8225 = vpack.c.b16 %v6557, %v6555
        %v8226 = vpack.c.b16 %v6560, %v6558
        %v8227 = vpack.c.b16 %v6561, %v6559
        %v8228 = vpack.c.b16 %v6564, %v6562
        %v8229 = vpack.c.b16 %v6565, %v6563
        %v8230 = vpack.c.b16 %v6568, %v6566
        %v8231 = vpack.c.b16 %v6569, %v6567
        %v8232 = vpack.c.b16 %v6572, %v6570
        %v8233 = vpack.c.b16 %v6573, %v6571
        %v8234 = vpack.c.b16 %v6576, %v6574
        %v8235 = vpack.c.b16 %v6577, %v6575
        %v8236 = vpack.c.b16 %v6580, %v6578
        %v8237 = vpack.c.b16 %v6581, %v6579
        %v8238 = vpack.c.b16 %v6584, %v6582
        %v8239 = vpack.c.b16 %v6585, %v6583
        %v8240 = vpack.c.b16 %v6588, %v6586
        %v8241 = vpack.c.b16 %v6589, %v6587
        %v8242 = vpack.c.b16 %v6592, %v6590
        %v8243 = vpack.c.b16 %v6593, %v6591
        %v8244 = vpack.c.b16 %v6596, %v6594
        %v8245 = vpack.c.b16 %v6597, %v6595
        %v8246 = vpack.c.b16 %v6600, %v6598
        %v8247 = vpack.c.b16 %v6601, %v6599
        %v8248 = vpack.c.b16 %v6604, %v6602
        %v8249 = vpack.c.b16 %v6605, %v6603
        %v8250 = vpack.c.b16 %v6608, %v6606
        %v8251 = vpack.c.b16 %v6609, %v6607
        %v8252 = vpack.c.b16 %v6612, %v6610
        %v8253 = vpack.c.b16 %v6613, %v6611
        %v8254 = vpack.c.b16 %v6616, %v6614
        %v8255 = vpack.c.b16 %v6617, %v6615
        %v8256 = vpack.c.b16 %v6620, %v6618
        %v8257 = vpack.c.b16 %v6621, %v6619
        %v8258 = vpack.c.b16 %v6624, %v6622
        %v8259 = vpack.c.b16 %v6625, %v6623
        %v8260 = vpack.c.b16 %v6628, %v6626
        %v8261 = vpack.c.b16 %v6629, %v6627
        %v8262 = vpack.c.b16 %v6632, %v6630
        %v8263 = vpack.c.b16 %v6633, %v6631
        %v8264 = vpack.c.b16 %v6636, %v6634
        %v8265 = vpack.c.b16 %v6637, %v6635
        %v8266 = vpack.c.b16 %v6640, %v6638
        %v8267 = vpack.c.b16 %v6641, %v6639
        %v8268 = vpack.c.b16 %v6644, %v6642
        %v8269 = vpack.c.b16 %v6645, %v6643
        %v8270 = vpack.c.b16 %v6648, %v6646
        %v8271 = vpack.c.b16 %v6649, %v6647
        %v8272 = vpack.c.b16 %v6652, %v6650
        %v8273 = vpack.c.b16 %v6653, %v6651
        %v8274 = vpack.c.b16 %v6656, %v6654
        %v8275 = vpack.c.b16 %v6657, %v6655
        %v8276 = vpack.c.b16 %v6660, %v6658
        %v8277 = vpack.c.b16 %v6661, %v6659
        %v8278 = vpack.c.b16 %v6664, %v6662
        %v8279 = vpack.c.b16 %v6665, %v6663
        %v8280 = vpack.c.b16 %v6668, %v6666
        %v8281 = vpack.c.b16 %v6669, %v6667
        %v8282 = vpack.c.b16 %v6672, %v6670
        %v8283 = vpack.c.b16 %v6673, %v6671
        %v8284 = vpack.c.b16 %v6676, %v6674
        %v8285 = vpack.c.b16 %v6677, %v6675
        %v8286 = vpack.c.b16 %v6680, %v6678
        %v8287 = vpack.c.b16 %v6681, %v6679
        %v8288 = vpack.c.b16 %v6684, %v6682
        %v8289 = vpack.c.b16 %v6685, %v6683
        %v8290 = vpack.c.b16 %v6688, %v6686
        %v8291 = vpack.c.b16 %v6689, %v6687
        %v8292 = vpack.c.b16 %v6692, %v6690
        %v8293 = vpack.c.b16 %v6693, %v6691
        %v8294 = vpack.c.b16 %v6696, %v6694
        %v8295 = vpack.c.b16 %v6697, %v6695
        %v8296 = vpack.c.b16 %v6700, %v6698
        %v8297 = vpack.c.b16 %v6701, %v6699
        %v8298 = vpack.c.b16 %v6704, %v6702
        %v8299 = vpack.c.b16 %v6705, %v6703
        %v8300 = vpack.c.b16 %v6708, %v6706
        %v8301 = vpack.c.b16 %v6709, %v6707
        %v8302 = vpack.c.b16 %v6712, %v6710
        %v8303 = vpack.c.b16 %v6713, %v6711
        %v8304 = vpack.c.b16 %v6716, %v6714
        %v8305 = vpack.c.b16 %v6717, %v6715
        %v8306 = vpack.c.b16 %v6720, %v6718
        %v8307 = vpack.c.b16 %v6721, %v6719
        %v8308 = vpack.c.b16 %v6724, %v6722
        %v8309 = vpack.c.b16 %v6725, %v6723
        %v8310 = vpack.c.b16 %v6728, %v6726
        %v8311 = vpack.c.b16 %v6729, %v6727
        %v8312 = vpack.c.b16 %v6732, %v6730
        %v8313 = vpack.c.b16 %v6733, %v6731
        %v8314 = vpack.c.b16 %v6736, %v6734
        %v8315 = vpack.c.b16 %v6737, %v6735
        %v8316 = vpack.c.b16 %v6740, %v6738
        %v8317 = vpack.c.b16 %v6741, %v6739
        %v8318 = vpack.c.b16 %v6744, %v6742
        %v8319 = vpack.c.b16 %v6745, %v6743
        %v8320 = vpack.c.b16 %v6748, %v6746
        %v8321 = vpack.c.b16 %v6749, %v6747
        %v8322 = vpack.c.b16 %v6752, %v6750
        %v8323 = vpack.c.b16 %v6753, %v6751
        %v8324 = vpack.c.b16 %v6756, %v6754
        %v8325 = vpack.c.b16 %v6757, %v6755
        %9894 = vmatpush.bf16.msra.mxu0 %v6772
        %9895 = vmatpush.bf16.msra.mxu0 %v6770
        %9896 = vmatpush.bf16.msra.mxu0 %v6768
        %9897 = vmatpush.bf16.msra.mxu0 %v6766
        %9898 = vmatpush.bf16.msra.mxu0 %v6764
        %9899 = vmatpush.bf16.msra.mxu0 %v6762
        %9900 = vmatpush.bf16.msra.mxu0 %v6760
        %9901 = vmatpush.bf16.msra.mxu0 %v6758
        %9902 = vmatmul.bf16.gmra.mxu0 %v1812
        %v9903 = vpop.f32.mrf.mxu0
        %v9904 = vadd.f32 0.0, %v9903
        %v9905 = vpop.f32.mrf.mxu0
        %9906 = vdwg.mxu0
        %9907 = vmatpush.bf16.msra.mxu0 %v6788
        %9908 = vmatpush.bf16.msra.mxu0 %v6786
        %9909 = vmatpush.bf16.msra.mxu0 %v6784
        %9910 = vmatpush.bf16.msra.mxu0 %v6782
        %9911 = vmatpush.bf16.msra.mxu0 %v6780
        %9912 = vmatpush.bf16.msra.mxu0 %v6778
        %9913 = vmatpush.bf16.msra.mxu0 %v6776
        %9914 = vmatpush.bf16.msra.mxu0 %v6774
        %9915 = vmatmul.bf16.gmra.mxu0 %v1813
        %v9916 = vpop.f32.mrf.mxu0
        %v9917 = vadd.f32 %v9904, %v9916
        %v9918 = vpop.f32.mrf.mxu0
        %9919 = vdwg.mxu0
        %9920 = vmatpush.bf16.msra.mxu0 %v6804
        %9921 = vmatpush.bf16.msra.mxu0 %v6802
        %9922 = vmatpush.bf16.msra.mxu0 %v6800
        %9923 = vmatpush.bf16.msra.mxu0 %v6798
        %9924 = vmatpush.bf16.msra.mxu0 %v6796
        %9925 = vmatpush.bf16.msra.mxu0 %v6794
        %9926 = vmatpush.bf16.msra.mxu0 %v6792
        %9927 = vmatpush.bf16.msra.mxu0 %v6790
        %9928 = vmatmul.bf16.gmra.mxu0 %v1814
        %v9929 = vpop.f32.mrf.mxu0
        %v9930 = vadd.f32 %v9917, %v9929
        %v9931 = vpop.f32.mrf.mxu0
        %9932 = vdwg.mxu0
        %9933 = vmatpush.bf16.msra.mxu0 %v6820
        %9934 = vmatpush.bf16.msra.mxu0 %v6818
        %9935 = vmatpush.bf16.msra.mxu0 %v6816
        %9936 = vmatpush.bf16.msra.mxu0 %v6814
        %9937 = vmatpush.bf16.msra.mxu0 %v6812
        %9938 = vmatpush.bf16.msra.mxu0 %v6810
        %9939 = vmatpush.bf16.msra.mxu0 %v6808
        %9940 = vmatpush.bf16.msra.mxu0 %v6806
        %9941 = vmatmul.bf16.gmra.mxu0 %v1815
        %v9942 = vpop.f32.mrf.mxu0
        %v9943 = vadd.f32 %v9930, %v9942
        %v9944 = vpop.f32.mrf.mxu0
        %9945 = vdwg.mxu0
        %9946 = vmatpush.bf16.msra.mxu0 %v6836
        %9947 = vmatpush.bf16.msra.mxu0 %v6834
        %9948 = vmatpush.bf16.msra.mxu0 %v6832
        %9949 = vmatpush.bf16.msra.mxu0 %v6830
        %9950 = vmatpush.bf16.msra.mxu0 %v6828
        %9951 = vmatpush.bf16.msra.mxu0 %v6826
        %9952 = vmatpush.bf16.msra.mxu0 %v6824
        %9953 = vmatpush.bf16.msra.mxu0 %v6822
        %9954 = vmatmul.bf16.gmra.mxu0 %v1816
        %v9955 = vpop.f32.mrf.mxu0
        %v9956 = vadd.f32 %v9943, %v9955
        %v9957 = vpop.f32.mrf.mxu0
        %9958 = vdwg.mxu0
        %9959 = vmatpush.bf16.msra.mxu0 %v6852
        %9960 = vmatpush.bf16.msra.mxu0 %v6850
        %9961 = vmatpush.bf16.msra.mxu0 %v6848
        %9962 = vmatpush.bf16.msra.mxu0 %v6846
        %9963 = vmatpush.bf16.msra.mxu0 %v6844
        %9964 = vmatpush.bf16.msra.mxu0 %v6842
        %9965 = vmatpush.bf16.msra.mxu0 %v6840
        %9966 = vmatpush.bf16.msra.mxu0 %v6838
        %9967 = vmatmul.bf16.gmra.mxu0 %v1817
        %v9968 = vpop.f32.mrf.mxu0
        %v9969 = vadd.f32 %v9956, %v9968
        %v9970 = vpop.f32.mrf.mxu0
        %9971 = vdwg.mxu0
        %9972 = vmatpush.bf16.msra.mxu0 %v6868
        %9973 = vmatpush.bf16.msra.mxu0 %v6866
        %9974 = vmatpush.bf16.msra.mxu0 %v6864
        %9975 = vmatpush.bf16.msra.mxu0 %v6862
        %9976 = vmatpush.bf16.msra.mxu0 %v6860
        %9977 = vmatpush.bf16.msra.mxu0 %v6858
        %9978 = vmatpush.bf16.msra.mxu0 %v6856
        %9979 = vmatpush.bf16.msra.mxu0 %v6854
        %9980 = vmatmul.bf16.gmra.mxu0 %v1818
        %v9981 = vpop.f32.mrf.mxu0
        %v9982 = vadd.f32 %v9969, %v9981
        %v9983 = vpop.f32.mrf.mxu0
        %9984 = vdwg.mxu0
        %9985 = vmatpush.bf16.msra.mxu0 %v6884
        %9986 = vmatpush.bf16.msra.mxu0 %v6882
        %9987 = vmatpush.bf16.msra.mxu0 %v6880
        %9988 = vmatpush.bf16.msra.mxu0 %v6878
        %9989 = vmatpush.bf16.msra.mxu0 %v6876
        %9990 = vmatpush.bf16.msra.mxu0 %v6874
        %9991 = vmatpush.bf16.msra.mxu0 %v6872
        %9992 = vmatpush.bf16.msra.mxu0 %v6870
        %9993 = vmatmul.bf16.gmra.mxu0 %v1819
        %v9994 = vpop.f32.mrf.mxu0
        %v9995 = vadd.f32 %v9982, %v9994
        %v9996 = vpop.f32.mrf.mxu0
        %9997 = vdwg.mxu0
        %9998 = vmatpush.bf16.msra.mxu0 %v6900
        %9999 = vmatpush.bf16.msra.mxu0 %v6898
        %10000 = vmatpush.bf16.msra.mxu0 %v6896
        %10001 = vmatpush.bf16.msra.mxu0 %v6894
        %10002 = vmatpush.bf16.msra.mxu0 %v6892
        %10003 = vmatpush.bf16.msra.mxu0 %v6890
        %10004 = vmatpush.bf16.msra.mxu0 %v6888
        %10005 = vmatpush.bf16.msra.mxu0 %v6886
        %10006 = vmatmul.bf16.gmra.mxu0 %v1824
        %v10007 = vpop.f32.mrf.mxu0
        %v10008 = vadd.f32 %v9995, %v10007
        %v10009 = vpop.f32.mrf.mxu0
        %10010 = vdwg.mxu0
        %10011 = vmatpush.bf16.msra.mxu0 %v6916
        %10012 = vmatpush.bf16.msra.mxu0 %v6914
        %10013 = vmatpush.bf16.msra.mxu0 %v6912
        %10014 = vmatpush.bf16.msra.mxu0 %v6910
        %10015 = vmatpush.bf16.msra.mxu0 %v6908
        %10016 = vmatpush.bf16.msra.mxu0 %v6906
        %10017 = vmatpush.bf16.msra.mxu0 %v6904
        %10018 = vmatpush.bf16.msra.mxu0 %v6902
        %10019 = vmatmul.bf16.gmra.mxu0 %v1825
        %v10020 = vpop.f32.mrf.mxu0
        %v10021 = vadd.f32 %v10008, %v10020
        %v10022 = vpop.f32.mrf.mxu0
        %10023 = vdwg.mxu0
        %10024 = vmatpush.bf16.msra.mxu0 %v6932
        %10025 = vmatpush.bf16.msra.mxu0 %v6930
        %10026 = vmatpush.bf16.msra.mxu0 %v6928
        %10027 = vmatpush.bf16.msra.mxu0 %v6926
        %10028 = vmatpush.bf16.msra.mxu0 %v6924
        %10029 = vmatpush.bf16.msra.mxu0 %v6922
        %10030 = vmatpush.bf16.msra.mxu0 %v6920
        %10031 = vmatpush.bf16.msra.mxu0 %v6918
        %10032 = vmatmul.bf16.gmra.mxu0 %v1826
        %v10033 = vpop.f32.mrf.mxu0
        %v10034 = vadd.f32 %v10021, %v10033
        %v10035 = vpop.f32.mrf.mxu0
        %10036 = vdwg.mxu0
        %10037 = vmatpush.bf16.msra.mxu0 %v6948
        %10038 = vmatpush.bf16.msra.mxu0 %v6946
        %10039 = vmatpush.bf16.msra.mxu0 %v6944
        %10040 = vmatpush.bf16.msra.mxu0 %v6942
        %10041 = vmatpush.bf16.msra.mxu0 %v6940
        %10042 = vmatpush.bf16.msra.mxu0 %v6938
        %10043 = vmatpush.bf16.msra.mxu0 %v6936
        %10044 = vmatpush.bf16.msra.mxu0 %v6934
        %10045 = vmatmul.bf16.gmra.mxu0 %v1827
        %v10046 = vpop.f32.mrf.mxu0
        %v10047 = vadd.f32 %v10034, %v10046
        %v10048 = vpop.f32.mrf.mxu0
        %10049 = vdwg.mxu0
        %10050 = vmatpush.bf16.msra.mxu0 %v6964
        %10051 = vmatpush.bf16.msra.mxu0 %v6962
        %10052 = vmatpush.bf16.msra.mxu0 %v6960
        %10053 = vmatpush.bf16.msra.mxu0 %v6958
        %10054 = vmatpush.bf16.msra.mxu0 %v6956
        %10055 = vmatpush.bf16.msra.mxu0 %v6954
        %10056 = vmatpush.bf16.msra.mxu0 %v6952
        %10057 = vmatpush.bf16.msra.mxu0 %v6950
        %10058 = vmatmul.bf16.gmra.mxu0 %v1828
        %v10059 = vpop.f32.mrf.mxu0
        %v10060 = vadd.f32 %v10047, %v10059
        %v10061 = vpop.f32.mrf.mxu0
        %10062 = vdwg.mxu0
        %10063 = vmatpush.bf16.msra.mxu0 %v6980
        %10064 = vmatpush.bf16.msra.mxu0 %v6978
        %10065 = vmatpush.bf16.msra.mxu0 %v6976
        %10066 = vmatpush.bf16.msra.mxu0 %v6974
        %10067 = vmatpush.bf16.msra.mxu0 %v6972
        %10068 = vmatpush.bf16.msra.mxu0 %v6970
        %10069 = vmatpush.bf16.msra.mxu0 %v6968
        %10070 = vmatpush.bf16.msra.mxu0 %v6966
        %10071 = vmatmul.bf16.gmra.mxu0 %v1829
        %v10072 = vpop.f32.mrf.mxu0
        %v10073 = vadd.f32 %v10060, %v10072
        %v10074 = vpop.f32.mrf.mxu0
        %10075 = vdwg.mxu0
        %10076 = vmatpush.bf16.msra.mxu0 %v6996
        %10077 = vmatpush.bf16.msra.mxu0 %v6994
        %10078 = vmatpush.bf16.msra.mxu0 %v6992
        %10079 = vmatpush.bf16.msra.mxu0 %v6990
        %10080 = vmatpush.bf16.msra.mxu0 %v6988
        %10081 = vmatpush.bf16.msra.mxu0 %v6986
        %10082 = vmatpush.bf16.msra.mxu0 %v6984
        %10083 = vmatpush.bf16.msra.mxu0 %v6982
        %10084 = vmatmul.bf16.gmra.mxu0 %v1830
        %v10085 = vpop.f32.mrf.mxu0
        %v10086 = vadd.f32 %v10073, %v10085
        %v10087 = vpop.f32.mrf.mxu0
        %10088 = vdwg.mxu0
        %10089 = vmatpush.bf16.msra.mxu0 %v7012
        %10090 = vmatpush.bf16.msra.mxu0 %v7010
        %10091 = vmatpush.bf16.msra.mxu0 %v7008
        %10092 = vmatpush.bf16.msra.mxu0 %v7006
        %10093 = vmatpush.bf16.msra.mxu0 %v7004
        %10094 = vmatpush.bf16.msra.mxu0 %v7002
        %10095 = vmatpush.bf16.msra.mxu0 %v7000
        %10096 = vmatpush.bf16.msra.mxu0 %v6998
        %10097 = vmatmul.bf16.gmra.mxu0 %v1831
        %v10098 = vpop.f32.mrf.mxu0
        %v10099 = vadd.f32 %v10086, %v10098
        %v10100 = vpop.f32.mrf.mxu0
        %10101 = vdwg.mxu0
        %10102 = vmatpush.bf16.msra.mxu0 %v7028
        %10103 = vmatpush.bf16.msra.mxu0 %v7026
        %10104 = vmatpush.bf16.msra.mxu0 %v7024
        %10105 = vmatpush.bf16.msra.mxu0 %v7022
        %10106 = vmatpush.bf16.msra.mxu0 %v7020
        %10107 = vmatpush.bf16.msra.mxu0 %v7018
        %10108 = vmatpush.bf16.msra.mxu0 %v7016
        %10109 = vmatpush.bf16.msra.mxu0 %v7014
        %10110 = vmatmul.bf16.gmra.mxu0 %v1836
        %v10111 = vpop.f32.mrf.mxu0
        %v10112 = vadd.f32 %v10099, %v10111
        %v10113 = vpop.f32.mrf.mxu0
        %10114 = vdwg.mxu0
        %10115 = vmatpush.bf16.msra.mxu0 %v7044
        %10116 = vmatpush.bf16.msra.mxu0 %v7042
        %10117 = vmatpush.bf16.msra.mxu0 %v7040
        %10118 = vmatpush.bf16.msra.mxu0 %v7038
        %10119 = vmatpush.bf16.msra.mxu0 %v7036
        %10120 = vmatpush.bf16.msra.mxu0 %v7034
        %10121 = vmatpush.bf16.msra.mxu0 %v7032
        %10122 = vmatpush.bf16.msra.mxu0 %v7030
        %10123 = vmatmul.bf16.gmra.mxu0 %v1837
        %v10124 = vpop.f32.mrf.mxu0
        %v10125 = vadd.f32 %v10112, %v10124
        %v10126 = vpop.f32.mrf.mxu0
        %10127 = vdwg.mxu0
        %10128 = vmatpush.bf16.msra.mxu0 %v7060
        %10129 = vmatpush.bf16.msra.mxu0 %v7058
        %10130 = vmatpush.bf16.msra.mxu0 %v7056
        %10131 = vmatpush.bf16.msra.mxu0 %v7054
        %10132 = vmatpush.bf16.msra.mxu0 %v7052
        %10133 = vmatpush.bf16.msra.mxu0 %v7050
        %10134 = vmatpush.bf16.msra.mxu0 %v7048
        %10135 = vmatpush.bf16.msra.mxu0 %v7046
        %10136 = vmatmul.bf16.gmra.mxu0 %v1838
        %v10137 = vpop.f32.mrf.mxu0
        %v10138 = vadd.f32 %v10125, %v10137
        %v10139 = vpop.f32.mrf.mxu0
        %10140 = vdwg.mxu0
        %10141 = vmatpush.bf16.msra.mxu0 %v7076
        %10142 = vmatpush.bf16.msra.mxu0 %v7074
        %10143 = vmatpush.bf16.msra.mxu0 %v7072
        %10144 = vmatpush.bf16.msra.mxu0 %v7070
        %10145 = vmatpush.bf16.msra.mxu0 %v7068
        %10146 = vmatpush.bf16.msra.mxu0 %v7066
        %10147 = vmatpush.bf16.msra.mxu0 %v7064
        %10148 = vmatpush.bf16.msra.mxu0 %v7062
        %10149 = vmatmul.bf16.gmra.mxu0 %v1839
        %v10150 = vpop.f32.mrf.mxu0
        %v10151 = vadd.f32 %v10138, %v10150
        %v10152 = vpop.f32.mrf.mxu0
        %10153 = vdwg.mxu0
        %10154 = vmatpush.bf16.msra.mxu0 %v7092
        %10155 = vmatpush.bf16.msra.mxu0 %v7090
        %10156 = vmatpush.bf16.msra.mxu0 %v7088
        %10157 = vmatpush.bf16.msra.mxu0 %v7086
        %10158 = vmatpush.bf16.msra.mxu0 %v7084
        %10159 = vmatpush.bf16.msra.mxu0 %v7082
        %10160 = vmatpush.bf16.msra.mxu0 %v7080
        %10161 = vmatpush.bf16.msra.mxu0 %v7078
        %10162 = vmatmul.bf16.gmra.mxu0 %v1840
        %v10163 = vpop.f32.mrf.mxu0
        %v10164 = vadd.f32 %v10151, %v10163
        %v10165 = vpop.f32.mrf.mxu0
        %10166 = vdwg.mxu0
        %10167 = vmatpush.bf16.msra.mxu0 %v7108
        %10168 = vmatpush.bf16.msra.mxu0 %v7106
        %10169 = vmatpush.bf16.msra.mxu0 %v7104
        %10170 = vmatpush.bf16.msra.mxu0 %v7102
        %10171 = vmatpush.bf16.msra.mxu0 %v7100
        %10172 = vmatpush.bf16.msra.mxu0 %v7098
        %10173 = vmatpush.bf16.msra.mxu0 %v7096
        %10174 = vmatpush.bf16.msra.mxu0 %v7094
        %10175 = vmatmul.bf16.gmra.mxu0 %v1841
        %v10176 = vpop.f32.mrf.mxu0
        %v10177 = vadd.f32 %v10164, %v10176
        %v10178 = vpop.f32.mrf.mxu0
        %10179 = vdwg.mxu0
        %10180 = vmatpush.bf16.msra.mxu0 %v7124
        %10181 = vmatpush.bf16.msra.mxu0 %v7122
        %10182 = vmatpush.bf16.msra.mxu0 %v7120
        %10183 = vmatpush.bf16.msra.mxu0 %v7118
        %10184 = vmatpush.bf16.msra.mxu0 %v7116
        %10185 = vmatpush.bf16.msra.mxu0 %v7114
        %10186 = vmatpush.bf16.msra.mxu0 %v7112
        %10187 = vmatpush.bf16.msra.mxu0 %v7110
        %10188 = vmatmul.bf16.gmra.mxu0 %v1842
        %v10189 = vpop.f32.mrf.mxu0
        %v10190 = vadd.f32 %v10177, %v10189
        %v10191 = vpop.f32.mrf.mxu0
        %10192 = vdwg.mxu0
        %10193 = vmatpush.bf16.msra.mxu0 %v7140
        %10194 = vmatpush.bf16.msra.mxu0 %v7138
        %10195 = vmatpush.bf16.msra.mxu0 %v7136
        %10196 = vmatpush.bf16.msra.mxu0 %v7134
        %10197 = vmatpush.bf16.msra.mxu0 %v7132
        %10198 = vmatpush.bf16.msra.mxu0 %v7130
        %10199 = vmatpush.bf16.msra.mxu0 %v7128
        %10200 = vmatpush.bf16.msra.mxu0 %v7126
        %10201 = vmatmul.bf16.gmra.mxu0 %v1843
        %v10202 = vpop.f32.mrf.mxu0
        %v10203 = vadd.f32 %v10190, %v10202
        %v10204 = vpop.f32.mrf.mxu0
        %10205 = vdwg.mxu0
        %10206 = vmatpush.bf16.msra.mxu0 %v7156
        %10207 = vmatpush.bf16.msra.mxu0 %v7154
        %10208 = vmatpush.bf16.msra.mxu0 %v7152
        %10209 = vmatpush.bf16.msra.mxu0 %v7150
        %10210 = vmatpush.bf16.msra.mxu0 %v7148
        %10211 = vmatpush.bf16.msra.mxu0 %v7146
        %10212 = vmatpush.bf16.msra.mxu0 %v7144
        %10213 = vmatpush.bf16.msra.mxu0 %v7142
        %10214 = vmatmul.bf16.gmra.mxu0 %v1848
        %v10215 = vpop.f32.mrf.mxu0
        %v10216 = vadd.f32 %v10203, %v10215
        %v10217 = vpop.f32.mrf.mxu0
        %10218 = vdwg.mxu0
        %10219 = vmatpush.bf16.msra.mxu0 %v7172
        %10220 = vmatpush.bf16.msra.mxu0 %v7170
        %10221 = vmatpush.bf16.msra.mxu0 %v7168
        %10222 = vmatpush.bf16.msra.mxu0 %v7166
        %10223 = vmatpush.bf16.msra.mxu0 %v7164
        %10224 = vmatpush.bf16.msra.mxu0 %v7162
        %10225 = vmatpush.bf16.msra.mxu0 %v7160
        %10226 = vmatpush.bf16.msra.mxu0 %v7158
        %10227 = vmatmul.bf16.gmra.mxu0 %v1849
        %v10228 = vpop.f32.mrf.mxu0
        %v10229 = vadd.f32 %v10216, %v10228
        %v10230 = vpop.f32.mrf.mxu0
        %10231 = vdwg.mxu0
        %10232 = vmatpush.bf16.msra.mxu0 %v7188
        %10233 = vmatpush.bf16.msra.mxu0 %v7186
        %10234 = vmatpush.bf16.msra.mxu0 %v7184
        %10235 = vmatpush.bf16.msra.mxu0 %v7182
        %10236 = vmatpush.bf16.msra.mxu0 %v7180
        %10237 = vmatpush.bf16.msra.mxu0 %v7178
        %10238 = vmatpush.bf16.msra.mxu0 %v7176
        %10239 = vmatpush.bf16.msra.mxu0 %v7174
        %10240 = vmatmul.bf16.gmra.mxu0 %v1850
        %v10241 = vpop.f32.mrf.mxu0
        %v10242 = vadd.f32 %v10229, %v10241
        %v10243 = vpop.f32.mrf.mxu0
        %10244 = vdwg.mxu0
        %10245 = vmatpush.bf16.msra.mxu0 %v7204
        %10246 = vmatpush.bf16.msra.mxu0 %v7202
        %10247 = vmatpush.bf16.msra.mxu0 %v7200
        %10248 = vmatpush.bf16.msra.mxu0 %v7198
        %10249 = vmatpush.bf16.msra.mxu0 %v7196
        %10250 = vmatpush.bf16.msra.mxu0 %v7194
        %10251 = vmatpush.bf16.msra.mxu0 %v7192
        %10252 = vmatpush.bf16.msra.mxu0 %v7190
        %10253 = vmatmul.bf16.gmra.mxu0 %v1851
        %v10254 = vpop.f32.mrf.mxu0
        %v10255 = vadd.f32 %v10242, %v10254
        %v10256 = vpop.f32.mrf.mxu0
        %10257 = vdwg.mxu0
        %10258 = vmatpush.bf16.msra.mxu0 %v7220
        %10259 = vmatpush.bf16.msra.mxu0 %v7218
        %10260 = vmatpush.bf16.msra.mxu0 %v7216
        %10261 = vmatpush.bf16.msra.mxu0 %v7214
        %10262 = vmatpush.bf16.msra.mxu0 %v7212
        %10263 = vmatpush.bf16.msra.mxu0 %v7210
        %10264 = vmatpush.bf16.msra.mxu0 %v7208
        %10265 = vmatpush.bf16.msra.mxu0 %v7206
        %10266 = vmatmul.bf16.gmra.mxu0 %v1852
        %v10267 = vpop.f32.mrf.mxu0
        %v10268 = vadd.f32 %v10255, %v10267
        %v10269 = vpop.f32.mrf.mxu0
        %10270 = vdwg.mxu0
        %10271 = vmatpush.bf16.msra.mxu0 %v7236
        %10272 = vmatpush.bf16.msra.mxu0 %v7234
        %10273 = vmatpush.bf16.msra.mxu0 %v7232
        %10274 = vmatpush.bf16.msra.mxu0 %v7230
        %10275 = vmatpush.bf16.msra.mxu0 %v7228
        %10276 = vmatpush.bf16.msra.mxu0 %v7226
        %10277 = vmatpush.bf16.msra.mxu0 %v7224
        %10278 = vmatpush.bf16.msra.mxu0 %v7222
        %10279 = vmatmul.bf16.gmra.mxu0 %v1853
        %v10280 = vpop.f32.mrf.mxu0
        %v10281 = vadd.f32 %v10268, %v10280
        %v10282 = vpop.f32.mrf.mxu0
        %10283 = vdwg.mxu0
        %10284 = vmatpush.bf16.msra.mxu0 %v7252
        %10285 = vmatpush.bf16.msra.mxu0 %v7250
        %10286 = vmatpush.bf16.msra.mxu0 %v7248
        %10287 = vmatpush.bf16.msra.mxu0 %v7246
        %10288 = vmatpush.bf16.msra.mxu0 %v7244
        %10289 = vmatpush.bf16.msra.mxu0 %v7242
        %10290 = vmatpush.bf16.msra.mxu0 %v7240
        %10291 = vmatpush.bf16.msra.mxu0 %v7238
        %10292 = vmatmul.bf16.gmra.mxu0 %v1854
        %v10293 = vpop.f32.mrf.mxu0
        %v10294 = vadd.f32 %v10281, %v10293
        %v10295 = vpop.f32.mrf.mxu0
        %10296 = vdwg.mxu0
        %10297 = vmatpush.bf16.msra.mxu0 %v7268
        %10298 = vmatpush.bf16.msra.mxu0 %v7266
        %10299 = vmatpush.bf16.msra.mxu0 %v7264
        %10300 = vmatpush.bf16.msra.mxu0 %v7262
        %10301 = vmatpush.bf16.msra.mxu0 %v7260
        %10302 = vmatpush.bf16.msra.mxu0 %v7258
        %10303 = vmatpush.bf16.msra.mxu0 %v7256
        %10304 = vmatpush.bf16.msra.mxu0 %v7254
        %10305 = vmatmul.bf16.gmra.mxu0 %v1855
        %v10306 = vpop.f32.mrf.mxu0
        %v10307 = vadd.f32 %v10294, %v10306
        %v10308 = vpop.f32.mrf.mxu0
        %10309 = vdwg.mxu0
        %10310 = vmatpush.bf16.msra.mxu0 %v7284
        %10311 = vmatpush.bf16.msra.mxu0 %v7282
        %10312 = vmatpush.bf16.msra.mxu0 %v7280
        %10313 = vmatpush.bf16.msra.mxu0 %v7278
        %10314 = vmatpush.bf16.msra.mxu0 %v7276
        %10315 = vmatpush.bf16.msra.mxu0 %v7274
        %10316 = vmatpush.bf16.msra.mxu0 %v7272
        %10317 = vmatpush.bf16.msra.mxu0 %v7270
        %10318 = vmatmul.bf16.gmra.mxu0 %v1860
        %v10319 = vpop.f32.mrf.mxu0
        %v10320 = vadd.f32 %v10307, %v10319
        %v10321 = vpop.f32.mrf.mxu0
        %10322 = vdwg.mxu0
        %10323 = vmatpush.bf16.msra.mxu0 %v7300
        %10324 = vmatpush.bf16.msra.mxu0 %v7298
        %10325 = vmatpush.bf16.msra.mxu0 %v7296
        %10326 = vmatpush.bf16.msra.mxu0 %v7294
        %10327 = vmatpush.bf16.msra.mxu0 %v7292
        %10328 = vmatpush.bf16.msra.mxu0 %v7290
        %10329 = vmatpush.bf16.msra.mxu0 %v7288
        %10330 = vmatpush.bf16.msra.mxu0 %v7286
        %10331 = vmatmul.bf16.gmra.mxu0 %v1861
        %v10332 = vpop.f32.mrf.mxu0
        %v10333 = vadd.f32 %v10320, %v10332
        %v10334 = vpop.f32.mrf.mxu0
        %10335 = vdwg.mxu0
        %10336 = vmatpush.bf16.msra.mxu0 %v7316
        %10337 = vmatpush.bf16.msra.mxu0 %v7314
        %10338 = vmatpush.bf16.msra.mxu0 %v7312
        %10339 = vmatpush.bf16.msra.mxu0 %v7310
        %10340 = vmatpush.bf16.msra.mxu0 %v7308
        %10341 = vmatpush.bf16.msra.mxu0 %v7306
        %10342 = vmatpush.bf16.msra.mxu0 %v7304
        %10343 = vmatpush.bf16.msra.mxu0 %v7302
        %10344 = vmatmul.bf16.gmra.mxu0 %v1862
        %v10345 = vpop.f32.mrf.mxu0
        %v10346 = vadd.f32 %v10333, %v10345
        %v10347 = vpop.f32.mrf.mxu0
        %10348 = vdwg.mxu0
        %10349 = vmatpush.bf16.msra.mxu0 %v7332
        %10350 = vmatpush.bf16.msra.mxu0 %v7330
        %10351 = vmatpush.bf16.msra.mxu0 %v7328
        %10352 = vmatpush.bf16.msra.mxu0 %v7326
        %10353 = vmatpush.bf16.msra.mxu0 %v7324
        %10354 = vmatpush.bf16.msra.mxu0 %v7322
        %10355 = vmatpush.bf16.msra.mxu0 %v7320
        %10356 = vmatpush.bf16.msra.mxu0 %v7318
        %10357 = vmatmul.bf16.gmra.mxu0 %v1863
        %v10358 = vpop.f32.mrf.mxu0
        %v10359 = vadd.f32 %v10346, %v10358
        %v10360 = vpop.f32.mrf.mxu0
        %10361 = vdwg.mxu0
        %10362 = vmatpush.bf16.msra.mxu0 %v7348
        %10363 = vmatpush.bf16.msra.mxu0 %v7346
        %10364 = vmatpush.bf16.msra.mxu0 %v7344
        %10365 = vmatpush.bf16.msra.mxu0 %v7342
        %10366 = vmatpush.bf16.msra.mxu0 %v7340
        %10367 = vmatpush.bf16.msra.mxu0 %v7338
        %10368 = vmatpush.bf16.msra.mxu0 %v7336
        %10369 = vmatpush.bf16.msra.mxu0 %v7334
        %10370 = vmatmul.bf16.gmra.mxu0 %v1864
        %v10371 = vpop.f32.mrf.mxu0
        %v10372 = vadd.f32 %v10359, %v10371
        %v10373 = vpop.f32.mrf.mxu0
        %10374 = vdwg.mxu0
        %10375 = vmatpush.bf16.msra.mxu0 %v7364
        %10376 = vmatpush.bf16.msra.mxu0 %v7362
        %10377 = vmatpush.bf16.msra.mxu0 %v7360
        %10378 = vmatpush.bf16.msra.mxu0 %v7358
        %10379 = vmatpush.bf16.msra.mxu0 %v7356
        %10380 = vmatpush.bf16.msra.mxu0 %v7354
        %10381 = vmatpush.bf16.msra.mxu0 %v7352
        %10382 = vmatpush.bf16.msra.mxu0 %v7350
        %10383 = vmatmul.bf16.gmra.mxu0 %v1865
        %v10384 = vpop.f32.mrf.mxu0
        %v10385 = vadd.f32 %v10372, %v10384
        %v10386 = vpop.f32.mrf.mxu0
        %10387 = vdwg.mxu0
        %10388 = vmatpush.bf16.msra.mxu0 %v7380
        %10389 = vmatpush.bf16.msra.mxu0 %v7378
        %10390 = vmatpush.bf16.msra.mxu0 %v7376
        %10391 = vmatpush.bf16.msra.mxu0 %v7374
        %10392 = vmatpush.bf16.msra.mxu0 %v7372
        %10393 = vmatpush.bf16.msra.mxu0 %v7370
        %10394 = vmatpush.bf16.msra.mxu0 %v7368
        %10395 = vmatpush.bf16.msra.mxu0 %v7366
        %10396 = vmatmul.bf16.gmra.mxu0 %v1866
        %v10397 = vpop.f32.mrf.mxu0
        %v10398 = vadd.f32 %v10385, %v10397
        %v10399 = vpop.f32.mrf.mxu0
        %10400 = vdwg.mxu0
        %10401 = vmatpush.bf16.msra.mxu0 %v7396
        %10402 = vmatpush.bf16.msra.mxu0 %v7394
        %10403 = vmatpush.bf16.msra.mxu0 %v7392
        %10404 = vmatpush.bf16.msra.mxu0 %v7390
        %10405 = vmatpush.bf16.msra.mxu0 %v7388
        %10406 = vmatpush.bf16.msra.mxu0 %v7386
        %10407 = vmatpush.bf16.msra.mxu0 %v7384
        %10408 = vmatpush.bf16.msra.mxu0 %v7382
        %10409 = vmatmul.bf16.gmra.mxu0 %v1867
        %v10410 = vpop.f32.mrf.mxu0
        %v10411 = vadd.f32 %v10398, %v10410
        %v10412 = vpop.f32.mrf.mxu0
        %10413 = vdwg.mxu0
        %10414 = vmatpush.bf16.msra.mxu0 %v7412
        %10415 = vmatpush.bf16.msra.mxu0 %v7410
        %10416 = vmatpush.bf16.msra.mxu0 %v7408
        %10417 = vmatpush.bf16.msra.mxu0 %v7406
        %10418 = vmatpush.bf16.msra.mxu0 %v7404
        %10419 = vmatpush.bf16.msra.mxu0 %v7402
        %10420 = vmatpush.bf16.msra.mxu0 %v7400
        %10421 = vmatpush.bf16.msra.mxu0 %v7398
        %10422 = vmatmul.bf16.gmra.mxu0 %v1872
        %v10423 = vpop.f32.mrf.mxu0
        %v10424 = vadd.f32 %v10411, %v10423
        %v10425 = vpop.f32.mrf.mxu0
        %10426 = vdwg.mxu0
        %10427 = vmatpush.bf16.msra.mxu0 %v7428
        %10428 = vmatpush.bf16.msra.mxu0 %v7426
        %10429 = vmatpush.bf16.msra.mxu0 %v7424
        %10430 = vmatpush.bf16.msra.mxu0 %v7422
        %10431 = vmatpush.bf16.msra.mxu0 %v7420
        %10432 = vmatpush.bf16.msra.mxu0 %v7418
        %10433 = vmatpush.bf16.msra.mxu0 %v7416
        %10434 = vmatpush.bf16.msra.mxu0 %v7414
        %10435 = vmatmul.bf16.gmra.mxu0 %v1873
        %v10436 = vpop.f32.mrf.mxu0
        %v10437 = vadd.f32 %v10424, %v10436
        %v10438 = vpop.f32.mrf.mxu0
        %10439 = vdwg.mxu0
        %10440 = vmatpush.bf16.msra.mxu0 %v7444
        %10441 = vmatpush.bf16.msra.mxu0 %v7442
        %10442 = vmatpush.bf16.msra.mxu0 %v7440
        %10443 = vmatpush.bf16.msra.mxu0 %v7438
        %10444 = vmatpush.bf16.msra.mxu0 %v7436
        %10445 = vmatpush.bf16.msra.mxu0 %v7434
        %10446 = vmatpush.bf16.msra.mxu0 %v7432
        %10447 = vmatpush.bf16.msra.mxu0 %v7430
        %10448 = vmatmul.bf16.gmra.mxu0 %v1874
        %v10449 = vpop.f32.mrf.mxu0
        %v10450 = vadd.f32 %v10437, %v10449
        %v10451 = vpop.f32.mrf.mxu0
        %10452 = vdwg.mxu0
        %10453 = vmatpush.bf16.msra.mxu0 %v7460
        %10454 = vmatpush.bf16.msra.mxu0 %v7458
        %10455 = vmatpush.bf16.msra.mxu0 %v7456
        %10456 = vmatpush.bf16.msra.mxu0 %v7454
        %10457 = vmatpush.bf16.msra.mxu0 %v7452
        %10458 = vmatpush.bf16.msra.mxu0 %v7450
        %10459 = vmatpush.bf16.msra.mxu0 %v7448
        %10460 = vmatpush.bf16.msra.mxu0 %v7446
        %10461 = vmatmul.bf16.gmra.mxu0 %v1875
        %v10462 = vpop.f32.mrf.mxu0
        %v10463 = vadd.f32 %v10450, %v10462
        %v10464 = vpop.f32.mrf.mxu0
        %10465 = vdwg.mxu0
        %10466 = vmatpush.bf16.msra.mxu0 %v7476
        %10467 = vmatpush.bf16.msra.mxu0 %v7474
        %10468 = vmatpush.bf16.msra.mxu0 %v7472
        %10469 = vmatpush.bf16.msra.mxu0 %v7470
        %10470 = vmatpush.bf16.msra.mxu0 %v7468
        %10471 = vmatpush.bf16.msra.mxu0 %v7466
        %10472 = vmatpush.bf16.msra.mxu0 %v7464
        %10473 = vmatpush.bf16.msra.mxu0 %v7462
        %10474 = vmatmul.bf16.gmra.mxu0 %v1876
        %v10475 = vpop.f32.mrf.mxu0
        %v10476 = vadd.f32 %v10463, %v10475
        %v10477 = vpop.f32.mrf.mxu0
        %10478 = vdwg.mxu0
        %10479 = vmatpush.bf16.msra.mxu0 %v7492
        %10480 = vmatpush.bf16.msra.mxu0 %v7490
        %10481 = vmatpush.bf16.msra.mxu0 %v7488
        %10482 = vmatpush.bf16.msra.mxu0 %v7486
        %10483 = vmatpush.bf16.msra.mxu0 %v7484
        %10484 = vmatpush.bf16.msra.mxu0 %v7482
        %10485 = vmatpush.bf16.msra.mxu0 %v7480
        %10486 = vmatpush.bf16.msra.mxu0 %v7478
        %10487 = vmatmul.bf16.gmra.mxu0 %v1877
        %v10488 = vpop.f32.mrf.mxu0
        %v10489 = vadd.f32 %v10476, %v10488
        %v10490 = vpop.f32.mrf.mxu0
        %10491 = vdwg.mxu0
        %10492 = vmatpush.bf16.msra.mxu0 %v7508
        %10493 = vmatpush.bf16.msra.mxu0 %v7506
        %10494 = vmatpush.bf16.msra.mxu0 %v7504
        %10495 = vmatpush.bf16.msra.mxu0 %v7502
        %10496 = vmatpush.bf16.msra.mxu0 %v7500
        %10497 = vmatpush.bf16.msra.mxu0 %v7498
        %10498 = vmatpush.bf16.msra.mxu0 %v7496
        %10499 = vmatpush.bf16.msra.mxu0 %v7494
        %10500 = vmatmul.bf16.gmra.mxu0 %v1878
        %v10501 = vpop.f32.mrf.mxu0
        %v10502 = vadd.f32 %v10489, %v10501
        %v10503 = vpop.f32.mrf.mxu0
        %10504 = vdwg.mxu0
        %10505 = vmatpush.bf16.msra.mxu0 %v7524
        %10506 = vmatpush.bf16.msra.mxu0 %v7522
        %10507 = vmatpush.bf16.msra.mxu0 %v7520
        %10508 = vmatpush.bf16.msra.mxu0 %v7518
        %10509 = vmatpush.bf16.msra.mxu0 %v7516
        %10510 = vmatpush.bf16.msra.mxu0 %v7514
        %10511 = vmatpush.bf16.msra.mxu0 %v7512
        %10512 = vmatpush.bf16.msra.mxu0 %v7510
        %10513 = vmatmul.bf16.gmra.mxu0 %v1879
        %v10514 = vpop.f32.mrf.mxu0
        %v10515 = vadd.f32 %v10502, %v10514
        %v10516 = vpop.f32.mrf.mxu0
        %10517 = vdwg.mxu0
        %10518 = vmatpush.bf16.msra.mxu0 %v7540
        %10519 = vmatpush.bf16.msra.mxu0 %v7538
        %10520 = vmatpush.bf16.msra.mxu0 %v7536
        %10521 = vmatpush.bf16.msra.mxu0 %v7534
        %10522 = vmatpush.bf16.msra.mxu0 %v7532
        %10523 = vmatpush.bf16.msra.mxu0 %v7530
        %10524 = vmatpush.bf16.msra.mxu0 %v7528
        %10525 = vmatpush.bf16.msra.mxu0 %v7526
        %10526 = vmatmul.bf16.gmra.mxu0 %v1884
        %v10527 = vpop.f32.mrf.mxu0
        %v10528 = vadd.f32 %v10515, %v10527
        %v10529 = vpop.f32.mrf.mxu0
        %10530 = vdwg.mxu0
        %10531 = vmatpush.bf16.msra.mxu0 %v7556
        %10532 = vmatpush.bf16.msra.mxu0 %v7554
        %10533 = vmatpush.bf16.msra.mxu0 %v7552
        %10534 = vmatpush.bf16.msra.mxu0 %v7550
        %10535 = vmatpush.bf16.msra.mxu0 %v7548
        %10536 = vmatpush.bf16.msra.mxu0 %v7546
        %10537 = vmatpush.bf16.msra.mxu0 %v7544
        %10538 = vmatpush.bf16.msra.mxu0 %v7542
        %10539 = vmatmul.bf16.gmra.mxu0 %v1885
        %v10540 = vpop.f32.mrf.mxu0
        %v10541 = vadd.f32 %v10528, %v10540
        %v10542 = vpop.f32.mrf.mxu0
        %10543 = vdwg.mxu0
        %10544 = vmatpush.bf16.msra.mxu0 %v7572
        %10545 = vmatpush.bf16.msra.mxu0 %v7570
        %10546 = vmatpush.bf16.msra.mxu0 %v7568
        %10547 = vmatpush.bf16.msra.mxu0 %v7566
        %10548 = vmatpush.bf16.msra.mxu0 %v7564
        %10549 = vmatpush.bf16.msra.mxu0 %v7562
        %10550 = vmatpush.bf16.msra.mxu0 %v7560
        %10551 = vmatpush.bf16.msra.mxu0 %v7558
        %10552 = vmatmul.bf16.gmra.mxu0 %v1886
        %v10553 = vpop.f32.mrf.mxu0
        %v10554 = vadd.f32 %v10541, %v10553
        %v10555 = vpop.f32.mrf.mxu0
        %10556 = vdwg.mxu0
        %10557 = vmatpush.bf16.msra.mxu0 %v7588
        %10558 = vmatpush.bf16.msra.mxu0 %v7586
        %10559 = vmatpush.bf16.msra.mxu0 %v7584
        %10560 = vmatpush.bf16.msra.mxu0 %v7582
        %10561 = vmatpush.bf16.msra.mxu0 %v7580
        %10562 = vmatpush.bf16.msra.mxu0 %v7578
        %10563 = vmatpush.bf16.msra.mxu0 %v7576
        %10564 = vmatpush.bf16.msra.mxu0 %v7574
        %10565 = vmatmul.bf16.gmra.mxu0 %v1887
        %v10566 = vpop.f32.mrf.mxu0
        %v10567 = vadd.f32 %v10554, %v10566
        %v10568 = vpop.f32.mrf.mxu0
        %10569 = vdwg.mxu0
        %10570 = vmatpush.bf16.msra.mxu0 %v7604
        %10571 = vmatpush.bf16.msra.mxu0 %v7602
        %10572 = vmatpush.bf16.msra.mxu0 %v7600
        %10573 = vmatpush.bf16.msra.mxu0 %v7598
        %10574 = vmatpush.bf16.msra.mxu0 %v7596
        %10575 = vmatpush.bf16.msra.mxu0 %v7594
        %10576 = vmatpush.bf16.msra.mxu0 %v7592
        %10577 = vmatpush.bf16.msra.mxu0 %v7590
        %10578 = vmatmul.bf16.gmra.mxu0 %v1888
        %v10579 = vpop.f32.mrf.mxu0
        %v10580 = vadd.f32 %v10567, %v10579
        %v10581 = vpop.f32.mrf.mxu0
        %10582 = vdwg.mxu0
        %10583 = vmatpush.bf16.msra.mxu0 %v7620
        %10584 = vmatpush.bf16.msra.mxu0 %v7618
        %10585 = vmatpush.bf16.msra.mxu0 %v7616
        %10586 = vmatpush.bf16.msra.mxu0 %v7614
        %10587 = vmatpush.bf16.msra.mxu0 %v7612
        %10588 = vmatpush.bf16.msra.mxu0 %v7610
        %10589 = vmatpush.bf16.msra.mxu0 %v7608
        %10590 = vmatpush.bf16.msra.mxu0 %v7606
        %10591 = vmatmul.bf16.gmra.mxu0 %v1889
        %v10592 = vpop.f32.mrf.mxu0
        %v10593 = vadd.f32 %v10580, %v10592
        %v10594 = vpop.f32.mrf.mxu0
        %10595 = vdwg.mxu0
        %10596 = vmatpush.bf16.msra.mxu0 %v7636
        %10597 = vmatpush.bf16.msra.mxu0 %v7634
        %10598 = vmatpush.bf16.msra.mxu0 %v7632
        %10599 = vmatpush.bf16.msra.mxu0 %v7630
        %10600 = vmatpush.bf16.msra.mxu0 %v7628
        %10601 = vmatpush.bf16.msra.mxu0 %v7626
        %10602 = vmatpush.bf16.msra.mxu0 %v7624
        %10603 = vmatpush.bf16.msra.mxu0 %v7622
        %10604 = vmatmul.bf16.gmra.mxu0 %v1890
        %v10605 = vpop.f32.mrf.mxu0
        %v10606 = vadd.f32 %v10593, %v10605
        %v10607 = vpop.f32.mrf.mxu0
        %10608 = vdwg.mxu0
        %10609 = vmatpush.bf16.msra.mxu0 %v7652
        %10610 = vmatpush.bf16.msra.mxu0 %v7650
        %10611 = vmatpush.bf16.msra.mxu0 %v7648
        %10612 = vmatpush.bf16.msra.mxu0 %v7646
        %10613 = vmatpush.bf16.msra.mxu0 %v7644
        %10614 = vmatpush.bf16.msra.mxu0 %v7642
        %10615 = vmatpush.bf16.msra.mxu0 %v7640
        %10616 = vmatpush.bf16.msra.mxu0 %v7638
        %10617 = vmatmul.bf16.gmra.mxu0 %v1891
        %v10618 = vpop.f32.mrf.mxu0
        %v10619 = vadd.f32 %v10606, %v10618
        %v10620 = vpop.f32.mrf.mxu0
        %10621 = vdwg.mxu0
        %10622 = vmatpush.bf16.msra.mxu0 %v7668
        %10623 = vmatpush.bf16.msra.mxu0 %v7666
        %10624 = vmatpush.bf16.msra.mxu0 %v7664
        %10625 = vmatpush.bf16.msra.mxu0 %v7662
        %10626 = vmatpush.bf16.msra.mxu0 %v7660
        %10627 = vmatpush.bf16.msra.mxu0 %v7658
        %10628 = vmatpush.bf16.msra.mxu0 %v7656
        %10629 = vmatpush.bf16.msra.mxu0 %v7654
        %10630 = vmatmul.bf16.gmra.mxu0 %v1896
        %v10631 = vpop.f32.mrf.mxu0
        %v10632 = vadd.f32 %v10619, %v10631
        %v10633 = vpop.f32.mrf.mxu0
        %10634 = vdwg.mxu0
        %10635 = vmatpush.bf16.msra.mxu0 %v7684
        %10636 = vmatpush.bf16.msra.mxu0 %v7682
        %10637 = vmatpush.bf16.msra.mxu0 %v7680
        %10638 = vmatpush.bf16.msra.mxu0 %v7678
        %10639 = vmatpush.bf16.msra.mxu0 %v7676
        %10640 = vmatpush.bf16.msra.mxu0 %v7674
        %10641 = vmatpush.bf16.msra.mxu0 %v7672
        %10642 = vmatpush.bf16.msra.mxu0 %v7670
        %10643 = vmatmul.bf16.gmra.mxu0 %v1897
        %v10644 = vpop.f32.mrf.mxu0
        %v10645 = vadd.f32 %v10632, %v10644
        %v10646 = vpop.f32.mrf.mxu0
        %10647 = vdwg.mxu0
        %10648 = vmatpush.bf16.msra.mxu0 %v7700
        %10649 = vmatpush.bf16.msra.mxu0 %v7698
        %10650 = vmatpush.bf16.msra.mxu0 %v7696
        %10651 = vmatpush.bf16.msra.mxu0 %v7694
        %10652 = vmatpush.bf16.msra.mxu0 %v7692
        %10653 = vmatpush.bf16.msra.mxu0 %v7690
        %10654 = vmatpush.bf16.msra.mxu0 %v7688
        %10655 = vmatpush.bf16.msra.mxu0 %v7686
        %10656 = vmatmul.bf16.gmra.mxu0 %v1898
        %v10657 = vpop.f32.mrf.mxu0
        %v10658 = vadd.f32 %v10645, %v10657
        %v10659 = vpop.f32.mrf.mxu0
        %10660 = vdwg.mxu0
        %10661 = vmatpush.bf16.msra.mxu0 %v7716
        %10662 = vmatpush.bf16.msra.mxu0 %v7714
        %10663 = vmatpush.bf16.msra.mxu0 %v7712
        %10664 = vmatpush.bf16.msra.mxu0 %v7710
        %10665 = vmatpush.bf16.msra.mxu0 %v7708
        %10666 = vmatpush.bf16.msra.mxu0 %v7706
        %10667 = vmatpush.bf16.msra.mxu0 %v7704
        %10668 = vmatpush.bf16.msra.mxu0 %v7702
        %10669 = vmatmul.bf16.gmra.mxu0 %v1899
        %v10670 = vpop.f32.mrf.mxu0
        %v10671 = vadd.f32 %v10658, %v10670
        %v10672 = vpop.f32.mrf.mxu0
        %10673 = vdwg.mxu0
        %10674 = vmatpush.bf16.msra.mxu0 %v7732
        %10675 = vmatpush.bf16.msra.mxu0 %v7730
        %10676 = vmatpush.bf16.msra.mxu0 %v7728
        %10677 = vmatpush.bf16.msra.mxu0 %v7726
        %10678 = vmatpush.bf16.msra.mxu0 %v7724
        %10679 = vmatpush.bf16.msra.mxu0 %v7722
        %10680 = vmatpush.bf16.msra.mxu0 %v7720
        %10681 = vmatpush.bf16.msra.mxu0 %v7718
        %10682 = vmatmul.bf16.gmra.mxu0 %v1900
        %v10683 = vpop.f32.mrf.mxu0
        %v10684 = vadd.f32 %v10671, %v10683
        %v10685 = vpop.f32.mrf.mxu0
        %10686 = vdwg.mxu0
        %10687 = vmatpush.bf16.msra.mxu0 %v7748
        %10688 = vmatpush.bf16.msra.mxu0 %v7746
        %10689 = vmatpush.bf16.msra.mxu0 %v7744
        %10690 = vmatpush.bf16.msra.mxu0 %v7742
        %10691 = vmatpush.bf16.msra.mxu0 %v7740
        %10692 = vmatpush.bf16.msra.mxu0 %v7738
        %10693 = vmatpush.bf16.msra.mxu0 %v7736
        %10694 = vmatpush.bf16.msra.mxu0 %v7734
        %10695 = vmatmul.bf16.gmra.mxu0 %v1901
        %v10696 = vpop.f32.mrf.mxu0
        %v10697 = vadd.f32 %v10684, %v10696
        %v10698 = vpop.f32.mrf.mxu0
        %10699 = vdwg.mxu0
        %10700 = vmatpush.bf16.msra.mxu0 %v7764
        %10701 = vmatpush.bf16.msra.mxu0 %v7762
        %10702 = vmatpush.bf16.msra.mxu0 %v7760
        %10703 = vmatpush.bf16.msra.mxu0 %v7758
        %10704 = vmatpush.bf16.msra.mxu0 %v7756
        %10705 = vmatpush.bf16.msra.mxu0 %v7754
        %10706 = vmatpush.bf16.msra.mxu0 %v7752
        %10707 = vmatpush.bf16.msra.mxu0 %v7750
        %10708 = vmatmul.bf16.gmra.mxu0 %v1902
        %v10709 = vpop.f32.mrf.mxu0
        %v10710 = vadd.f32 %v10697, %v10709
        %v10711 = vpop.f32.mrf.mxu0
        %10712 = vdwg.mxu0
        %10713 = vmatpush.bf16.msra.mxu0 %v7780
        %10714 = vmatpush.bf16.msra.mxu0 %v7778
        %10715 = vmatpush.bf16.msra.mxu0 %v7776
        %10716 = vmatpush.bf16.msra.mxu0 %v7774
        %10717 = vmatpush.bf16.msra.mxu0 %v7772
        %10718 = vmatpush.bf16.msra.mxu0 %v7770
        %10719 = vmatpush.bf16.msra.mxu0 %v7768
        %10720 = vmatpush.bf16.msra.mxu0 %v7766
        %10721 = vmatmul.bf16.gmra.mxu0 %v1903
        %v10722 = vpop.f32.mrf.mxu0
        %v10723 = vadd.f32 %v10710, %v10722
        %v10724 = vpop.f32.mrf.mxu0
        %10725 = vdwg.mxu0
        %10726 = vmatpush.bf16.msra.mxu0 %v7796
        %10727 = vmatpush.bf16.msra.mxu0 %v7794
        %10728 = vmatpush.bf16.msra.mxu0 %v7792
        %10729 = vmatpush.bf16.msra.mxu0 %v7790
        %10730 = vmatpush.bf16.msra.mxu0 %v7788
        %10731 = vmatpush.bf16.msra.mxu0 %v7786
        %10732 = vmatpush.bf16.msra.mxu0 %v7784
        %10733 = vmatpush.bf16.msra.mxu0 %v7782
        %10734 = vmatmul.bf16.gmra.mxu0 %v1908
        %v10735 = vpop.f32.mrf.mxu0
        %v10736 = vadd.f32 %v10723, %v10735
        %v10737 = vpop.f32.mrf.mxu0
        %10738 = vdwg.mxu0
        %10739 = vmatpush.bf16.msra.mxu0 %v7812
        %10740 = vmatpush.bf16.msra.mxu0 %v7810
        %10741 = vmatpush.bf16.msra.mxu0 %v7808
        %10742 = vmatpush.bf16.msra.mxu0 %v7806
        %10743 = vmatpush.bf16.msra.mxu0 %v7804
        %10744 = vmatpush.bf16.msra.mxu0 %v7802
        %10745 = vmatpush.bf16.msra.mxu0 %v7800
        %10746 = vmatpush.bf16.msra.mxu0 %v7798
        %10747 = vmatmul.bf16.gmra.mxu0 %v1909
        %v10748 = vpop.f32.mrf.mxu0
        %v10749 = vadd.f32 %v10736, %v10748
        %v10750 = vpop.f32.mrf.mxu0
        %10751 = vdwg.mxu0
        %10752 = vmatpush.bf16.msra.mxu0 %v7828
        %10753 = vmatpush.bf16.msra.mxu0 %v7826
        %10754 = vmatpush.bf16.msra.mxu0 %v7824
        %10755 = vmatpush.bf16.msra.mxu0 %v7822
        %10756 = vmatpush.bf16.msra.mxu0 %v7820
        %10757 = vmatpush.bf16.msra.mxu0 %v7818
        %10758 = vmatpush.bf16.msra.mxu0 %v7816
        %10759 = vmatpush.bf16.msra.mxu0 %v7814
        %10760 = vmatmul.bf16.gmra.mxu0 %v1910
        %v10761 = vpop.f32.mrf.mxu0
        %v10762 = vadd.f32 %v10749, %v10761
        %v10763 = vpop.f32.mrf.mxu0
        %10764 = vdwg.mxu0
        %10765 = vmatpush.bf16.msra.mxu0 %v7844
        %10766 = vmatpush.bf16.msra.mxu0 %v7842
        %10767 = vmatpush.bf16.msra.mxu0 %v7840
        %10768 = vmatpush.bf16.msra.mxu0 %v7838
        %10769 = vmatpush.bf16.msra.mxu0 %v7836
        %10770 = vmatpush.bf16.msra.mxu0 %v7834
        %10771 = vmatpush.bf16.msra.mxu0 %v7832
        %10772 = vmatpush.bf16.msra.mxu0 %v7830
        %10773 = vmatmul.bf16.gmra.mxu0 %v1911
        %v10774 = vpop.f32.mrf.mxu0
        %v10775 = vadd.f32 %v10762, %v10774
        %v10776 = vpop.f32.mrf.mxu0
        %10777 = vdwg.mxu0
        %10778 = vmatpush.bf16.msra.mxu0 %v7860
        %10779 = vmatpush.bf16.msra.mxu0 %v7858
        %10780 = vmatpush.bf16.msra.mxu0 %v7856
        %10781 = vmatpush.bf16.msra.mxu0 %v7854
        %10782 = vmatpush.bf16.msra.mxu0 %v7852
        %10783 = vmatpush.bf16.msra.mxu0 %v7850
        %10784 = vmatpush.bf16.msra.mxu0 %v7848
        %10785 = vmatpush.bf16.msra.mxu0 %v7846
        %10786 = vmatmul.bf16.gmra.mxu0 %v1912
        %v10787 = vpop.f32.mrf.mxu0
        %v10788 = vadd.f32 %v10775, %v10787
        %v10789 = vpop.f32.mrf.mxu0
        %10790 = vdwg.mxu0
        %10791 = vmatpush.bf16.msra.mxu0 %v7876
        %10792 = vmatpush.bf16.msra.mxu0 %v7874
        %10793 = vmatpush.bf16.msra.mxu0 %v7872
        %10794 = vmatpush.bf16.msra.mxu0 %v7870
        %10795 = vmatpush.bf16.msra.mxu0 %v7868
        %10796 = vmatpush.bf16.msra.mxu0 %v7866
        %10797 = vmatpush.bf16.msra.mxu0 %v7864
        %10798 = vmatpush.bf16.msra.mxu0 %v7862
        %10799 = vmatmul.bf16.gmra.mxu0 %v1913
        %v10800 = vpop.f32.mrf.mxu0
        %v10801 = vadd.f32 %v10788, %v10800
        %v10802 = vpop.f32.mrf.mxu0
        %10803 = vdwg.mxu0
        %10804 = vmatpush.bf16.msra.mxu0 %v7892
        %10805 = vmatpush.bf16.msra.mxu0 %v7890
        %10806 = vmatpush.bf16.msra.mxu0 %v7888
        %10807 = vmatpush.bf16.msra.mxu0 %v7886
        %10808 = vmatpush.bf16.msra.mxu0 %v7884
        %10809 = vmatpush.bf16.msra.mxu0 %v7882
        %10810 = vmatpush.bf16.msra.mxu0 %v7880
        %10811 = vmatpush.bf16.msra.mxu0 %v7878
        %10812 = vmatmul.bf16.gmra.mxu0 %v1914
        %v10813 = vpop.f32.mrf.mxu0
        %v10814 = vadd.f32 %v10801, %v10813
        %v10815 = vpop.f32.mrf.mxu0
        %10816 = vdwg.mxu0
        %10817 = vmatpush.bf16.msra.mxu0 %v7908
        %10818 = vmatpush.bf16.msra.mxu0 %v7906
        %10819 = vmatpush.bf16.msra.mxu0 %v7904
        %10820 = vmatpush.bf16.msra.mxu0 %v7902
        %10821 = vmatpush.bf16.msra.mxu0 %v7900
        %10822 = vmatpush.bf16.msra.mxu0 %v7898
        %10823 = vmatpush.bf16.msra.mxu0 %v7896
        %10824 = vmatpush.bf16.msra.mxu0 %v7894
        %10825 = vmatmul.bf16.gmra.mxu0 %v1915
        %v10826 = vpop.f32.mrf.mxu0
        %v10827 = vadd.f32 %v10814, %v10826
        %v10828 = vpop.f32.mrf.mxu0
        %10829 = vdwg.mxu0
        %10830 = vmatpush.bf16.msra.mxu0 %v7924
        %10831 = vmatpush.bf16.msra.mxu0 %v7922
        %10832 = vmatpush.bf16.msra.mxu0 %v7920
        %10833 = vmatpush.bf16.msra.mxu0 %v7918
        %10834 = vmatpush.bf16.msra.mxu0 %v7916
        %10835 = vmatpush.bf16.msra.mxu0 %v7914
        %10836 = vmatpush.bf16.msra.mxu0 %v7912
        %10837 = vmatpush.bf16.msra.mxu0 %v7910
        %10838 = vmatmul.bf16.gmra.mxu0 %v1920
        %v10839 = vpop.f32.mrf.mxu0
        %v10840 = vadd.f32 %v10827, %v10839
        %v10841 = vpop.f32.mrf.mxu0
        %10842 = vdwg.mxu0
        %10843 = vmatpush.bf16.msra.mxu0 %v7940
        %10844 = vmatpush.bf16.msra.mxu0 %v7938
        %10845 = vmatpush.bf16.msra.mxu0 %v7936
        %10846 = vmatpush.bf16.msra.mxu0 %v7934
        %10847 = vmatpush.bf16.msra.mxu0 %v7932
        %10848 = vmatpush.bf16.msra.mxu0 %v7930
        %10849 = vmatpush.bf16.msra.mxu0 %v7928
        %10850 = vmatpush.bf16.msra.mxu0 %v7926
        %10851 = vmatmul.bf16.gmra.mxu0 %v1921
        %v10852 = vpop.f32.mrf.mxu0
        %v10853 = vadd.f32 %v10840, %v10852
        %v10854 = vpop.f32.mrf.mxu0
        %10855 = vdwg.mxu0
        %10856 = vmatpush.bf16.msra.mxu0 %v7956
        %10857 = vmatpush.bf16.msra.mxu0 %v7954
        %10858 = vmatpush.bf16.msra.mxu0 %v7952
        %10859 = vmatpush.bf16.msra.mxu0 %v7950
        %10860 = vmatpush.bf16.msra.mxu0 %v7948
        %10861 = vmatpush.bf16.msra.mxu0 %v7946
        %10862 = vmatpush.bf16.msra.mxu0 %v7944
        %10863 = vmatpush.bf16.msra.mxu0 %v7942
        %10864 = vmatmul.bf16.gmra.mxu0 %v1922
        %v10865 = vpop.f32.mrf.mxu0
        %v10866 = vadd.f32 %v10853, %v10865
        %v10867 = vpop.f32.mrf.mxu0
        %10868 = vdwg.mxu0
        %10869 = vmatpush.bf16.msra.mxu0 %v7972
        %10870 = vmatpush.bf16.msra.mxu0 %v7970
        %10871 = vmatpush.bf16.msra.mxu0 %v7968
        %10872 = vmatpush.bf16.msra.mxu0 %v7966
        %10873 = vmatpush.bf16.msra.mxu0 %v7964
        %10874 = vmatpush.bf16.msra.mxu0 %v7962
        %10875 = vmatpush.bf16.msra.mxu0 %v7960
        %10876 = vmatpush.bf16.msra.mxu0 %v7958
        %10877 = vmatmul.bf16.gmra.mxu0 %v1923
        %v10878 = vpop.f32.mrf.mxu0
        %v10879 = vadd.f32 %v10866, %v10878
        %v10880 = vpop.f32.mrf.mxu0
        %10881 = vdwg.mxu0
        %10882 = vmatpush.bf16.msra.mxu0 %v7988
        %10883 = vmatpush.bf16.msra.mxu0 %v7986
        %10884 = vmatpush.bf16.msra.mxu0 %v7984
        %10885 = vmatpush.bf16.msra.mxu0 %v7982
        %10886 = vmatpush.bf16.msra.mxu0 %v7980
        %10887 = vmatpush.bf16.msra.mxu0 %v7978
        %10888 = vmatpush.bf16.msra.mxu0 %v7976
        %10889 = vmatpush.bf16.msra.mxu0 %v7974
        %10890 = vmatmul.bf16.gmra.mxu0 %v1924
        %v10891 = vpop.f32.mrf.mxu0
        %v10892 = vadd.f32 %v10879, %v10891
        %v10893 = vpop.f32.mrf.mxu0
        %10894 = vdwg.mxu0
        %10895 = vmatpush.bf16.msra.mxu0 %v8004
        %10896 = vmatpush.bf16.msra.mxu0 %v8002
        %10897 = vmatpush.bf16.msra.mxu0 %v8000
        %10898 = vmatpush.bf16.msra.mxu0 %v7998
        %10899 = vmatpush.bf16.msra.mxu0 %v7996
        %10900 = vmatpush.bf16.msra.mxu0 %v7994
        %10901 = vmatpush.bf16.msra.mxu0 %v7992
        %10902 = vmatpush.bf16.msra.mxu0 %v7990
        %10903 = vmatmul.bf16.gmra.mxu0 %v1925
        %v10904 = vpop.f32.mrf.mxu0
        %v10905 = vadd.f32 %v10892, %v10904
        %v10906 = vpop.f32.mrf.mxu0
        %10907 = vdwg.mxu0
        %10908 = vmatpush.bf16.msra.mxu0 %v8020
        %10909 = vmatpush.bf16.msra.mxu0 %v8018
        %10910 = vmatpush.bf16.msra.mxu0 %v8016
        %10911 = vmatpush.bf16.msra.mxu0 %v8014
        %10912 = vmatpush.bf16.msra.mxu0 %v8012
        %10913 = vmatpush.bf16.msra.mxu0 %v8010
        %10914 = vmatpush.bf16.msra.mxu0 %v8008
        %10915 = vmatpush.bf16.msra.mxu0 %v8006
        %10916 = vmatmul.bf16.gmra.mxu0 %v1926
        %v10917 = vpop.f32.mrf.mxu0
        %v10918 = vadd.f32 %v10905, %v10917
        %v10919 = vpop.f32.mrf.mxu0
        %10920 = vdwg.mxu0
        %10921 = vmatpush.bf16.msra.mxu0 %v8036
        %10922 = vmatpush.bf16.msra.mxu0 %v8034
        %10923 = vmatpush.bf16.msra.mxu0 %v8032
        %10924 = vmatpush.bf16.msra.mxu0 %v8030
        %10925 = vmatpush.bf16.msra.mxu0 %v8028
        %10926 = vmatpush.bf16.msra.mxu0 %v8026
        %10927 = vmatpush.bf16.msra.mxu0 %v8024
        %10928 = vmatpush.bf16.msra.mxu0 %v8022
        %10929 = vmatmul.bf16.gmra.mxu0 %v1927
        %v10930 = vpop.f32.mrf.mxu0
        %v10931 = vadd.f32 %v10918, %v10930
        %v10932 = vpop.f32.mrf.mxu0
        %10933 = vdwg.mxu0
        %10934 = vmatpush.bf16.msra.mxu0 %v8052
        %10935 = vmatpush.bf16.msra.mxu0 %v8050
        %10936 = vmatpush.bf16.msra.mxu0 %v8048
        %10937 = vmatpush.bf16.msra.mxu0 %v8046
        %10938 = vmatpush.bf16.msra.mxu0 %v8044
        %10939 = vmatpush.bf16.msra.mxu0 %v8042
        %10940 = vmatpush.bf16.msra.mxu0 %v8040
        %10941 = vmatpush.bf16.msra.mxu0 %v8038
        %10942 = vmatmul.bf16.gmra.mxu0 %v1932
        %v10943 = vpop.f32.mrf.mxu0
        %v10944 = vadd.f32 %v10931, %v10943
        %v10945 = vpop.f32.mrf.mxu0
        %10946 = vdwg.mxu0
        %10947 = vmatpush.bf16.msra.mxu0 %v8068
        %10948 = vmatpush.bf16.msra.mxu0 %v8066
        %10949 = vmatpush.bf16.msra.mxu0 %v8064
        %10950 = vmatpush.bf16.msra.mxu0 %v8062
        %10951 = vmatpush.bf16.msra.mxu0 %v8060
        %10952 = vmatpush.bf16.msra.mxu0 %v8058
        %10953 = vmatpush.bf16.msra.mxu0 %v8056
        %10954 = vmatpush.bf16.msra.mxu0 %v8054
        %10955 = vmatmul.bf16.gmra.mxu0 %v1933
        %v10956 = vpop.f32.mrf.mxu0
        %v10957 = vadd.f32 %v10944, %v10956
        %v10958 = vpop.f32.mrf.mxu0
        %10959 = vdwg.mxu0
        %10960 = vmatpush.bf16.msra.mxu0 %v8084
        %10961 = vmatpush.bf16.msra.mxu0 %v8082
        %10962 = vmatpush.bf16.msra.mxu0 %v8080
        %10963 = vmatpush.bf16.msra.mxu0 %v8078
        %10964 = vmatpush.bf16.msra.mxu0 %v8076
        %10965 = vmatpush.bf16.msra.mxu0 %v8074
        %10966 = vmatpush.bf16.msra.mxu0 %v8072
        %10967 = vmatpush.bf16.msra.mxu0 %v8070
        %10968 = vmatmul.bf16.gmra.mxu0 %v1934
        %v10969 = vpop.f32.mrf.mxu0
        %v10970 = vadd.f32 %v10957, %v10969
        %v10971 = vpop.f32.mrf.mxu0
        %10972 = vdwg.mxu0
        %10973 = vmatpush.bf16.msra.mxu0 %v8100
        %10974 = vmatpush.bf16.msra.mxu0 %v8098
        %10975 = vmatpush.bf16.msra.mxu0 %v8096
        %10976 = vmatpush.bf16.msra.mxu0 %v8094
        %10977 = vmatpush.bf16.msra.mxu0 %v8092
        %10978 = vmatpush.bf16.msra.mxu0 %v8090
        %10979 = vmatpush.bf16.msra.mxu0 %v8088
        %10980 = vmatpush.bf16.msra.mxu0 %v8086
        %10981 = vmatmul.bf16.gmra.mxu0 %v1935
        %v10982 = vpop.f32.mrf.mxu0
        %v10983 = vadd.f32 %v10970, %v10982
        %v10984 = vpop.f32.mrf.mxu0
        %10985 = vdwg.mxu0
        %10986 = vmatpush.bf16.msra.mxu0 %v8116
        %10987 = vmatpush.bf16.msra.mxu0 %v8114
        %10988 = vmatpush.bf16.msra.mxu0 %v8112
        %10989 = vmatpush.bf16.msra.mxu0 %v8110
        %10990 = vmatpush.bf16.msra.mxu0 %v8108
        %10991 = vmatpush.bf16.msra.mxu0 %v8106
        %10992 = vmatpush.bf16.msra.mxu0 %v8104
        %10993 = vmatpush.bf16.msra.mxu0 %v8102
        %10994 = vmatmul.bf16.gmra.mxu0 %v1936
        %v10995 = vpop.f32.mrf.mxu0
        %v10996 = vadd.f32 %v10983, %v10995
        %v10997 = vpop.f32.mrf.mxu0
        %10998 = vdwg.mxu0
        %10999 = vmatpush.bf16.msra.mxu0 %v8132
        %11000 = vmatpush.bf16.msra.mxu0 %v8130
        %11001 = vmatpush.bf16.msra.mxu0 %v8128
        %11002 = vmatpush.bf16.msra.mxu0 %v8126
        %11003 = vmatpush.bf16.msra.mxu0 %v8124
        %11004 = vmatpush.bf16.msra.mxu0 %v8122
        %11005 = vmatpush.bf16.msra.mxu0 %v8120
        %11006 = vmatpush.bf16.msra.mxu0 %v8118
        %11007 = vmatmul.bf16.gmra.mxu0 %v1937
        %v11008 = vpop.f32.mrf.mxu0
        %v11009 = vadd.f32 %v10996, %v11008
        %v11010 = vpop.f32.mrf.mxu0
        %11011 = vdwg.mxu0
        %11012 = vmatpush.bf16.msra.mxu0 %v8148
        %11013 = vmatpush.bf16.msra.mxu0 %v8146
        %11014 = vmatpush.bf16.msra.mxu0 %v8144
        %11015 = vmatpush.bf16.msra.mxu0 %v8142
        %11016 = vmatpush.bf16.msra.mxu0 %v8140
        %11017 = vmatpush.bf16.msra.mxu0 %v8138
        %11018 = vmatpush.bf16.msra.mxu0 %v8136
        %11019 = vmatpush.bf16.msra.mxu0 %v8134
        %11020 = vmatmul.bf16.gmra.mxu0 %v1938
        %v11021 = vpop.f32.mrf.mxu0
        %v11022 = vadd.f32 %v11009, %v11021
        %v11023 = vpop.f32.mrf.mxu0
        %11024 = vdwg.mxu0
        %11025 = vmatpush.bf16.msra.mxu0 %v8164
        %11026 = vmatpush.bf16.msra.mxu0 %v8162
        %11027 = vmatpush.bf16.msra.mxu0 %v8160
        %11028 = vmatpush.bf16.msra.mxu0 %v8158
        %11029 = vmatpush.bf16.msra.mxu0 %v8156
        %11030 = vmatpush.bf16.msra.mxu0 %v8154
        %11031 = vmatpush.bf16.msra.mxu0 %v8152
        %11032 = vmatpush.bf16.msra.mxu0 %v8150
        %11033 = vmatmul.bf16.gmra.mxu0 %v1939
        %v11034 = vpop.f32.mrf.mxu0
        %v11035 = vadd.f32 %v11022, %v11034
        %v11036 = vpop.f32.mrf.mxu0
        %11037 = vdwg.mxu0
        %11038 = vmatpush.bf16.msra.mxu0 %v8180
        %11039 = vmatpush.bf16.msra.mxu0 %v8178
        %11040 = vmatpush.bf16.msra.mxu0 %v8176
        %11041 = vmatpush.bf16.msra.mxu0 %v8174
        %11042 = vmatpush.bf16.msra.mxu0 %v8172
        %11043 = vmatpush.bf16.msra.mxu0 %v8170
        %11044 = vmatpush.bf16.msra.mxu0 %v8168
        %11045 = vmatpush.bf16.msra.mxu0 %v8166
        %11046 = vmatmul.bf16.gmra.mxu0 %v1944
        %v11047 = vpop.f32.mrf.mxu0
        %v11048 = vadd.f32 %v11035, %v11047
        %v11049 = vpop.f32.mrf.mxu0
        %11050 = vdwg.mxu0
        %11051 = vmatpush.bf16.msra.mxu0 %v8196
        %11052 = vmatpush.bf16.msra.mxu0 %v8194
        %11053 = vmatpush.bf16.msra.mxu0 %v8192
        %11054 = vmatpush.bf16.msra.mxu0 %v8190
        %11055 = vmatpush.bf16.msra.mxu0 %v8188
        %11056 = vmatpush.bf16.msra.mxu0 %v8186
        %11057 = vmatpush.bf16.msra.mxu0 %v8184
        %11058 = vmatpush.bf16.msra.mxu0 %v8182
        %11059 = vmatmul.bf16.gmra.mxu0 %v1945
        %v11060 = vpop.f32.mrf.mxu0
        %v11061 = vadd.f32 %v11048, %v11060
        %v11062 = vpop.f32.mrf.mxu0
        %11063 = vdwg.mxu0
        %11064 = vmatpush.bf16.msra.mxu0 %v8212
        %11065 = vmatpush.bf16.msra.mxu0 %v8210
        %11066 = vmatpush.bf16.msra.mxu0 %v8208
        %11067 = vmatpush.bf16.msra.mxu0 %v8206
        %11068 = vmatpush.bf16.msra.mxu0 %v8204
        %11069 = vmatpush.bf16.msra.mxu0 %v8202
        %11070 = vmatpush.bf16.msra.mxu0 %v8200
        %11071 = vmatpush.bf16.msra.mxu0 %v8198
        %11072 = vmatmul.bf16.gmra.mxu0 %v1946
        %v11073 = vpop.f32.mrf.mxu0
        %v11074 = vadd.f32 %v11061, %v11073
        %v11075 = vpop.f32.mrf.mxu0
        %11076 = vdwg.mxu0
        %11077 = vmatpush.bf16.msra.mxu0 %v8228
        %11078 = vmatpush.bf16.msra.mxu0 %v8226
        %11079 = vmatpush.bf16.msra.mxu0 %v8224
        %11080 = vmatpush.bf16.msra.mxu0 %v8222
        %11081 = vmatpush.bf16.msra.mxu0 %v8220
        %11082 = vmatpush.bf16.msra.mxu0 %v8218
        %11083 = vmatpush.bf16.msra.mxu0 %v8216
        %11084 = vmatpush.bf16.msra.mxu0 %v8214
        %11085 = vmatmul.bf16.gmra.mxu0 %v1947
        %v11086 = vpop.f32.mrf.mxu0
        %v11087 = vadd.f32 %v11074, %v11086
        %v11088 = vpop.f32.mrf.mxu0
        %11089 = vdwg.mxu0
        %11090 = vmatpush.bf16.msra.mxu0 %v8244
        %11091 = vmatpush.bf16.msra.mxu0 %v8242
        %11092 = vmatpush.bf16.msra.mxu0 %v8240
        %11093 = vmatpush.bf16.msra.mxu0 %v8238
        %11094 = vmatpush.bf16.msra.mxu0 %v8236
        %11095 = vmatpush.bf16.msra.mxu0 %v8234
        %11096 = vmatpush.bf16.msra.mxu0 %v8232
        %11097 = vmatpush.bf16.msra.mxu0 %v8230
        %11098 = vmatmul.bf16.gmra.mxu0 %v1948
        %v11099 = vpop.f32.mrf.mxu0
        %v11100 = vadd.f32 %v11087, %v11099
        %v11101 = vpop.f32.mrf.mxu0
        %11102 = vdwg.mxu0
        %11103 = vmatpush.bf16.msra.mxu0 %v8260
        %11104 = vmatpush.bf16.msra.mxu0 %v8258
        %11105 = vmatpush.bf16.msra.mxu0 %v8256
        %11106 = vmatpush.bf16.msra.mxu0 %v8254
        %11107 = vmatpush.bf16.msra.mxu0 %v8252
        %11108 = vmatpush.bf16.msra.mxu0 %v8250
        %11109 = vmatpush.bf16.msra.mxu0 %v8248
        %11110 = vmatpush.bf16.msra.mxu0 %v8246
        %11111 = vmatmul.bf16.gmra.mxu0 %v1949
        %v11112 = vpop.f32.mrf.mxu0
        %v11113 = vadd.f32 %v11100, %v11112
        %v11114 = vpop.f32.mrf.mxu0
        %11115 = vdwg.mxu0
        %11116 = vmatpush.bf16.msra.mxu0 %v8276
        %11117 = vmatpush.bf16.msra.mxu0 %v8274
        %11118 = vmatpush.bf16.msra.mxu0 %v8272
        %11119 = vmatpush.bf16.msra.mxu0 %v8270
        %11120 = vmatpush.bf16.msra.mxu0 %v8268
        %11121 = vmatpush.bf16.msra.mxu0 %v8266
        %11122 = vmatpush.bf16.msra.mxu0 %v8264
        %11123 = vmatpush.bf16.msra.mxu0 %v8262
        %11124 = vmatmul.bf16.gmra.mxu0 %v1950
        %v11125 = vpop.f32.mrf.mxu0
        %v11126 = vadd.f32 %v11113, %v11125
        %v11127 = vpop.f32.mrf.mxu0
        %11128 = vdwg.mxu0
        %11129 = vmatpush.bf16.msra.mxu0 %v8292
        %11130 = vmatpush.bf16.msra.mxu0 %v8290
        %11131 = vmatpush.bf16.msra.mxu0 %v8288
        %11132 = vmatpush.bf16.msra.mxu0 %v8286
        %11133 = vmatpush.bf16.msra.mxu0 %v8284
        %11134 = vmatpush.bf16.msra.mxu0 %v8282
        %11135 = vmatpush.bf16.msra.mxu0 %v8280
        %11136 = vmatpush.bf16.msra.mxu0 %v8278
        %11137 = vmatmul.bf16.gmra.mxu0 %v1951
        %v11138 = vpop.f32.mrf.mxu0
        %v11139 = vadd.f32 %v11126, %v11138
        %v11140 = vpop.f32.mrf.mxu0
        %11141 = vdwg.mxu0
        %11142 = vmatpush.bf16.msra.mxu0 %v8308
        %11143 = vmatpush.bf16.msra.mxu0 %v8306
        %11144 = vmatpush.bf16.msra.mxu0 %v8304
        %11145 = vmatpush.bf16.msra.mxu0 %v8302
        %11146 = vmatpush.bf16.msra.mxu0 %v8300
        %11147 = vmatpush.bf16.msra.mxu0 %v8298
        %11148 = vmatpush.bf16.msra.mxu0 %v8296
        %11149 = vmatpush.bf16.msra.mxu0 %v8294
        %11150 = vmatmul.bf16.gmra.mxu0 %v1954
        %v11151 = vpop.f32.mrf.mxu0
        %v11152 = vadd.f32 %v11139, %v11151
        %v11153 = vpop.f32.mrf.mxu0
        %11154 = vdwg.mxu0
        %11155 = vmatpush.bf16.msra.mxu0 %v8324
        %11156 = vmatpush.bf16.msra.mxu0 %v8322
        %11157 = vmatpush.bf16.msra.mxu0 %v8320
        %11158 = vmatpush.bf16.msra.mxu0 %v8318
        %11159 = vmatpush.bf16.msra.mxu0 %v8316
        %11160 = vmatpush.bf16.msra.mxu0 %v8314
        %11161 = vmatpush.bf16.msra.mxu0 %v8312
        %11162 = vmatpush.bf16.msra.mxu0 %v8310
        %11163 = vmatmul.bf16.gmra.mxu0 %v1955
        %v11164 = vpop.f32.mrf.mxu0
        %v11165 = vadd.f32 %v11152, %v11164
        %v11166 = vpop.f32.mrf.mxu0
        %11167 = vdwg.mxu0
        %11168 = vmatpush.bf16.msra.mxu0 %v6773
        %11169 = vmatpush.bf16.msra.mxu0 %v6771
        %11170 = vmatpush.bf16.msra.mxu0 %v6769
        %11171 = vmatpush.bf16.msra.mxu0 %v6767
        %11172 = vmatpush.bf16.msra.mxu0 %v6765
        %11173 = vmatpush.bf16.msra.mxu0 %v6763
        %11174 = vmatpush.bf16.msra.mxu0 %v6761
        %11175 = vmatpush.bf16.msra.mxu0 %v6759
        %11176 = vmatmul.bf16.gmra.mxu0 %v1812
        %v11177 = vpop.f32.mrf.mxu0
        %v11178 = vadd.f32 0.0, %v11177
        %v11179 = vpop.f32.mrf.mxu0
        %11180 = vdwg.mxu0
        %11181 = vmatpush.bf16.msra.mxu0 %v6789
        %11182 = vmatpush.bf16.msra.mxu0 %v6787
        %11183 = vmatpush.bf16.msra.mxu0 %v6785
        %11184 = vmatpush.bf16.msra.mxu0 %v6783
        %11185 = vmatpush.bf16.msra.mxu0 %v6781
        %11186 = vmatpush.bf16.msra.mxu0 %v6779
        %11187 = vmatpush.bf16.msra.mxu0 %v6777
        %11188 = vmatpush.bf16.msra.mxu0 %v6775
        %11189 = vmatmul.bf16.gmra.mxu0 %v1813
        %v11190 = vpop.f32.mrf.mxu0
        %v11191 = vadd.f32 %v11178, %v11190
        %v11192 = vpop.f32.mrf.mxu0
        %11193 = vdwg.mxu0
        %11194 = vmatpush.bf16.msra.mxu0 %v6805
        %11195 = vmatpush.bf16.msra.mxu0 %v6803
        %11196 = vmatpush.bf16.msra.mxu0 %v6801
        %11197 = vmatpush.bf16.msra.mxu0 %v6799
        %11198 = vmatpush.bf16.msra.mxu0 %v6797
        %11199 = vmatpush.bf16.msra.mxu0 %v6795
        %11200 = vmatpush.bf16.msra.mxu0 %v6793
        %11201 = vmatpush.bf16.msra.mxu0 %v6791
        %11202 = vmatmul.bf16.gmra.mxu0 %v1814
        %v11203 = vpop.f32.mrf.mxu0
        %v11204 = vadd.f32 %v11191, %v11203
        %v11205 = vpop.f32.mrf.mxu0
        %11206 = vdwg.mxu0
        %11207 = vmatpush.bf16.msra.mxu0 %v6821
        %11208 = vmatpush.bf16.msra.mxu0 %v6819
        %11209 = vmatpush.bf16.msra.mxu0 %v6817
        %11210 = vmatpush.bf16.msra.mxu0 %v6815
        %11211 = vmatpush.bf16.msra.mxu0 %v6813
        %11212 = vmatpush.bf16.msra.mxu0 %v6811
        %11213 = vmatpush.bf16.msra.mxu0 %v6809
        %11214 = vmatpush.bf16.msra.mxu0 %v6807
        %11215 = vmatmul.bf16.gmra.mxu0 %v1815
        %v11216 = vpop.f32.mrf.mxu0
        %v11217 = vadd.f32 %v11204, %v11216
        %v11218 = vpop.f32.mrf.mxu0
        %11219 = vdwg.mxu0
        %11220 = vmatpush.bf16.msra.mxu0 %v6837
        %11221 = vmatpush.bf16.msra.mxu0 %v6835
        %11222 = vmatpush.bf16.msra.mxu0 %v6833
        %11223 = vmatpush.bf16.msra.mxu0 %v6831
        %11224 = vmatpush.bf16.msra.mxu0 %v6829
        %11225 = vmatpush.bf16.msra.mxu0 %v6827
        %11226 = vmatpush.bf16.msra.mxu0 %v6825
        %11227 = vmatpush.bf16.msra.mxu0 %v6823
        %11228 = vmatmul.bf16.gmra.mxu0 %v1816
        %v11229 = vpop.f32.mrf.mxu0
        %v11230 = vadd.f32 %v11217, %v11229
        %v11231 = vpop.f32.mrf.mxu0
        %11232 = vdwg.mxu0
        %11233 = vmatpush.bf16.msra.mxu0 %v6853
        %11234 = vmatpush.bf16.msra.mxu0 %v6851
        %11235 = vmatpush.bf16.msra.mxu0 %v6849
        %11236 = vmatpush.bf16.msra.mxu0 %v6847
        %11237 = vmatpush.bf16.msra.mxu0 %v6845
        %11238 = vmatpush.bf16.msra.mxu0 %v6843
        %11239 = vmatpush.bf16.msra.mxu0 %v6841
        %11240 = vmatpush.bf16.msra.mxu0 %v6839
        %11241 = vmatmul.bf16.gmra.mxu0 %v1817
        %v11242 = vpop.f32.mrf.mxu0
        %v11243 = vadd.f32 %v11230, %v11242
        %v11244 = vpop.f32.mrf.mxu0
        %11245 = vdwg.mxu0
        %11246 = vmatpush.bf16.msra.mxu0 %v6869
        %11247 = vmatpush.bf16.msra.mxu0 %v6867
        %11248 = vmatpush.bf16.msra.mxu0 %v6865
        %11249 = vmatpush.bf16.msra.mxu0 %v6863
        %11250 = vmatpush.bf16.msra.mxu0 %v6861
        %11251 = vmatpush.bf16.msra.mxu0 %v6859
        %11252 = vmatpush.bf16.msra.mxu0 %v6857
        %11253 = vmatpush.bf16.msra.mxu0 %v6855
        %11254 = vmatmul.bf16.gmra.mxu0 %v1818
        %v11255 = vpop.f32.mrf.mxu0
        %v11256 = vadd.f32 %v11243, %v11255
        %v11257 = vpop.f32.mrf.mxu0
        %11258 = vdwg.mxu0
        %11259 = vmatpush.bf16.msra.mxu0 %v6885
        %11260 = vmatpush.bf16.msra.mxu0 %v6883
        %11261 = vmatpush.bf16.msra.mxu0 %v6881
        %11262 = vmatpush.bf16.msra.mxu0 %v6879
        %11263 = vmatpush.bf16.msra.mxu0 %v6877
        %11264 = vmatpush.bf16.msra.mxu0 %v6875
        %11265 = vmatpush.bf16.msra.mxu0 %v6873
        %11266 = vmatpush.bf16.msra.mxu0 %v6871
        %11267 = vmatmul.bf16.gmra.mxu0 %v1819
        %v11268 = vpop.f32.mrf.mxu0
        %v11269 = vadd.f32 %v11256, %v11268
        %v11270 = vpop.f32.mrf.mxu0
        %11271 = vdwg.mxu0
        %11272 = vmatpush.bf16.msra.mxu0 %v6901
        %11273 = vmatpush.bf16.msra.mxu0 %v6899
        %11274 = vmatpush.bf16.msra.mxu0 %v6897
        %11275 = vmatpush.bf16.msra.mxu0 %v6895
        %11276 = vmatpush.bf16.msra.mxu0 %v6893
        %11277 = vmatpush.bf16.msra.mxu0 %v6891
        %11278 = vmatpush.bf16.msra.mxu0 %v6889
        %11279 = vmatpush.bf16.msra.mxu0 %v6887
        %11280 = vmatmul.bf16.gmra.mxu0 %v1824
        %v11281 = vpop.f32.mrf.mxu0
        %v11282 = vadd.f32 %v11269, %v11281
        %v11283 = vpop.f32.mrf.mxu0
        %11284 = vdwg.mxu0
        %11285 = vmatpush.bf16.msra.mxu0 %v6917
        %11286 = vmatpush.bf16.msra.mxu0 %v6915
        %11287 = vmatpush.bf16.msra.mxu0 %v6913
        %11288 = vmatpush.bf16.msra.mxu0 %v6911
        %11289 = vmatpush.bf16.msra.mxu0 %v6909
        %11290 = vmatpush.bf16.msra.mxu0 %v6907
        %11291 = vmatpush.bf16.msra.mxu0 %v6905
        %11292 = vmatpush.bf16.msra.mxu0 %v6903
        %11293 = vmatmul.bf16.gmra.mxu0 %v1825
        %v11294 = vpop.f32.mrf.mxu0
        %v11295 = vadd.f32 %v11282, %v11294
        %v11296 = vpop.f32.mrf.mxu0
        %11297 = vdwg.mxu0
        %11298 = vmatpush.bf16.msra.mxu0 %v6933
        %11299 = vmatpush.bf16.msra.mxu0 %v6931
        %11300 = vmatpush.bf16.msra.mxu0 %v6929
        %11301 = vmatpush.bf16.msra.mxu0 %v6927
        %11302 = vmatpush.bf16.msra.mxu0 %v6925
        %11303 = vmatpush.bf16.msra.mxu0 %v6923
        %11304 = vmatpush.bf16.msra.mxu0 %v6921
        %11305 = vmatpush.bf16.msra.mxu0 %v6919
        %11306 = vmatmul.bf16.gmra.mxu0 %v1826
        %v11307 = vpop.f32.mrf.mxu0
        %v11308 = vadd.f32 %v11295, %v11307
        %v11309 = vpop.f32.mrf.mxu0
        %11310 = vdwg.mxu0
        %11311 = vmatpush.bf16.msra.mxu0 %v6949
        %11312 = vmatpush.bf16.msra.mxu0 %v6947
        %11313 = vmatpush.bf16.msra.mxu0 %v6945
        %11314 = vmatpush.bf16.msra.mxu0 %v6943
        %11315 = vmatpush.bf16.msra.mxu0 %v6941
        %11316 = vmatpush.bf16.msra.mxu0 %v6939
        %11317 = vmatpush.bf16.msra.mxu0 %v6937
        %11318 = vmatpush.bf16.msra.mxu0 %v6935
        %11319 = vmatmul.bf16.gmra.mxu0 %v1827
        %v11320 = vpop.f32.mrf.mxu0
        %v11321 = vadd.f32 %v11308, %v11320
        %v11322 = vpop.f32.mrf.mxu0
        %11323 = vdwg.mxu0
        %11324 = vmatpush.bf16.msra.mxu0 %v6965
        %11325 = vmatpush.bf16.msra.mxu0 %v6963
        %11326 = vmatpush.bf16.msra.mxu0 %v6961
        %11327 = vmatpush.bf16.msra.mxu0 %v6959
        %11328 = vmatpush.bf16.msra.mxu0 %v6957
        %11329 = vmatpush.bf16.msra.mxu0 %v6955
        %11330 = vmatpush.bf16.msra.mxu0 %v6953
        %11331 = vmatpush.bf16.msra.mxu0 %v6951
        %11332 = vmatmul.bf16.gmra.mxu0 %v1828
        %v11333 = vpop.f32.mrf.mxu0
        %v11334 = vadd.f32 %v11321, %v11333
        %v11335 = vpop.f32.mrf.mxu0
        %11336 = vdwg.mxu0
        %11337 = vmatpush.bf16.msra.mxu0 %v6981
        %11338 = vmatpush.bf16.msra.mxu0 %v6979
        %11339 = vmatpush.bf16.msra.mxu0 %v6977
        %11340 = vmatpush.bf16.msra.mxu0 %v6975
        %11341 = vmatpush.bf16.msra.mxu0 %v6973
        %11342 = vmatpush.bf16.msra.mxu0 %v6971
        %11343 = vmatpush.bf16.msra.mxu0 %v6969
        %11344 = vmatpush.bf16.msra.mxu0 %v6967
        %11345 = vmatmul.bf16.gmra.mxu0 %v1829
        %v11346 = vpop.f32.mrf.mxu0
        %v11347 = vadd.f32 %v11334, %v11346
        %v11348 = vpop.f32.mrf.mxu0
        %11349 = vdwg.mxu0
        %11350 = vmatpush.bf16.msra.mxu0 %v6997
        %11351 = vmatpush.bf16.msra.mxu0 %v6995
        %11352 = vmatpush.bf16.msra.mxu0 %v6993
        %11353 = vmatpush.bf16.msra.mxu0 %v6991
        %11354 = vmatpush.bf16.msra.mxu0 %v6989
        %11355 = vmatpush.bf16.msra.mxu0 %v6987
        %11356 = vmatpush.bf16.msra.mxu0 %v6985
        %11357 = vmatpush.bf16.msra.mxu0 %v6983
        %11358 = vmatmul.bf16.gmra.mxu0 %v1830
        %v11359 = vpop.f32.mrf.mxu0
        %v11360 = vadd.f32 %v11347, %v11359
        %v11361 = vpop.f32.mrf.mxu0
        %11362 = vdwg.mxu0
        %11363 = vmatpush.bf16.msra.mxu0 %v7013
        %11364 = vmatpush.bf16.msra.mxu0 %v7011
        %11365 = vmatpush.bf16.msra.mxu0 %v7009
        %11366 = vmatpush.bf16.msra.mxu0 %v7007
        %11367 = vmatpush.bf16.msra.mxu0 %v7005
        %11368 = vmatpush.bf16.msra.mxu0 %v7003
        %11369 = vmatpush.bf16.msra.mxu0 %v7001
        %11370 = vmatpush.bf16.msra.mxu0 %v6999
        %11371 = vmatmul.bf16.gmra.mxu0 %v1831
        %v11372 = vpop.f32.mrf.mxu0
        %v11373 = vadd.f32 %v11360, %v11372
        %v11374 = vpop.f32.mrf.mxu0
        %11375 = vdwg.mxu0
        %11376 = vmatpush.bf16.msra.mxu0 %v7029
        %11377 = vmatpush.bf16.msra.mxu0 %v7027
        %11378 = vmatpush.bf16.msra.mxu0 %v7025
        %11379 = vmatpush.bf16.msra.mxu0 %v7023
        %11380 = vmatpush.bf16.msra.mxu0 %v7021
        %11381 = vmatpush.bf16.msra.mxu0 %v7019
        %11382 = vmatpush.bf16.msra.mxu0 %v7017
        %11383 = vmatpush.bf16.msra.mxu0 %v7015
        %11384 = vmatmul.bf16.gmra.mxu0 %v1836
        %v11385 = vpop.f32.mrf.mxu0
        %v11386 = vadd.f32 %v11373, %v11385
        %v11387 = vpop.f32.mrf.mxu0
        %11388 = vdwg.mxu0
        %11389 = vmatpush.bf16.msra.mxu0 %v7045
        %11390 = vmatpush.bf16.msra.mxu0 %v7043
        %11391 = vmatpush.bf16.msra.mxu0 %v7041
        %11392 = vmatpush.bf16.msra.mxu0 %v7039
        %11393 = vmatpush.bf16.msra.mxu0 %v7037
        %11394 = vmatpush.bf16.msra.mxu0 %v7035
        %11395 = vmatpush.bf16.msra.mxu0 %v7033
        %11396 = vmatpush.bf16.msra.mxu0 %v7031
        %11397 = vmatmul.bf16.gmra.mxu0 %v1837
        %v11398 = vpop.f32.mrf.mxu0
        %v11399 = vadd.f32 %v11386, %v11398
        %v11400 = vpop.f32.mrf.mxu0
        %11401 = vdwg.mxu0
        %11402 = vmatpush.bf16.msra.mxu0 %v7061
        %11403 = vmatpush.bf16.msra.mxu0 %v7059
        %11404 = vmatpush.bf16.msra.mxu0 %v7057
        %11405 = vmatpush.bf16.msra.mxu0 %v7055
        %11406 = vmatpush.bf16.msra.mxu0 %v7053
        %11407 = vmatpush.bf16.msra.mxu0 %v7051
        %11408 = vmatpush.bf16.msra.mxu0 %v7049
        %11409 = vmatpush.bf16.msra.mxu0 %v7047
        %11410 = vmatmul.bf16.gmra.mxu0 %v1838
        %v11411 = vpop.f32.mrf.mxu0
        %v11412 = vadd.f32 %v11399, %v11411
        %v11413 = vpop.f32.mrf.mxu0
        %11414 = vdwg.mxu0
        %11415 = vmatpush.bf16.msra.mxu0 %v7077
        %11416 = vmatpush.bf16.msra.mxu0 %v7075
        %11417 = vmatpush.bf16.msra.mxu0 %v7073
        %11418 = vmatpush.bf16.msra.mxu0 %v7071
        %11419 = vmatpush.bf16.msra.mxu0 %v7069
        %11420 = vmatpush.bf16.msra.mxu0 %v7067
        %11421 = vmatpush.bf16.msra.mxu0 %v7065
        %11422 = vmatpush.bf16.msra.mxu0 %v7063
        %11423 = vmatmul.bf16.gmra.mxu0 %v1839
        %v11424 = vpop.f32.mrf.mxu0
        %v11425 = vadd.f32 %v11412, %v11424
        %v11426 = vpop.f32.mrf.mxu0
        %11427 = vdwg.mxu0
        %11428 = vmatpush.bf16.msra.mxu0 %v7093
        %11429 = vmatpush.bf16.msra.mxu0 %v7091
        %11430 = vmatpush.bf16.msra.mxu0 %v7089
        %11431 = vmatpush.bf16.msra.mxu0 %v7087
        %11432 = vmatpush.bf16.msra.mxu0 %v7085
        %11433 = vmatpush.bf16.msra.mxu0 %v7083
        %11434 = vmatpush.bf16.msra.mxu0 %v7081
        %11435 = vmatpush.bf16.msra.mxu0 %v7079
        %11436 = vmatmul.bf16.gmra.mxu0 %v1840
        %v11437 = vpop.f32.mrf.mxu0
        %v11438 = vadd.f32 %v11425, %v11437
        %v11439 = vpop.f32.mrf.mxu0
        %11440 = vdwg.mxu0
        %11441 = vmatpush.bf16.msra.mxu0 %v7109
        %11442 = vmatpush.bf16.msra.mxu0 %v7107
        %11443 = vmatpush.bf16.msra.mxu0 %v7105
        %11444 = vmatpush.bf16.msra.mxu0 %v7103
        %11445 = vmatpush.bf16.msra.mxu0 %v7101
        %11446 = vmatpush.bf16.msra.mxu0 %v7099
        %11447 = vmatpush.bf16.msra.mxu0 %v7097
        %11448 = vmatpush.bf16.msra.mxu0 %v7095
        %11449 = vmatmul.bf16.gmra.mxu0 %v1841
        %v11450 = vpop.f32.mrf.mxu0
        %v11451 = vadd.f32 %v11438, %v11450
        %v11452 = vpop.f32.mrf.mxu0
        %11453 = vdwg.mxu0
        %11454 = vmatpush.bf16.msra.mxu0 %v7125
        %11455 = vmatpush.bf16.msra.mxu0 %v7123
        %11456 = vmatpush.bf16.msra.mxu0 %v7121
        %11457 = vmatpush.bf16.msra.mxu0 %v7119
        %11458 = vmatpush.bf16.msra.mxu0 %v7117
        %11459 = vmatpush.bf16.msra.mxu0 %v7115
        %11460 = vmatpush.bf16.msra.mxu0 %v7113
        %11461 = vmatpush.bf16.msra.mxu0 %v7111
        %11462 = vmatmul.bf16.gmra.mxu0 %v1842
        %v11463 = vpop.f32.mrf.mxu0
        %v11464 = vadd.f32 %v11451, %v11463
        %v11465 = vpop.f32.mrf.mxu0
        %11466 = vdwg.mxu0
        %11467 = vmatpush.bf16.msra.mxu0 %v7141
        %11468 = vmatpush.bf16.msra.mxu0 %v7139
        %11469 = vmatpush.bf16.msra.mxu0 %v7137
        %11470 = vmatpush.bf16.msra.mxu0 %v7135
        %11471 = vmatpush.bf16.msra.mxu0 %v7133
        %11472 = vmatpush.bf16.msra.mxu0 %v7131
        %11473 = vmatpush.bf16.msra.mxu0 %v7129
        %11474 = vmatpush.bf16.msra.mxu0 %v7127
        %11475 = vmatmul.bf16.gmra.mxu0 %v1843
        %v11476 = vpop.f32.mrf.mxu0
        %v11477 = vadd.f32 %v11464, %v11476
        %v11478 = vpop.f32.mrf.mxu0
        %11479 = vdwg.mxu0
        %11480 = vmatpush.bf16.msra.mxu0 %v7157
        %11481 = vmatpush.bf16.msra.mxu0 %v7155
        %11482 = vmatpush.bf16.msra.mxu0 %v7153
        %11483 = vmatpush.bf16.msra.mxu0 %v7151
        %11484 = vmatpush.bf16.msra.mxu0 %v7149
        %11485 = vmatpush.bf16.msra.mxu0 %v7147
        %11486 = vmatpush.bf16.msra.mxu0 %v7145
        %11487 = vmatpush.bf16.msra.mxu0 %v7143
        %11488 = vmatmul.bf16.gmra.mxu0 %v1848
        %v11489 = vpop.f32.mrf.mxu0
        %v11490 = vadd.f32 %v11477, %v11489
        %v11491 = vpop.f32.mrf.mxu0
        %11492 = vdwg.mxu0
        %11493 = vmatpush.bf16.msra.mxu0 %v7173
        %11494 = vmatpush.bf16.msra.mxu0 %v7171
        %11495 = vmatpush.bf16.msra.mxu0 %v7169
        %11496 = vmatpush.bf16.msra.mxu0 %v7167
        %11497 = vmatpush.bf16.msra.mxu0 %v7165
        %11498 = vmatpush.bf16.msra.mxu0 %v7163
        %11499 = vmatpush.bf16.msra.mxu0 %v7161
        %11500 = vmatpush.bf16.msra.mxu0 %v7159
        %11501 = vmatmul.bf16.gmra.mxu0 %v1849
        %v11502 = vpop.f32.mrf.mxu0
        %v11503 = vadd.f32 %v11490, %v11502
        %v11504 = vpop.f32.mrf.mxu0
        %11505 = vdwg.mxu0
        %11506 = vmatpush.bf16.msra.mxu0 %v7189
        %11507 = vmatpush.bf16.msra.mxu0 %v7187
        %11508 = vmatpush.bf16.msra.mxu0 %v7185
        %11509 = vmatpush.bf16.msra.mxu0 %v7183
        %11510 = vmatpush.bf16.msra.mxu0 %v7181
        %11511 = vmatpush.bf16.msra.mxu0 %v7179
        %11512 = vmatpush.bf16.msra.mxu0 %v7177
        %11513 = vmatpush.bf16.msra.mxu0 %v7175
        %11514 = vmatmul.bf16.gmra.mxu0 %v1850
        %v11515 = vpop.f32.mrf.mxu0
        %v11516 = vadd.f32 %v11503, %v11515
        %v11517 = vpop.f32.mrf.mxu0
        %11518 = vdwg.mxu0
        %11519 = vmatpush.bf16.msra.mxu0 %v7205
        %11520 = vmatpush.bf16.msra.mxu0 %v7203
        %11521 = vmatpush.bf16.msra.mxu0 %v7201
        %11522 = vmatpush.bf16.msra.mxu0 %v7199
        %11523 = vmatpush.bf16.msra.mxu0 %v7197
        %11524 = vmatpush.bf16.msra.mxu0 %v7195
        %11525 = vmatpush.bf16.msra.mxu0 %v7193
        %11526 = vmatpush.bf16.msra.mxu0 %v7191
        %11527 = vmatmul.bf16.gmra.mxu0 %v1851
        %v11528 = vpop.f32.mrf.mxu0
        %v11529 = vadd.f32 %v11516, %v11528
        %v11530 = vpop.f32.mrf.mxu0
        %11531 = vdwg.mxu0
        %11532 = vmatpush.bf16.msra.mxu0 %v7221
        %11533 = vmatpush.bf16.msra.mxu0 %v7219
        %11534 = vmatpush.bf16.msra.mxu0 %v7217
        %11535 = vmatpush.bf16.msra.mxu0 %v7215
        %11536 = vmatpush.bf16.msra.mxu0 %v7213
        %11537 = vmatpush.bf16.msra.mxu0 %v7211
        %11538 = vmatpush.bf16.msra.mxu0 %v7209
        %11539 = vmatpush.bf16.msra.mxu0 %v7207
        %11540 = vmatmul.bf16.gmra.mxu0 %v1852
        %v11541 = vpop.f32.mrf.mxu0
        %v11542 = vadd.f32 %v11529, %v11541
        %v11543 = vpop.f32.mrf.mxu0
        %11544 = vdwg.mxu0
        %11545 = vmatpush.bf16.msra.mxu0 %v7237
        %11546 = vmatpush.bf16.msra.mxu0 %v7235
        %11547 = vmatpush.bf16.msra.mxu0 %v7233
        %11548 = vmatpush.bf16.msra.mxu0 %v7231
        %11549 = vmatpush.bf16.msra.mxu0 %v7229
        %11550 = vmatpush.bf16.msra.mxu0 %v7227
        %11551 = vmatpush.bf16.msra.mxu0 %v7225
        %11552 = vmatpush.bf16.msra.mxu0 %v7223
        %11553 = vmatmul.bf16.gmra.mxu0 %v1853
        %v11554 = vpop.f32.mrf.mxu0
        %v11555 = vadd.f32 %v11542, %v11554
        %v11556 = vpop.f32.mrf.mxu0
        %11557 = vdwg.mxu0
        %11558 = vmatpush.bf16.msra.mxu0 %v7253
        %11559 = vmatpush.bf16.msra.mxu0 %v7251
        %11560 = vmatpush.bf16.msra.mxu0 %v7249
        %11561 = vmatpush.bf16.msra.mxu0 %v7247
        %11562 = vmatpush.bf16.msra.mxu0 %v7245
        %11563 = vmatpush.bf16.msra.mxu0 %v7243
        %11564 = vmatpush.bf16.msra.mxu0 %v7241
        %11565 = vmatpush.bf16.msra.mxu0 %v7239
        %11566 = vmatmul.bf16.gmra.mxu0 %v1854
        %v11567 = vpop.f32.mrf.mxu0
        %v11568 = vadd.f32 %v11555, %v11567
        %v11569 = vpop.f32.mrf.mxu0
        %11570 = vdwg.mxu0
        %11571 = vmatpush.bf16.msra.mxu0 %v7269
        %11572 = vmatpush.bf16.msra.mxu0 %v7267
        %11573 = vmatpush.bf16.msra.mxu0 %v7265
        %11574 = vmatpush.bf16.msra.mxu0 %v7263
        %11575 = vmatpush.bf16.msra.mxu0 %v7261
        %11576 = vmatpush.bf16.msra.mxu0 %v7259
        %11577 = vmatpush.bf16.msra.mxu0 %v7257
        %11578 = vmatpush.bf16.msra.mxu0 %v7255
        %11579 = vmatmul.bf16.gmra.mxu0 %v1855
        %v11580 = vpop.f32.mrf.mxu0
        %v11581 = vadd.f32 %v11568, %v11580
        %v11582 = vpop.f32.mrf.mxu0
        %11583 = vdwg.mxu0
        %11584 = vmatpush.bf16.msra.mxu0 %v7285
        %11585 = vmatpush.bf16.msra.mxu0 %v7283
        %11586 = vmatpush.bf16.msra.mxu0 %v7281
        %11587 = vmatpush.bf16.msra.mxu0 %v7279
        %11588 = vmatpush.bf16.msra.mxu0 %v7277
        %11589 = vmatpush.bf16.msra.mxu0 %v7275
        %11590 = vmatpush.bf16.msra.mxu0 %v7273
        %11591 = vmatpush.bf16.msra.mxu0 %v7271
        %11592 = vmatmul.bf16.gmra.mxu0 %v1860
        %v11593 = vpop.f32.mrf.mxu0
        %v11594 = vadd.f32 %v11581, %v11593
        %v11595 = vpop.f32.mrf.mxu0
        %11596 = vdwg.mxu0
        %11597 = vmatpush.bf16.msra.mxu0 %v7301
        %11598 = vmatpush.bf16.msra.mxu0 %v7299
        %11599 = vmatpush.bf16.msra.mxu0 %v7297
        %11600 = vmatpush.bf16.msra.mxu0 %v7295
        %11601 = vmatpush.bf16.msra.mxu0 %v7293
        %11602 = vmatpush.bf16.msra.mxu0 %v7291
        %11603 = vmatpush.bf16.msra.mxu0 %v7289
        %11604 = vmatpush.bf16.msra.mxu0 %v7287
        %11605 = vmatmul.bf16.gmra.mxu0 %v1861
        %v11606 = vpop.f32.mrf.mxu0
        %v11607 = vadd.f32 %v11594, %v11606
        %v11608 = vpop.f32.mrf.mxu0
        %11609 = vdwg.mxu0
        %11610 = vmatpush.bf16.msra.mxu0 %v7317
        %11611 = vmatpush.bf16.msra.mxu0 %v7315
        %11612 = vmatpush.bf16.msra.mxu0 %v7313
        %11613 = vmatpush.bf16.msra.mxu0 %v7311
        %11614 = vmatpush.bf16.msra.mxu0 %v7309
        %11615 = vmatpush.bf16.msra.mxu0 %v7307
        %11616 = vmatpush.bf16.msra.mxu0 %v7305
        %11617 = vmatpush.bf16.msra.mxu0 %v7303
        %11618 = vmatmul.bf16.gmra.mxu0 %v1862
        %v11619 = vpop.f32.mrf.mxu0
        %v11620 = vadd.f32 %v11607, %v11619
        %v11621 = vpop.f32.mrf.mxu0
        %11622 = vdwg.mxu0
        %11623 = vmatpush.bf16.msra.mxu0 %v7333
        %11624 = vmatpush.bf16.msra.mxu0 %v7331
        %11625 = vmatpush.bf16.msra.mxu0 %v7329
        %11626 = vmatpush.bf16.msra.mxu0 %v7327
        %11627 = vmatpush.bf16.msra.mxu0 %v7325
        %11628 = vmatpush.bf16.msra.mxu0 %v7323
        %11629 = vmatpush.bf16.msra.mxu0 %v7321
        %11630 = vmatpush.bf16.msra.mxu0 %v7319
        %11631 = vmatmul.bf16.gmra.mxu0 %v1863
        %v11632 = vpop.f32.mrf.mxu0
        %v11633 = vadd.f32 %v11620, %v11632
        %v11634 = vpop.f32.mrf.mxu0
        %11635 = vdwg.mxu0
        %11636 = vmatpush.bf16.msra.mxu0 %v7349
        %11637 = vmatpush.bf16.msra.mxu0 %v7347
        %11638 = vmatpush.bf16.msra.mxu0 %v7345
        %11639 = vmatpush.bf16.msra.mxu0 %v7343
        %11640 = vmatpush.bf16.msra.mxu0 %v7341
        %11641 = vmatpush.bf16.msra.mxu0 %v7339
        %11642 = vmatpush.bf16.msra.mxu0 %v7337
        %11643 = vmatpush.bf16.msra.mxu0 %v7335
        %11644 = vmatmul.bf16.gmra.mxu0 %v1864
        %v11645 = vpop.f32.mrf.mxu0
        %v11646 = vadd.f32 %v11633, %v11645
        %v11647 = vpop.f32.mrf.mxu0
        %11648 = vdwg.mxu0
        %11649 = vmatpush.bf16.msra.mxu0 %v7365
        %11650 = vmatpush.bf16.msra.mxu0 %v7363
        %11651 = vmatpush.bf16.msra.mxu0 %v7361
        %11652 = vmatpush.bf16.msra.mxu0 %v7359
        %11653 = vmatpush.bf16.msra.mxu0 %v7357
        %11654 = vmatpush.bf16.msra.mxu0 %v7355
        %11655 = vmatpush.bf16.msra.mxu0 %v7353
        %11656 = vmatpush.bf16.msra.mxu0 %v7351
        %11657 = vmatmul.bf16.gmra.mxu0 %v1865
        %v11658 = vpop.f32.mrf.mxu0
        %v11659 = vadd.f32 %v11646, %v11658
        %v11660 = vpop.f32.mrf.mxu0
        %11661 = vdwg.mxu0
        %11662 = vmatpush.bf16.msra.mxu0 %v7381
        %11663 = vmatpush.bf16.msra.mxu0 %v7379
        %11664 = vmatpush.bf16.msra.mxu0 %v7377
        %11665 = vmatpush.bf16.msra.mxu0 %v7375
        %11666 = vmatpush.bf16.msra.mxu0 %v7373
        %11667 = vmatpush.bf16.msra.mxu0 %v7371
        %11668 = vmatpush.bf16.msra.mxu0 %v7369
        %11669 = vmatpush.bf16.msra.mxu0 %v7367
        %11670 = vmatmul.bf16.gmra.mxu0 %v1866
        %v11671 = vpop.f32.mrf.mxu0
        %v11672 = vadd.f32 %v11659, %v11671
        %v11673 = vpop.f32.mrf.mxu0
        %11674 = vdwg.mxu0
        %11675 = vmatpush.bf16.msra.mxu0 %v7397
        %11676 = vmatpush.bf16.msra.mxu0 %v7395
        %11677 = vmatpush.bf16.msra.mxu0 %v7393
        %11678 = vmatpush.bf16.msra.mxu0 %v7391
        %11679 = vmatpush.bf16.msra.mxu0 %v7389
        %11680 = vmatpush.bf16.msra.mxu0 %v7387
        %11681 = vmatpush.bf16.msra.mxu0 %v7385
        %11682 = vmatpush.bf16.msra.mxu0 %v7383
        %11683 = vmatmul.bf16.gmra.mxu0 %v1867
        %v11684 = vpop.f32.mrf.mxu0
        %v11685 = vadd.f32 %v11672, %v11684
        %v11686 = vpop.f32.mrf.mxu0
        %11687 = vdwg.mxu0
        %11688 = vmatpush.bf16.msra.mxu0 %v7413
        %11689 = vmatpush.bf16.msra.mxu0 %v7411
        %11690 = vmatpush.bf16.msra.mxu0 %v7409
        %11691 = vmatpush.bf16.msra.mxu0 %v7407
        %11692 = vmatpush.bf16.msra.mxu0 %v7405
        %11693 = vmatpush.bf16.msra.mxu0 %v7403
        %11694 = vmatpush.bf16.msra.mxu0 %v7401
        %11695 = vmatpush.bf16.msra.mxu0 %v7399
        %11696 = vmatmul.bf16.gmra.mxu0 %v1872
        %v11697 = vpop.f32.mrf.mxu0
        %v11698 = vadd.f32 %v11685, %v11697
        %v11699 = vpop.f32.mrf.mxu0
        %11700 = vdwg.mxu0
        %11701 = vmatpush.bf16.msra.mxu0 %v7429
        %11702 = vmatpush.bf16.msra.mxu0 %v7427
        %11703 = vmatpush.bf16.msra.mxu0 %v7425
        %11704 = vmatpush.bf16.msra.mxu0 %v7423
        %11705 = vmatpush.bf16.msra.mxu0 %v7421
        %11706 = vmatpush.bf16.msra.mxu0 %v7419
        %11707 = vmatpush.bf16.msra.mxu0 %v7417
        %11708 = vmatpush.bf16.msra.mxu0 %v7415
        %11709 = vmatmul.bf16.gmra.mxu0 %v1873
        %v11710 = vpop.f32.mrf.mxu0
        %v11711 = vadd.f32 %v11698, %v11710
        %v11712 = vpop.f32.mrf.mxu0
        %11713 = vdwg.mxu0
        %11714 = vmatpush.bf16.msra.mxu0 %v7445
        %11715 = vmatpush.bf16.msra.mxu0 %v7443
        %11716 = vmatpush.bf16.msra.mxu0 %v7441
        %11717 = vmatpush.bf16.msra.mxu0 %v7439
        %11718 = vmatpush.bf16.msra.mxu0 %v7437
        %11719 = vmatpush.bf16.msra.mxu0 %v7435
        %11720 = vmatpush.bf16.msra.mxu0 %v7433
        %11721 = vmatpush.bf16.msra.mxu0 %v7431
        %11722 = vmatmul.bf16.gmra.mxu0 %v1874
        %v11723 = vpop.f32.mrf.mxu0
        %v11724 = vadd.f32 %v11711, %v11723
        %v11725 = vpop.f32.mrf.mxu0
        %11726 = vdwg.mxu0
        %11727 = vmatpush.bf16.msra.mxu0 %v7461
        %11728 = vmatpush.bf16.msra.mxu0 %v7459
        %11729 = vmatpush.bf16.msra.mxu0 %v7457
        %11730 = vmatpush.bf16.msra.mxu0 %v7455
        %11731 = vmatpush.bf16.msra.mxu0 %v7453
        %11732 = vmatpush.bf16.msra.mxu0 %v7451
        %11733 = vmatpush.bf16.msra.mxu0 %v7449
        %11734 = vmatpush.bf16.msra.mxu0 %v7447
        %11735 = vmatmul.bf16.gmra.mxu0 %v1875
        %v11736 = vpop.f32.mrf.mxu0
        %v11737 = vadd.f32 %v11724, %v11736
        %v11738 = vpop.f32.mrf.mxu0
        %11739 = vdwg.mxu0
        %11740 = vmatpush.bf16.msra.mxu0 %v7477
        %11741 = vmatpush.bf16.msra.mxu0 %v7475
        %11742 = vmatpush.bf16.msra.mxu0 %v7473
        %11743 = vmatpush.bf16.msra.mxu0 %v7471
        %11744 = vmatpush.bf16.msra.mxu0 %v7469
        %11745 = vmatpush.bf16.msra.mxu0 %v7467
        %11746 = vmatpush.bf16.msra.mxu0 %v7465
        %11747 = vmatpush.bf16.msra.mxu0 %v7463
        %11748 = vmatmul.bf16.gmra.mxu0 %v1876
        %v11749 = vpop.f32.mrf.mxu0
        %v11750 = vadd.f32 %v11737, %v11749
        %v11751 = vpop.f32.mrf.mxu0
        %11752 = vdwg.mxu0
        %11753 = vmatpush.bf16.msra.mxu0 %v7493
        %11754 = vmatpush.bf16.msra.mxu0 %v7491
        %11755 = vmatpush.bf16.msra.mxu0 %v7489
        %11756 = vmatpush.bf16.msra.mxu0 %v7487
        %11757 = vmatpush.bf16.msra.mxu0 %v7485
        %11758 = vmatpush.bf16.msra.mxu0 %v7483
        %11759 = vmatpush.bf16.msra.mxu0 %v7481
        %11760 = vmatpush.bf16.msra.mxu0 %v7479
        %11761 = vmatmul.bf16.gmra.mxu0 %v1877
        %v11762 = vpop.f32.mrf.mxu0
        %v11763 = vadd.f32 %v11750, %v11762
        %v11764 = vpop.f32.mrf.mxu0
        %11765 = vdwg.mxu0
        %11766 = vmatpush.bf16.msra.mxu0 %v7509
        %11767 = vmatpush.bf16.msra.mxu0 %v7507
        %11768 = vmatpush.bf16.msra.mxu0 %v7505
        %11769 = vmatpush.bf16.msra.mxu0 %v7503
        %11770 = vmatpush.bf16.msra.mxu0 %v7501
        %11771 = vmatpush.bf16.msra.mxu0 %v7499
        %11772 = vmatpush.bf16.msra.mxu0 %v7497
        %11773 = vmatpush.bf16.msra.mxu0 %v7495
        %11774 = vmatmul.bf16.gmra.mxu0 %v1878
        %v11775 = vpop.f32.mrf.mxu0
        %v11776 = vadd.f32 %v11763, %v11775
        %v11777 = vpop.f32.mrf.mxu0
        %11778 = vdwg.mxu0
        %11779 = vmatpush.bf16.msra.mxu0 %v7525
        %11780 = vmatpush.bf16.msra.mxu0 %v7523
        %11781 = vmatpush.bf16.msra.mxu0 %v7521
        %11782 = vmatpush.bf16.msra.mxu0 %v7519
        %11783 = vmatpush.bf16.msra.mxu0 %v7517
        %11784 = vmatpush.bf16.msra.mxu0 %v7515
        %11785 = vmatpush.bf16.msra.mxu0 %v7513
        %11786 = vmatpush.bf16.msra.mxu0 %v7511
        %11787 = vmatmul.bf16.gmra.mxu0 %v1879
        %v11788 = vpop.f32.mrf.mxu0
        %v11789 = vadd.f32 %v11776, %v11788
        %v11790 = vpop.f32.mrf.mxu0
        %11791 = vdwg.mxu0
        %11792 = vmatpush.bf16.msra.mxu0 %v7541
        %11793 = vmatpush.bf16.msra.mxu0 %v7539
        %11794 = vmatpush.bf16.msra.mxu0 %v7537
        %11795 = vmatpush.bf16.msra.mxu0 %v7535
        %11796 = vmatpush.bf16.msra.mxu0 %v7533
        %11797 = vmatpush.bf16.msra.mxu0 %v7531
        %11798 = vmatpush.bf16.msra.mxu0 %v7529
        %11799 = vmatpush.bf16.msra.mxu0 %v7527
        %11800 = vmatmul.bf16.gmra.mxu0 %v1884
        %v11801 = vpop.f32.mrf.mxu0
        %v11802 = vadd.f32 %v11789, %v11801
        %v11803 = vpop.f32.mrf.mxu0
        %11804 = vdwg.mxu0
        %11805 = vmatpush.bf16.msra.mxu0 %v7557
        %11806 = vmatpush.bf16.msra.mxu0 %v7555
        %11807 = vmatpush.bf16.msra.mxu0 %v7553
        %11808 = vmatpush.bf16.msra.mxu0 %v7551
        %11809 = vmatpush.bf16.msra.mxu0 %v7549
        %11810 = vmatpush.bf16.msra.mxu0 %v7547
        %11811 = vmatpush.bf16.msra.mxu0 %v7545
        %11812 = vmatpush.bf16.msra.mxu0 %v7543
        %11813 = vmatmul.bf16.gmra.mxu0 %v1885
        %v11814 = vpop.f32.mrf.mxu0
        %v11815 = vadd.f32 %v11802, %v11814
        %v11816 = vpop.f32.mrf.mxu0
        %11817 = vdwg.mxu0
        %11818 = vmatpush.bf16.msra.mxu0 %v7573
        %11819 = vmatpush.bf16.msra.mxu0 %v7571
        %11820 = vmatpush.bf16.msra.mxu0 %v7569
        %11821 = vmatpush.bf16.msra.mxu0 %v7567
        %11822 = vmatpush.bf16.msra.mxu0 %v7565
        %11823 = vmatpush.bf16.msra.mxu0 %v7563
        %11824 = vmatpush.bf16.msra.mxu0 %v7561
        %11825 = vmatpush.bf16.msra.mxu0 %v7559
        %11826 = vmatmul.bf16.gmra.mxu0 %v1886
        %v11827 = vpop.f32.mrf.mxu0
        %v11828 = vadd.f32 %v11815, %v11827
        %v11829 = vpop.f32.mrf.mxu0
        %11830 = vdwg.mxu0
        %11831 = vmatpush.bf16.msra.mxu0 %v7589
        %11832 = vmatpush.bf16.msra.mxu0 %v7587
        %11833 = vmatpush.bf16.msra.mxu0 %v7585
        %11834 = vmatpush.bf16.msra.mxu0 %v7583
        %11835 = vmatpush.bf16.msra.mxu0 %v7581
        %11836 = vmatpush.bf16.msra.mxu0 %v7579
        %11837 = vmatpush.bf16.msra.mxu0 %v7577
        %11838 = vmatpush.bf16.msra.mxu0 %v7575
        %11839 = vmatmul.bf16.gmra.mxu0 %v1887
        %v11840 = vpop.f32.mrf.mxu0
        %v11841 = vadd.f32 %v11828, %v11840
        %v11842 = vpop.f32.mrf.mxu0
        %11843 = vdwg.mxu0
        %11844 = vmatpush.bf16.msra.mxu0 %v7605
        %11845 = vmatpush.bf16.msra.mxu0 %v7603
        %11846 = vmatpush.bf16.msra.mxu0 %v7601
        %11847 = vmatpush.bf16.msra.mxu0 %v7599
        %11848 = vmatpush.bf16.msra.mxu0 %v7597
        %11849 = vmatpush.bf16.msra.mxu0 %v7595
        %11850 = vmatpush.bf16.msra.mxu0 %v7593
        %11851 = vmatpush.bf16.msra.mxu0 %v7591
        %11852 = vmatmul.bf16.gmra.mxu0 %v1888
        %v11853 = vpop.f32.mrf.mxu0
        %v11854 = vadd.f32 %v11841, %v11853
        %v11855 = vpop.f32.mrf.mxu0
        %11856 = vdwg.mxu0
        %11857 = vmatpush.bf16.msra.mxu0 %v7621
        %11858 = vmatpush.bf16.msra.mxu0 %v7619
        %11859 = vmatpush.bf16.msra.mxu0 %v7617
        %11860 = vmatpush.bf16.msra.mxu0 %v7615
        %11861 = vmatpush.bf16.msra.mxu0 %v7613
        %11862 = vmatpush.bf16.msra.mxu0 %v7611
        %11863 = vmatpush.bf16.msra.mxu0 %v7609
        %11864 = vmatpush.bf16.msra.mxu0 %v7607
        %11865 = vmatmul.bf16.gmra.mxu0 %v1889
        %v11866 = vpop.f32.mrf.mxu0
        %v11867 = vadd.f32 %v11854, %v11866
        %v11868 = vpop.f32.mrf.mxu0
        %11869 = vdwg.mxu0
        %11870 = vmatpush.bf16.msra.mxu0 %v7637
        %11871 = vmatpush.bf16.msra.mxu0 %v7635
        %11872 = vmatpush.bf16.msra.mxu0 %v7633
        %11873 = vmatpush.bf16.msra.mxu0 %v7631
        %11874 = vmatpush.bf16.msra.mxu0 %v7629
        %11875 = vmatpush.bf16.msra.mxu0 %v7627
        %11876 = vmatpush.bf16.msra.mxu0 %v7625
        %11877 = vmatpush.bf16.msra.mxu0 %v7623
        %11878 = vmatmul.bf16.gmra.mxu0 %v1890
        %v11879 = vpop.f32.mrf.mxu0
        %v11880 = vadd.f32 %v11867, %v11879
        %v11881 = vpop.f32.mrf.mxu0
        %11882 = vdwg.mxu0
        %11883 = vmatpush.bf16.msra.mxu0 %v7653
        %11884 = vmatpush.bf16.msra.mxu0 %v7651
        %11885 = vmatpush.bf16.msra.mxu0 %v7649
        %11886 = vmatpush.bf16.msra.mxu0 %v7647
        %11887 = vmatpush.bf16.msra.mxu0 %v7645
        %11888 = vmatpush.bf16.msra.mxu0 %v7643
        %11889 = vmatpush.bf16.msra.mxu0 %v7641
        %11890 = vmatpush.bf16.msra.mxu0 %v7639
        %11891 = vmatmul.bf16.gmra.mxu0 %v1891
        %v11892 = vpop.f32.mrf.mxu0
        %v11893 = vadd.f32 %v11880, %v11892
        %v11894 = vpop.f32.mrf.mxu0
        %11895 = vdwg.mxu0
        %11896 = vmatpush.bf16.msra.mxu0 %v7669
        %11897 = vmatpush.bf16.msra.mxu0 %v7667
        %11898 = vmatpush.bf16.msra.mxu0 %v7665
        %11899 = vmatpush.bf16.msra.mxu0 %v7663
        %11900 = vmatpush.bf16.msra.mxu0 %v7661
        %11901 = vmatpush.bf16.msra.mxu0 %v7659
        %11902 = vmatpush.bf16.msra.mxu0 %v7657
        %11903 = vmatpush.bf16.msra.mxu0 %v7655
        %11904 = vmatmul.bf16.gmra.mxu0 %v1896
        %v11905 = vpop.f32.mrf.mxu0
        %v11906 = vadd.f32 %v11893, %v11905
        %v11907 = vpop.f32.mrf.mxu0
        %11908 = vdwg.mxu0
        %11909 = vmatpush.bf16.msra.mxu0 %v7685
        %11910 = vmatpush.bf16.msra.mxu0 %v7683
        %11911 = vmatpush.bf16.msra.mxu0 %v7681
        %11912 = vmatpush.bf16.msra.mxu0 %v7679
        %11913 = vmatpush.bf16.msra.mxu0 %v7677
        %11914 = vmatpush.bf16.msra.mxu0 %v7675
        %11915 = vmatpush.bf16.msra.mxu0 %v7673
        %11916 = vmatpush.bf16.msra.mxu0 %v7671
        %11917 = vmatmul.bf16.gmra.mxu0 %v1897
        %v11918 = vpop.f32.mrf.mxu0
        %v11919 = vadd.f32 %v11906, %v11918
        %v11920 = vpop.f32.mrf.mxu0
        %11921 = vdwg.mxu0
        %11922 = vmatpush.bf16.msra.mxu0 %v7701
        %11923 = vmatpush.bf16.msra.mxu0 %v7699
        %11924 = vmatpush.bf16.msra.mxu0 %v7697
        %11925 = vmatpush.bf16.msra.mxu0 %v7695
        %11926 = vmatpush.bf16.msra.mxu0 %v7693
        %11927 = vmatpush.bf16.msra.mxu0 %v7691
        %11928 = vmatpush.bf16.msra.mxu0 %v7689
        %11929 = vmatpush.bf16.msra.mxu0 %v7687
        %11930 = vmatmul.bf16.gmra.mxu0 %v1898
        %v11931 = vpop.f32.mrf.mxu0
        %v11932 = vadd.f32 %v11919, %v11931
        %v11933 = vpop.f32.mrf.mxu0
        %11934 = vdwg.mxu0
        %11935 = vmatpush.bf16.msra.mxu0 %v7717
        %11936 = vmatpush.bf16.msra.mxu0 %v7715
        %11937 = vmatpush.bf16.msra.mxu0 %v7713
        %11938 = vmatpush.bf16.msra.mxu0 %v7711
        %11939 = vmatpush.bf16.msra.mxu0 %v7709
        %11940 = vmatpush.bf16.msra.mxu0 %v7707
        %11941 = vmatpush.bf16.msra.mxu0 %v7705
        %11942 = vmatpush.bf16.msra.mxu0 %v7703
        %11943 = vmatmul.bf16.gmra.mxu0 %v1899
        %v11944 = vpop.f32.mrf.mxu0
        %v11945 = vadd.f32 %v11932, %v11944
        %v11946 = vpop.f32.mrf.mxu0
        %11947 = vdwg.mxu0
        %11948 = vmatpush.bf16.msra.mxu0 %v7733
        %11949 = vmatpush.bf16.msra.mxu0 %v7731
        %11950 = vmatpush.bf16.msra.mxu0 %v7729
        %11951 = vmatpush.bf16.msra.mxu0 %v7727
        %11952 = vmatpush.bf16.msra.mxu0 %v7725
        %11953 = vmatpush.bf16.msra.mxu0 %v7723
        %11954 = vmatpush.bf16.msra.mxu0 %v7721
        %11955 = vmatpush.bf16.msra.mxu0 %v7719
        %11956 = vmatmul.bf16.gmra.mxu0 %v1900
        %v11957 = vpop.f32.mrf.mxu0
        %v11958 = vadd.f32 %v11945, %v11957
        %v11959 = vpop.f32.mrf.mxu0
        %11960 = vdwg.mxu0
        %11961 = vmatpush.bf16.msra.mxu0 %v7749
        %11962 = vmatpush.bf16.msra.mxu0 %v7747
        %11963 = vmatpush.bf16.msra.mxu0 %v7745
        %11964 = vmatpush.bf16.msra.mxu0 %v7743
        %11965 = vmatpush.bf16.msra.mxu0 %v7741
        %11966 = vmatpush.bf16.msra.mxu0 %v7739
        %11967 = vmatpush.bf16.msra.mxu0 %v7737
        %11968 = vmatpush.bf16.msra.mxu0 %v7735
        %11969 = vmatmul.bf16.gmra.mxu0 %v1901
        %v11970 = vpop.f32.mrf.mxu0
        %v11971 = vadd.f32 %v11958, %v11970
        %v11972 = vpop.f32.mrf.mxu0
        %11973 = vdwg.mxu0
        %11974 = vmatpush.bf16.msra.mxu0 %v7765
        %11975 = vmatpush.bf16.msra.mxu0 %v7763
        %11976 = vmatpush.bf16.msra.mxu0 %v7761
        %11977 = vmatpush.bf16.msra.mxu0 %v7759
        %11978 = vmatpush.bf16.msra.mxu0 %v7757
        %11979 = vmatpush.bf16.msra.mxu0 %v7755
        %11980 = vmatpush.bf16.msra.mxu0 %v7753
        %11981 = vmatpush.bf16.msra.mxu0 %v7751
        %11982 = vmatmul.bf16.gmra.mxu0 %v1902
        %v11983 = vpop.f32.mrf.mxu0
        %v11984 = vadd.f32 %v11971, %v11983
        %v11985 = vpop.f32.mrf.mxu0
        %11986 = vdwg.mxu0
        %11987 = vmatpush.bf16.msra.mxu0 %v7781
        %11988 = vmatpush.bf16.msra.mxu0 %v7779
        %11989 = vmatpush.bf16.msra.mxu0 %v7777
        %11990 = vmatpush.bf16.msra.mxu0 %v7775
        %11991 = vmatpush.bf16.msra.mxu0 %v7773
        %11992 = vmatpush.bf16.msra.mxu0 %v7771
        %11993 = vmatpush.bf16.msra.mxu0 %v7769
        %11994 = vmatpush.bf16.msra.mxu0 %v7767
        %11995 = vmatmul.bf16.gmra.mxu0 %v1903
        %v11996 = vpop.f32.mrf.mxu0
        %v11997 = vadd.f32 %v11984, %v11996
        %v11998 = vpop.f32.mrf.mxu0
        %11999 = vdwg.mxu0
        %12000 = vmatpush.bf16.msra.mxu0 %v7797
        %12001 = vmatpush.bf16.msra.mxu0 %v7795
        %12002 = vmatpush.bf16.msra.mxu0 %v7793
        %12003 = vmatpush.bf16.msra.mxu0 %v7791
        %12004 = vmatpush.bf16.msra.mxu0 %v7789
        %12005 = vmatpush.bf16.msra.mxu0 %v7787
        %12006 = vmatpush.bf16.msra.mxu0 %v7785
        %12007 = vmatpush.bf16.msra.mxu0 %v7783
        %12008 = vmatmul.bf16.gmra.mxu0 %v1908
        %v12009 = vpop.f32.mrf.mxu0
        %v12010 = vadd.f32 %v11997, %v12009
        %v12011 = vpop.f32.mrf.mxu0
        %12012 = vdwg.mxu0
        %12013 = vmatpush.bf16.msra.mxu0 %v7813
        %12014 = vmatpush.bf16.msra.mxu0 %v7811
        %12015 = vmatpush.bf16.msra.mxu0 %v7809
        %12016 = vmatpush.bf16.msra.mxu0 %v7807
        %12017 = vmatpush.bf16.msra.mxu0 %v7805
        %12018 = vmatpush.bf16.msra.mxu0 %v7803
        %12019 = vmatpush.bf16.msra.mxu0 %v7801
        %12020 = vmatpush.bf16.msra.mxu0 %v7799
        %12021 = vmatmul.bf16.gmra.mxu0 %v1909
        %v12022 = vpop.f32.mrf.mxu0
        %v12023 = vadd.f32 %v12010, %v12022
        %v12024 = vpop.f32.mrf.mxu0
        %12025 = vdwg.mxu0
        %12026 = vmatpush.bf16.msra.mxu0 %v7829
        %12027 = vmatpush.bf16.msra.mxu0 %v7827
        %12028 = vmatpush.bf16.msra.mxu0 %v7825
        %12029 = vmatpush.bf16.msra.mxu0 %v7823
        %12030 = vmatpush.bf16.msra.mxu0 %v7821
        %12031 = vmatpush.bf16.msra.mxu0 %v7819
        %12032 = vmatpush.bf16.msra.mxu0 %v7817
        %12033 = vmatpush.bf16.msra.mxu0 %v7815
        %12034 = vmatmul.bf16.gmra.mxu0 %v1910
        %v12035 = vpop.f32.mrf.mxu0
        %v12036 = vadd.f32 %v12023, %v12035
        %v12037 = vpop.f32.mrf.mxu0
        %12038 = vdwg.mxu0
        %12039 = vmatpush.bf16.msra.mxu0 %v7845
        %12040 = vmatpush.bf16.msra.mxu0 %v7843
        %12041 = vmatpush.bf16.msra.mxu0 %v7841
        %12042 = vmatpush.bf16.msra.mxu0 %v7839
        %12043 = vmatpush.bf16.msra.mxu0 %v7837
        %12044 = vmatpush.bf16.msra.mxu0 %v7835
        %12045 = vmatpush.bf16.msra.mxu0 %v7833
        %12046 = vmatpush.bf16.msra.mxu0 %v7831
        %12047 = vmatmul.bf16.gmra.mxu0 %v1911
        %v12048 = vpop.f32.mrf.mxu0
        %v12049 = vadd.f32 %v12036, %v12048
        %v12050 = vpop.f32.mrf.mxu0
        %12051 = vdwg.mxu0
        %12052 = vmatpush.bf16.msra.mxu0 %v7861
        %12053 = vmatpush.bf16.msra.mxu0 %v7859
        %12054 = vmatpush.bf16.msra.mxu0 %v7857
        %12055 = vmatpush.bf16.msra.mxu0 %v7855
        %12056 = vmatpush.bf16.msra.mxu0 %v7853
        %12057 = vmatpush.bf16.msra.mxu0 %v7851
        %12058 = vmatpush.bf16.msra.mxu0 %v7849
        %12059 = vmatpush.bf16.msra.mxu0 %v7847
        %12060 = vmatmul.bf16.gmra.mxu0 %v1912
        %v12061 = vpop.f32.mrf.mxu0
        %v12062 = vadd.f32 %v12049, %v12061
        %v12063 = vpop.f32.mrf.mxu0
        %12064 = vdwg.mxu0
        %12065 = vmatpush.bf16.msra.mxu0 %v7877
        %12066 = vmatpush.bf16.msra.mxu0 %v7875
        %12067 = vmatpush.bf16.msra.mxu0 %v7873
        %12068 = vmatpush.bf16.msra.mxu0 %v7871
        %12069 = vmatpush.bf16.msra.mxu0 %v7869
        %12070 = vmatpush.bf16.msra.mxu0 %v7867
        %12071 = vmatpush.bf16.msra.mxu0 %v7865
        %12072 = vmatpush.bf16.msra.mxu0 %v7863
        %12073 = vmatmul.bf16.gmra.mxu0 %v1913
        %v12074 = vpop.f32.mrf.mxu0
        %v12075 = vadd.f32 %v12062, %v12074
        %v12076 = vpop.f32.mrf.mxu0
        %12077 = vdwg.mxu0
        %12078 = vmatpush.bf16.msra.mxu0 %v7893
        %12079 = vmatpush.bf16.msra.mxu0 %v7891
        %12080 = vmatpush.bf16.msra.mxu0 %v7889
        %12081 = vmatpush.bf16.msra.mxu0 %v7887
        %12082 = vmatpush.bf16.msra.mxu0 %v7885
        %12083 = vmatpush.bf16.msra.mxu0 %v7883
        %12084 = vmatpush.bf16.msra.mxu0 %v7881
        %12085 = vmatpush.bf16.msra.mxu0 %v7879
        %12086 = vmatmul.bf16.gmra.mxu0 %v1914
        %v12087 = vpop.f32.mrf.mxu0
        %v12088 = vadd.f32 %v12075, %v12087
        %v12089 = vpop.f32.mrf.mxu0
        %12090 = vdwg.mxu0
        %12091 = vmatpush.bf16.msra.mxu0 %v7909
        %12092 = vmatpush.bf16.msra.mxu0 %v7907
        %12093 = vmatpush.bf16.msra.mxu0 %v7905
        %12094 = vmatpush.bf16.msra.mxu0 %v7903
        %12095 = vmatpush.bf16.msra.mxu0 %v7901
        %12096 = vmatpush.bf16.msra.mxu0 %v7899
        %12097 = vmatpush.bf16.msra.mxu0 %v7897
        %12098 = vmatpush.bf16.msra.mxu0 %v7895
        %12099 = vmatmul.bf16.gmra.mxu0 %v1915
        %v12100 = vpop.f32.mrf.mxu0
        %v12101 = vadd.f32 %v12088, %v12100
        %v12102 = vpop.f32.mrf.mxu0
        %12103 = vdwg.mxu0
        %12104 = vmatpush.bf16.msra.mxu0 %v7925
        %12105 = vmatpush.bf16.msra.mxu0 %v7923
        %12106 = vmatpush.bf16.msra.mxu0 %v7921
        %12107 = vmatpush.bf16.msra.mxu0 %v7919
        %12108 = vmatpush.bf16.msra.mxu0 %v7917
        %12109 = vmatpush.bf16.msra.mxu0 %v7915
        %12110 = vmatpush.bf16.msra.mxu0 %v7913
        %12111 = vmatpush.bf16.msra.mxu0 %v7911
        %12112 = vmatmul.bf16.gmra.mxu0 %v1920
        %v12113 = vpop.f32.mrf.mxu0
        %v12114 = vadd.f32 %v12101, %v12113
        %v12115 = vpop.f32.mrf.mxu0
        %12116 = vdwg.mxu0
        %12117 = vmatpush.bf16.msra.mxu0 %v7941
        %12118 = vmatpush.bf16.msra.mxu0 %v7939
        %12119 = vmatpush.bf16.msra.mxu0 %v7937
        %12120 = vmatpush.bf16.msra.mxu0 %v7935
        %12121 = vmatpush.bf16.msra.mxu0 %v7933
        %12122 = vmatpush.bf16.msra.mxu0 %v7931
        %12123 = vmatpush.bf16.msra.mxu0 %v7929
        %12124 = vmatpush.bf16.msra.mxu0 %v7927
        %12125 = vmatmul.bf16.gmra.mxu0 %v1921
        %v12126 = vpop.f32.mrf.mxu0
        %v12127 = vadd.f32 %v12114, %v12126
        %v12128 = vpop.f32.mrf.mxu0
        %12129 = vdwg.mxu0
        %12130 = vmatpush.bf16.msra.mxu0 %v7957
        %12131 = vmatpush.bf16.msra.mxu0 %v7955
        %12132 = vmatpush.bf16.msra.mxu0 %v7953
        %12133 = vmatpush.bf16.msra.mxu0 %v7951
        %12134 = vmatpush.bf16.msra.mxu0 %v7949
        %12135 = vmatpush.bf16.msra.mxu0 %v7947
        %12136 = vmatpush.bf16.msra.mxu0 %v7945
        %12137 = vmatpush.bf16.msra.mxu0 %v7943
        %12138 = vmatmul.bf16.gmra.mxu0 %v1922
        %v12139 = vpop.f32.mrf.mxu0
        %v12140 = vadd.f32 %v12127, %v12139
        %v12141 = vpop.f32.mrf.mxu0
        %12142 = vdwg.mxu0
        %12143 = vmatpush.bf16.msra.mxu0 %v7973
        %12144 = vmatpush.bf16.msra.mxu0 %v7971
        %12145 = vmatpush.bf16.msra.mxu0 %v7969
        %12146 = vmatpush.bf16.msra.mxu0 %v7967
        %12147 = vmatpush.bf16.msra.mxu0 %v7965
        %12148 = vmatpush.bf16.msra.mxu0 %v7963
        %12149 = vmatpush.bf16.msra.mxu0 %v7961
        %12150 = vmatpush.bf16.msra.mxu0 %v7959
        %12151 = vmatmul.bf16.gmra.mxu0 %v1923
        %v12152 = vpop.f32.mrf.mxu0
        %v12153 = vadd.f32 %v12140, %v12152
        %v12154 = vpop.f32.mrf.mxu0
        %12155 = vdwg.mxu0
        %12156 = vmatpush.bf16.msra.mxu0 %v7989
        %12157 = vmatpush.bf16.msra.mxu0 %v7987
        %12158 = vmatpush.bf16.msra.mxu0 %v7985
        %12159 = vmatpush.bf16.msra.mxu0 %v7983
        %12160 = vmatpush.bf16.msra.mxu0 %v7981
        %12161 = vmatpush.bf16.msra.mxu0 %v7979
        %12162 = vmatpush.bf16.msra.mxu0 %v7977
        %12163 = vmatpush.bf16.msra.mxu0 %v7975
        %12164 = vmatmul.bf16.gmra.mxu0 %v1924
        %v12165 = vpop.f32.mrf.mxu0
        %v12166 = vadd.f32 %v12153, %v12165
        %v12167 = vpop.f32.mrf.mxu0
        %12168 = vdwg.mxu0
        %12169 = vmatpush.bf16.msra.mxu0 %v8005
        %12170 = vmatpush.bf16.msra.mxu0 %v8003
        %12171 = vmatpush.bf16.msra.mxu0 %v8001
        %12172 = vmatpush.bf16.msra.mxu0 %v7999
        %12173 = vmatpush.bf16.msra.mxu0 %v7997
        %12174 = vmatpush.bf16.msra.mxu0 %v7995
        %12175 = vmatpush.bf16.msra.mxu0 %v7993
        %12176 = vmatpush.bf16.msra.mxu0 %v7991
        %12177 = vmatmul.bf16.gmra.mxu0 %v1925
        %v12178 = vpop.f32.mrf.mxu0
        %v12179 = vadd.f32 %v12166, %v12178
        %v12180 = vpop.f32.mrf.mxu0
        %12181 = vdwg.mxu0
        %12182 = vmatpush.bf16.msra.mxu0 %v8021
        %12183 = vmatpush.bf16.msra.mxu0 %v8019
        %12184 = vmatpush.bf16.msra.mxu0 %v8017
        %12185 = vmatpush.bf16.msra.mxu0 %v8015
        %12186 = vmatpush.bf16.msra.mxu0 %v8013
        %12187 = vmatpush.bf16.msra.mxu0 %v8011
        %12188 = vmatpush.bf16.msra.mxu0 %v8009
        %12189 = vmatpush.bf16.msra.mxu0 %v8007
        %12190 = vmatmul.bf16.gmra.mxu0 %v1926
        %v12191 = vpop.f32.mrf.mxu0
        %v12192 = vadd.f32 %v12179, %v12191
        %v12193 = vpop.f32.mrf.mxu0
        %12194 = vdwg.mxu0
        %12195 = vmatpush.bf16.msra.mxu0 %v8037
        %12196 = vmatpush.bf16.msra.mxu0 %v8035
        %12197 = vmatpush.bf16.msra.mxu0 %v8033
        %12198 = vmatpush.bf16.msra.mxu0 %v8031
        %12199 = vmatpush.bf16.msra.mxu0 %v8029
        %12200 = vmatpush.bf16.msra.mxu0 %v8027
        %12201 = vmatpush.bf16.msra.mxu0 %v8025
        %12202 = vmatpush.bf16.msra.mxu0 %v8023
        %12203 = vmatmul.bf16.gmra.mxu0 %v1927
        %v12204 = vpop.f32.mrf.mxu0
        %v12205 = vadd.f32 %v12192, %v12204
        %v12206 = vpop.f32.mrf.mxu0
        %12207 = vdwg.mxu0
        %12208 = vmatpush.bf16.msra.mxu0 %v8053
        %12209 = vmatpush.bf16.msra.mxu0 %v8051
        %12210 = vmatpush.bf16.msra.mxu0 %v8049
        %12211 = vmatpush.bf16.msra.mxu0 %v8047
        %12212 = vmatpush.bf16.msra.mxu0 %v8045
        %12213 = vmatpush.bf16.msra.mxu0 %v8043
        %12214 = vmatpush.bf16.msra.mxu0 %v8041
        %12215 = vmatpush.bf16.msra.mxu0 %v8039
        %12216 = vmatmul.bf16.gmra.mxu0 %v1932
        %v12217 = vpop.f32.mrf.mxu0
        %v12218 = vadd.f32 %v12205, %v12217
        %v12219 = vpop.f32.mrf.mxu0
        %12220 = vdwg.mxu0
        %12221 = vmatpush.bf16.msra.mxu0 %v8069
        %12222 = vmatpush.bf16.msra.mxu0 %v8067
        %12223 = vmatpush.bf16.msra.mxu0 %v8065
        %12224 = vmatpush.bf16.msra.mxu0 %v8063
        %12225 = vmatpush.bf16.msra.mxu0 %v8061
        %12226 = vmatpush.bf16.msra.mxu0 %v8059
        %12227 = vmatpush.bf16.msra.mxu0 %v8057
        %12228 = vmatpush.bf16.msra.mxu0 %v8055
        %12229 = vmatmul.bf16.gmra.mxu0 %v1933
        %v12230 = vpop.f32.mrf.mxu0
        %v12231 = vadd.f32 %v12218, %v12230
        %v12232 = vpop.f32.mrf.mxu0
        %12233 = vdwg.mxu0
        %12234 = vmatpush.bf16.msra.mxu0 %v8085
        %12235 = vmatpush.bf16.msra.mxu0 %v8083
        %12236 = vmatpush.bf16.msra.mxu0 %v8081
        %12237 = vmatpush.bf16.msra.mxu0 %v8079
        %12238 = vmatpush.bf16.msra.mxu0 %v8077
        %12239 = vmatpush.bf16.msra.mxu0 %v8075
        %12240 = vmatpush.bf16.msra.mxu0 %v8073
        %12241 = vmatpush.bf16.msra.mxu0 %v8071
        %12242 = vmatmul.bf16.gmra.mxu0 %v1934
        %v12243 = vpop.f32.mrf.mxu0
        %v12244 = vadd.f32 %v12231, %v12243
        %v12245 = vpop.f32.mrf.mxu0
        %12246 = vdwg.mxu0
        %12247 = vmatpush.bf16.msra.mxu0 %v8101
        %12248 = vmatpush.bf16.msra.mxu0 %v8099
        %12249 = vmatpush.bf16.msra.mxu0 %v8097
        %12250 = vmatpush.bf16.msra.mxu0 %v8095
        %12251 = vmatpush.bf16.msra.mxu0 %v8093
        %12252 = vmatpush.bf16.msra.mxu0 %v8091
        %12253 = vmatpush.bf16.msra.mxu0 %v8089
        %12254 = vmatpush.bf16.msra.mxu0 %v8087
        %12255 = vmatmul.bf16.gmra.mxu0 %v1935
        %v12256 = vpop.f32.mrf.mxu0
        %v12257 = vadd.f32 %v12244, %v12256
        %v12258 = vpop.f32.mrf.mxu0
        %12259 = vdwg.mxu0
        %12260 = vmatpush.bf16.msra.mxu0 %v8117
        %12261 = vmatpush.bf16.msra.mxu0 %v8115
        %12262 = vmatpush.bf16.msra.mxu0 %v8113
        %12263 = vmatpush.bf16.msra.mxu0 %v8111
        %12264 = vmatpush.bf16.msra.mxu0 %v8109
        %12265 = vmatpush.bf16.msra.mxu0 %v8107
        %12266 = vmatpush.bf16.msra.mxu0 %v8105
        %12267 = vmatpush.bf16.msra.mxu0 %v8103
        %12268 = vmatmul.bf16.gmra.mxu0 %v1936
        %v12269 = vpop.f32.mrf.mxu0
        %v12270 = vadd.f32 %v12257, %v12269
        %v12271 = vpop.f32.mrf.mxu0
        %12272 = vdwg.mxu0
        %12273 = vmatpush.bf16.msra.mxu0 %v8133
        %12274 = vmatpush.bf16.msra.mxu0 %v8131
        %12275 = vmatpush.bf16.msra.mxu0 %v8129
        %12276 = vmatpush.bf16.msra.mxu0 %v8127
        %12277 = vmatpush.bf16.msra.mxu0 %v8125
        %12278 = vmatpush.bf16.msra.mxu0 %v8123
        %12279 = vmatpush.bf16.msra.mxu0 %v8121
        %12280 = vmatpush.bf16.msra.mxu0 %v8119
        %12281 = vmatmul.bf16.gmra.mxu0 %v1937
        %v12282 = vpop.f32.mrf.mxu0
        %v12283 = vadd.f32 %v12270, %v12282
        %v12284 = vpop.f32.mrf.mxu0
        %12285 = vdwg.mxu0
        %12286 = vmatpush.bf16.msra.mxu0 %v8149
        %12287 = vmatpush.bf16.msra.mxu0 %v8147
        %12288 = vmatpush.bf16.msra.mxu0 %v8145
        %12289 = vmatpush.bf16.msra.mxu0 %v8143
        %12290 = vmatpush.bf16.msra.mxu0 %v8141
        %12291 = vmatpush.bf16.msra.mxu0 %v8139
        %12292 = vmatpush.bf16.msra.mxu0 %v8137
        %12293 = vmatpush.bf16.msra.mxu0 %v8135
        %12294 = vmatmul.bf16.gmra.mxu0 %v1938
        %v12295 = vpop.f32.mrf.mxu0
        %v12296 = vadd.f32 %v12283, %v12295
        %v12297 = vpop.f32.mrf.mxu0
        %12298 = vdwg.mxu0
        %12299 = vmatpush.bf16.msra.mxu0 %v8165
        %12300 = vmatpush.bf16.msra.mxu0 %v8163
        %12301 = vmatpush.bf16.msra.mxu0 %v8161
        %12302 = vmatpush.bf16.msra.mxu0 %v8159
        %12303 = vmatpush.bf16.msra.mxu0 %v8157
        %12304 = vmatpush.bf16.msra.mxu0 %v8155
        %12305 = vmatpush.bf16.msra.mxu0 %v8153
        %12306 = vmatpush.bf16.msra.mxu0 %v8151
        %12307 = vmatmul.bf16.gmra.mxu0 %v1939
        %v12308 = vpop.f32.mrf.mxu0
        %v12309 = vadd.f32 %v12296, %v12308
        %v12310 = vpop.f32.mrf.mxu0
        %12311 = vdwg.mxu0
        %12312 = vmatpush.bf16.msra.mxu0 %v8181
        %12313 = vmatpush.bf16.msra.mxu0 %v8179
        %12314 = vmatpush.bf16.msra.mxu0 %v8177
        %12315 = vmatpush.bf16.msra.mxu0 %v8175
        %12316 = vmatpush.bf16.msra.mxu0 %v8173
        %12317 = vmatpush.bf16.msra.mxu0 %v8171
        %12318 = vmatpush.bf16.msra.mxu0 %v8169
        %12319 = vmatpush.bf16.msra.mxu0 %v8167
        %12320 = vmatmul.bf16.gmra.mxu0 %v1944
        %v12321 = vpop.f32.mrf.mxu0
        %v12322 = vadd.f32 %v12309, %v12321
        %v12323 = vpop.f32.mrf.mxu0
        %12324 = vdwg.mxu0
        %12325 = vmatpush.bf16.msra.mxu0 %v8197
        %12326 = vmatpush.bf16.msra.mxu0 %v8195
        %12327 = vmatpush.bf16.msra.mxu0 %v8193
        %12328 = vmatpush.bf16.msra.mxu0 %v8191
        %12329 = vmatpush.bf16.msra.mxu0 %v8189
        %12330 = vmatpush.bf16.msra.mxu0 %v8187
        %12331 = vmatpush.bf16.msra.mxu0 %v8185
        %12332 = vmatpush.bf16.msra.mxu0 %v8183
        %12333 = vmatmul.bf16.gmra.mxu0 %v1945
        %v12334 = vpop.f32.mrf.mxu0
        %v12335 = vadd.f32 %v12322, %v12334
        %v12336 = vpop.f32.mrf.mxu0
        %12337 = vdwg.mxu0
        %12338 = vmatpush.bf16.msra.mxu0 %v8213
        %12339 = vmatpush.bf16.msra.mxu0 %v8211
        %12340 = vmatpush.bf16.msra.mxu0 %v8209
        %12341 = vmatpush.bf16.msra.mxu0 %v8207
        %12342 = vmatpush.bf16.msra.mxu0 %v8205
        %12343 = vmatpush.bf16.msra.mxu0 %v8203
        %12344 = vmatpush.bf16.msra.mxu0 %v8201
        %12345 = vmatpush.bf16.msra.mxu0 %v8199
        %12346 = vmatmul.bf16.gmra.mxu0 %v1946
        %v12347 = vpop.f32.mrf.mxu0
        %v12348 = vadd.f32 %v12335, %v12347
        %v12349 = vpop.f32.mrf.mxu0
        %12350 = vdwg.mxu0
        %12351 = vmatpush.bf16.msra.mxu0 %v8229
        %12352 = vmatpush.bf16.msra.mxu0 %v8227
        %12353 = vmatpush.bf16.msra.mxu0 %v8225
        %12354 = vmatpush.bf16.msra.mxu0 %v8223
        %12355 = vmatpush.bf16.msra.mxu0 %v8221
        %12356 = vmatpush.bf16.msra.mxu0 %v8219
        %12357 = vmatpush.bf16.msra.mxu0 %v8217
        %12358 = vmatpush.bf16.msra.mxu0 %v8215
        %12359 = vmatmul.bf16.gmra.mxu0 %v1947
        %v12360 = vpop.f32.mrf.mxu0
        %v12361 = vadd.f32 %v12348, %v12360
        %v12362 = vpop.f32.mrf.mxu0
        %12363 = vdwg.mxu0
        %12364 = vmatpush.bf16.msra.mxu0 %v8245
        %12365 = vmatpush.bf16.msra.mxu0 %v8243
        %12366 = vmatpush.bf16.msra.mxu0 %v8241
        %12367 = vmatpush.bf16.msra.mxu0 %v8239
        %12368 = vmatpush.bf16.msra.mxu0 %v8237
        %12369 = vmatpush.bf16.msra.mxu0 %v8235
        %12370 = vmatpush.bf16.msra.mxu0 %v8233
        %12371 = vmatpush.bf16.msra.mxu0 %v8231
        %12372 = vmatmul.bf16.gmra.mxu0 %v1948
        %v12373 = vpop.f32.mrf.mxu0
        %v12374 = vadd.f32 %v12361, %v12373
        %v12375 = vpop.f32.mrf.mxu0
        %12376 = vdwg.mxu0
        %12377 = vmatpush.bf16.msra.mxu0 %v8261
        %12378 = vmatpush.bf16.msra.mxu0 %v8259
        %12379 = vmatpush.bf16.msra.mxu0 %v8257
        %12380 = vmatpush.bf16.msra.mxu0 %v8255
        %12381 = vmatpush.bf16.msra.mxu0 %v8253
        %12382 = vmatpush.bf16.msra.mxu0 %v8251
        %12383 = vmatpush.bf16.msra.mxu0 %v8249
        %12384 = vmatpush.bf16.msra.mxu0 %v8247
        %12385 = vmatmul.bf16.gmra.mxu0 %v1949
        %v12386 = vpop.f32.mrf.mxu0
        %v12387 = vadd.f32 %v12374, %v12386
        %v12388 = vpop.f32.mrf.mxu0
        %12389 = vdwg.mxu0
        %12390 = vmatpush.bf16.msra.mxu0 %v8277
        %12391 = vmatpush.bf16.msra.mxu0 %v8275
        %12392 = vmatpush.bf16.msra.mxu0 %v8273
        %12393 = vmatpush.bf16.msra.mxu0 %v8271
        %12394 = vmatpush.bf16.msra.mxu0 %v8269
        %12395 = vmatpush.bf16.msra.mxu0 %v8267
        %12396 = vmatpush.bf16.msra.mxu0 %v8265
        %12397 = vmatpush.bf16.msra.mxu0 %v8263
        %12398 = vmatmul.bf16.gmra.mxu0 %v1950
        %v12399 = vpop.f32.mrf.mxu0
        %v12400 = vadd.f32 %v12387, %v12399
        %v12401 = vpop.f32.mrf.mxu0
        %12402 = vdwg.mxu0
        %12403 = vmatpush.bf16.msra.mxu0 %v8293
        %12404 = vmatpush.bf16.msra.mxu0 %v8291
        %12405 = vmatpush.bf16.msra.mxu0 %v8289
        %12406 = vmatpush.bf16.msra.mxu0 %v8287
        %12407 = vmatpush.bf16.msra.mxu0 %v8285
        %12408 = vmatpush.bf16.msra.mxu0 %v8283
        %12409 = vmatpush.bf16.msra.mxu0 %v8281
        %12410 = vmatpush.bf16.msra.mxu0 %v8279
        %12411 = vmatmul.bf16.gmra.mxu0 %v1951
        %v12412 = vpop.f32.mrf.mxu0
        %v12413 = vadd.f32 %v12400, %v12412
        %v12414 = vpop.f32.mrf.mxu0
        %12415 = vdwg.mxu0
        %12416 = vmatpush.bf16.msra.mxu0 %v8309
        %12417 = vmatpush.bf16.msra.mxu0 %v8307
        %12418 = vmatpush.bf16.msra.mxu0 %v8305
        %12419 = vmatpush.bf16.msra.mxu0 %v8303
        %12420 = vmatpush.bf16.msra.mxu0 %v8301
        %12421 = vmatpush.bf16.msra.mxu0 %v8299
        %12422 = vmatpush.bf16.msra.mxu0 %v8297
        %12423 = vmatpush.bf16.msra.mxu0 %v8295
        %12424 = vmatmul.bf16.gmra.mxu0 %v1954
        %v12425 = vpop.f32.mrf.mxu0
        %v12426 = vadd.f32 %v12413, %v12425
        %v12427 = vpop.f32.mrf.mxu0
        %12428 = vdwg.mxu0
        %12429 = vmatpush.bf16.msra.mxu0 %v8325
        %12430 = vmatpush.bf16.msra.mxu0 %v8323
        %12431 = vmatpush.bf16.msra.mxu0 %v8321
        %12432 = vmatpush.bf16.msra.mxu0 %v8319
        %12433 = vmatpush.bf16.msra.mxu0 %v8317
        %12434 = vmatpush.bf16.msra.mxu0 %v8315
        %12435 = vmatpush.bf16.msra.mxu0 %v8313
        %12436 = vmatpush.bf16.msra.mxu0 %v8311
        %12437 = vmatmul.bf16.gmra.mxu0 %v1955
        %v12438 = vpop.f32.mrf.mxu0
        %v12439 = vadd.f32 %v12426, %v12438
        %v12440 = vpop.f32.mrf.mxu0
        %12441 = vdwg.mxu0
        %v12444 = vrot.slane %v12439, 4
        %vm12445 = vcmask 1043456
        %v12446 = vsel %vm12445, %v11165, %v12444
        %v12448 = vadd.f32 %v213, %v12446
        %12449 = vst [vmem:[%s206] sm:$0xff] %v12448
        %s12450 = smul.u32 2, %s20
        %p12451 = scmp.lt.s32.totalorder %s12450, 3
        %s12452 = scalar_select %p12451, %s12450, 3
        %s12453 = smul.addr %s12452, 4
        %s12454 = scalar_lea.vmem %s2, %s12453
        // Predicated region
        $region37: #{id_loss_forward.5} parent=27 // pred_check
          %p12455 = pneg %p100
        $region38: #{id_loss_forward.5} parent=27 // pred_check_branch
          %12457 = sbr.rel (%p12455) target = $region40
        $region39: #{id_loss_forward.5} parent=27 // pred_region
          %s12458 = smul.u32 2, %s20
        $region40: #{id_loss_forward.5} parent=27 // pred_fallthru
          _
      $region28: #{id_loss_forward.5} parent=5 // pred_fallthru
        _
      %p12459 = scmp.le.s32.totalorder 2, %s11
      // Predicated region
      $region41: #{id_loss_forward.5} parent=5 // pred_check
        %p12460 = pneg %p12459
      $region42: #{id_loss_forward.5} parent=5 // pred_check_branch
        %12462 = sbr.rel (%p12460) target = $region44
      $region43: #{id_loss_forward.5} parent=5 // pred_region
        %s12463 = ssub.s32 %s11, 2
        // Predicated region
        $region45: #{id_loss_forward.5} parent=43 // pred_check
          %p12464 = pneg %p106
        $region46: #{id_loss_forward.5} parent=43 // pred_check_branch
          %12466 = sbr.rel (%p12464) target = $region48
        $region47: #{id_loss_forward.5} parent=43 // pred_region
          %s12467 = smul.u32 2, %s22
          %p12468 = scmp.lt.s32.totalorder %s12467, 3
          %s12469 = scalar_select %p12468, %s12467, 3
          %s12470 = smul.addr %s12469, 4
          %s12471 = scalar_lea.vmem %s2, %s12470
        $region48: #{id_loss_forward.5} parent=43 // pred_fallthru
          _
      $region44: #{id_loss_forward.5} parent=5 // pred_fallthru
        _
    $region6: #{id_loss_forward.5} parent=1 // loop_footer
      %s15 = sadd.s32 1, %s11
    $region7: #{id_loss_forward.5} parent=1 // loop_footer_branch
      %10 = sbr.rel target = $region3
    $region8: #{id_loss_forward.5} parent=1 // loop_exit
      _
    %12472 = vsyncpa [#allocation3], 1
    %s12473 = scalar_lea.sflag [#allocation3], 1
    %12474 = vsyncpa %s12473, 1

</llo_original>
